<compile_context>
chip_gen: v7x
topology: tpu7x:2x2x1
jax: 0.10.0
libtpu: 0.0.40
codegen_flags: <defaults>
</compile_context>

<pallas_src>
import numpy as np

import jax
import jax.numpy as jnp
from jax.experimental import pallas as pl
from jax.experimental.pallas import tpu as pltpu


# ----------------------------------------------------------------------------
# Static architecture constants (small synthetic shapes).
# ----------------------------------------------------------------------------
LATENT_DIM = 256
INIT_RES = 4                    # resolution after latent projection
RES1 = 8                        # after first 2x upsample
RES2 = 16                       # after second 2x upsample (output resolution)
C0, C1, C2 = 32, 16, 8          # channel schedule
CH_OUT = 3                      # RGB

S0 = INIT_RES * INIT_RES        # 16
S1 = RES1 * RES1                # 64
S2 = RES2 * RES2                # 256

F0 = C0 * S0                    # 512   flattened features after projection
F1 = C1 * S1                    # 1024  after conv block 1
F2 = C2 * S2                    # 2048  after conv block 2
FOUT = CH_OUT * S2              # 768   flattened RGB output per sample

MAX_B_TILE = 128                # batch rows per grid step (sublane M dim)


# ----------------------------------------------------------------------------
# Host-side constant operators.
#   _upsample_tap_matrix(low, high, dy, dx)[s_low, y*high + x] == 1  iff
#   (y+dy, x+dx) is in-bounds at `high` resolution and maps (via 2x nearest
#   upsampling) back to low-res pixel s_low.  Right-multiplying a (C, low^2)
#   feature map by it yields the zero-padded, (dy,dx)-shifted, 2x-upsampled
#   map — i.e. upsample + conv-tap shift fused into one constant matmul.
# ----------------------------------------------------------------------------
def _upsample_tap_matrix(low, high, dy, dx):
    e = np.zeros((low * low, high * high), np.float32)
    for y in range(high):
        for x in range(high):
            yy, xx = y + dy, x + dx
            if 0 <= yy < high and 0 <= xx < high:
                e[(yy // 2) * low + (xx // 2), y * high + x] = 1.0
    return e


def init_params(key):
    """Raw (per-tap) generator parameters — same layout as the spec version."""
    ks = jax.random.split(key, 6)
    s = 0.02
    return {
        # latent projection: equivalent to ConvTranspose2d(256 -> C0, 4x4)
        "wp": s * jax.random.normal(ks[0], (S0, C0, LATENT_DIM), jnp.float32),
        "bp": s * jax.random.normal(ks[1], (C0, 1), jnp.float32),
        # conv block 1: 8x8, C0 -> C1 (3x3), weights per tap (Cout, Cin)
        "w1": s * jax.random.normal(ks[2], (9, C1, C0), jnp.float32),
        "b1": jnp.zeros((C1, 1), jnp.float32),
        # conv block 2: 16x16, C1 -> C2 (3x3)
        "w2": s * jax.random.normal(ks[3], (9, C2, C1), jnp.float32),
        "b2": jnp.zeros((C2, 1), jnp.float32),
        # to-RGB: 1x1 conv, C2 -> 3
        "wrgb": s * jax.random.normal(ks[4], (CH_OUT, C2), jnp.float32),
        "brgb": jnp.zeros((CH_OUT, 1), jnp.float32),
    }


def build_operators(params):
    """Fuse the per-tap conv weights and the constant upsample/shift matrices
    into one dense matmul operator per stage.  Feature flattening everywhere
    is channel-major: feature index = c * (H*W) + (y*W + x), so the final
    (B, CH_OUT*S2) output reshapes row-major straight to NCHW.

    NOTE: these must be rebuilt whenever the raw weights change (fine for a
    fixed EMA inference checkpoint)."""
    wp, bp = params["wp"], params["bp"]
    w1, b1 = params["w1"], params["b1"]
    w2, b2 = params["w2"], params["b2"]
    wrgb, brgb = params["wrgb"], params["brgb"]

    # Stage 0: (LATENT_DIM, C0*S0).  wp0[l, c*S0+s] = wp[s, c, l]
    wp0 = jnp.transpose(wp, (2, 1, 0)).reshape(LATENT_DIM, F0)
    bp0 = jnp.broadcast_to(bp, (C0, S0)).reshape(1, F0)

    # Per-tap constant upsample+shift operators (tap order matches the spec:
    # t = (dy+1)*3 + (dx+1)).
    e1 = np.stack([_upsample_tap_matrix(INIT_RES, RES1, dy, dx)
                   for dy in (-1, 0, 1) for dx in (-1, 0, 1)])   # (9, S0, S1)
    e2 = np.stack([_upsample_tap_matrix(RES1, RES2, dy, dx)
                   for dy in (-1, 0, 1) for dx in (-1, 0, 1)])   # (9, S1, S2)
    e1 = jnp.asarray(e1)
    e2 = jnp.asarray(e2)

    # Stage 1 fused operator: B1[c0*S0+s0, c1*S1+s1] = sum_t w1[t,c1,c0]*e1[t,s0,s1]
    b1op = jnp.einsum("tac,tbd->cbad", w1, e1).reshape(F0, F1)
    b1row = jnp.broadcast_to(b1, (C1, S1)).reshape(1, F1)

    # Stage 2 fused operator: B2[c1*S1+s1, c2*S2+s2] = sum_t w2[t,c2,c1]*e2[t,s1,s2]
    b2op = jnp.einsum("tac,tbd->cbad", w2, e2).reshape(F1, F2)
    b2row = jnp.broadcast_to(b2, (C2, S2)).reshape(1, F2)

    # Stage 3 (1x1 to-RGB): RGBOP[c2*S2+s, o*S2+s'] = wrgb[o, c2] * (s == s')
    eye = jnp.eye(S2, dtype=jnp.float32)
    rgbop = jnp.einsum("oc,st->csot", wrgb, eye).reshape(F2, FOUT)
    brgbrow = jnp.broadcast_to(brgb, (CH_OUT, S2)).reshape(1, FOUT)

    return {
        "wp0": wp0, "bp0": bp0,
        "b1op": b1op, "b1": b1row,
        "b2op": b2op, "b2": b2row,
        "rgbop": rgbop, "brgb": brgbrow,
    }


# ----------------------------------------------------------------------------
# The single fused generator kernel: a 4-matmul "MLP" over a batch tile.
# Activations are (B_tile, features): samples on sublanes (MXU M dim),
# flattened channel*spatial features on lanes (MXU N / K dims).
# ----------------------------------------------------------------------------
def _leaky(x):
    return jnp.where(x >= 0.0, x, 0.2 * x)      # LeakyReLU(0.2) on the VPU


def _generator_kernel(x_ref, wp0_ref, bp0_ref, b1op_ref, b1_ref,
                      b2op_ref, b2_ref, rgbop_ref, brgb_ref, out_ref):
    # stage 0: latent projection -> (B_tile, C0*S0)
    h0 = _leaky(jnp.dot(x_ref[...], wp0_ref[...],
                        preferred_element_type=jnp.float32) + bp0_ref[...])
    # stage 1: fused 2x upsample + 3x3 conv (C0->C1) -> (B_tile, C1*S1)
    h1 = _leaky(jnp.dot(h0, b1op_ref[...],
                        preferred_element_type=jnp.float32) + b1_ref[...])
    # stage 2: fused 2x upsample + 3x3 conv (C1->C2) -> (B_tile, C2*S2)
    h2 = _leaky(jnp.dot(h1, b2op_ref[...],
                        preferred_element_type=jnp.float32) + b2_ref[...])
    # stage 3: 1x1 to-RGB + tanh, dense (B_tile, CH_OUT*S2) store
    out_ref[...] = jnp.tanh(jnp.dot(h2, rgbop_ref[...],
                                    preferred_element_type=jnp.float32)
                            + brgb_ref[...])


# ----------------------------------------------------------------------------
# Wrapper.forward equivalent: latent (B, 256) -> image (B, 3, 16, 16) NCHW.
# ----------------------------------------------------------------------------
@jax.jit
def wrapper_forward(ops, x):
    B = x.shape[0]
    # batch tile: multiple of 8 sublanes, capped at MAX_B_TILE
    b_tile = min(MAX_B_TILE, -(-B // 8) * 8)
    b_pad = -(-B // b_tile) * b_tile
    x_pad = jnp.pad(x, ((0, b_pad - B), (0, 0)))     # padded rows -> garbage, sliced off

    const = lambda b: (0, 0)                          # weights: fetched once
    grid_spec = pltpu.PrefetchScalarGridSpec(
        num_scalar_prefetch=0,
        grid=(b_pad // b_tile,),
        in_specs=[
            pl.BlockSpec((b_tile, LATENT_DIM), lambda b: (b, 0)),   # latent rows
            pl.BlockSpec((LATENT_DIM, F0), const),                  # wp0
            pl.BlockSpec((1, F0), const),                           # bp0
            pl.BlockSpec((F0, F1), const),                          # b1op
            pl.BlockSpec((1, F1), const),                           # b1
            pl.BlockSpec((F1, F2), const),                          # b2op
            pl.BlockSpec((1, F2), const),                           # b2
            pl.BlockSpec((F2, FOUT), const),                        # rgbop
            pl.BlockSpec((1, FOUT), const),                         # brgb
        ],
        out_specs=pl.BlockSpec((b_tile, FOUT), lambda b: (b, 0)),
    )

    out = pl.pallas_call(
        _generator_kernel,
        grid_spec=grid_spec,
        out_shape=jax.ShapeDtypeStruct((b_pad, FOUT), jnp.float32),
        compiler_params=pltpu.CompilerParams(
            dimension_semantics=("parallel",),
            vmem_limit_bytes=64 * 1024 * 1024),
    )(x_pad, ops["wp0"], ops["bp0"], ops["b1op"], ops["b1"],
      ops["b2op"], ops["b2"], ops["rgbop"], ops["brgb"])

    # (B, 3*256) is already NCHW memory order: pure row-major reshape.
    return out[:B].reshape(B, CH_OUT, RES2, RES2)


if __name__ == "__main__":
    key = jax.random.PRNGKey(0)
    pkey, xkey = jax.random.split(key)
    params = init_params(pkey)
    ops = build_operators(params)     # host-side fusion of per-tap weights

    B = 2
    x = jax.random.normal(xkey, (B, LATENT_DIM), jnp.float32)   # latent noise

    out = jax.block_until_ready(wrapper_forward(ops, x))

    assert out.shape == (B, CH_OUT, RES2, RES2), out.shape
    assert out.dtype == jnp.float32
    assert bool(jnp.all(jnp.isfinite(out)))
    assert bool(jnp.all(jnp.abs(out) <= 1.0))   # tanh output range
    print("KERNEL_OK")
</pallas_src>

<mosaic_0001>
module attributes {stable_mosaic.version = 11 : i64} {
  func.func @_generator_kernel(%arg0: i32, %arg1: memref<8x256xf32, #tpu.memory_space<vmem>>, %arg2: memref<256x512xf32, #tpu.memory_space<vmem>>, %arg3: memref<1x512xf32, #tpu.memory_space<vmem>>, %arg4: memref<512x1024xf32, #tpu.memory_space<vmem>>, %arg5: memref<1x1024xf32, #tpu.memory_space<vmem>>, %arg6: memref<1024x2048xf32, #tpu.memory_space<vmem>>, %arg7: memref<1x2048xf32, #tpu.memory_space<vmem>>, %arg8: memref<2048x768xf32, #tpu.memory_space<vmem>>, %arg9: memref<1x768xf32, #tpu.memory_space<vmem>>, %arg10: memref<8x768xf32, #tpu.memory_space<vmem>>) attributes {dimension_semantics = [#tpu.dimension_semantics<parallel>], iteration_bounds = array<i64: 1>, scalar_prefetch = 0 : i64, scratch_operands = 0 : i64, tpu.core_type = #tpu.core_type<tc>, window_params = [{transform_indices = @transform_0, window_bounds = array<i64: 8, 256>}, {pipeline_mode = #tpu.pipeline_mode<synchronous>, transform_indices = @transform_1, window_bounds = array<i64: 256, 512>}, {pipeline_mode = #tpu.pipeline_mode<synchronous>, transform_indices = @transform_2, window_bounds = array<i64: 1, 512>}, {pipeline_mode = #tpu.pipeline_mode<synchronous>, transform_indices = @transform_3, window_bounds = array<i64: 512, 1024>}, {pipeline_mode = #tpu.pipeline_mode<synchronous>, transform_indices = @transform_4, window_bounds = array<i64: 1, 1024>}, {pipeline_mode = #tpu.pipeline_mode<synchronous>, transform_indices = @transform_5, window_bounds = array<i64: 1024, 2048>}, {pipeline_mode = #tpu.pipeline_mode<synchronous>, transform_indices = @transform_6, window_bounds = array<i64: 1, 2048>}, {pipeline_mode = #tpu.pipeline_mode<synchronous>, transform_indices = @transform_7, window_bounds = array<i64: 2048, 768>}, {pipeline_mode = #tpu.pipeline_mode<synchronous>, transform_indices = @transform_8, window_bounds = array<i64: 1, 768>}, {transform_indices = @transform_9, window_bounds = array<i64: 8, 768>}]} {
    %c0 = arith.constant 0 : index
    %c0_0 = arith.constant 0 : index
    %0 = vector.load %arg1[%c0, %c0_0] : memref<8x256xf32, #tpu.memory_space<vmem>>, vector<8x256xf32>
    %c0_1 = arith.constant 0 : index
    %c0_2 = arith.constant 0 : index
    %1 = vector.load %arg2[%c0_1, %c0_2] : memref<256x512xf32, #tpu.memory_space<vmem>>, vector<256x512xf32>
    %cst = arith.constant dense<0.000000e+00> : vector<8x512xf32>
    %2 = tpu.matmul %0, %1, %cst {dimension_numbers = #tpu.dot_dimension_numbers<[1], [0], [0], [1], [0, 0, 1, 1], [], []>} : vector<8x256xf32>, vector<256x512xf32>, vector<8x512xf32> -> vector<8x512xf32>
    %c0_3 = arith.constant 0 : index
    %c0_4 = arith.constant 0 : index
    %3 = vector.load %arg3[%c0_3, %c0_4] : memref<1x512xf32, #tpu.memory_space<vmem>>, vector<1x512xf32>
    %4 = vector.broadcast %3 : vector<1x512xf32> to vector<8x512xf32>
    %5 = arith.addf %2, %4 : vector<8x512xf32>
    %cst_5 = arith.constant 0.000000e+00 : f32
    %6 = vector.broadcast %cst_5 : f32 to vector<8x512xf32>
    %7 = arith.cmpf oge, %5, %6 : vector<8x512xf32>
    %cst_6 = arith.constant 2.000000e-01 : f32
    %8 = vector.broadcast %cst_6 : f32 to vector<8x512xf32>
    %9 = arith.mulf %8, %5 : vector<8x512xf32>
    %10 = arith.select %7, %5, %9 : vector<8x512xi1>, vector<8x512xf32>
    %c0_7 = arith.constant 0 : index
    %c0_8 = arith.constant 0 : index
    %11 = vector.load %arg4[%c0_7, %c0_8] : memref<512x1024xf32, #tpu.memory_space<vmem>>, vector<512x1024xf32>
    %cst_9 = arith.constant dense<0.000000e+00> : vector<8x1024xf32>
    %12 = tpu.matmul %10, %11, %cst_9 {dimension_numbers = #tpu.dot_dimension_numbers<[1], [0], [0], [1], [0, 0, 1, 1], [], []>} : vector<8x512xf32>, vector<512x1024xf32>, vector<8x1024xf32> -> vector<8x1024xf32>
    %c0_10 = arith.constant 0 : index
    %c0_11 = arith.constant 0 : index
    %13 = vector.load %arg5[%c0_10, %c0_11] : memref<1x1024xf32, #tpu.memory_space<vmem>>, vector<1x1024xf32>
    %14 = vector.broadcast %13 : vector<1x1024xf32> to vector<8x1024xf32>
    %15 = arith.addf %12, %14 : vector<8x1024xf32>
    %cst_12 = arith.constant 0.000000e+00 : f32
    %16 = vector.broadcast %cst_12 : f32 to vector<8x1024xf32>
    %17 = arith.cmpf oge, %15, %16 : vector<8x1024xf32>
    %cst_13 = arith.constant 2.000000e-01 : f32
    %18 = vector.broadcast %cst_13 : f32 to vector<8x1024xf32>
    %19 = arith.mulf %18, %15 : vector<8x1024xf32>
    %20 = arith.select %17, %15, %19 : vector<8x1024xi1>, vector<8x1024xf32>
    %c0_14 = arith.constant 0 : index
    %c0_15 = arith.constant 0 : index
    %21 = vector.load %arg6[%c0_14, %c0_15] : memref<1024x2048xf32, #tpu.memory_space<vmem>>, vector<1024x2048xf32>
    %cst_16 = arith.constant dense<0.000000e+00> : vector<8x2048xf32>
    %22 = tpu.matmul %20, %21, %cst_16 {dimension_numbers = #tpu.dot_dimension_numbers<[1], [0], [0], [1], [0, 0, 1, 1], [], []>} : vector<8x1024xf32>, vector<1024x2048xf32>, vector<8x2048xf32> -> vector<8x2048xf32>
    %c0_17 = arith.constant 0 : index
    %c0_18 = arith.constant 0 : index
    %23 = vector.load %arg7[%c0_17, %c0_18] : memref<1x2048xf32, #tpu.memory_space<vmem>>, vector<1x2048xf32>
    %24 = vector.broadcast %23 : vector<1x2048xf32> to vector<8x2048xf32>
    %25 = arith.addf %22, %24 : vector<8x2048xf32>
    %cst_19 = arith.constant 0.000000e+00 : f32
    %26 = vector.broadcast %cst_19 : f32 to vector<8x2048xf32>
    %27 = arith.cmpf oge, %25, %26 : vector<8x2048xf32>
    %cst_20 = arith.constant 2.000000e-01 : f32
    %28 = vector.broadcast %cst_20 : f32 to vector<8x2048xf32>
    %29 = arith.mulf %28, %25 : vector<8x2048xf32>
    %30 = arith.select %27, %25, %29 : vector<8x2048xi1>, vector<8x2048xf32>
    %c0_21 = arith.constant 0 : index
    %c0_22 = arith.constant 0 : index
    %31 = vector.load %arg8[%c0_21, %c0_22] : memref<2048x768xf32, #tpu.memory_space<vmem>>, vector<2048x768xf32>
    %cst_23 = arith.constant dense<0.000000e+00> : vector<8x768xf32>
    %32 = tpu.matmul %30, %31, %cst_23 {dimension_numbers = #tpu.dot_dimension_numbers<[1], [0], [0], [1], [0, 0, 1, 1], [], []>} : vector<8x2048xf32>, vector<2048x768xf32>, vector<8x768xf32> -> vector<8x768xf32>
    %c0_24 = arith.constant 0 : index
    %c0_25 = arith.constant 0 : index
    %33 = vector.load %arg9[%c0_24, %c0_25] : memref<1x768xf32, #tpu.memory_space<vmem>>, vector<1x768xf32>
    %34 = vector.broadcast %33 : vector<1x768xf32> to vector<8x768xf32>
    %35 = arith.addf %32, %34 : vector<8x768xf32>
    %36 = math.tanh %35 : vector<8x768xf32>
    %c0_26 = arith.constant 0 : index
    %c0_27 = arith.constant 0 : index
    %37 = vector.load %arg10[%c0_26, %c0_27] : memref<8x768xf32, #tpu.memory_space<vmem>>, vector<8x768xf32>
    tpu.vector_store %arg10[%c0_26, %c0_27], %36 {strides = array<i32>} : memref<8x768xf32, #tpu.memory_space<vmem>>, vector<8x768xf32>,
    return
  }
  func.func @transform_0(%arg0: i32) -> (i32, i32) {
    %c0_i32 = arith.constant 0 : i32
    %c0_i32_0 = arith.constant 0 : i32
    return %arg0, %c0_i32 : i32, i32
  }
  func.func @transform_1(%arg0: i32) -> (i32, i32) {
    %c0_i32 = arith.constant 0 : i32
    %c0_i32_0 = arith.constant 0 : i32
    %c0_i32_1 = arith.constant 0 : i32
    return %c0_i32, %c0_i32_0 : i32, i32
  }
  func.func @transform_2(%arg0: i32) -> (i32, i32) {
    %c0_i32 = arith.constant 0 : i32
    %c0_i32_0 = arith.constant 0 : i32
    %c0_i32_1 = arith.constant 0 : i32
    return %c0_i32, %c0_i32_0 : i32, i32
  }
  func.func @transform_3(%arg0: i32) -> (i32, i32) {
    %c0_i32 = arith.constant 0 : i32
    %c0_i32_0 = arith.constant 0 : i32
    %c0_i32_1 = arith.constant 0 : i32
    return %c0_i32, %c0_i32_0 : i32, i32
  }
  func.func @transform_4(%arg0: i32) -> (i32, i32) {
    %c0_i32 = arith.constant 0 : i32
    %c0_i32_0 = arith.constant 0 : i32
    %c0_i32_1 = arith.constant 0 : i32
    return %c0_i32, %c0_i32_0 : i32, i32
  }
  func.func @transform_5(%arg0: i32) -> (i32, i32) {
    %c0_i32 = arith.constant 0 : i32
    %c0_i32_0 = arith.constant 0 : i32
    %c0_i32_1 = arith.constant 0 : i32
    return %c0_i32, %c0_i32_0 : i32, i32
  }
  func.func @transform_6(%arg0: i32) -> (i32, i32) {
    %c0_i32 = arith.constant 0 : i32
    %c0_i32_0 = arith.constant 0 : i32
    %c0_i32_1 = arith.constant 0 : i32
    return %c0_i32, %c0_i32_0 : i32, i32
  }
  func.func @transform_7(%arg0: i32) -> (i32, i32) {
    %c0_i32 = arith.constant 0 : i32
    %c0_i32_0 = arith.constant 0 : i32
    %c0_i32_1 = arith.constant 0 : i32
    return %c0_i32, %c0_i32_0 : i32, i32
  }
  func.func @transform_8(%arg0: i32) -> (i32, i32) {
    %c0_i32 = arith.constant 0 : i32
    %c0_i32_0 = arith.constant 0 : i32
    %c0_i32_1 = arith.constant 0 : i32
    return %c0_i32, %c0_i32_0 : i32, i32
  }
  func.func @transform_9(%arg0: i32) -> (i32, i32) {
    %c0_i32 = arith.constant 0 : i32
    %c0_i32_0 = arith.constant 0 : i32
    return %arg0, %c0_i32 : i32, i32
  }
}

</mosaic_0001>

<llo_original>
// kernel: wrapper_forward.1
$region0: #{wrapper_forward.1}
  #allocation0 [shape = 'u32[]', space=smem, size = 0x4, offset = 0x4, fixed_abs, tag = 'smem constant byte address 0x4 - core index']
  #allocation1 [shape = 'u32[144,128]{1,0:T(1,128)}', space=vmem, size = 0x12000, scoped, tag = 'internal scratch']
  %s0 = inlined_call_operand.hbm [shape: f32[8,256], index: 0, kind: input, shape index: {}]
  %s1 = inlined_call_operand.hbm [shape: f32[256,512], index: 1, kind: input, shape index: {}]
  %s2 = inlined_call_operand.hbm [shape: f32[1,512], index: 2, kind: input, shape index: {}]
  %s3 = inlined_call_operand.hbm [shape: f32[512,1024], index: 3, kind: input, shape index: {}]
  %s4 = inlined_call_operand.hbm [shape: f32[1,1024], index: 4, kind: input, shape index: {}]
  %s5 = inlined_call_operand.hbm [shape: f32[1024,2048], index: 5, kind: input, shape index: {}]
  %s6 = inlined_call_operand.hbm [shape: f32[1,2048], index: 6, kind: input, shape index: {}]
  %s7 = inlined_call_operand.hbm [shape: f32[2048,768], index: 7, kind: input, shape index: {}]
  %s8 = inlined_call_operand.hbm [shape: f32[1,768], index: 8, kind: input, shape index: {}]
  %s9 = inlined_call_operand.hbm [shape: f32[8,768], index: 9, kind: output, shape index: {}]
  %s10 = sld [smem:[#allocation0]]
  $region82: #{wrapper_forward.1} parent=0
    _
  %s12 = ssub.s32 1, %s10
  %s13 = scalar_select 0, %s12, %s10
  $region1: #{wrapper_forward.1} parent=0
    #allocation2 [shape = 'u8[8192]{0}', space=vmem, size = 0x2000, scoped, tag = 'input window, operand 0, single buffered']
    #allocation3 [shape = 's32[1]{0}', space=sflag, size = 0x4, scoped, tag = 'scoped memory for wrapper_forward.1']
    #allocation4 [shape = 's32[1]{0}', space=sflag, size = 0x4, scoped, tag = 'scoped memory for wrapper_forward.1']
    #allocation5 [shape = 'u8[524288]{0}', space=vmem, size = 0x80000, scoped, tag = 'input window, operand 1, single buffered']
    #allocation6 [shape = 's32[1]{0}', space=sflag, size = 0x4, scoped, tag = 'scoped memory for wrapper_forward.1']
    #allocation7 [shape = 'u8[2048]{0}', space=vmem, size = 0x800, scoped, tag = 'input window, operand 2, single buffered']
    #allocation8 [shape = 'u8[2097152]{0}', space=vmem, size = 0x200000, scoped, tag = 'input window, operand 3, single buffered']
    #allocation9 [shape = 's32[1]{0}', space=sflag, size = 0x4, scoped, tag = 'scoped memory for wrapper_forward.1']
    #allocation10 [shape = 'u8[4096]{0}', space=vmem, size = 0x1000, scoped, tag = 'input window, operand 4, single buffered']
    #allocation11 [shape = 'u8[8388608]{0}', space=vmem, size = 0x800000, scoped, tag = 'input window, operand 5, single buffered']
    #allocation12 [shape = 's32[1]{0}', space=sflag, size = 0x4, scoped, tag = 'scoped memory for wrapper_forward.1']
    #allocation13 [shape = 'u8[8192]{0}', space=vmem, size = 0x2000, scoped, tag = 'input window, operand 6, single buffered']
    #allocation14 [shape = 'u8[6291456]{0}', space=vmem, size = 0x600000, scoped, tag = 'input window, operand 7, single buffered']
    #allocation15 [shape = 's32[1]{0}', space=sflag, size = 0x4, scoped, tag = 'scoped memory for wrapper_forward.1']
    #allocation16 [shape = 'u8[3072]{0}', space=vmem, size = 0xc00, scoped, tag = 'input window, operand 8, single buffered']
    #allocation17 [shape = 'u8[24576]{0}', space=vmem, size = 0x6000, scoped, tag = 'output window, operand 0, single buffered']
    %14 = vsyncpa [#allocation3], 0
    %15 = vsyncpa [#allocation6], 0
    %16 = vsyncpa [#allocation9], 0
    %17 = vsyncpa [#allocation12], 0
    %18 = vsyncpa [#allocation15], 0
    %19 = vsyncpa [#allocation4], 0
    // Predicated region
    $region2: #{wrapper_forward.1} parent=1 // pred_check
      _
    $region3: #{wrapper_forward.1} parent=1 // pred_check_branch
      %21 = sbr.rel (0) target = $region5
    $region4: #{wrapper_forward.1} parent=1 // pred_region
      %s23 = ssub.s32 256, 256
      %24 = vsyncadd [#allocation3], %s23
      %s26 = sshll.u32 [#allocation2], 4
      %s27 = int_to_ptr.vmem [resolvable:$true] %s26
      %29 = dma.hbm_to_vmem [thread:$0]  %s0, 256, %s27, [#allocation3]
    $region5: #{wrapper_forward.1} parent=1 // pred_fallthru
      _
    // Predicated region
    $region6: #{wrapper_forward.1} parent=1 // pred_check
      _
    $region7: #{wrapper_forward.1} parent=1 // pred_check_branch
      %31 = sbr.rel (0) target = $region9
    $region8: #{wrapper_forward.1} parent=1 // pred_region
      %s33 = ssub.s32 16384, 16384
      %34 = vsyncadd [#allocation6], %s33
      %s35 = sshll.u32 [#allocation5], 4
      %s36 = int_to_ptr.vmem [resolvable:$true] %s35
      %41 = dma.hbm_to_vmem [thread:$0]  %s1, 16384, %s36, [#allocation6], 512, 512, 32
    $region9: #{wrapper_forward.1} parent=1 // pred_fallthru
      _
    // Predicated region
    $region10: #{wrapper_forward.1} parent=1 // pred_check
      _
    $region11: #{wrapper_forward.1} parent=1 // pred_check_branch
      %43 = sbr.rel (0) target = $region13
    $region12: #{wrapper_forward.1} parent=1 // pred_region
      %s45 = ssub.s32 64, 64
      %46 = vsyncadd [#allocation6], %s45
      %s48 = sshll.u32 [#allocation7], 4
      %s49 = int_to_ptr.vmem [resolvable:$true] %s48
      %51 = dma.hbm_to_vmem [thread:$0]  %s2, 64, %s49, [#allocation6]
    $region13: #{wrapper_forward.1} parent=1 // pred_fallthru
      _
    // Predicated region
    $region14: #{wrapper_forward.1} parent=1 // pred_check
      _
    $region15: #{wrapper_forward.1} parent=1 // pred_check_branch
      %53 = sbr.rel (0) target = $region17
    $region16: #{wrapper_forward.1} parent=1 // pred_region
      %s55 = ssub.s32 65536, 65536
      %56 = vsyncadd [#allocation9], %s55
      %s57 = sshll.u32 [#allocation8], 4
      %s58 = int_to_ptr.vmem [resolvable:$true] %s57
      %63 = dma.hbm_to_vmem [thread:$0]  %s3, 65536, %s58, [#allocation9], 1024, 1024, 64
    $region17: #{wrapper_forward.1} parent=1 // pred_fallthru
      _
    // Predicated region
    $region18: #{wrapper_forward.1} parent=1 // pred_check
      _
    $region19: #{wrapper_forward.1} parent=1 // pred_check_branch
      %65 = sbr.rel (0) target = $region21
    $region20: #{wrapper_forward.1} parent=1 // pred_region
      %s67 = ssub.s32 128, 128
      %68 = vsyncadd [#allocation9], %s67
      %s70 = sshll.u32 [#allocation10], 4
      %s71 = int_to_ptr.vmem [resolvable:$true] %s70
      %73 = dma.hbm_to_vmem [thread:$0]  %s4, 128, %s71, [#allocation9]
    $region21: #{wrapper_forward.1} parent=1 // pred_fallthru
      _
    // Predicated region
    $region22: #{wrapper_forward.1} parent=1 // pred_check
      _
    $region23: #{wrapper_forward.1} parent=1 // pred_check_branch
      %75 = sbr.rel (0) target = $region25
    $region24: #{wrapper_forward.1} parent=1 // pred_region
      %s77 = ssub.s32 262144, 262144
      %78 = vsyncadd [#allocation12], %s77
      %s79 = sshll.u32 [#allocation11], 4
      %s80 = int_to_ptr.vmem [resolvable:$true] %s79
      %85 = dma.hbm_to_vmem [thread:$0]  %s5, 262144, %s80, [#allocation12], 2048, 2048, 128
    $region25: #{wrapper_forward.1} parent=1 // pred_fallthru
      _
    // Predicated region
    $region26: #{wrapper_forward.1} parent=1 // pred_check
      _
    $region27: #{wrapper_forward.1} parent=1 // pred_check_branch
      %87 = sbr.rel (0) target = $region29
    $region28: #{wrapper_forward.1} parent=1 // pred_region
      %s89 = ssub.s32 256, 256
      %90 = vsyncadd [#allocation12], %s89
      %s92 = sshll.u32 [#allocation13], 4
      %s93 = int_to_ptr.vmem [resolvable:$true] %s92
      %95 = dma.hbm_to_vmem [thread:$0]  %s6, 256, %s93, [#allocation12]
    $region29: #{wrapper_forward.1} parent=1 // pred_fallthru
      _
    // Predicated region
    $region30: #{wrapper_forward.1} parent=1 // pred_check
      _
    $region31: #{wrapper_forward.1} parent=1 // pred_check_branch
      %97 = sbr.rel (0) target = $region33
    $region32: #{wrapper_forward.1} parent=1 // pred_region
      %s99 = ssub.s32 196608, 196608
      %100 = vsyncadd [#allocation15], %s99
      %s101 = sshll.u32 [#allocation14], 4
      %s102 = int_to_ptr.vmem [resolvable:$true] %s101
      %107 = dma.hbm_to_vmem [thread:$0]  %s7, 196608, %s102, [#allocation15], 768, 768, 48
    $region33: #{wrapper_forward.1} parent=1 // pred_fallthru
      _
    // Predicated region
    $region34: #{wrapper_forward.1} parent=1 // pred_check
      _
    $region35: #{wrapper_forward.1} parent=1 // pred_check_branch
      %109 = sbr.rel (0) target = $region37
    $region36: #{wrapper_forward.1} parent=1 // pred_region
      %s111 = ssub.s32 96, 96
      %112 = vsyncadd [#allocation15], %s111
      %s114 = sshll.u32 [#allocation16], 4
      %s115 = int_to_ptr.vmem [resolvable:$true] %s114
      %117 = dma.hbm_to_vmem [thread:$0]  %s8, 96, %s115, [#allocation15]
    $region37: #{wrapper_forward.1} parent=1 // pred_fallthru
      _
    // Predicated region
    $region38: #{wrapper_forward.1} parent=1 // pred_check
      _
    $region39: #{wrapper_forward.1} parent=1 // pred_check_branch
      %119 = sbr.rel (0) target = $region41
    $region40: #{wrapper_forward.1} parent=1 // pred_region
      %120 = dma.done [#allocation3], 256
    $region41: #{wrapper_forward.1} parent=1 // pred_fallthru
      _
    // Predicated region
    $region42: #{wrapper_forward.1} parent=1 // pred_check
      _
    $region43: #{wrapper_forward.1} parent=1 // pred_check_branch
      %122 = sbr.rel (0) target = $region45
    $region44: #{wrapper_forward.1} parent=1 // pred_region
      %123 = dma.done [#allocation6], 16384
    $region45: #{wrapper_forward.1} parent=1 // pred_fallthru
      _
    // Predicated region
    $region46: #{wrapper_forward.1} parent=1 // pred_check
      _
    $region47: #{wrapper_forward.1} parent=1 // pred_check_branch
      %125 = sbr.rel (0) target = $region49
    $region48: #{wrapper_forward.1} parent=1 // pred_region
      %126 = dma.done [#allocation6], 64
    $region49: #{wrapper_forward.1} parent=1 // pred_fallthru
      _
    // Predicated region
    $region50: #{wrapper_forward.1} parent=1 // pred_check
      _
    $region51: #{wrapper_forward.1} parent=1 // pred_check_branch
      %128 = sbr.rel (0) target = $region53
    $region52: #{wrapper_forward.1} parent=1 // pred_region
      %129 = dma.done [#allocation9], 65536
    $region53: #{wrapper_forward.1} parent=1 // pred_fallthru
      _
    // Predicated region
    $region54: #{wrapper_forward.1} parent=1 // pred_check
      _
    $region55: #{wrapper_forward.1} parent=1 // pred_check_branch
      %131 = sbr.rel (0) target = $region57
    $region56: #{wrapper_forward.1} parent=1 // pred_region
      %132 = dma.done [#allocation9], 128
    $region57: #{wrapper_forward.1} parent=1 // pred_fallthru
      _
    // Predicated region
    $region58: #{wrapper_forward.1} parent=1 // pred_check
      _
    $region59: #{wrapper_forward.1} parent=1 // pred_check_branch
      %134 = sbr.rel (0) target = $region61
    $region60: #{wrapper_forward.1} parent=1 // pred_region
      %135 = dma.done [#allocation12], 262144
    $region61: #{wrapper_forward.1} parent=1 // pred_fallthru
      _
    // Predicated region
    $region62: #{wrapper_forward.1} parent=1 // pred_check
      _
    $region63: #{wrapper_forward.1} parent=1 // pred_check_branch
      %137 = sbr.rel (0) target = $region65
    $region64: #{wrapper_forward.1} parent=1 // pred_region
      %138 = dma.done [#allocation12], 256
    $region65: #{wrapper_forward.1} parent=1 // pred_fallthru
      _
    // Predicated region
    $region66: #{wrapper_forward.1} parent=1 // pred_check
      _
    $region67: #{wrapper_forward.1} parent=1 // pred_check_branch
      %140 = sbr.rel (0) target = $region69
    $region68: #{wrapper_forward.1} parent=1 // pred_region
      %141 = dma.done [#allocation15], 196608
    $region69: #{wrapper_forward.1} parent=1 // pred_fallthru
      _
    // Predicated region
    $region70: #{wrapper_forward.1} parent=1 // pred_check
      _
    $region71: #{wrapper_forward.1} parent=1 // pred_check_branch
      %143 = sbr.rel (0) target = $region73
    $region72: #{wrapper_forward.1} parent=1 // pred_region
      %144 = dma.done [#allocation15], 96
    $region73: #{wrapper_forward.1} parent=1 // pred_fallthru
      _
    %v145 = vld [vmem:[#allocation2] sm:$0xff]
    %v146 = vld [vmem:[#allocation2 + $0x8] sm:$0xff]
    %v147 = vld [vmem:[#allocation5] sm:$0xff]
    %v148 = vld [vmem:[#allocation5 + $0x8] sm:$0xff]
    %v149 = vld [vmem:[#allocation5 + $0x10] sm:$0xff]
    %v150 = vld [vmem:[#allocation5 + $0x18] sm:$0xff]
    %v151 = vld [vmem:[#allocation5 + $0x20] sm:$0xff]
    %v152 = vld [vmem:[#allocation5 + $0x28] sm:$0xff]
    %v153 = vld [vmem:[#allocation5 + $0x30] sm:$0xff]
    %v154 = vld [vmem:[#allocation5 + $0x38] sm:$0xff]
    %v155 = vld [vmem:[#allocation5 + $0x40] sm:$0xff]
    %v156 = vld [vmem:[#allocation5 + $0x48] sm:$0xff]
    %v157 = vld [vmem:[#allocation5 + $0x50] sm:$0xff]
    %v158 = vld [vmem:[#allocation5 + $0x58] sm:$0xff]
    %v159 = vld [vmem:[#allocation5 + $0x60] sm:$0xff]
    %v160 = vld [vmem:[#allocation5 + $0x68] sm:$0xff]
    %v161 = vld [vmem:[#allocation5 + $0x70] sm:$0xff]
    %v162 = vld [vmem:[#allocation5 + $0x78] sm:$0xff]
    %v163 = vld [vmem:[#allocation5 + $0x80] sm:$0xff]
    %v164 = vld [vmem:[#allocation5 + $0x88] sm:$0xff]
    %v165 = vld [vmem:[#allocation5 + $0x90] sm:$0xff]
    %v166 = vld [vmem:[#allocation5 + $0x98] sm:$0xff]
    %v167 = vld [vmem:[#allocation5 + $0xa0] sm:$0xff]
    %v168 = vld [vmem:[#allocation5 + $0xa8] sm:$0xff]
    %v169 = vld [vmem:[#allocation5 + $0xb0] sm:$0xff]
    %v170 = vld [vmem:[#allocation5 + $0xb8] sm:$0xff]
    %v171 = vld [vmem:[#allocation5 + $0xc0] sm:$0xff]
    %v172 = vld [vmem:[#allocation5 + $0xc8] sm:$0xff]
    %v173 = vld [vmem:[#allocation5 + $0xd0] sm:$0xff]
    %v174 = vld [vmem:[#allocation5 + $0xd8] sm:$0xff]
    %v175 = vld [vmem:[#allocation5 + $0xe0] sm:$0xff]
    %v176 = vld [vmem:[#allocation5 + $0xe8] sm:$0xff]
    %v177 = vld [vmem:[#allocation5 + $0xf0] sm:$0xff]
    %v178 = vld [vmem:[#allocation5 + $0xf8] sm:$0xff]
    %v179 = vld [vmem:[#allocation5 + $0x100] sm:$0xff]
    %v180 = vld [vmem:[#allocation5 + $0x108] sm:$0xff]
    %v181 = vld [vmem:[#allocation5 + $0x110] sm:$0xff]
    %v182 = vld [vmem:[#allocation5 + $0x118] sm:$0xff]
    %v183 = vld [vmem:[#allocation5 + $0x120] sm:$0xff]
    %v184 = vld [vmem:[#allocation5 + $0x128] sm:$0xff]
    %v185 = vld [vmem:[#allocation5 + $0x130] sm:$0xff]
    %v186 = vld [vmem:[#allocation5 + $0x138] sm:$0xff]
    %v187 = vld [vmem:[#allocation5 + $0x140] sm:$0xff]
    %v188 = vld [vmem:[#allocation5 + $0x148] sm:$0xff]
    %v189 = vld [vmem:[#allocation5 + $0x150] sm:$0xff]
    %v190 = vld [vmem:[#allocation5 + $0x158] sm:$0xff]
    %v191 = vld [vmem:[#allocation5 + $0x160] sm:$0xff]
    %v192 = vld [vmem:[#allocation5 + $0x168] sm:$0xff]
    %v193 = vld [vmem:[#allocation5 + $0x170] sm:$0xff]
    %v194 = vld [vmem:[#allocation5 + $0x178] sm:$0xff]
    %v195 = vld [vmem:[#allocation5 + $0x180] sm:$0xff]
    %v196 = vld [vmem:[#allocation5 + $0x188] sm:$0xff]
    %v197 = vld [vmem:[#allocation5 + $0x190] sm:$0xff]
    %v198 = vld [vmem:[#allocation5 + $0x198] sm:$0xff]
    %v199 = vld [vmem:[#allocation5 + $0x1a0] sm:$0xff]
    %v200 = vld [vmem:[#allocation5 + $0x1a8] sm:$0xff]
    %v201 = vld [vmem:[#allocation5 + $0x1b0] sm:$0xff]
    %v202 = vld [vmem:[#allocation5 + $0x1b8] sm:$0xff]
    %v203 = vld [vmem:[#allocation5 + $0x1c0] sm:$0xff]
    %v204 = vld [vmem:[#allocation5 + $0x1c8] sm:$0xff]
    %v205 = vld [vmem:[#allocation5 + $0x1d0] sm:$0xff]
    %v206 = vld [vmem:[#allocation5 + $0x1d8] sm:$0xff]
    %v207 = vld [vmem:[#allocation5 + $0x1e0] sm:$0xff]
    %v208 = vld [vmem:[#allocation5 + $0x1e8] sm:$0xff]
    %v209 = vld [vmem:[#allocation5 + $0x1f0] sm:$0xff]
    %v210 = vld [vmem:[#allocation5 + $0x1f8] sm:$0xff]
    %v211 = vld [vmem:[#allocation5 + $0x200] sm:$0xff]
    %v212 = vld [vmem:[#allocation5 + $0x208] sm:$0xff]
    %v213 = vld [vmem:[#allocation5 + $0x210] sm:$0xff]
    %v214 = vld [vmem:[#allocation5 + $0x218] sm:$0xff]
    %v215 = vld [vmem:[#allocation5 + $0x220] sm:$0xff]
    %v216 = vld [vmem:[#allocation5 + $0x228] sm:$0xff]
    %v217 = vld [vmem:[#allocation5 + $0x230] sm:$0xff]
    %v218 = vld [vmem:[#allocation5 + $0x238] sm:$0xff]
    %v219 = vld [vmem:[#allocation5 + $0x240] sm:$0xff]
    %v220 = vld [vmem:[#allocation5 + $0x248] sm:$0xff]
    %v221 = vld [vmem:[#allocation5 + $0x250] sm:$0xff]
    %v222 = vld [vmem:[#allocation5 + $0x258] sm:$0xff]
    %v223 = vld [vmem:[#allocation5 + $0x260] sm:$0xff]
    %v224 = vld [vmem:[#allocation5 + $0x268] sm:$0xff]
    %v225 = vld [vmem:[#allocation5 + $0x270] sm:$0xff]
    %v226 = vld [vmem:[#allocation5 + $0x278] sm:$0xff]
    %v227 = vld [vmem:[#allocation5 + $0x280] sm:$0xff]
    %v228 = vld [vmem:[#allocation5 + $0x288] sm:$0xff]
    %v229 = vld [vmem:[#allocation5 + $0x290] sm:$0xff]
    %v230 = vld [vmem:[#allocation5 + $0x298] sm:$0xff]
    %v231 = vld [vmem:[#allocation5 + $0x2a0] sm:$0xff]
    %v232 = vld [vmem:[#allocation5 + $0x2a8] sm:$0xff]
    %v233 = vld [vmem:[#allocation5 + $0x2b0] sm:$0xff]
    %v234 = vld [vmem:[#allocation5 + $0x2b8] sm:$0xff]
    %v235 = vld [vmem:[#allocation5 + $0x2c0] sm:$0xff]
    %v236 = vld [vmem:[#allocation5 + $0x2c8] sm:$0xff]
    %v237 = vld [vmem:[#allocation5 + $0x2d0] sm:$0xff]
    %v238 = vld [vmem:[#allocation5 + $0x2d8] sm:$0xff]
    %v239 = vld [vmem:[#allocation5 + $0x2e0] sm:$0xff]
    %v240 = vld [vmem:[#allocation5 + $0x2e8] sm:$0xff]
    %v241 = vld [vmem:[#allocation5 + $0x2f0] sm:$0xff]
    %v242 = vld [vmem:[#allocation5 + $0x2f8] sm:$0xff]
    %v243 = vld [vmem:[#allocation5 + $0x300] sm:$0xff]
    %v244 = vld [vmem:[#allocation5 + $0x308] sm:$0xff]
    %v245 = vld [vmem:[#allocation5 + $0x310] sm:$0xff]
    %v246 = vld [vmem:[#allocation5 + $0x318] sm:$0xff]
    %v247 = vld [vmem:[#allocation5 + $0x320] sm:$0xff]
    %v248 = vld [vmem:[#allocation5 + $0x328] sm:$0xff]
    %v249 = vld [vmem:[#allocation5 + $0x330] sm:$0xff]
    %v250 = vld [vmem:[#allocation5 + $0x338] sm:$0xff]
    %v251 = vld [vmem:[#allocation5 + $0x340] sm:$0xff]
    %v252 = vld [vmem:[#allocation5 + $0x348] sm:$0xff]
    %v253 = vld [vmem:[#allocation5 + $0x350] sm:$0xff]
    %v254 = vld [vmem:[#allocation5 + $0x358] sm:$0xff]
    %v255 = vld [vmem:[#allocation5 + $0x360] sm:$0xff]
    %v256 = vld [vmem:[#allocation5 + $0x368] sm:$0xff]
    %v257 = vld [vmem:[#allocation5 + $0x370] sm:$0xff]
    %v258 = vld [vmem:[#allocation5 + $0x378] sm:$0xff]
    %v259 = vld [vmem:[#allocation5 + $0x380] sm:$0xff]
    %v260 = vld [vmem:[#allocation5 + $0x388] sm:$0xff]
    %v261 = vld [vmem:[#allocation5 + $0x390] sm:$0xff]
    %v262 = vld [vmem:[#allocation5 + $0x398] sm:$0xff]
    %v263 = vld [vmem:[#allocation5 + $0x3a0] sm:$0xff]
    %v264 = vld [vmem:[#allocation5 + $0x3a8] sm:$0xff]
    %v265 = vld [vmem:[#allocation5 + $0x3b0] sm:$0xff]
    %v266 = vld [vmem:[#allocation5 + $0x3b8] sm:$0xff]
    %v267 = vld [vmem:[#allocation5 + $0x3c0] sm:$0xff]
    %v268 = vld [vmem:[#allocation5 + $0x3c8] sm:$0xff]
    %v269 = vld [vmem:[#allocation5 + $0x3d0] sm:$0xff]
    %v270 = vld [vmem:[#allocation5 + $0x3d8] sm:$0xff]
    %v271 = vld [vmem:[#allocation5 + $0x3e0] sm:$0xff]
    %v272 = vld [vmem:[#allocation5 + $0x3e8] sm:$0xff]
    %v273 = vld [vmem:[#allocation5 + $0x3f0] sm:$0xff]
    %v274 = vld [vmem:[#allocation5 + $0x3f8] sm:$0xff]
    %v275 = vld [vmem:[#allocation7] sm:$0xf]
    %v277 = vlaneseq
    %v278 = vshrl.u32 %v277, 7
    %v279 = vsub.s32 0, %v278
    %v280 = vrot.slane %v275, %v279
    %v281 = vlaneseq
    %v282 = vshrl.u32 %v281, 7
    %v283 = vsub.s32 1, %v282
    %v284 = vrot.slane %v275, %v283
    %v285 = vlaneseq
    %v286 = vshrl.u32 %v285, 7
    %v287 = vsub.s32 2, %v286
    %v288 = vrot.slane %v275, %v287
    %v289 = vlaneseq
    %v290 = vshrl.u32 %v289, 7
    %v291 = vsub.s32 3, %v290
    %v292 = vrot.slane %v275, %v291
    %297 = vmatprep.subr.mxu0 %v148
    %298 = vmatpush1.msra.mxu0 %v147
    %299 = vmatprep.subr.mxu0 %v152
    %300 = vmatpush1.msra.mxu0 %v151
    %301 = vmatprep.subr.mxu0 %v156
    %302 = vmatpush1.msra.mxu0 %v155
    %303 = vmatprep.subr.mxu0 %v160
    %304 = vmatpush1.msra.mxu0 %v159
    %305 = vmatprep.subr.mxu0 %v164
    %306 = vmatpush1.msra.mxu0 %v163
    %307 = vmatprep.subr.mxu0 %v168
    %308 = vmatpush1.msra.mxu0 %v167
    %309 = vmatprep.subr.mxu0 %v172
    %310 = vmatpush1.msra.mxu0 %v171
    %311 = vmatprep.subr.mxu0 %v176
    %312 = vmatpush1.msra.mxu0 %v175
    %313 = vmatprep.subr.mxu0 %v180
    %314 = vmatpush1.msra.mxu0 %v179
    %315 = vmatprep.subr.mxu0 %v184
    %316 = vmatpush1.msra.mxu0 %v183
    %317 = vmatprep.subr.mxu0 %v188
    %318 = vmatpush1.msra.mxu0 %v187
    %319 = vmatprep.subr.mxu0 %v192
    %320 = vmatpush1.msra.mxu0 %v191
    %321 = vmatprep.subr.mxu0 %v196
    %322 = vmatpush1.msra.mxu0 %v195
    %323 = vmatprep.subr.mxu0 %v200
    %324 = vmatpush1.msra.mxu0 %v199
    %325 = vmatprep.subr.mxu0 %v204
    %326 = vmatpush1.msra.mxu0 %v203
    %327 = vmatprep.subr.mxu0 %v208
    %328 = vmatpush1.msra.mxu0 %v207
    %329 = vmatprep.subr.mxu0 %v212
    %330 = vmatpush1.msra.mxu0 %v211
    %331 = vmatprep.subr.mxu0 %v216
    %332 = vmatpush1.msra.mxu0 %v215
    %333 = vmatprep.subr.mxu0 %v220
    %334 = vmatpush1.msra.mxu0 %v219
    %335 = vmatprep.subr.mxu0 %v224
    %336 = vmatpush1.msra.mxu0 %v223
    %337 = vmatprep.subr.mxu0 %v228
    %338 = vmatpush1.msra.mxu0 %v227
    %339 = vmatprep.subr.mxu0 %v232
    %340 = vmatpush1.msra.mxu0 %v231
    %341 = vmatprep.subr.mxu0 %v236
    %342 = vmatpush1.msra.mxu0 %v235
    %343 = vmatprep.subr.mxu0 %v240
    %344 = vmatpush1.msra.mxu0 %v239
    %345 = vmatprep.subr.mxu0 %v244
    %346 = vmatpush1.msra.mxu0 %v243
    %347 = vmatprep.subr.mxu0 %v248
    %348 = vmatpush1.msra.mxu0 %v247
    %349 = vmatprep.subr.mxu0 %v252
    %350 = vmatpush1.msra.mxu0 %v251
    %351 = vmatprep.subr.mxu0 %v256
    %352 = vmatpush1.msra.mxu0 %v255
    %353 = vmatprep.subr.mxu0 %v260
    %354 = vmatpush1.msra.mxu0 %v259
    %355 = vmatprep.subr.mxu0 %v264
    %356 = vmatpush1.msra.mxu0 %v263
    %357 = vmatprep.subr.mxu0 %v268
    %358 = vmatpush1.msra.mxu0 %v267
    %359 = vmatprep.subr.mxu0 %v272
    %360 = vmatpush1.msra.mxu0 %v271
    %361 = vmatprep.mubr.f32.mxu0 %v146
    %362 = vmatmul.mubr.f32.gmra.mrb[0].mxu0 %v145
    %v363 = vpop.f32.mrb[0].mxu0
    %v364 = vadd.f32 %v280, %v363
    %v365 = vpop.f32.mrb[0].mxu0
    %v366 = vadd.f32 %v284, %v365
    %367 = vdwg.mxu0
    %368 = vmatprep.subr.mxu0 %v150
    %369 = vmatpush1.msra.mxu0 %v149
    %370 = vmatprep.subr.mxu0 %v154
    %371 = vmatpush1.msra.mxu0 %v153
    %372 = vmatprep.subr.mxu0 %v158
    %373 = vmatpush1.msra.mxu0 %v157
    %374 = vmatprep.subr.mxu0 %v162
    %375 = vmatpush1.msra.mxu0 %v161
    %376 = vmatprep.subr.mxu0 %v166
    %377 = vmatpush1.msra.mxu0 %v165
    %378 = vmatprep.subr.mxu0 %v170
    %379 = vmatpush1.msra.mxu0 %v169
    %380 = vmatprep.subr.mxu0 %v174
    %381 = vmatpush1.msra.mxu0 %v173
    %382 = vmatprep.subr.mxu0 %v178
    %383 = vmatpush1.msra.mxu0 %v177
    %384 = vmatprep.subr.mxu0 %v182
    %385 = vmatpush1.msra.mxu0 %v181
    %386 = vmatprep.subr.mxu0 %v186
    %387 = vmatpush1.msra.mxu0 %v185
    %388 = vmatprep.subr.mxu0 %v190
    %389 = vmatpush1.msra.mxu0 %v189
    %390 = vmatprep.subr.mxu0 %v194
    %391 = vmatpush1.msra.mxu0 %v193
    %392 = vmatprep.subr.mxu0 %v198
    %393 = vmatpush1.msra.mxu0 %v197
    %394 = vmatprep.subr.mxu0 %v202
    %395 = vmatpush1.msra.mxu0 %v201
    %396 = vmatprep.subr.mxu0 %v206
    %397 = vmatpush1.msra.mxu0 %v205
    %398 = vmatprep.subr.mxu0 %v210
    %399 = vmatpush1.msra.mxu0 %v209
    %400 = vmatprep.subr.mxu0 %v214
    %401 = vmatpush1.msra.mxu0 %v213
    %402 = vmatprep.subr.mxu0 %v218
    %403 = vmatpush1.msra.mxu0 %v217
    %404 = vmatprep.subr.mxu0 %v222
    %405 = vmatpush1.msra.mxu0 %v221
    %406 = vmatprep.subr.mxu0 %v226
    %407 = vmatpush1.msra.mxu0 %v225
    %408 = vmatprep.subr.mxu0 %v230
    %409 = vmatpush1.msra.mxu0 %v229
    %410 = vmatprep.subr.mxu0 %v234
    %411 = vmatpush1.msra.mxu0 %v233
    %412 = vmatprep.subr.mxu0 %v238
    %413 = vmatpush1.msra.mxu0 %v237
    %414 = vmatprep.subr.mxu0 %v242
    %415 = vmatpush1.msra.mxu0 %v241
    %416 = vmatprep.subr.mxu0 %v246
    %417 = vmatpush1.msra.mxu0 %v245
    %418 = vmatprep.subr.mxu0 %v250
    %419 = vmatpush1.msra.mxu0 %v249
    %420 = vmatprep.subr.mxu0 %v254
    %421 = vmatpush1.msra.mxu0 %v253
    %422 = vmatprep.subr.mxu0 %v258
    %423 = vmatpush1.msra.mxu0 %v257
    %424 = vmatprep.subr.mxu0 %v262
    %425 = vmatpush1.msra.mxu0 %v261
    %426 = vmatprep.subr.mxu0 %v266
    %427 = vmatpush1.msra.mxu0 %v265
    %428 = vmatprep.subr.mxu0 %v270
    %429 = vmatpush1.msra.mxu0 %v269
    %430 = vmatprep.subr.mxu0 %v274
    %431 = vmatpush1.msra.mxu0 %v273
    %432 = vmatprep.mubr.f32.mxu0 %v146
    %433 = vmatmul.mubr.f32.gmra.mrb[0].mxu0 %v145
    %v434 = vpop.f32.mrb[0].mxu0
    %v435 = vadd.f32 %v288, %v434
    %v436 = vpop.f32.mrb[0].mxu0
    %v437 = vadd.f32 %v292, %v436
    %438 = vdwg.mxu0
    %vm439 = vcmp.ge.f32.partialorder %v364, 0.0
    %vm440 = vcmp.ge.f32.partialorder %v366, 0.0
    %vm441 = vcmp.ge.f32.partialorder %v435, 0.0
    %vm442 = vcmp.ge.f32.partialorder %v437, 0.0
    %v443 = vmul.f32 %v364, 0.2
    %v444 = vmul.f32 %v366, 0.2
    %v445 = vmul.f32 %v435, 0.2
    %v446 = vmul.f32 %v437, 0.2
    %v447 = vsel %vm439, %v364, %v443
    %v448 = vsel %vm440, %v366, %v444
    %v449 = vsel %vm441, %v435, %v445
    %v450 = vsel %vm442, %v437, %v446
    %v451 = vld [vmem:[#allocation8] sm:$0xff]
    %v452 = vld [vmem:[#allocation8 + $0x8] sm:$0xff]
    %v453 = vld [vmem:[#allocation8 + $0x10] sm:$0xff]
    %v454 = vld [vmem:[#allocation8 + $0x18] sm:$0xff]
    %v455 = vld [vmem:[#allocation8 + $0x20] sm:$0xff]
    %v456 = vld [vmem:[#allocation8 + $0x28] sm:$0xff]
    %v457 = vld [vmem:[#allocation8 + $0x30] sm:$0xff]
    %v458 = vld [vmem:[#allocation8 + $0x38] sm:$0xff]
    %v459 = vld [vmem:[#allocation8 + $0x40] sm:$0xff]
    %v460 = vld [vmem:[#allocation8 + $0x48] sm:$0xff]
    %v461 = vld [vmem:[#allocation8 + $0x50] sm:$0xff]
    %v462 = vld [vmem:[#allocation8 + $0x58] sm:$0xff]
    %v463 = vld [vmem:[#allocation8 + $0x60] sm:$0xff]
    %v464 = vld [vmem:[#allocation8 + $0x68] sm:$0xff]
    %v465 = vld [vmem:[#allocation8 + $0x70] sm:$0xff]
    %v466 = vld [vmem:[#allocation8 + $0x78] sm:$0xff]
    %v467 = vld [vmem:[#allocation8 + $0x80] sm:$0xff]
    %v468 = vld [vmem:[#allocation8 + $0x88] sm:$0xff]
    %v469 = vld [vmem:[#allocation8 + $0x90] sm:$0xff]
    %v470 = vld [vmem:[#allocation8 + $0x98] sm:$0xff]
    %v471 = vld [vmem:[#allocation8 + $0xa0] sm:$0xff]
    %v472 = vld [vmem:[#allocation8 + $0xa8] sm:$0xff]
    %v473 = vld [vmem:[#allocation8 + $0xb0] sm:$0xff]
    %v474 = vld [vmem:[#allocation8 + $0xb8] sm:$0xff]
    %v475 = vld [vmem:[#allocation8 + $0xc0] sm:$0xff]
    %v476 = vld [vmem:[#allocation8 + $0xc8] sm:$0xff]
    %v477 = vld [vmem:[#allocation8 + $0xd0] sm:$0xff]
    %v478 = vld [vmem:[#allocation8 + $0xd8] sm:$0xff]
    %v479 = vld [vmem:[#allocation8 + $0xe0] sm:$0xff]
    %v480 = vld [vmem:[#allocation8 + $0xe8] sm:$0xff]
    %v481 = vld [vmem:[#allocation8 + $0xf0] sm:$0xff]
    %v482 = vld [vmem:[#allocation8 + $0xf8] sm:$0xff]
    %v483 = vld [vmem:[#allocation8 + $0x100] sm:$0xff]
    %v484 = vld [vmem:[#allocation8 + $0x108] sm:$0xff]
    %v485 = vld [vmem:[#allocation8 + $0x110] sm:$0xff]
    %v486 = vld [vmem:[#allocation8 + $0x118] sm:$0xff]
    %v487 = vld [vmem:[#allocation8 + $0x120] sm:$0xff]
    %v488 = vld [vmem:[#allocation8 + $0x128] sm:$0xff]
    %v489 = vld [vmem:[#allocation8 + $0x130] sm:$0xff]
    %v490 = vld [vmem:[#allocation8 + $0x138] sm:$0xff]
    %v491 = vld [vmem:[#allocation8 + $0x140] sm:$0xff]
    %v492 = vld [vmem:[#allocation8 + $0x148] sm:$0xff]
    %v493 = vld [vmem:[#allocation8 + $0x150] sm:$0xff]
    %v494 = vld [vmem:[#allocation8 + $0x158] sm:$0xff]
    %v495 = vld [vmem:[#allocation8 + $0x160] sm:$0xff]
    %v496 = vld [vmem:[#allocation8 + $0x168] sm:$0xff]
    %v497 = vld [vmem:[#allocation8 + $0x170] sm:$0xff]
    %v498 = vld [vmem:[#allocation8 + $0x178] sm:$0xff]
    %v499 = vld [vmem:[#allocation8 + $0x180] sm:$0xff]
    %v500 = vld [vmem:[#allocation8 + $0x188] sm:$0xff]
    %v501 = vld [vmem:[#allocation8 + $0x190] sm:$0xff]
    %v502 = vld [vmem:[#allocation8 + $0x198] sm:$0xff]
    %v503 = vld [vmem:[#allocation8 + $0x1a0] sm:$0xff]
    %v504 = vld [vmem:[#allocation8 + $0x1a8] sm:$0xff]
    %v505 = vld [vmem:[#allocation8 + $0x1b0] sm:$0xff]
    %v506 = vld [vmem:[#allocation8 + $0x1b8] sm:$0xff]
    %v507 = vld [vmem:[#allocation8 + $0x1c0] sm:$0xff]
    %v508 = vld [vmem:[#allocation8 + $0x1c8] sm:$0xff]
    %v509 = vld [vmem:[#allocation8 + $0x1d0] sm:$0xff]
    %v510 = vld [vmem:[#allocation8 + $0x1d8] sm:$0xff]
    %v511 = vld [vmem:[#allocation8 + $0x1e0] sm:$0xff]
    %v512 = vld [vmem:[#allocation8 + $0x1e8] sm:$0xff]
    %v513 = vld [vmem:[#allocation8 + $0x1f0] sm:$0xff]
    %v514 = vld [vmem:[#allocation8 + $0x1f8] sm:$0xff]
    %v515 = vld [vmem:[#allocation8 + $0x200] sm:$0xff]
    %v516 = vld [vmem:[#allocation8 + $0x208] sm:$0xff]
    %v517 = vld [vmem:[#allocation8 + $0x210] sm:$0xff]
    %v518 = vld [vmem:[#allocation8 + $0x218] sm:$0xff]
    %v519 = vld [vmem:[#allocation8 + $0x220] sm:$0xff]
    %v520 = vld [vmem:[#allocation8 + $0x228] sm:$0xff]
    %v521 = vld [vmem:[#allocation8 + $0x230] sm:$0xff]
    %v522 = vld [vmem:[#allocation8 + $0x238] sm:$0xff]
    %v523 = vld [vmem:[#allocation8 + $0x240] sm:$0xff]
    %v524 = vld [vmem:[#allocation8 + $0x248] sm:$0xff]
    %v525 = vld [vmem:[#allocation8 + $0x250] sm:$0xff]
    %v526 = vld [vmem:[#allocation8 + $0x258] sm:$0xff]
    %v527 = vld [vmem:[#allocation8 + $0x260] sm:$0xff]
    %v528 = vld [vmem:[#allocation8 + $0x268] sm:$0xff]
    %v529 = vld [vmem:[#allocation8 + $0x270] sm:$0xff]
    %v530 = vld [vmem:[#allocation8 + $0x278] sm:$0xff]
    %v531 = vld [vmem:[#allocation8 + $0x280] sm:$0xff]
    %v532 = vld [vmem:[#allocation8 + $0x288] sm:$0xff]
    %v533 = vld [vmem:[#allocation8 + $0x290] sm:$0xff]
    %v534 = vld [vmem:[#allocation8 + $0x298] sm:$0xff]
    %v535 = vld [vmem:[#allocation8 + $0x2a0] sm:$0xff]
    %v536 = vld [vmem:[#allocation8 + $0x2a8] sm:$0xff]
    %v537 = vld [vmem:[#allocation8 + $0x2b0] sm:$0xff]
    %v538 = vld [vmem:[#allocation8 + $0x2b8] sm:$0xff]
    %v539 = vld [vmem:[#allocation8 + $0x2c0] sm:$0xff]
    %v540 = vld [vmem:[#allocation8 + $0x2c8] sm:$0xff]
    %v541 = vld [vmem:[#allocation8 + $0x2d0] sm:$0xff]
    %v542 = vld [vmem:[#allocation8 + $0x2d8] sm:$0xff]
    %v543 = vld [vmem:[#allocation8 + $0x2e0] sm:$0xff]
    %v544 = vld [vmem:[#allocation8 + $0x2e8] sm:$0xff]
    %v545 = vld [vmem:[#allocation8 + $0x2f0] sm:$0xff]
    %v546 = vld [vmem:[#allocation8 + $0x2f8] sm:$0xff]
    %v547 = vld [vmem:[#allocation8 + $0x300] sm:$0xff]
    %v548 = vld [vmem:[#allocation8 + $0x308] sm:$0xff]
    %v549 = vld [vmem:[#allocation8 + $0x310] sm:$0xff]
    %v550 = vld [vmem:[#allocation8 + $0x318] sm:$0xff]
    %v551 = vld [vmem:[#allocation8 + $0x320] sm:$0xff]
    %v552 = vld [vmem:[#allocation8 + $0x328] sm:$0xff]
    %v553 = vld [vmem:[#allocation8 + $0x330] sm:$0xff]
    %v554 = vld [vmem:[#allocation8 + $0x338] sm:$0xff]
    %v555 = vld [vmem:[#allocation8 + $0x340] sm:$0xff]
    %v556 = vld [vmem:[#allocation8 + $0x348] sm:$0xff]
    %v557 = vld [vmem:[#allocation8 + $0x350] sm:$0xff]
    %v558 = vld [vmem:[#allocation8 + $0x358] sm:$0xff]
    %v559 = vld [vmem:[#allocation8 + $0x360] sm:$0xff]
    %v560 = vld [vmem:[#allocation8 + $0x368] sm:$0xff]
    %v561 = vld [vmem:[#allocation8 + $0x370] sm:$0xff]
    %v562 = vld [vmem:[#allocation8 + $0x378] sm:$0xff]
    %v563 = vld [vmem:[#allocation8 + $0x380] sm:$0xff]
    %v564 = vld [vmem:[#allocation8 + $0x388] sm:$0xff]
    %v565 = vld [vmem:[#allocation8 + $0x390] sm:$0xff]
    %v566 = vld [vmem:[#allocation8 + $0x398] sm:$0xff]
    %v567 = vld [vmem:[#allocation8 + $0x3a0] sm:$0xff]
    %v568 = vld [vmem:[#allocation8 + $0x3a8] sm:$0xff]
    %v569 = vld [vmem:[#allocation8 + $0x3b0] sm:$0xff]
    %v570 = vld [vmem:[#allocation8 + $0x3b8] sm:$0xff]
    %v571 = vld [vmem:[#allocation8 + $0x3c0] sm:$0xff]
    %v572 = vld [vmem:[#allocation8 + $0x3c8] sm:$0xff]
    %v573 = vld [vmem:[#allocation8 + $0x3d0] sm:$0xff]
    %v574 = vld [vmem:[#allocation8 + $0x3d8] sm:$0xff]
    %v575 = vld [vmem:[#allocation8 + $0x3e0] sm:$0xff]
    %v576 = vld [vmem:[#allocation8 + $0x3e8] sm:$0xff]
    %v577 = vld [vmem:[#allocation8 + $0x3f0] sm:$0xff]
    %v578 = vld [vmem:[#allocation8 + $0x3f8] sm:$0xff]
    %v579 = vld [vmem:[#allocation8 + $0x400] sm:$0xff]
    %v580 = vld [vmem:[#allocation8 + $0x408] sm:$0xff]
    %v581 = vld [vmem:[#allocation8 + $0x410] sm:$0xff]
    %v582 = vld [vmem:[#allocation8 + $0x418] sm:$0xff]
    %v583 = vld [vmem:[#allocation8 + $0x420] sm:$0xff]
    %v584 = vld [vmem:[#allocation8 + $0x428] sm:$0xff]
    %v585 = vld [vmem:[#allocation8 + $0x430] sm:$0xff]
    %v586 = vld [vmem:[#allocation8 + $0x438] sm:$0xff]
    %v587 = vld [vmem:[#allocation8 + $0x440] sm:$0xff]
    %v588 = vld [vmem:[#allocation8 + $0x448] sm:$0xff]
    %v589 = vld [vmem:[#allocation8 + $0x450] sm:$0xff]
    %v590 = vld [vmem:[#allocation8 + $0x458] sm:$0xff]
    %v591 = vld [vmem:[#allocation8 + $0x460] sm:$0xff]
    %v592 = vld [vmem:[#allocation8 + $0x468] sm:$0xff]
    %v593 = vld [vmem:[#allocation8 + $0x470] sm:$0xff]
    %v594 = vld [vmem:[#allocation8 + $0x478] sm:$0xff]
    %v595 = vld [vmem:[#allocation8 + $0x480] sm:$0xff]
    %v596 = vld [vmem:[#allocation8 + $0x488] sm:$0xff]
    %v597 = vld [vmem:[#allocation8 + $0x490] sm:$0xff]
    %v598 = vld [vmem:[#allocation8 + $0x498] sm:$0xff]
    %v599 = vld [vmem:[#allocation8 + $0x4a0] sm:$0xff]
    %v600 = vld [vmem:[#allocation8 + $0x4a8] sm:$0xff]
    %v601 = vld [vmem:[#allocation8 + $0x4b0] sm:$0xff]
    %v602 = vld [vmem:[#allocation8 + $0x4b8] sm:$0xff]
    %v603 = vld [vmem:[#allocation8 + $0x4c0] sm:$0xff]
    %v604 = vld [vmem:[#allocation8 + $0x4c8] sm:$0xff]
    %v605 = vld [vmem:[#allocation8 + $0x4d0] sm:$0xff]
    %v606 = vld [vmem:[#allocation8 + $0x4d8] sm:$0xff]
    %v607 = vld [vmem:[#allocation8 + $0x4e0] sm:$0xff]
    %v608 = vld [vmem:[#allocation8 + $0x4e8] sm:$0xff]
    %v609 = vld [vmem:[#allocation8 + $0x4f0] sm:$0xff]
    %v610 = vld [vmem:[#allocation8 + $0x4f8] sm:$0xff]
    %v611 = vld [vmem:[#allocation8 + $0x500] sm:$0xff]
    %v612 = vld [vmem:[#allocation8 + $0x508] sm:$0xff]
    %v613 = vld [vmem:[#allocation8 + $0x510] sm:$0xff]
    %v614 = vld [vmem:[#allocation8 + $0x518] sm:$0xff]
    %v615 = vld [vmem:[#allocation8 + $0x520] sm:$0xff]
    %v616 = vld [vmem:[#allocation8 + $0x528] sm:$0xff]
    %v617 = vld [vmem:[#allocation8 + $0x530] sm:$0xff]
    %v618 = vld [vmem:[#allocation8 + $0x538] sm:$0xff]
    %v619 = vld [vmem:[#allocation8 + $0x540] sm:$0xff]
    %v620 = vld [vmem:[#allocation8 + $0x548] sm:$0xff]
    %v621 = vld [vmem:[#allocation8 + $0x550] sm:$0xff]
    %v622 = vld [vmem:[#allocation8 + $0x558] sm:$0xff]
    %v623 = vld [vmem:[#allocation8 + $0x560] sm:$0xff]
    %v624 = vld [vmem:[#allocation8 + $0x568] sm:$0xff]
    %v625 = vld [vmem:[#allocation8 + $0x570] sm:$0xff]
    %v626 = vld [vmem:[#allocation8 + $0x578] sm:$0xff]
    %v627 = vld [vmem:[#allocation8 + $0x580] sm:$0xff]
    %v628 = vld [vmem:[#allocation8 + $0x588] sm:$0xff]
    %v629 = vld [vmem:[#allocation8 + $0x590] sm:$0xff]
    %v630 = vld [vmem:[#allocation8 + $0x598] sm:$0xff]
    %v631 = vld [vmem:[#allocation8 + $0x5a0] sm:$0xff]
    %v632 = vld [vmem:[#allocation8 + $0x5a8] sm:$0xff]
    %v633 = vld [vmem:[#allocation8 + $0x5b0] sm:$0xff]
    %v634 = vld [vmem:[#allocation8 + $0x5b8] sm:$0xff]
    %v635 = vld [vmem:[#allocation8 + $0x5c0] sm:$0xff]
    %v636 = vld [vmem:[#allocation8 + $0x5c8] sm:$0xff]
    %v637 = vld [vmem:[#allocation8 + $0x5d0] sm:$0xff]
    %v638 = vld [vmem:[#allocation8 + $0x5d8] sm:$0xff]
    %v639 = vld [vmem:[#allocation8 + $0x5e0] sm:$0xff]
    %v640 = vld [vmem:[#allocation8 + $0x5e8] sm:$0xff]
    %v641 = vld [vmem:[#allocation8 + $0x5f0] sm:$0xff]
    %v642 = vld [vmem:[#allocation8 + $0x5f8] sm:$0xff]
    %v643 = vld [vmem:[#allocation8 + $0x600] sm:$0xff]
    %v644 = vld [vmem:[#allocation8 + $0x608] sm:$0xff]
    %v645 = vld [vmem:[#allocation8 + $0x610] sm:$0xff]
    %v646 = vld [vmem:[#allocation8 + $0x618] sm:$0xff]
    %v647 = vld [vmem:[#allocation8 + $0x620] sm:$0xff]
    %v648 = vld [vmem:[#allocation8 + $0x628] sm:$0xff]
    %v649 = vld [vmem:[#allocation8 + $0x630] sm:$0xff]
    %v650 = vld [vmem:[#allocation8 + $0x638] sm:$0xff]
    %v651 = vld [vmem:[#allocation8 + $0x640] sm:$0xff]
    %v652 = vld [vmem:[#allocation8 + $0x648] sm:$0xff]
    %v653 = vld [vmem:[#allocation8 + $0x650] sm:$0xff]
    %v654 = vld [vmem:[#allocation8 + $0x658] sm:$0xff]
    %v655 = vld [vmem:[#allocation8 + $0x660] sm:$0xff]
    %v656 = vld [vmem:[#allocation8 + $0x668] sm:$0xff]
    %v657 = vld [vmem:[#allocation8 + $0x670] sm:$0xff]
    %v658 = vld [vmem:[#allocation8 + $0x678] sm:$0xff]
    %v659 = vld [vmem:[#allocation8 + $0x680] sm:$0xff]
    %v660 = vld [vmem:[#allocation8 + $0x688] sm:$0xff]
    %v661 = vld [vmem:[#allocation8 + $0x690] sm:$0xff]
    %v662 = vld [vmem:[#allocation8 + $0x698] sm:$0xff]
    %v663 = vld [vmem:[#allocation8 + $0x6a0] sm:$0xff]
    %v664 = vld [vmem:[#allocation8 + $0x6a8] sm:$0xff]
    %v665 = vld [vmem:[#allocation8 + $0x6b0] sm:$0xff]
    %v666 = vld [vmem:[#allocation8 + $0x6b8] sm:$0xff]
    %v667 = vld [vmem:[#allocation8 + $0x6c0] sm:$0xff]
    %v668 = vld [vmem:[#allocation8 + $0x6c8] sm:$0xff]
    %v669 = vld [vmem:[#allocation8 + $0x6d0] sm:$0xff]
    %v670 = vld [vmem:[#allocation8 + $0x6d8] sm:$0xff]
    %v671 = vld [vmem:[#allocation8 + $0x6e0] sm:$0xff]
    %v672 = vld [vmem:[#allocation8 + $0x6e8] sm:$0xff]
    %v673 = vld [vmem:[#allocation8 + $0x6f0] sm:$0xff]
    %v674 = vld [vmem:[#allocation8 + $0x6f8] sm:$0xff]
    %v675 = vld [vmem:[#allocation8 + $0x700] sm:$0xff]
    %v676 = vld [vmem:[#allocation8 + $0x708] sm:$0xff]
    %v677 = vld [vmem:[#allocation8 + $0x710] sm:$0xff]
    %v678 = vld [vmem:[#allocation8 + $0x718] sm:$0xff]
    %v679 = vld [vmem:[#allocation8 + $0x720] sm:$0xff]
    %v680 = vld [vmem:[#allocation8 + $0x728] sm:$0xff]
    %v681 = vld [vmem:[#allocation8 + $0x730] sm:$0xff]
    %v682 = vld [vmem:[#allocation8 + $0x738] sm:$0xff]
    %v683 = vld [vmem:[#allocation8 + $0x740] sm:$0xff]
    %v684 = vld [vmem:[#allocation8 + $0x748] sm:$0xff]
    %v685 = vld [vmem:[#allocation8 + $0x750] sm:$0xff]
    %v686 = vld [vmem:[#allocation8 + $0x758] sm:$0xff]
    %v687 = vld [vmem:[#allocation8 + $0x760] sm:$0xff]
    %v688 = vld [vmem:[#allocation8 + $0x768] sm:$0xff]
    %v689 = vld [vmem:[#allocation8 + $0x770] sm:$0xff]
    %v690 = vld [vmem:[#allocation8 + $0x778] sm:$0xff]
    %v691 = vld [vmem:[#allocation8 + $0x780] sm:$0xff]
    %v692 = vld [vmem:[#allocation8 + $0x788] sm:$0xff]
    %v693 = vld [vmem:[#allocation8 + $0x790] sm:$0xff]
    %v694 = vld [vmem:[#allocation8 + $0x798] sm:$0xff]
    %v695 = vld [vmem:[#allocation8 + $0x7a0] sm:$0xff]
    %v696 = vld [vmem:[#allocation8 + $0x7a8] sm:$0xff]
    %v697 = vld [vmem:[#allocation8 + $0x7b0] sm:$0xff]
    %v698 = vld [vmem:[#allocation8 + $0x7b8] sm:$0xff]
    %v699 = vld [vmem:[#allocation8 + $0x7c0] sm:$0xff]
    %v700 = vld [vmem:[#allocation8 + $0x7c8] sm:$0xff]
    %v701 = vld [vmem:[#allocation8 + $0x7d0] sm:$0xff]
    %v702 = vld [vmem:[#allocation8 + $0x7d8] sm:$0xff]
    %v703 = vld [vmem:[#allocation8 + $0x7e0] sm:$0xff]
    %v704 = vld [vmem:[#allocation8 + $0x7e8] sm:$0xff]
    %v705 = vld [vmem:[#allocation8 + $0x7f0] sm:$0xff]
    %v706 = vld [vmem:[#allocation8 + $0x7f8] sm:$0xff]
    %v707 = vld [vmem:[#allocation8 + $0x800] sm:$0xff]
    %v708 = vld [vmem:[#allocation8 + $0x808] sm:$0xff]
    %v709 = vld [vmem:[#allocation8 + $0x810] sm:$0xff]
    %v710 = vld [vmem:[#allocation8 + $0x818] sm:$0xff]
    %v711 = vld [vmem:[#allocation8 + $0x820] sm:$0xff]
    %v712 = vld [vmem:[#allocation8 + $0x828] sm:$0xff]
    %v713 = vld [vmem:[#allocation8 + $0x830] sm:$0xff]
    %v714 = vld [vmem:[#allocation8 + $0x838] sm:$0xff]
    %v715 = vld [vmem:[#allocation8 + $0x840] sm:$0xff]
    %v716 = vld [vmem:[#allocation8 + $0x848] sm:$0xff]
    %v717 = vld [vmem:[#allocation8 + $0x850] sm:$0xff]
    %v718 = vld [vmem:[#allocation8 + $0x858] sm:$0xff]
    %v719 = vld [vmem:[#allocation8 + $0x860] sm:$0xff]
    %v720 = vld [vmem:[#allocation8 + $0x868] sm:$0xff]
    %v721 = vld [vmem:[#allocation8 + $0x870] sm:$0xff]
    %v722 = vld [vmem:[#allocation8 + $0x878] sm:$0xff]
    %v723 = vld [vmem:[#allocation8 + $0x880] sm:$0xff]
    %v724 = vld [vmem:[#allocation8 + $0x888] sm:$0xff]
    %v725 = vld [vmem:[#allocation8 + $0x890] sm:$0xff]
    %v726 = vld [vmem:[#allocation8 + $0x898] sm:$0xff]
    %v727 = vld [vmem:[#allocation8 + $0x8a0] sm:$0xff]
    %v728 = vld [vmem:[#allocation8 + $0x8a8] sm:$0xff]
    %v729 = vld [vmem:[#allocation8 + $0x8b0] sm:$0xff]
    %v730 = vld [vmem:[#allocation8 + $0x8b8] sm:$0xff]
    %v731 = vld [vmem:[#allocation8 + $0x8c0] sm:$0xff]
    %v732 = vld [vmem:[#allocation8 + $0x8c8] sm:$0xff]
    %v733 = vld [vmem:[#allocation8 + $0x8d0] sm:$0xff]
    %v734 = vld [vmem:[#allocation8 + $0x8d8] sm:$0xff]
    %v735 = vld [vmem:[#allocation8 + $0x8e0] sm:$0xff]
    %v736 = vld [vmem:[#allocation8 + $0x8e8] sm:$0xff]
    %v737 = vld [vmem:[#allocation8 + $0x8f0] sm:$0xff]
    %v738 = vld [vmem:[#allocation8 + $0x8f8] sm:$0xff]
    %v739 = vld [vmem:[#allocation8 + $0x900] sm:$0xff]
    %v740 = vld [vmem:[#allocation8 + $0x908] sm:$0xff]
    %v741 = vld [vmem:[#allocation8 + $0x910] sm:$0xff]
    %v742 = vld [vmem:[#allocation8 + $0x918] sm:$0xff]
    %v743 = vld [vmem:[#allocation8 + $0x920] sm:$0xff]
    %v744 = vld [vmem:[#allocation8 + $0x928] sm:$0xff]
    %v745 = vld [vmem:[#allocation8 + $0x930] sm:$0xff]
    %v746 = vld [vmem:[#allocation8 + $0x938] sm:$0xff]
    %v747 = vld [vmem:[#allocation8 + $0x940] sm:$0xff]
    %v748 = vld [vmem:[#allocation8 + $0x948] sm:$0xff]
    %v749 = vld [vmem:[#allocation8 + $0x950] sm:$0xff]
    %v750 = vld [vmem:[#allocation8 + $0x958] sm:$0xff]
    %v751 = vld [vmem:[#allocation8 + $0x960] sm:$0xff]
    %v752 = vld [vmem:[#allocation8 + $0x968] sm:$0xff]
    %v753 = vld [vmem:[#allocation8 + $0x970] sm:$0xff]
    %v754 = vld [vmem:[#allocation8 + $0x978] sm:$0xff]
    %v755 = vld [vmem:[#allocation8 + $0x980] sm:$0xff]
    %v756 = vld [vmem:[#allocation8 + $0x988] sm:$0xff]
    %v757 = vld [vmem:[#allocation8 + $0x990] sm:$0xff]
    %v758 = vld [vmem:[#allocation8 + $0x998] sm:$0xff]
    %v759 = vld [vmem:[#allocation8 + $0x9a0] sm:$0xff]
    %v760 = vld [vmem:[#allocation8 + $0x9a8] sm:$0xff]
    %v761 = vld [vmem:[#allocation8 + $0x9b0] sm:$0xff]
    %v762 = vld [vmem:[#allocation8 + $0x9b8] sm:$0xff]
    %v763 = vld [vmem:[#allocation8 + $0x9c0] sm:$0xff]
    %v764 = vld [vmem:[#allocation8 + $0x9c8] sm:$0xff]
    %v765 = vld [vmem:[#allocation8 + $0x9d0] sm:$0xff]
    %v766 = vld [vmem:[#allocation8 + $0x9d8] sm:$0xff]
    %v767 = vld [vmem:[#allocation8 + $0x9e0] sm:$0xff]
    %v768 = vld [vmem:[#allocation8 + $0x9e8] sm:$0xff]
    %v769 = vld [vmem:[#allocation8 + $0x9f0] sm:$0xff]
    %v770 = vld [vmem:[#allocation8 + $0x9f8] sm:$0xff]
    %v771 = vld [vmem:[#allocation8 + $0xa00] sm:$0xff]
    %v772 = vld [vmem:[#allocation8 + $0xa08] sm:$0xff]
    %v773 = vld [vmem:[#allocation8 + $0xa10] sm:$0xff]
    %v774 = vld [vmem:[#allocation8 + $0xa18] sm:$0xff]
    %v775 = vld [vmem:[#allocation8 + $0xa20] sm:$0xff]
    %v776 = vld [vmem:[#allocation8 + $0xa28] sm:$0xff]
    %v777 = vld [vmem:[#allocation8 + $0xa30] sm:$0xff]
    %v778 = vld [vmem:[#allocation8 + $0xa38] sm:$0xff]
    %v779 = vld [vmem:[#allocation8 + $0xa40] sm:$0xff]
    %v780 = vld [vmem:[#allocation8 + $0xa48] sm:$0xff]
    %v781 = vld [vmem:[#allocation8 + $0xa50] sm:$0xff]
    %v782 = vld [vmem:[#allocation8 + $0xa58] sm:$0xff]
    %v783 = vld [vmem:[#allocation8 + $0xa60] sm:$0xff]
    %v784 = vld [vmem:[#allocation8 + $0xa68] sm:$0xff]
    %v785 = vld [vmem:[#allocation8 + $0xa70] sm:$0xff]
    %v786 = vld [vmem:[#allocation8 + $0xa78] sm:$0xff]
    %v787 = vld [vmem:[#allocation8 + $0xa80] sm:$0xff]
    %v788 = vld [vmem:[#allocation8 + $0xa88] sm:$0xff]
    %v789 = vld [vmem:[#allocation8 + $0xa90] sm:$0xff]
    %v790 = vld [vmem:[#allocation8 + $0xa98] sm:$0xff]
    %v791 = vld [vmem:[#allocation8 + $0xaa0] sm:$0xff]
    %v792 = vld [vmem:[#allocation8 + $0xaa8] sm:$0xff]
    %v793 = vld [vmem:[#allocation8 + $0xab0] sm:$0xff]
    %v794 = vld [vmem:[#allocation8 + $0xab8] sm:$0xff]
    %v795 = vld [vmem:[#allocation8 + $0xac0] sm:$0xff]
    %v796 = vld [vmem:[#allocation8 + $0xac8] sm:$0xff]
    %v797 = vld [vmem:[#allocation8 + $0xad0] sm:$0xff]
    %v798 = vld [vmem:[#allocation8 + $0xad8] sm:$0xff]
    %v799 = vld [vmem:[#allocation8 + $0xae0] sm:$0xff]
    %v800 = vld [vmem:[#allocation8 + $0xae8] sm:$0xff]
    %v801 = vld [vmem:[#allocation8 + $0xaf0] sm:$0xff]
    %v802 = vld [vmem:[#allocation8 + $0xaf8] sm:$0xff]
    %v803 = vld [vmem:[#allocation8 + $0xb00] sm:$0xff]
    %v804 = vld [vmem:[#allocation8 + $0xb08] sm:$0xff]
    %v805 = vld [vmem:[#allocation8 + $0xb10] sm:$0xff]
    %v806 = vld [vmem:[#allocation8 + $0xb18] sm:$0xff]
    %v807 = vld [vmem:[#allocation8 + $0xb20] sm:$0xff]
    %v808 = vld [vmem:[#allocation8 + $0xb28] sm:$0xff]
    %v809 = vld [vmem:[#allocation8 + $0xb30] sm:$0xff]
    %v810 = vld [vmem:[#allocation8 + $0xb38] sm:$0xff]
    %v811 = vld [vmem:[#allocation8 + $0xb40] sm:$0xff]
    %v812 = vld [vmem:[#allocation8 + $0xb48] sm:$0xff]
    %v813 = vld [vmem:[#allocation8 + $0xb50] sm:$0xff]
    %v814 = vld [vmem:[#allocation8 + $0xb58] sm:$0xff]
    %v815 = vld [vmem:[#allocation8 + $0xb60] sm:$0xff]
    %v816 = vld [vmem:[#allocation8 + $0xb68] sm:$0xff]
    %v817 = vld [vmem:[#allocation8 + $0xb70] sm:$0xff]
    %v818 = vld [vmem:[#allocation8 + $0xb78] sm:$0xff]
    %v819 = vld [vmem:[#allocation8 + $0xb80] sm:$0xff]
    %v820 = vld [vmem:[#allocation8 + $0xb88] sm:$0xff]
    %v821 = vld [vmem:[#allocation8 + $0xb90] sm:$0xff]
    %v822 = vld [vmem:[#allocation8 + $0xb98] sm:$0xff]
    %v823 = vld [vmem:[#allocation8 + $0xba0] sm:$0xff]
    %v824 = vld [vmem:[#allocation8 + $0xba8] sm:$0xff]
    %v825 = vld [vmem:[#allocation8 + $0xbb0] sm:$0xff]
    %v826 = vld [vmem:[#allocation8 + $0xbb8] sm:$0xff]
    %v827 = vld [vmem:[#allocation8 + $0xbc0] sm:$0xff]
    %v828 = vld [vmem:[#allocation8 + $0xbc8] sm:$0xff]
    %v829 = vld [vmem:[#allocation8 + $0xbd0] sm:$0xff]
    %v830 = vld [vmem:[#allocation8 + $0xbd8] sm:$0xff]
    %v831 = vld [vmem:[#allocation8 + $0xbe0] sm:$0xff]
    %v832 = vld [vmem:[#allocation8 + $0xbe8] sm:$0xff]
    %v833 = vld [vmem:[#allocation8 + $0xbf0] sm:$0xff]
    %v834 = vld [vmem:[#allocation8 + $0xbf8] sm:$0xff]
    %v835 = vld [vmem:[#allocation8 + $0xc00] sm:$0xff]
    %v836 = vld [vmem:[#allocation8 + $0xc08] sm:$0xff]
    %v837 = vld [vmem:[#allocation8 + $0xc10] sm:$0xff]
    %v838 = vld [vmem:[#allocation8 + $0xc18] sm:$0xff]
    %v839 = vld [vmem:[#allocation8 + $0xc20] sm:$0xff]
    %v840 = vld [vmem:[#allocation8 + $0xc28] sm:$0xff]
    %v841 = vld [vmem:[#allocation8 + $0xc30] sm:$0xff]
    %v842 = vld [vmem:[#allocation8 + $0xc38] sm:$0xff]
    %v843 = vld [vmem:[#allocation8 + $0xc40] sm:$0xff]
    %v844 = vld [vmem:[#allocation8 + $0xc48] sm:$0xff]
    %v845 = vld [vmem:[#allocation8 + $0xc50] sm:$0xff]
    %v846 = vld [vmem:[#allocation8 + $0xc58] sm:$0xff]
    %v847 = vld [vmem:[#allocation8 + $0xc60] sm:$0xff]
    %v848 = vld [vmem:[#allocation8 + $0xc68] sm:$0xff]
    %v849 = vld [vmem:[#allocation8 + $0xc70] sm:$0xff]
    %v850 = vld [vmem:[#allocation8 + $0xc78] sm:$0xff]
    %v851 = vld [vmem:[#allocation8 + $0xc80] sm:$0xff]
    %v852 = vld [vmem:[#allocation8 + $0xc88] sm:$0xff]
    %v853 = vld [vmem:[#allocation8 + $0xc90] sm:$0xff]
    %v854 = vld [vmem:[#allocation8 + $0xc98] sm:$0xff]
    %v855 = vld [vmem:[#allocation8 + $0xca0] sm:$0xff]
    %v856 = vld [vmem:[#allocation8 + $0xca8] sm:$0xff]
    %v857 = vld [vmem:[#allocation8 + $0xcb0] sm:$0xff]
    %v858 = vld [vmem:[#allocation8 + $0xcb8] sm:$0xff]
    %v859 = vld [vmem:[#allocation8 + $0xcc0] sm:$0xff]
    %v860 = vld [vmem:[#allocation8 + $0xcc8] sm:$0xff]
    %v861 = vld [vmem:[#allocation8 + $0xcd0] sm:$0xff]
    %v862 = vld [vmem:[#allocation8 + $0xcd8] sm:$0xff]
    %v863 = vld [vmem:[#allocation8 + $0xce0] sm:$0xff]
    %v864 = vld [vmem:[#allocation8 + $0xce8] sm:$0xff]
    %v865 = vld [vmem:[#allocation8 + $0xcf0] sm:$0xff]
    %v866 = vld [vmem:[#allocation8 + $0xcf8] sm:$0xff]
    %v867 = vld [vmem:[#allocation8 + $0xd00] sm:$0xff]
    %v868 = vld [vmem:[#allocation8 + $0xd08] sm:$0xff]
    %v869 = vld [vmem:[#allocation8 + $0xd10] sm:$0xff]
    %v870 = vld [vmem:[#allocation8 + $0xd18] sm:$0xff]
    %v871 = vld [vmem:[#allocation8 + $0xd20] sm:$0xff]
    %v872 = vld [vmem:[#allocation8 + $0xd28] sm:$0xff]
    %v873 = vld [vmem:[#allocation8 + $0xd30] sm:$0xff]
    %v874 = vld [vmem:[#allocation8 + $0xd38] sm:$0xff]
    %v875 = vld [vmem:[#allocation8 + $0xd40] sm:$0xff]
    %v876 = vld [vmem:[#allocation8 + $0xd48] sm:$0xff]
    %v877 = vld [vmem:[#allocation8 + $0xd50] sm:$0xff]
    %v878 = vld [vmem:[#allocation8 + $0xd58] sm:$0xff]
    %v879 = vld [vmem:[#allocation8 + $0xd60] sm:$0xff]
    %v880 = vld [vmem:[#allocation8 + $0xd68] sm:$0xff]
    %v881 = vld [vmem:[#allocation8 + $0xd70] sm:$0xff]
    %v882 = vld [vmem:[#allocation8 + $0xd78] sm:$0xff]
    %v883 = vld [vmem:[#allocation8 + $0xd80] sm:$0xff]
    %v884 = vld [vmem:[#allocation8 + $0xd88] sm:$0xff]
    %v885 = vld [vmem:[#allocation8 + $0xd90] sm:$0xff]
    %v886 = vld [vmem:[#allocation8 + $0xd98] sm:$0xff]
    %v887 = vld [vmem:[#allocation8 + $0xda0] sm:$0xff]
    %v888 = vld [vmem:[#allocation8 + $0xda8] sm:$0xff]
    %v889 = vld [vmem:[#allocation8 + $0xdb0] sm:$0xff]
    %v890 = vld [vmem:[#allocation8 + $0xdb8] sm:$0xff]
    %v891 = vld [vmem:[#allocation8 + $0xdc0] sm:$0xff]
    %v892 = vld [vmem:[#allocation8 + $0xdc8] sm:$0xff]
    %v893 = vld [vmem:[#allocation8 + $0xdd0] sm:$0xff]
    %v894 = vld [vmem:[#allocation8 + $0xdd8] sm:$0xff]
    %v895 = vld [vmem:[#allocation8 + $0xde0] sm:$0xff]
    %v896 = vld [vmem:[#allocation8 + $0xde8] sm:$0xff]
    %v897 = vld [vmem:[#allocation8 + $0xdf0] sm:$0xff]
    %v898 = vld [vmem:[#allocation8 + $0xdf8] sm:$0xff]
    %v899 = vld [vmem:[#allocation8 + $0xe00] sm:$0xff]
    %v900 = vld [vmem:[#allocation8 + $0xe08] sm:$0xff]
    %v901 = vld [vmem:[#allocation8 + $0xe10] sm:$0xff]
    %v902 = vld [vmem:[#allocation8 + $0xe18] sm:$0xff]
    %v903 = vld [vmem:[#allocation8 + $0xe20] sm:$0xff]
    %v904 = vld [vmem:[#allocation8 + $0xe28] sm:$0xff]
    %v905 = vld [vmem:[#allocation8 + $0xe30] sm:$0xff]
    %v906 = vld [vmem:[#allocation8 + $0xe38] sm:$0xff]
    %v907 = vld [vmem:[#allocation8 + $0xe40] sm:$0xff]
    %v908 = vld [vmem:[#allocation8 + $0xe48] sm:$0xff]
    %v909 = vld [vmem:[#allocation8 + $0xe50] sm:$0xff]
    %v910 = vld [vmem:[#allocation8 + $0xe58] sm:$0xff]
    %v911 = vld [vmem:[#allocation8 + $0xe60] sm:$0xff]
    %v912 = vld [vmem:[#allocation8 + $0xe68] sm:$0xff]
    %v913 = vld [vmem:[#allocation8 + $0xe70] sm:$0xff]
    %v914 = vld [vmem:[#allocation8 + $0xe78] sm:$0xff]
    %v915 = vld [vmem:[#allocation8 + $0xe80] sm:$0xff]
    %v916 = vld [vmem:[#allocation8 + $0xe88] sm:$0xff]
    %v917 = vld [vmem:[#allocation8 + $0xe90] sm:$0xff]
    %v918 = vld [vmem:[#allocation8 + $0xe98] sm:$0xff]
    %v919 = vld [vmem:[#allocation8 + $0xea0] sm:$0xff]
    %v920 = vld [vmem:[#allocation8 + $0xea8] sm:$0xff]
    %v921 = vld [vmem:[#allocation8 + $0xeb0] sm:$0xff]
    %v922 = vld [vmem:[#allocation8 + $0xeb8] sm:$0xff]
    %v923 = vld [vmem:[#allocation8 + $0xec0] sm:$0xff]
    %v924 = vld [vmem:[#allocation8 + $0xec8] sm:$0xff]
    %v925 = vld [vmem:[#allocation8 + $0xed0] sm:$0xff]
    %v926 = vld [vmem:[#allocation8 + $0xed8] sm:$0xff]
    %v927 = vld [vmem:[#allocation8 + $0xee0] sm:$0xff]
    %v928 = vld [vmem:[#allocation8 + $0xee8] sm:$0xff]
    %v929 = vld [vmem:[#allocation8 + $0xef0] sm:$0xff]
    %v930 = vld [vmem:[#allocation8 + $0xef8] sm:$0xff]
    %v931 = vld [vmem:[#allocation8 + $0xf00] sm:$0xff]
    %v932 = vld [vmem:[#allocation8 + $0xf08] sm:$0xff]
    %v933 = vld [vmem:[#allocation8 + $0xf10] sm:$0xff]
    %v934 = vld [vmem:[#allocation8 + $0xf18] sm:$0xff]
    %v935 = vld [vmem:[#allocation8 + $0xf20] sm:$0xff]
    %v936 = vld [vmem:[#allocation8 + $0xf28] sm:$0xff]
    %v937 = vld [vmem:[#allocation8 + $0xf30] sm:$0xff]
    %v938 = vld [vmem:[#allocation8 + $0xf38] sm:$0xff]
    %v939 = vld [vmem:[#allocation8 + $0xf40] sm:$0xff]
    %v940 = vld [vmem:[#allocation8 + $0xf48] sm:$0xff]
    %v941 = vld [vmem:[#allocation8 + $0xf50] sm:$0xff]
    %v942 = vld [vmem:[#allocation8 + $0xf58] sm:$0xff]
    %v943 = vld [vmem:[#allocation8 + $0xf60] sm:$0xff]
    %v944 = vld [vmem:[#allocation8 + $0xf68] sm:$0xff]
    %v945 = vld [vmem:[#allocation8 + $0xf70] sm:$0xff]
    %v946 = vld [vmem:[#allocation8 + $0xf78] sm:$0xff]
    %v947 = vld [vmem:[#allocation8 + $0xf80] sm:$0xff]
    %v948 = vld [vmem:[#allocation8 + $0xf88] sm:$0xff]
    %v949 = vld [vmem:[#allocation8 + $0xf90] sm:$0xff]
    %v950 = vld [vmem:[#allocation8 + $0xf98] sm:$0xff]
    %v951 = vld [vmem:[#allocation8 + $0xfa0] sm:$0xff]
    %v952 = vld [vmem:[#allocation8 + $0xfa8] sm:$0xff]
    %v953 = vld [vmem:[#allocation8 + $0xfb0] sm:$0xff]
    %v954 = vld [vmem:[#allocation8 + $0xfb8] sm:$0xff]
    %v955 = vld [vmem:[#allocation8 + $0xfc0] sm:$0xff]
    %v956 = vld [vmem:[#allocation8 + $0xfc8] sm:$0xff]
    %v957 = vld [vmem:[#allocation8 + $0xfd0] sm:$0xff]
    %v958 = vld [vmem:[#allocation8 + $0xfd8] sm:$0xff]
    %v959 = vld [vmem:[#allocation8 + $0xfe0] sm:$0xff]
    %v960 = vld [vmem:[#allocation8 + $0xfe8] sm:$0xff]
    %v961 = vld [vmem:[#allocation8 + $0xff0] sm:$0xff]
    %v962 = vld [vmem:[#allocation8 + $0xff8] sm:$0xff]
    %v963 = vld [vmem:[#allocation10] sm:$0xff]
    %v965 = vlaneseq
    %v966 = vshrl.u32 %v965, 7
    %v967 = vsub.s32 0, %v966
    %v968 = vrot.slane %v963, %v967
    %v969 = vlaneseq
    %v970 = vshrl.u32 %v969, 7
    %v971 = vsub.s32 1, %v970
    %v972 = vrot.slane %v963, %v971
    %v973 = vlaneseq
    %v974 = vshrl.u32 %v973, 7
    %v975 = vsub.s32 2, %v974
    %v976 = vrot.slane %v963, %v975
    %v977 = vlaneseq
    %v978 = vshrl.u32 %v977, 7
    %v979 = vsub.s32 3, %v978
    %v980 = vrot.slane %v963, %v979
    %v981 = vlaneseq
    %v982 = vshrl.u32 %v981, 7
    %v983 = vsub.s32 4, %v982
    %v984 = vrot.slane %v963, %v983
    %v985 = vlaneseq
    %v986 = vshrl.u32 %v985, 7
    %v987 = vsub.s32 5, %v986
    %v988 = vrot.slane %v963, %v987
    %v989 = vlaneseq
    %v990 = vshrl.u32 %v989, 7
    %v991 = vsub.s32 6, %v990
    %v992 = vrot.slane %v963, %v991
    %v993 = vlaneseq
    %v994 = vshrl.u32 %v993, 7
    %v995 = vsub.s32 7, %v994
    %v996 = vrot.slane %v963, %v995
    %1005 = vmatprep.subr.mxu0 %v452
    %1006 = vmatpush1.msra.mxu0 %v451
    %1007 = vmatprep.subr.mxu0 %v460
    %1008 = vmatpush1.msra.mxu0 %v459
    %1009 = vmatprep.subr.mxu0 %v468
    %1010 = vmatpush1.msra.mxu0 %v467
    %1011 = vmatprep.subr.mxu0 %v476
    %1012 = vmatpush1.msra.mxu0 %v475
    %1013 = vmatprep.subr.mxu0 %v484
    %1014 = vmatpush1.msra.mxu0 %v483
    %1015 = vmatprep.subr.mxu0 %v492
    %1016 = vmatpush1.msra.mxu0 %v491
    %1017 = vmatprep.subr.mxu0 %v500
    %1018 = vmatpush1.msra.mxu0 %v499
    %1019 = vmatprep.subr.mxu0 %v508
    %1020 = vmatpush1.msra.mxu0 %v507
    %1021 = vmatprep.subr.mxu0 %v516
    %1022 = vmatpush1.msra.mxu0 %v515
    %1023 = vmatprep.subr.mxu0 %v524
    %1024 = vmatpush1.msra.mxu0 %v523
    %1025 = vmatprep.subr.mxu0 %v532
    %1026 = vmatpush1.msra.mxu0 %v531
    %1027 = vmatprep.subr.mxu0 %v540
    %1028 = vmatpush1.msra.mxu0 %v539
    %1029 = vmatprep.subr.mxu0 %v548
    %1030 = vmatpush1.msra.mxu0 %v547
    %1031 = vmatprep.subr.mxu0 %v556
    %1032 = vmatpush1.msra.mxu0 %v555
    %1033 = vmatprep.subr.mxu0 %v564
    %1034 = vmatpush1.msra.mxu0 %v563
    %1035 = vmatprep.subr.mxu0 %v572
    %1036 = vmatpush1.msra.mxu0 %v571
    %1037 = vmatprep.subr.mxu0 %v580
    %1038 = vmatpush1.msra.mxu0 %v579
    %1039 = vmatprep.subr.mxu0 %v588
    %1040 = vmatpush1.msra.mxu0 %v587
    %1041 = vmatprep.subr.mxu0 %v596
    %1042 = vmatpush1.msra.mxu0 %v595
    %1043 = vmatprep.subr.mxu0 %v604
    %1044 = vmatpush1.msra.mxu0 %v603
    %1045 = vmatprep.subr.mxu0 %v612
    %1046 = vmatpush1.msra.mxu0 %v611
    %1047 = vmatprep.subr.mxu0 %v620
    %1048 = vmatpush1.msra.mxu0 %v619
    %1049 = vmatprep.subr.mxu0 %v628
    %1050 = vmatpush1.msra.mxu0 %v627
    %1051 = vmatprep.subr.mxu0 %v636
    %1052 = vmatpush1.msra.mxu0 %v635
    %1053 = vmatprep.subr.mxu0 %v644
    %1054 = vmatpush1.msra.mxu0 %v643
    %1055 = vmatprep.subr.mxu0 %v652
    %1056 = vmatpush1.msra.mxu0 %v651
    %1057 = vmatprep.subr.mxu0 %v660
    %1058 = vmatpush1.msra.mxu0 %v659
    %1059 = vmatprep.subr.mxu0 %v668
    %1060 = vmatpush1.msra.mxu0 %v667
    %1061 = vmatprep.subr.mxu0 %v676
    %1062 = vmatpush1.msra.mxu0 %v675
    %1063 = vmatprep.subr.mxu0 %v684
    %1064 = vmatpush1.msra.mxu0 %v683
    %1065 = vmatprep.subr.mxu0 %v692
    %1066 = vmatpush1.msra.mxu0 %v691
    %1067 = vmatprep.subr.mxu0 %v700
    %1068 = vmatpush1.msra.mxu0 %v699
    %1069 = vmatprep.mubr.f32.mxu0 %v448
    %1070 = vmatmul.mubr.f32.gmra.mrb[0].mxu0 %v447
    %v1071 = vpop.f32.mrb[0].mxu0
    %v1072 = vadd.f32 %v968, %v1071
    %v1073 = vpop.f32.mrb[0].mxu0
    %v1074 = vadd.f32 %v972, %v1073
    %1075 = vdwg.mxu0
    %1076 = vmatprep.subr.mxu0 %v708
    %1077 = vmatpush1.msra.mxu0 %v707
    %1078 = vmatprep.subr.mxu0 %v716
    %1079 = vmatpush1.msra.mxu0 %v715
    %1080 = vmatprep.subr.mxu0 %v724
    %1081 = vmatpush1.msra.mxu0 %v723
    %1082 = vmatprep.subr.mxu0 %v732
    %1083 = vmatpush1.msra.mxu0 %v731
    %1084 = vmatprep.subr.mxu0 %v740
    %1085 = vmatpush1.msra.mxu0 %v739
    %1086 = vmatprep.subr.mxu0 %v748
    %1087 = vmatpush1.msra.mxu0 %v747
    %1088 = vmatprep.subr.mxu0 %v756
    %1089 = vmatpush1.msra.mxu0 %v755
    %1090 = vmatprep.subr.mxu0 %v764
    %1091 = vmatpush1.msra.mxu0 %v763
    %1092 = vmatprep.subr.mxu0 %v772
    %1093 = vmatpush1.msra.mxu0 %v771
    %1094 = vmatprep.subr.mxu0 %v780
    %1095 = vmatpush1.msra.mxu0 %v779
    %1096 = vmatprep.subr.mxu0 %v788
    %1097 = vmatpush1.msra.mxu0 %v787
    %1098 = vmatprep.subr.mxu0 %v796
    %1099 = vmatpush1.msra.mxu0 %v795
    %1100 = vmatprep.subr.mxu0 %v804
    %1101 = vmatpush1.msra.mxu0 %v803
    %1102 = vmatprep.subr.mxu0 %v812
    %1103 = vmatpush1.msra.mxu0 %v811
    %1104 = vmatprep.subr.mxu0 %v820
    %1105 = vmatpush1.msra.mxu0 %v819
    %1106 = vmatprep.subr.mxu0 %v828
    %1107 = vmatpush1.msra.mxu0 %v827
    %1108 = vmatprep.subr.mxu0 %v836
    %1109 = vmatpush1.msra.mxu0 %v835
    %1110 = vmatprep.subr.mxu0 %v844
    %1111 = vmatpush1.msra.mxu0 %v843
    %1112 = vmatprep.subr.mxu0 %v852
    %1113 = vmatpush1.msra.mxu0 %v851
    %1114 = vmatprep.subr.mxu0 %v860
    %1115 = vmatpush1.msra.mxu0 %v859
    %1116 = vmatprep.subr.mxu0 %v868
    %1117 = vmatpush1.msra.mxu0 %v867
    %1118 = vmatprep.subr.mxu0 %v876
    %1119 = vmatpush1.msra.mxu0 %v875
    %1120 = vmatprep.subr.mxu0 %v884
    %1121 = vmatpush1.msra.mxu0 %v883
    %1122 = vmatprep.subr.mxu0 %v892
    %1123 = vmatpush1.msra.mxu0 %v891
    %1124 = vmatprep.subr.mxu0 %v900
    %1125 = vmatpush1.msra.mxu0 %v899
    %1126 = vmatprep.subr.mxu0 %v908
    %1127 = vmatpush1.msra.mxu0 %v907
    %1128 = vmatprep.subr.mxu0 %v916
    %1129 = vmatpush1.msra.mxu0 %v915
    %1130 = vmatprep.subr.mxu0 %v924
    %1131 = vmatpush1.msra.mxu0 %v923
    %1132 = vmatprep.subr.mxu0 %v932
    %1133 = vmatpush1.msra.mxu0 %v931
    %1134 = vmatprep.subr.mxu0 %v940
    %1135 = vmatpush1.msra.mxu0 %v939
    %1136 = vmatprep.subr.mxu0 %v948
    %1137 = vmatpush1.msra.mxu0 %v947
    %1138 = vmatprep.subr.mxu0 %v956
    %1139 = vmatpush1.msra.mxu0 %v955
    %1140 = vmatprep.mubr.f32.mxu0 %v450
    %1141 = vmatmul.mubr.f32.gmra.mrb[0].mxu0 %v449
    %v1142 = vpop.f32.mrb[0].mxu0
    %v1143 = vadd.f32 %v1072, %v1142
    %v1144 = vpop.f32.mrb[0].mxu0
    %v1145 = vadd.f32 %v1074, %v1144
    %1146 = vdwg.mxu0
    %1147 = vmatprep.subr.mxu0 %v454
    %1148 = vmatpush1.msra.mxu0 %v453
    %1149 = vmatprep.subr.mxu0 %v462
    %1150 = vmatpush1.msra.mxu0 %v461
    %1151 = vmatprep.subr.mxu0 %v470
    %1152 = vmatpush1.msra.mxu0 %v469
    %1153 = vmatprep.subr.mxu0 %v478
    %1154 = vmatpush1.msra.mxu0 %v477
    %1155 = vmatprep.subr.mxu0 %v486
    %1156 = vmatpush1.msra.mxu0 %v485
    %1157 = vmatprep.subr.mxu0 %v494
    %1158 = vmatpush1.msra.mxu0 %v493
    %1159 = vmatprep.subr.mxu0 %v502
    %1160 = vmatpush1.msra.mxu0 %v501
    %1161 = vmatprep.subr.mxu0 %v510
    %1162 = vmatpush1.msra.mxu0 %v509
    %1163 = vmatprep.subr.mxu0 %v518
    %1164 = vmatpush1.msra.mxu0 %v517
    %1165 = vmatprep.subr.mxu0 %v526
    %1166 = vmatpush1.msra.mxu0 %v525
    %1167 = vmatprep.subr.mxu0 %v534
    %1168 = vmatpush1.msra.mxu0 %v533
    %1169 = vmatprep.subr.mxu0 %v542
    %1170 = vmatpush1.msra.mxu0 %v541
    %1171 = vmatprep.subr.mxu0 %v550
    %1172 = vmatpush1.msra.mxu0 %v549
    %1173 = vmatprep.subr.mxu0 %v558
    %1174 = vmatpush1.msra.mxu0 %v557
    %1175 = vmatprep.subr.mxu0 %v566
    %1176 = vmatpush1.msra.mxu0 %v565
    %1177 = vmatprep.subr.mxu0 %v574
    %1178 = vmatpush1.msra.mxu0 %v573
    %1179 = vmatprep.subr.mxu0 %v582
    %1180 = vmatpush1.msra.mxu0 %v581
    %1181 = vmatprep.subr.mxu0 %v590
    %1182 = vmatpush1.msra.mxu0 %v589
    %1183 = vmatprep.subr.mxu0 %v598
    %1184 = vmatpush1.msra.mxu0 %v597
    %1185 = vmatprep.subr.mxu0 %v606
    %1186 = vmatpush1.msra.mxu0 %v605
    %1187 = vmatprep.subr.mxu0 %v614
    %1188 = vmatpush1.msra.mxu0 %v613
    %1189 = vmatprep.subr.mxu0 %v622
    %1190 = vmatpush1.msra.mxu0 %v621
    %1191 = vmatprep.subr.mxu0 %v630
    %1192 = vmatpush1.msra.mxu0 %v629
    %1193 = vmatprep.subr.mxu0 %v638
    %1194 = vmatpush1.msra.mxu0 %v637
    %1195 = vmatprep.subr.mxu0 %v646
    %1196 = vmatpush1.msra.mxu0 %v645
    %1197 = vmatprep.subr.mxu0 %v654
    %1198 = vmatpush1.msra.mxu0 %v653
    %1199 = vmatprep.subr.mxu0 %v662
    %1200 = vmatpush1.msra.mxu0 %v661
    %1201 = vmatprep.subr.mxu0 %v670
    %1202 = vmatpush1.msra.mxu0 %v669
    %1203 = vmatprep.subr.mxu0 %v678
    %1204 = vmatpush1.msra.mxu0 %v677
    %1205 = vmatprep.subr.mxu0 %v686
    %1206 = vmatpush1.msra.mxu0 %v685
    %1207 = vmatprep.subr.mxu0 %v694
    %1208 = vmatpush1.msra.mxu0 %v693
    %1209 = vmatprep.subr.mxu0 %v702
    %1210 = vmatpush1.msra.mxu0 %v701
    %1211 = vmatprep.mubr.f32.mxu0 %v448
    %1212 = vmatmul.mubr.f32.gmra.mrb[0].mxu0 %v447
    %v1213 = vpop.f32.mrb[0].mxu0
    %v1214 = vadd.f32 %v976, %v1213
    %v1215 = vpop.f32.mrb[0].mxu0
    %v1216 = vadd.f32 %v980, %v1215
    %1217 = vdwg.mxu0
    %1218 = vmatprep.subr.mxu0 %v710
    %1219 = vmatpush1.msra.mxu0 %v709
    %1220 = vmatprep.subr.mxu0 %v718
    %1221 = vmatpush1.msra.mxu0 %v717
    %1222 = vmatprep.subr.mxu0 %v726
    %1223 = vmatpush1.msra.mxu0 %v725
    %1224 = vmatprep.subr.mxu0 %v734
    %1225 = vmatpush1.msra.mxu0 %v733
    %1226 = vmatprep.subr.mxu0 %v742
    %1227 = vmatpush1.msra.mxu0 %v741
    %1228 = vmatprep.subr.mxu0 %v750
    %1229 = vmatpush1.msra.mxu0 %v749
    %1230 = vmatprep.subr.mxu0 %v758
    %1231 = vmatpush1.msra.mxu0 %v757
    %1232 = vmatprep.subr.mxu0 %v766
    %1233 = vmatpush1.msra.mxu0 %v765
    %1234 = vmatprep.subr.mxu0 %v774
    %1235 = vmatpush1.msra.mxu0 %v773
    %1236 = vmatprep.subr.mxu0 %v782
    %1237 = vmatpush1.msra.mxu0 %v781
    %1238 = vmatprep.subr.mxu0 %v790
    %1239 = vmatpush1.msra.mxu0 %v789
    %1240 = vmatprep.subr.mxu0 %v798
    %1241 = vmatpush1.msra.mxu0 %v797
    %1242 = vmatprep.subr.mxu0 %v806
    %1243 = vmatpush1.msra.mxu0 %v805
    %1244 = vmatprep.subr.mxu0 %v814
    %1245 = vmatpush1.msra.mxu0 %v813
    %1246 = vmatprep.subr.mxu0 %v822
    %1247 = vmatpush1.msra.mxu0 %v821
    %1248 = vmatprep.subr.mxu0 %v830
    %1249 = vmatpush1.msra.mxu0 %v829
    %1250 = vmatprep.subr.mxu0 %v838
    %1251 = vmatpush1.msra.mxu0 %v837
    %1252 = vmatprep.subr.mxu0 %v846
    %1253 = vmatpush1.msra.mxu0 %v845
    %1254 = vmatprep.subr.mxu0 %v854
    %1255 = vmatpush1.msra.mxu0 %v853
    %1256 = vmatprep.subr.mxu0 %v862
    %1257 = vmatpush1.msra.mxu0 %v861
    %1258 = vmatprep.subr.mxu0 %v870
    %1259 = vmatpush1.msra.mxu0 %v869
    %1260 = vmatprep.subr.mxu0 %v878
    %1261 = vmatpush1.msra.mxu0 %v877
    %1262 = vmatprep.subr.mxu0 %v886
    %1263 = vmatpush1.msra.mxu0 %v885
    %1264 = vmatprep.subr.mxu0 %v894
    %1265 = vmatpush1.msra.mxu0 %v893
    %1266 = vmatprep.subr.mxu0 %v902
    %1267 = vmatpush1.msra.mxu0 %v901
    %1268 = vmatprep.subr.mxu0 %v910
    %1269 = vmatpush1.msra.mxu0 %v909
    %1270 = vmatprep.subr.mxu0 %v918
    %1271 = vmatpush1.msra.mxu0 %v917
    %1272 = vmatprep.subr.mxu0 %v926
    %1273 = vmatpush1.msra.mxu0 %v925
    %1274 = vmatprep.subr.mxu0 %v934
    %1275 = vmatpush1.msra.mxu0 %v933
    %1276 = vmatprep.subr.mxu0 %v942
    %1277 = vmatpush1.msra.mxu0 %v941
    %1278 = vmatprep.subr.mxu0 %v950
    %1279 = vmatpush1.msra.mxu0 %v949
    %1280 = vmatprep.subr.mxu0 %v958
    %1281 = vmatpush1.msra.mxu0 %v957
    %1282 = vmatprep.mubr.f32.mxu0 %v450
    %1283 = vmatmul.mubr.f32.gmra.mrb[0].mxu0 %v449
    %v1284 = vpop.f32.mrb[0].mxu0
    %v1285 = vadd.f32 %v1214, %v1284
    %v1286 = vpop.f32.mrb[0].mxu0
    %v1287 = vadd.f32 %v1216, %v1286
    %1288 = vdwg.mxu0
    %1289 = vmatprep.subr.mxu0 %v456
    %1290 = vmatpush1.msra.mxu0 %v455
    %1291 = vmatprep.subr.mxu0 %v464
    %1292 = vmatpush1.msra.mxu0 %v463
    %1293 = vmatprep.subr.mxu0 %v472
    %1294 = vmatpush1.msra.mxu0 %v471
    %1295 = vmatprep.subr.mxu0 %v480
    %1296 = vmatpush1.msra.mxu0 %v479
    %1297 = vmatprep.subr.mxu0 %v488
    %1298 = vmatpush1.msra.mxu0 %v487
    %1299 = vmatprep.subr.mxu0 %v496
    %1300 = vmatpush1.msra.mxu0 %v495
    %1301 = vmatprep.subr.mxu0 %v504
    %1302 = vmatpush1.msra.mxu0 %v503
    %1303 = vmatprep.subr.mxu0 %v512
    %1304 = vmatpush1.msra.mxu0 %v511
    %1305 = vmatprep.subr.mxu0 %v520
    %1306 = vmatpush1.msra.mxu0 %v519
    %1307 = vmatprep.subr.mxu0 %v528
    %1308 = vmatpush1.msra.mxu0 %v527
    %1309 = vmatprep.subr.mxu0 %v536
    %1310 = vmatpush1.msra.mxu0 %v535
    %1311 = vmatprep.subr.mxu0 %v544
    %1312 = vmatpush1.msra.mxu0 %v543
    %1313 = vmatprep.subr.mxu0 %v552
    %1314 = vmatpush1.msra.mxu0 %v551
    %1315 = vmatprep.subr.mxu0 %v560
    %1316 = vmatpush1.msra.mxu0 %v559
    %1317 = vmatprep.subr.mxu0 %v568
    %1318 = vmatpush1.msra.mxu0 %v567
    %1319 = vmatprep.subr.mxu0 %v576
    %1320 = vmatpush1.msra.mxu0 %v575
    %1321 = vmatprep.subr.mxu0 %v584
    %1322 = vmatpush1.msra.mxu0 %v583
    %1323 = vmatprep.subr.mxu0 %v592
    %1324 = vmatpush1.msra.mxu0 %v591
    %1325 = vmatprep.subr.mxu0 %v600
    %1326 = vmatpush1.msra.mxu0 %v599
    %1327 = vmatprep.subr.mxu0 %v608
    %1328 = vmatpush1.msra.mxu0 %v607
    %1329 = vmatprep.subr.mxu0 %v616
    %1330 = vmatpush1.msra.mxu0 %v615
    %1331 = vmatprep.subr.mxu0 %v624
    %1332 = vmatpush1.msra.mxu0 %v623
    %1333 = vmatprep.subr.mxu0 %v632
    %1334 = vmatpush1.msra.mxu0 %v631
    %1335 = vmatprep.subr.mxu0 %v640
    %1336 = vmatpush1.msra.mxu0 %v639
    %1337 = vmatprep.subr.mxu0 %v648
    %1338 = vmatpush1.msra.mxu0 %v647
    %1339 = vmatprep.subr.mxu0 %v656
    %1340 = vmatpush1.msra.mxu0 %v655
    %1341 = vmatprep.subr.mxu0 %v664
    %1342 = vmatpush1.msra.mxu0 %v663
    %1343 = vmatprep.subr.mxu0 %v672
    %1344 = vmatpush1.msra.mxu0 %v671
    %1345 = vmatprep.subr.mxu0 %v680
    %1346 = vmatpush1.msra.mxu0 %v679
    %1347 = vmatprep.subr.mxu0 %v688
    %1348 = vmatpush1.msra.mxu0 %v687
    %1349 = vmatprep.subr.mxu0 %v696
    %1350 = vmatpush1.msra.mxu0 %v695
    %1351 = vmatprep.subr.mxu0 %v704
    %1352 = vmatpush1.msra.mxu0 %v703
    %1353 = vmatprep.mubr.f32.mxu0 %v448
    %1354 = vmatmul.mubr.f32.gmra.mrb[0].mxu0 %v447
    %v1355 = vpop.f32.mrb[0].mxu0
    %v1356 = vadd.f32 %v984, %v1355
    %v1357 = vpop.f32.mrb[0].mxu0
    %v1358 = vadd.f32 %v988, %v1357
    %1359 = vdwg.mxu0
    %1360 = vmatprep.subr.mxu0 %v712
    %1361 = vmatpush1.msra.mxu0 %v711
    %1362 = vmatprep.subr.mxu0 %v720
    %1363 = vmatpush1.msra.mxu0 %v719
    %1364 = vmatprep.subr.mxu0 %v728
    %1365 = vmatpush1.msra.mxu0 %v727
    %1366 = vmatprep.subr.mxu0 %v736
    %1367 = vmatpush1.msra.mxu0 %v735
    %1368 = vmatprep.subr.mxu0 %v744
    %1369 = vmatpush1.msra.mxu0 %v743
    %1370 = vmatprep.subr.mxu0 %v752
    %1371 = vmatpush1.msra.mxu0 %v751
    %1372 = vmatprep.subr.mxu0 %v760
    %1373 = vmatpush1.msra.mxu0 %v759
    %1374 = vmatprep.subr.mxu0 %v768
    %1375 = vmatpush1.msra.mxu0 %v767
    %1376 = vmatprep.subr.mxu0 %v776
    %1377 = vmatpush1.msra.mxu0 %v775
    %1378 = vmatprep.subr.mxu0 %v784
    %1379 = vmatpush1.msra.mxu0 %v783
    %1380 = vmatprep.subr.mxu0 %v792
    %1381 = vmatpush1.msra.mxu0 %v791
    %1382 = vmatprep.subr.mxu0 %v800
    %1383 = vmatpush1.msra.mxu0 %v799
    %1384 = vmatprep.subr.mxu0 %v808
    %1385 = vmatpush1.msra.mxu0 %v807
    %1386 = vmatprep.subr.mxu0 %v816
    %1387 = vmatpush1.msra.mxu0 %v815
    %1388 = vmatprep.subr.mxu0 %v824
    %1389 = vmatpush1.msra.mxu0 %v823
    %1390 = vmatprep.subr.mxu0 %v832
    %1391 = vmatpush1.msra.mxu0 %v831
    %1392 = vmatprep.subr.mxu0 %v840
    %1393 = vmatpush1.msra.mxu0 %v839
    %1394 = vmatprep.subr.mxu0 %v848
    %1395 = vmatpush1.msra.mxu0 %v847
    %1396 = vmatprep.subr.mxu0 %v856
    %1397 = vmatpush1.msra.mxu0 %v855
    %1398 = vmatprep.subr.mxu0 %v864
    %1399 = vmatpush1.msra.mxu0 %v863
    %1400 = vmatprep.subr.mxu0 %v872
    %1401 = vmatpush1.msra.mxu0 %v871
    %1402 = vmatprep.subr.mxu0 %v880
    %1403 = vmatpush1.msra.mxu0 %v879
    %1404 = vmatprep.subr.mxu0 %v888
    %1405 = vmatpush1.msra.mxu0 %v887
    %1406 = vmatprep.subr.mxu0 %v896
    %1407 = vmatpush1.msra.mxu0 %v895
    %1408 = vmatprep.subr.mxu0 %v904
    %1409 = vmatpush1.msra.mxu0 %v903
    %1410 = vmatprep.subr.mxu0 %v912
    %1411 = vmatpush1.msra.mxu0 %v911
    %1412 = vmatprep.subr.mxu0 %v920
    %1413 = vmatpush1.msra.mxu0 %v919
    %1414 = vmatprep.subr.mxu0 %v928
    %1415 = vmatpush1.msra.mxu0 %v927
    %1416 = vmatprep.subr.mxu0 %v936
    %1417 = vmatpush1.msra.mxu0 %v935
    %1418 = vmatprep.subr.mxu0 %v944
    %1419 = vmatpush1.msra.mxu0 %v943
    %1420 = vmatprep.subr.mxu0 %v952
    %1421 = vmatpush1.msra.mxu0 %v951
    %1422 = vmatprep.subr.mxu0 %v960
    %1423 = vmatpush1.msra.mxu0 %v959
    %1424 = vmatprep.mubr.f32.mxu0 %v450
    %1425 = vmatmul.mubr.f32.gmra.mrb[0].mxu0 %v449
    %v1426 = vpop.f32.mrb[0].mxu0
    %v1427 = vadd.f32 %v1356, %v1426
    %v1428 = vpop.f32.mrb[0].mxu0
    %v1429 = vadd.f32 %v1358, %v1428
    %1430 = vdwg.mxu0
    %1431 = vmatprep.subr.mxu0 %v458
    %1432 = vmatpush1.msra.mxu0 %v457
    %1433 = vmatprep.subr.mxu0 %v466
    %1434 = vmatpush1.msra.mxu0 %v465
    %1435 = vmatprep.subr.mxu0 %v474
    %1436 = vmatpush1.msra.mxu0 %v473
    %1437 = vmatprep.subr.mxu0 %v482
    %1438 = vmatpush1.msra.mxu0 %v481
    %1439 = vmatprep.subr.mxu0 %v490
    %1440 = vmatpush1.msra.mxu0 %v489
    %1441 = vmatprep.subr.mxu0 %v498
    %1442 = vmatpush1.msra.mxu0 %v497
    %1443 = vmatprep.subr.mxu0 %v506
    %1444 = vmatpush1.msra.mxu0 %v505
    %1445 = vmatprep.subr.mxu0 %v514
    %1446 = vmatpush1.msra.mxu0 %v513
    %1447 = vmatprep.subr.mxu0 %v522
    %1448 = vmatpush1.msra.mxu0 %v521
    %1449 = vmatprep.subr.mxu0 %v530
    %1450 = vmatpush1.msra.mxu0 %v529
    %1451 = vmatprep.subr.mxu0 %v538
    %1452 = vmatpush1.msra.mxu0 %v537
    %1453 = vmatprep.subr.mxu0 %v546
    %1454 = vmatpush1.msra.mxu0 %v545
    %1455 = vmatprep.subr.mxu0 %v554
    %1456 = vmatpush1.msra.mxu0 %v553
    %1457 = vmatprep.subr.mxu0 %v562
    %1458 = vmatpush1.msra.mxu0 %v561
    %1459 = vmatprep.subr.mxu0 %v570
    %1460 = vmatpush1.msra.mxu0 %v569
    %1461 = vmatprep.subr.mxu0 %v578
    %1462 = vmatpush1.msra.mxu0 %v577
    %1463 = vmatprep.subr.mxu0 %v586
    %1464 = vmatpush1.msra.mxu0 %v585
    %1465 = vmatprep.subr.mxu0 %v594
    %1466 = vmatpush1.msra.mxu0 %v593
    %1467 = vmatprep.subr.mxu0 %v602
    %1468 = vmatpush1.msra.mxu0 %v601
    %1469 = vmatprep.subr.mxu0 %v610
    %1470 = vmatpush1.msra.mxu0 %v609
    %1471 = vmatprep.subr.mxu0 %v618
    %1472 = vmatpush1.msra.mxu0 %v617
    %1473 = vmatprep.subr.mxu0 %v626
    %1474 = vmatpush1.msra.mxu0 %v625
    %1475 = vmatprep.subr.mxu0 %v634
    %1476 = vmatpush1.msra.mxu0 %v633
    %1477 = vmatprep.subr.mxu0 %v642
    %1478 = vmatpush1.msra.mxu0 %v641
    %1479 = vmatprep.subr.mxu0 %v650
    %1480 = vmatpush1.msra.mxu0 %v649
    %1481 = vmatprep.subr.mxu0 %v658
    %1482 = vmatpush1.msra.mxu0 %v657
    %1483 = vmatprep.subr.mxu0 %v666
    %1484 = vmatpush1.msra.mxu0 %v665
    %1485 = vmatprep.subr.mxu0 %v674
    %1486 = vmatpush1.msra.mxu0 %v673
    %1487 = vmatprep.subr.mxu0 %v682
    %1488 = vmatpush1.msra.mxu0 %v681
    %1489 = vmatprep.subr.mxu0 %v690
    %1490 = vmatpush1.msra.mxu0 %v689
    %1491 = vmatprep.subr.mxu0 %v698
    %1492 = vmatpush1.msra.mxu0 %v697
    %1493 = vmatprep.subr.mxu0 %v706
    %1494 = vmatpush1.msra.mxu0 %v705
    %1495 = vmatprep.mubr.f32.mxu0 %v448
    %1496 = vmatmul.mubr.f32.gmra.mrb[0].mxu0 %v447
    %v1497 = vpop.f32.mrb[0].mxu0
    %v1498 = vadd.f32 %v992, %v1497
    %v1499 = vpop.f32.mrb[0].mxu0
    %v1500 = vadd.f32 %v996, %v1499
    %1501 = vdwg.mxu0
    %1502 = vmatprep.subr.mxu0 %v714
    %1503 = vmatpush1.msra.mxu0 %v713
    %1504 = vmatprep.subr.mxu0 %v722
    %1505 = vmatpush1.msra.mxu0 %v721
    %1506 = vmatprep.subr.mxu0 %v730
    %1507 = vmatpush1.msra.mxu0 %v729
    %1508 = vmatprep.subr.mxu0 %v738
    %1509 = vmatpush1.msra.mxu0 %v737
    %1510 = vmatprep.subr.mxu0 %v746
    %1511 = vmatpush1.msra.mxu0 %v745
    %1512 = vmatprep.subr.mxu0 %v754
    %1513 = vmatpush1.msra.mxu0 %v753
    %1514 = vmatprep.subr.mxu0 %v762
    %1515 = vmatpush1.msra.mxu0 %v761
    %1516 = vmatprep.subr.mxu0 %v770
    %1517 = vmatpush1.msra.mxu0 %v769
    %1518 = vmatprep.subr.mxu0 %v778
    %1519 = vmatpush1.msra.mxu0 %v777
    %1520 = vmatprep.subr.mxu0 %v786
    %1521 = vmatpush1.msra.mxu0 %v785
    %1522 = vmatprep.subr.mxu0 %v794
    %1523 = vmatpush1.msra.mxu0 %v793
    %1524 = vmatprep.subr.mxu0 %v802
    %1525 = vmatpush1.msra.mxu0 %v801
    %1526 = vmatprep.subr.mxu0 %v810
    %1527 = vmatpush1.msra.mxu0 %v809
    %1528 = vmatprep.subr.mxu0 %v818
    %1529 = vmatpush1.msra.mxu0 %v817
    %1530 = vmatprep.subr.mxu0 %v826
    %1531 = vmatpush1.msra.mxu0 %v825
    %1532 = vmatprep.subr.mxu0 %v834
    %1533 = vmatpush1.msra.mxu0 %v833
    %1534 = vmatprep.subr.mxu0 %v842
    %1535 = vmatpush1.msra.mxu0 %v841
    %1536 = vmatprep.subr.mxu0 %v850
    %1537 = vmatpush1.msra.mxu0 %v849
    %1538 = vmatprep.subr.mxu0 %v858
    %1539 = vmatpush1.msra.mxu0 %v857
    %1540 = vmatprep.subr.mxu0 %v866
    %1541 = vmatpush1.msra.mxu0 %v865
    %1542 = vmatprep.subr.mxu0 %v874
    %1543 = vmatpush1.msra.mxu0 %v873
    %1544 = vmatprep.subr.mxu0 %v882
    %1545 = vmatpush1.msra.mxu0 %v881
    %1546 = vmatprep.subr.mxu0 %v890
    %1547 = vmatpush1.msra.mxu0 %v889
    %1548 = vmatprep.subr.mxu0 %v898
    %1549 = vmatpush1.msra.mxu0 %v897
    %1550 = vmatprep.subr.mxu0 %v906
    %1551 = vmatpush1.msra.mxu0 %v905
    %1552 = vmatprep.subr.mxu0 %v914
    %1553 = vmatpush1.msra.mxu0 %v913
    %1554 = vmatprep.subr.mxu0 %v922
    %1555 = vmatpush1.msra.mxu0 %v921
    %1556 = vmatprep.subr.mxu0 %v930
    %1557 = vmatpush1.msra.mxu0 %v929
    %1558 = vmatprep.subr.mxu0 %v938
    %1559 = vmatpush1.msra.mxu0 %v937
    %1560 = vmatprep.subr.mxu0 %v946
    %1561 = vmatpush1.msra.mxu0 %v945
    %1562 = vmatprep.subr.mxu0 %v954
    %1563 = vmatpush1.msra.mxu0 %v953
    %1564 = vmatprep.subr.mxu0 %v962
    %1565 = vmatpush1.msra.mxu0 %v961
    %1566 = vmatprep.mubr.f32.mxu0 %v450
    %1567 = vmatmul.mubr.f32.gmra.mrb[0].mxu0 %v449
    %v1568 = vpop.f32.mrb[0].mxu0
    %v1569 = vadd.f32 %v1498, %v1568
    %v1570 = vpop.f32.mrb[0].mxu0
    %v1571 = vadd.f32 %v1500, %v1570
    %1572 = vdwg.mxu0
    %vm1573 = vcmp.ge.f32.partialorder %v1143, 0.0
    %vm1574 = vcmp.ge.f32.partialorder %v1145, 0.0
    %vm1575 = vcmp.ge.f32.partialorder %v1285, 0.0
    %vm1576 = vcmp.ge.f32.partialorder %v1287, 0.0
    %vm1577 = vcmp.ge.f32.partialorder %v1427, 0.0
    %vm1578 = vcmp.ge.f32.partialorder %v1429, 0.0
    %vm1579 = vcmp.ge.f32.partialorder %v1569, 0.0
    %vm1580 = vcmp.ge.f32.partialorder %v1571, 0.0
    %v1581 = vmul.f32 %v1143, 0.2
    %v1582 = vmul.f32 %v1145, 0.2
    %v1583 = vmul.f32 %v1285, 0.2
    %v1584 = vmul.f32 %v1287, 0.2
    %v1585 = vmul.f32 %v1427, 0.2
    %v1586 = vmul.f32 %v1429, 0.2
    %v1587 = vmul.f32 %v1569, 0.2
    %v1588 = vmul.f32 %v1571, 0.2
    %v1589 = vsel %vm1573, %v1143, %v1581
    %v1590 = vsel %vm1574, %v1145, %v1582
    %v1591 = vsel %vm1575, %v1285, %v1583
    %v1592 = vsel %vm1576, %v1287, %v1584
    %v1593 = vsel %vm1577, %v1427, %v1585
    %v1594 = vsel %vm1578, %v1429, %v1586
    %v1595 = vsel %vm1579, %v1569, %v1587
    %v1596 = vsel %vm1580, %v1571, %v1588
    %v1597 = vld [vmem:[#allocation11] sm:$0xff]
    %v1598 = vld [vmem:[#allocation11 + $0x8] sm:$0xff]
    %v1599 = vld [vmem:[#allocation11 + $0x10] sm:$0xff]
    %v1600 = vld [vmem:[#allocation11 + $0x18] sm:$0xff]
    %v1601 = vld [vmem:[#allocation11 + $0x20] sm:$0xff]
    %v1602 = vld [vmem:[#allocation11 + $0x28] sm:$0xff]
    %v1603 = vld [vmem:[#allocation11 + $0x30] sm:$0xff]
    %v1604 = vld [vmem:[#allocation11 + $0x38] sm:$0xff]
    %v1605 = vld [vmem:[#allocation11 + $0x40] sm:$0xff]
    %v1606 = vld [vmem:[#allocation11 + $0x48] sm:$0xff]
    %v1607 = vld [vmem:[#allocation11 + $0x50] sm:$0xff]
    %v1608 = vld [vmem:[#allocation11 + $0x58] sm:$0xff]
    %v1609 = vld [vmem:[#allocation11 + $0x60] sm:$0xff]
    %v1610 = vld [vmem:[#allocation11 + $0x68] sm:$0xff]
    %v1611 = vld [vmem:[#allocation11 + $0x70] sm:$0xff]
    %v1612 = vld [vmem:[#allocation11 + $0x78] sm:$0xff]
    %v1613 = vld [vmem:[#allocation11 + $0x80] sm:$0xff]
    %v1614 = vld [vmem:[#allocation11 + $0x88] sm:$0xff]
    %v1615 = vld [vmem:[#allocation11 + $0x90] sm:$0xff]
    %v1616 = vld [vmem:[#allocation11 + $0x98] sm:$0xff]
    %v1617 = vld [vmem:[#allocation11 + $0xa0] sm:$0xff]
    %v1618 = vld [vmem:[#allocation11 + $0xa8] sm:$0xff]
    %v1619 = vld [vmem:[#allocation11 + $0xb0] sm:$0xff]
    %v1620 = vld [vmem:[#allocation11 + $0xb8] sm:$0xff]
    %v1621 = vld [vmem:[#allocation11 + $0xc0] sm:$0xff]
    %v1622 = vld [vmem:[#allocation11 + $0xc8] sm:$0xff]
    %v1623 = vld [vmem:[#allocation11 + $0xd0] sm:$0xff]
    %v1624 = vld [vmem:[#allocation11 + $0xd8] sm:$0xff]
    %v1625 = vld [vmem:[#allocation11 + $0xe0] sm:$0xff]
    %v1626 = vld [vmem:[#allocation11 + $0xe8] sm:$0xff]
    %v1627 = vld [vmem:[#allocation11 + $0xf0] sm:$0xff]
    %v1628 = vld [vmem:[#allocation11 + $0xf8] sm:$0xff]
    %v1629 = vld [vmem:[#allocation11 + $0x100] sm:$0xff]
    %v1630 = vld [vmem:[#allocation11 + $0x108] sm:$0xff]
    %v1631 = vld [vmem:[#allocation11 + $0x110] sm:$0xff]
    %v1632 = vld [vmem:[#allocation11 + $0x118] sm:$0xff]
    %v1633 = vld [vmem:[#allocation11 + $0x120] sm:$0xff]
    %v1634 = vld [vmem:[#allocation11 + $0x128] sm:$0xff]
    %v1635 = vld [vmem:[#allocation11 + $0x130] sm:$0xff]
    %v1636 = vld [vmem:[#allocation11 + $0x138] sm:$0xff]
    %v1637 = vld [vmem:[#allocation11 + $0x140] sm:$0xff]
    %v1638 = vld [vmem:[#allocation11 + $0x148] sm:$0xff]
    %v1639 = vld [vmem:[#allocation11 + $0x150] sm:$0xff]
    %v1640 = vld [vmem:[#allocation11 + $0x158] sm:$0xff]
    %v1641 = vld [vmem:[#allocation11 + $0x160] sm:$0xff]
    %v1642 = vld [vmem:[#allocation11 + $0x168] sm:$0xff]
    %v1643 = vld [vmem:[#allocation11 + $0x170] sm:$0xff]
    %v1644 = vld [vmem:[#allocation11 + $0x178] sm:$0xff]
    %v1645 = vld [vmem:[#allocation11 + $0x180] sm:$0xff]
    %v1646 = vld [vmem:[#allocation11 + $0x188] sm:$0xff]
    %v1647 = vld [vmem:[#allocation11 + $0x190] sm:$0xff]
    %v1648 = vld [vmem:[#allocation11 + $0x198] sm:$0xff]
    %v1649 = vld [vmem:[#allocation11 + $0x1a0] sm:$0xff]
    %v1650 = vld [vmem:[#allocation11 + $0x1a8] sm:$0xff]
    %v1651 = vld [vmem:[#allocation11 + $0x1b0] sm:$0xff]
    %v1652 = vld [vmem:[#allocation11 + $0x1b8] sm:$0xff]
    %v1653 = vld [vmem:[#allocation11 + $0x1c0] sm:$0xff]
    %v1654 = vld [vmem:[#allocation11 + $0x1c8] sm:$0xff]
    %v1655 = vld [vmem:[#allocation11 + $0x1d0] sm:$0xff]
    %v1656 = vld [vmem:[#allocation11 + $0x1d8] sm:$0xff]
    %v1657 = vld [vmem:[#allocation11 + $0x1e0] sm:$0xff]
    %v1658 = vld [vmem:[#allocation11 + $0x1e8] sm:$0xff]
    %v1659 = vld [vmem:[#allocation11 + $0x1f0] sm:$0xff]
    %v1660 = vld [vmem:[#allocation11 + $0x1f8] sm:$0xff]
    %v1661 = vld [vmem:[#allocation11 + $0x200] sm:$0xff]
    %v1662 = vld [vmem:[#allocation11 + $0x208] sm:$0xff]
    %v1663 = vld [vmem:[#allocation11 + $0x210] sm:$0xff]
    %v1664 = vld [vmem:[#allocation11 + $0x218] sm:$0xff]
    %v1665 = vld [vmem:[#allocation11 + $0x220] sm:$0xff]
    %v1666 = vld [vmem:[#allocation11 + $0x228] sm:$0xff]
    %v1667 = vld [vmem:[#allocation11 + $0x230] sm:$0xff]
    %v1668 = vld [vmem:[#allocation11 + $0x238] sm:$0xff]
    %v1669 = vld [vmem:[#allocation11 + $0x240] sm:$0xff]
    %v1670 = vld [vmem:[#allocation11 + $0x248] sm:$0xff]
    %v1671 = vld [vmem:[#allocation11 + $0x250] sm:$0xff]
    %v1672 = vld [vmem:[#allocation11 + $0x258] sm:$0xff]
    %v1673 = vld [vmem:[#allocation11 + $0x260] sm:$0xff]
    %v1674 = vld [vmem:[#allocation11 + $0x268] sm:$0xff]
    %v1675 = vld [vmem:[#allocation11 + $0x270] sm:$0xff]
    %v1676 = vld [vmem:[#allocation11 + $0x278] sm:$0xff]
    %v1677 = vld [vmem:[#allocation11 + $0x280] sm:$0xff]
    %v1678 = vld [vmem:[#allocation11 + $0x288] sm:$0xff]
    %v1679 = vld [vmem:[#allocation11 + $0x290] sm:$0xff]
    %v1680 = vld [vmem:[#allocation11 + $0x298] sm:$0xff]
    %v1681 = vld [vmem:[#allocation11 + $0x2a0] sm:$0xff]
    %v1682 = vld [vmem:[#allocation11 + $0x2a8] sm:$0xff]
    %v1683 = vld [vmem:[#allocation11 + $0x2b0] sm:$0xff]
    %v1684 = vld [vmem:[#allocation11 + $0x2b8] sm:$0xff]
    %v1685 = vld [vmem:[#allocation11 + $0x2c0] sm:$0xff]
    %v1686 = vld [vmem:[#allocation11 + $0x2c8] sm:$0xff]
    %v1687 = vld [vmem:[#allocation11 + $0x2d0] sm:$0xff]
    %v1688 = vld [vmem:[#allocation11 + $0x2d8] sm:$0xff]
    %v1689 = vld [vmem:[#allocation11 + $0x2e0] sm:$0xff]
    %v1690 = vld [vmem:[#allocation11 + $0x2e8] sm:$0xff]
    %v1691 = vld [vmem:[#allocation11 + $0x2f0] sm:$0xff]
    %v1692 = vld [vmem:[#allocation11 + $0x2f8] sm:$0xff]
    %v1693 = vld [vmem:[#allocation11 + $0x300] sm:$0xff]
    %v1694 = vld [vmem:[#allocation11 + $0x308] sm:$0xff]
    %v1695 = vld [vmem:[#allocation11 + $0x310] sm:$0xff]
    %v1696 = vld [vmem:[#allocation11 + $0x318] sm:$0xff]
    %v1697 = vld [vmem:[#allocation11 + $0x320] sm:$0xff]
    %v1698 = vld [vmem:[#allocation11 + $0x328] sm:$0xff]
    %v1699 = vld [vmem:[#allocation11 + $0x330] sm:$0xff]
    %v1700 = vld [vmem:[#allocation11 + $0x338] sm:$0xff]
    %v1701 = vld [vmem:[#allocation11 + $0x340] sm:$0xff]
    %v1702 = vld [vmem:[#allocation11 + $0x348] sm:$0xff]
    %v1703 = vld [vmem:[#allocation11 + $0x350] sm:$0xff]
    %v1704 = vld [vmem:[#allocation11 + $0x358] sm:$0xff]
    %v1705 = vld [vmem:[#allocation11 + $0x360] sm:$0xff]
    %v1706 = vld [vmem:[#allocation11 + $0x368] sm:$0xff]
    %v1707 = vld [vmem:[#allocation11 + $0x370] sm:$0xff]
    %v1708 = vld [vmem:[#allocation11 + $0x378] sm:$0xff]
    %v1709 = vld [vmem:[#allocation11 + $0x380] sm:$0xff]
    %v1710 = vld [vmem:[#allocation11 + $0x388] sm:$0xff]
    %v1711 = vld [vmem:[#allocation11 + $0x390] sm:$0xff]
    %v1712 = vld [vmem:[#allocation11 + $0x398] sm:$0xff]
    %v1713 = vld [vmem:[#allocation11 + $0x3a0] sm:$0xff]
    %v1714 = vld [vmem:[#allocation11 + $0x3a8] sm:$0xff]
    %v1715 = vld [vmem:[#allocation11 + $0x3b0] sm:$0xff]
    %v1716 = vld [vmem:[#allocation11 + $0x3b8] sm:$0xff]
    %v1717 = vld [vmem:[#allocation11 + $0x3c0] sm:$0xff]
    %v1718 = vld [vmem:[#allocation11 + $0x3c8] sm:$0xff]
    %v1719 = vld [vmem:[#allocation11 + $0x3d0] sm:$0xff]
    %v1720 = vld [vmem:[#allocation11 + $0x3d8] sm:$0xff]
    %v1721 = vld [vmem:[#allocation11 + $0x3e0] sm:$0xff]
    %v1722 = vld [vmem:[#allocation11 + $0x3e8] sm:$0xff]
    %v1723 = vld [vmem:[#allocation11 + $0x3f0] sm:$0xff]
    %v1724 = vld [vmem:[#allocation11 + $0x3f8] sm:$0xff]
    %v1725 = vld [vmem:[#allocation11 + $0x400] sm:$0xff]
    %v1726 = vld [vmem:[#allocation11 + $0x408] sm:$0xff]
    %v1727 = vld [vmem:[#allocation11 + $0x410] sm:$0xff]
    %v1728 = vld [vmem:[#allocation11 + $0x418] sm:$0xff]
    %v1729 = vld [vmem:[#allocation11 + $0x420] sm:$0xff]
    %v1730 = vld [vmem:[#allocation11 + $0x428] sm:$0xff]
    %v1731 = vld [vmem:[#allocation11 + $0x430] sm:$0xff]
    %v1732 = vld [vmem:[#allocation11 + $0x438] sm:$0xff]
    %v1733 = vld [vmem:[#allocation11 + $0x440] sm:$0xff]
    %v1734 = vld [vmem:[#allocation11 + $0x448] sm:$0xff]
    %v1735 = vld [vmem:[#allocation11 + $0x450] sm:$0xff]
    %v1736 = vld [vmem:[#allocation11 + $0x458] sm:$0xff]
    %v1737 = vld [vmem:[#allocation11 + $0x460] sm:$0xff]
    %v1738 = vld [vmem:[#allocation11 + $0x468] sm:$0xff]
    %v1739 = vld [vmem:[#allocation11 + $0x470] sm:$0xff]
    %v1740 = vld [vmem:[#allocation11 + $0x478] sm:$0xff]
    %v1741 = vld [vmem:[#allocation11 + $0x480] sm:$0xff]
    %v1742 = vld [vmem:[#allocation11 + $0x488] sm:$0xff]
    %v1743 = vld [vmem:[#allocation11 + $0x490] sm:$0xff]
    %v1744 = vld [vmem:[#allocation11 + $0x498] sm:$0xff]
    %v1745 = vld [vmem:[#allocation11 + $0x4a0] sm:$0xff]
    %v1746 = vld [vmem:[#allocation11 + $0x4a8] sm:$0xff]
    %v1747 = vld [vmem:[#allocation11 + $0x4b0] sm:$0xff]
    %v1748 = vld [vmem:[#allocation11 + $0x4b8] sm:$0xff]
    %v1749 = vld [vmem:[#allocation11 + $0x4c0] sm:$0xff]
    %v1750 = vld [vmem:[#allocation11 + $0x4c8] sm:$0xff]
    %v1751 = vld [vmem:[#allocation11 + $0x4d0] sm:$0xff]
    %v1752 = vld [vmem:[#allocation11 + $0x4d8] sm:$0xff]
    %v1753 = vld [vmem:[#allocation11 + $0x4e0] sm:$0xff]
    %v1754 = vld [vmem:[#allocation11 + $0x4e8] sm:$0xff]
    %v1755 = vld [vmem:[#allocation11 + $0x4f0] sm:$0xff]
    %v1756 = vld [vmem:[#allocation11 + $0x4f8] sm:$0xff]
    %v1757 = vld [vmem:[#allocation11 + $0x500] sm:$0xff]
    %v1758 = vld [vmem:[#allocation11 + $0x508] sm:$0xff]
    %v1759 = vld [vmem:[#allocation11 + $0x510] sm:$0xff]
    %v1760 = vld [vmem:[#allocation11 + $0x518] sm:$0xff]
    %v1761 = vld [vmem:[#allocation11 + $0x520] sm:$0xff]
    %v1762 = vld [vmem:[#allocation11 + $0x528] sm:$0xff]
    %v1763 = vld [vmem:[#allocation11 + $0x530] sm:$0xff]
    %v1764 = vld [vmem:[#allocation11 + $0x538] sm:$0xff]
    %v1765 = vld [vmem:[#allocation11 + $0x540] sm:$0xff]
    %v1766 = vld [vmem:[#allocation11 + $0x548] sm:$0xff]
    %v1767 = vld [vmem:[#allocation11 + $0x550] sm:$0xff]
    %v1768 = vld [vmem:[#allocation11 + $0x558] sm:$0xff]
    %v1769 = vld [vmem:[#allocation11 + $0x560] sm:$0xff]
    %v1770 = vld [vmem:[#allocation11 + $0x568] sm:$0xff]
    %v1771 = vld [vmem:[#allocation11 + $0x570] sm:$0xff]
    %v1772 = vld [vmem:[#allocation11 + $0x578] sm:$0xff]
    %v1773 = vld [vmem:[#allocation11 + $0x580] sm:$0xff]
    %v1774 = vld [vmem:[#allocation11 + $0x588] sm:$0xff]
    %v1775 = vld [vmem:[#allocation11 + $0x590] sm:$0xff]
    %v1776 = vld [vmem:[#allocation11 + $0x598] sm:$0xff]
    %v1777 = vld [vmem:[#allocation11 + $0x5a0] sm:$0xff]
    %v1778 = vld [vmem:[#allocation11 + $0x5a8] sm:$0xff]
    %v1779 = vld [vmem:[#allocation11 + $0x5b0] sm:$0xff]
    %v1780 = vld [vmem:[#allocation11 + $0x5b8] sm:$0xff]
    %v1781 = vld [vmem:[#allocation11 + $0x5c0] sm:$0xff]
    %v1782 = vld [vmem:[#allocation11 + $0x5c8] sm:$0xff]
    %v1783 = vld [vmem:[#allocation11 + $0x5d0] sm:$0xff]
    %v1784 = vld [vmem:[#allocation11 + $0x5d8] sm:$0xff]
    %v1785 = vld [vmem:[#allocation11 + $0x5e0] sm:$0xff]
    %v1786 = vld [vmem:[#allocation11 + $0x5e8] sm:$0xff]
    %v1787 = vld [vmem:[#allocation11 + $0x5f0] sm:$0xff]
    %v1788 = vld [vmem:[#allocation11 + $0x5f8] sm:$0xff]
    %v1789 = vld [vmem:[#allocation11 + $0x600] sm:$0xff]
    %v1790 = vld [vmem:[#allocation11 + $0x608] sm:$0xff]
    %v1791 = vld [vmem:[#allocation11 + $0x610] sm:$0xff]
    %v1792 = vld [vmem:[#allocation11 + $0x618] sm:$0xff]
    %v1793 = vld [vmem:[#allocation11 + $0x620] sm:$0xff]
    %v1794 = vld [vmem:[#allocation11 + $0x628] sm:$0xff]
    %v1795 = vld [vmem:[#allocation11 + $0x630] sm:$0xff]
    %v1796 = vld [vmem:[#allocation11 + $0x638] sm:$0xff]
    %v1797 = vld [vmem:[#allocation11 + $0x640] sm:$0xff]
    %v1798 = vld [vmem:[#allocation11 + $0x648] sm:$0xff]
    %v1799 = vld [vmem:[#allocation11 + $0x650] sm:$0xff]
    %v1800 = vld [vmem:[#allocation11 + $0x658] sm:$0xff]
    %v1801 = vld [vmem:[#allocation11 + $0x660] sm:$0xff]
    %v1802 = vld [vmem:[#allocation11 + $0x668] sm:$0xff]
    %v1803 = vld [vmem:[#allocation11 + $0x670] sm:$0xff]
    %v1804 = vld [vmem:[#allocation11 + $0x678] sm:$0xff]
    %v1805 = vld [vmem:[#allocation11 + $0x680] sm:$0xff]
    %v1806 = vld [vmem:[#allocation11 + $0x688] sm:$0xff]
    %v1807 = vld [vmem:[#allocation11 + $0x690] sm:$0xff]
    %v1808 = vld [vmem:[#allocation11 + $0x698] sm:$0xff]
    %v1809 = vld [vmem:[#allocation11 + $0x6a0] sm:$0xff]
    %v1810 = vld [vmem:[#allocation11 + $0x6a8] sm:$0xff]
    %v1811 = vld [vmem:[#allocation11 + $0x6b0] sm:$0xff]
    %v1812 = vld [vmem:[#allocation11 + $0x6b8] sm:$0xff]
    %v1813 = vld [vmem:[#allocation11 + $0x6c0] sm:$0xff]
    %v1814 = vld [vmem:[#allocation11 + $0x6c8] sm:$0xff]
    %v1815 = vld [vmem:[#allocation11 + $0x6d0] sm:$0xff]
    %v1816 = vld [vmem:[#allocation11 + $0x6d8] sm:$0xff]
    %v1817 = vld [vmem:[#allocation11 + $0x6e0] sm:$0xff]
    %v1818 = vld [vmem:[#allocation11 + $0x6e8] sm:$0xff]
    %v1819 = vld [vmem:[#allocation11 + $0x6f0] sm:$0xff]
    %v1820 = vld [vmem:[#allocation11 + $0x6f8] sm:$0xff]
    %v1821 = vld [vmem:[#allocation11 + $0x700] sm:$0xff]
    %v1822 = vld [vmem:[#allocation11 + $0x708] sm:$0xff]
    %v1823 = vld [vmem:[#allocation11 + $0x710] sm:$0xff]
    %v1824 = vld [vmem:[#allocation11 + $0x718] sm:$0xff]
    %v1825 = vld [vmem:[#allocation11 + $0x720] sm:$0xff]
    %v1826 = vld [vmem:[#allocation11 + $0x728] sm:$0xff]
    %v1827 = vld [vmem:[#allocation11 + $0x730] sm:$0xff]
    %v1828 = vld [vmem:[#allocation11 + $0x738] sm:$0xff]
    %v1829 = vld [vmem:[#allocation11 + $0x740] sm:$0xff]
    %v1830 = vld [vmem:[#allocation11 + $0x748] sm:$0xff]
    %v1831 = vld [vmem:[#allocation11 + $0x750] sm:$0xff]
    %v1832 = vld [vmem:[#allocation11 + $0x758] sm:$0xff]
    %v1833 = vld [vmem:[#allocation11 + $0x760] sm:$0xff]
    %v1834 = vld [vmem:[#allocation11 + $0x768] sm:$0xff]
    %v1835 = vld [vmem:[#allocation11 + $0x770] sm:$0xff]
    %v1836 = vld [vmem:[#allocation11 + $0x778] sm:$0xff]
    %v1837 = vld [vmem:[#allocation11 + $0x780] sm:$0xff]
    %v1838 = vld [vmem:[#allocation11 + $0x788] sm:$0xff]
    %v1839 = vld [vmem:[#allocation11 + $0x790] sm:$0xff]
    %v1840 = vld [vmem:[#allocation11 + $0x798] sm:$0xff]
    %v1841 = vld [vmem:[#allocation11 + $0x7a0] sm:$0xff]
    %v1842 = vld [vmem:[#allocation11 + $0x7a8] sm:$0xff]
    %v1843 = vld [vmem:[#allocation11 + $0x7b0] sm:$0xff]
    %v1844 = vld [vmem:[#allocation11 + $0x7b8] sm:$0xff]
    %v1845 = vld [vmem:[#allocation11 + $0x7c0] sm:$0xff]
    %v1846 = vld [vmem:[#allocation11 + $0x7c8] sm:$0xff]
    %v1847 = vld [vmem:[#allocation11 + $0x7d0] sm:$0xff]
    %v1848 = vld [vmem:[#allocation11 + $0x7d8] sm:$0xff]
    %v1849 = vld [vmem:[#allocation11 + $0x7e0] sm:$0xff]
    %v1850 = vld [vmem:[#allocation11 + $0x7e8] sm:$0xff]
    %v1851 = vld [vmem:[#allocation11 + $0x7f0] sm:$0xff]
    %v1852 = vld [vmem:[#allocation11 + $0x7f8] sm:$0xff]
    %v1853 = vld [vmem:[#allocation11 + $0x800] sm:$0xff]
    %v1854 = vld [vmem:[#allocation11 + $0x808] sm:$0xff]
    %v1855 = vld [vmem:[#allocation11 + $0x810] sm:$0xff]
    %v1856 = vld [vmem:[#allocation11 + $0x818] sm:$0xff]
    %v1857 = vld [vmem:[#allocation11 + $0x820] sm:$0xff]
    %v1858 = vld [vmem:[#allocation11 + $0x828] sm:$0xff]
    %v1859 = vld [vmem:[#allocation11 + $0x830] sm:$0xff]
    %v1860 = vld [vmem:[#allocation11 + $0x838] sm:$0xff]
    %v1861 = vld [vmem:[#allocation11 + $0x840] sm:$0xff]
    %v1862 = vld [vmem:[#allocation11 + $0x848] sm:$0xff]
    %v1863 = vld [vmem:[#allocation11 + $0x850] sm:$0xff]
    %v1864 = vld [vmem:[#allocation11 + $0x858] sm:$0xff]
    %v1865 = vld [vmem:[#allocation11 + $0x860] sm:$0xff]
    %v1866 = vld [vmem:[#allocation11 + $0x868] sm:$0xff]
    %v1867 = vld [vmem:[#allocation11 + $0x870] sm:$0xff]
    %v1868 = vld [vmem:[#allocation11 + $0x878] sm:$0xff]
    %v1869 = vld [vmem:[#allocation11 + $0x880] sm:$0xff]
    %v1870 = vld [vmem:[#allocation11 + $0x888] sm:$0xff]
    %v1871 = vld [vmem:[#allocation11 + $0x890] sm:$0xff]
    %v1872 = vld [vmem:[#allocation11 + $0x898] sm:$0xff]
    %v1873 = vld [vmem:[#allocation11 + $0x8a0] sm:$0xff]
    %v1874 = vld [vmem:[#allocation11 + $0x8a8] sm:$0xff]
    %v1875 = vld [vmem:[#allocation11 + $0x8b0] sm:$0xff]
    %v1876 = vld [vmem:[#allocation11 + $0x8b8] sm:$0xff]
    %v1877 = vld [vmem:[#allocation11 + $0x8c0] sm:$0xff]
    %v1878 = vld [vmem:[#allocation11 + $0x8c8] sm:$0xff]
    %v1879 = vld [vmem:[#allocation11 + $0x8d0] sm:$0xff]
    %v1880 = vld [vmem:[#allocation11 + $0x8d8] sm:$0xff]
    %v1881 = vld [vmem:[#allocation11 + $0x8e0] sm:$0xff]
    %v1882 = vld [vmem:[#allocation11 + $0x8e8] sm:$0xff]
    %v1883 = vld [vmem:[#allocation11 + $0x8f0] sm:$0xff]
    %v1884 = vld [vmem:[#allocation11 + $0x8f8] sm:$0xff]
    %v1885 = vld [vmem:[#allocation11 + $0x900] sm:$0xff]
    %v1886 = vld [vmem:[#allocation11 + $0x908] sm:$0xff]
    %v1887 = vld [vmem:[#allocation11 + $0x910] sm:$0xff]
    %v1888 = vld [vmem:[#allocation11 + $0x918] sm:$0xff]
    %v1889 = vld [vmem:[#allocation11 + $0x920] sm:$0xff]
    %v1890 = vld [vmem:[#allocation11 + $0x928] sm:$0xff]
    %v1891 = vld [vmem:[#allocation11 + $0x930] sm:$0xff]
    %v1892 = vld [vmem:[#allocation11 + $0x938] sm:$0xff]
    %v1893 = vld [vmem:[#allocation11 + $0x940] sm:$0xff]
    %v1894 = vld [vmem:[#allocation11 + $0x948] sm:$0xff]
    %v1895 = vld [vmem:[#allocation11 + $0x950] sm:$0xff]
    %v1896 = vld [vmem:[#allocation11 + $0x958] sm:$0xff]
    %v1897 = vld [vmem:[#allocation11 + $0x960] sm:$0xff]
    %v1898 = vld [vmem:[#allocation11 + $0x968] sm:$0xff]
    %v1899 = vld [vmem:[#allocation11 + $0x970] sm:$0xff]
    %v1900 = vld [vmem:[#allocation11 + $0x978] sm:$0xff]
    %v1901 = vld [vmem:[#allocation11 + $0x980] sm:$0xff]
    %v1902 = vld [vmem:[#allocation11 + $0x988] sm:$0xff]
    %v1903 = vld [vmem:[#allocation11 + $0x990] sm:$0xff]
    %v1904 = vld [vmem:[#allocation11 + $0x998] sm:$0xff]
    %v1905 = vld [vmem:[#allocation11 + $0x9a0] sm:$0xff]
    %v1906 = vld [vmem:[#allocation11 + $0x9a8] sm:$0xff]
    %v1907 = vld [vmem:[#allocation11 + $0x9b0] sm:$0xff]
    %v1908 = vld [vmem:[#allocation11 + $0x9b8] sm:$0xff]
    %v1909 = vld [vmem:[#allocation11 + $0x9c0] sm:$0xff]
    %v1910 = vld [vmem:[#allocation11 + $0x9c8] sm:$0xff]
    %v1911 = vld [vmem:[#allocation11 + $0x9d0] sm:$0xff]
    %v1912 = vld [vmem:[#allocation11 + $0x9d8] sm:$0xff]
    %v1913 = vld [vmem:[#allocation11 + $0x9e0] sm:$0xff]
    %v1914 = vld [vmem:[#allocation11 + $0x9e8] sm:$0xff]
    %v1915 = vld [vmem:[#allocation11 + $0x9f0] sm:$0xff]
    %v1916 = vld [vmem:[#allocation11 + $0x9f8] sm:$0xff]
    %v1917 = vld [vmem:[#allocation11 + $0xa00] sm:$0xff]
    %v1918 = vld [vmem:[#allocation11 + $0xa08] sm:$0xff]
    %v1919 = vld [vmem:[#allocation11 + $0xa10] sm:$0xff]
    %v1920 = vld [vmem:[#allocation11 + $0xa18] sm:$0xff]
    %v1921 = vld [vmem:[#allocation11 + $0xa20] sm:$0xff]
    %v1922 = vld [vmem:[#allocation11 + $0xa28] sm:$0xff]
    %v1923 = vld [vmem:[#allocation11 + $0xa30] sm:$0xff]
    %v1924 = vld [vmem:[#allocation11 + $0xa38] sm:$0xff]
    %v1925 = vld [vmem:[#allocation11 + $0xa40] sm:$0xff]
    %v1926 = vld [vmem:[#allocation11 + $0xa48] sm:$0xff]
    %v1927 = vld [vmem:[#allocation11 + $0xa50] sm:$0xff]
    %v1928 = vld [vmem:[#allocation11 + $0xa58] sm:$0xff]
    %v1929 = vld [vmem:[#allocation11 + $0xa60] sm:$0xff]
    %v1930 = vld [vmem:[#allocation11 + $0xa68] sm:$0xff]
    %v1931 = vld [vmem:[#allocation11 + $0xa70] sm:$0xff]
    %v1932 = vld [vmem:[#allocation11 + $0xa78] sm:$0xff]
    %v1933 = vld [vmem:[#allocation11 + $0xa80] sm:$0xff]
    %v1934 = vld [vmem:[#allocation11 + $0xa88] sm:$0xff]
    %v1935 = vld [vmem:[#allocation11 + $0xa90] sm:$0xff]
    %v1936 = vld [vmem:[#allocation11 + $0xa98] sm:$0xff]
    %v1937 = vld [vmem:[#allocation11 + $0xaa0] sm:$0xff]
    %v1938 = vld [vmem:[#allocation11 + $0xaa8] sm:$0xff]
    %v1939 = vld [vmem:[#allocation11 + $0xab0] sm:$0xff]
    %v1940 = vld [vmem:[#allocation11 + $0xab8] sm:$0xff]
    %v1941 = vld [vmem:[#allocation11 + $0xac0] sm:$0xff]
    %v1942 = vld [vmem:[#allocation11 + $0xac8] sm:$0xff]
    %v1943 = vld [vmem:[#allocation11 + $0xad0] sm:$0xff]
    %v1944 = vld [vmem:[#allocation11 + $0xad8] sm:$0xff]
    %v1945 = vld [vmem:[#allocation11 + $0xae0] sm:$0xff]
    %v1946 = vld [vmem:[#allocation11 + $0xae8] sm:$0xff]
    %v1947 = vld [vmem:[#allocation11 + $0xaf0] sm:$0xff]
    %v1948 = vld [vmem:[#allocation11 + $0xaf8] sm:$0xff]
    %v1949 = vld [vmem:[#allocation11 + $0xb00] sm:$0xff]
    %v1950 = vld [vmem:[#allocation11 + $0xb08] sm:$0xff]
    %v1951 = vld [vmem:[#allocation11 + $0xb10] sm:$0xff]
    %v1952 = vld [vmem:[#allocation11 + $0xb18] sm:$0xff]
    %v1953 = vld [vmem:[#allocation11 + $0xb20] sm:$0xff]
    %v1954 = vld [vmem:[#allocation11 + $0xb28] sm:$0xff]
    %v1955 = vld [vmem:[#allocation11 + $0xb30] sm:$0xff]
    %v1956 = vld [vmem:[#allocation11 + $0xb38] sm:$0xff]
    %v1957 = vld [vmem:[#allocation11 + $0xb40] sm:$0xff]
    %v1958 = vld [vmem:[#allocation11 + $0xb48] sm:$0xff]
    %v1959 = vld [vmem:[#allocation11 + $0xb50] sm:$0xff]
    %v1960 = vld [vmem:[#allocation11 + $0xb58] sm:$0xff]
    %v1961 = vld [vmem:[#allocation11 + $0xb60] sm:$0xff]
    %v1962 = vld [vmem:[#allocation11 + $0xb68] sm:$0xff]
    %v1963 = vld [vmem:[#allocation11 + $0xb70] sm:$0xff]
    %v1964 = vld [vmem:[#allocation11 + $0xb78] sm:$0xff]
    %v1965 = vld [vmem:[#allocation11 + $0xb80] sm:$0xff]
    %v1966 = vld [vmem:[#allocation11 + $0xb88] sm:$0xff]
    %v1967 = vld [vmem:[#allocation11 + $0xb90] sm:$0xff]
    %v1968 = vld [vmem:[#allocation11 + $0xb98] sm:$0xff]
    %v1969 = vld [vmem:[#allocation11 + $0xba0] sm:$0xff]
    %v1970 = vld [vmem:[#allocation11 + $0xba8] sm:$0xff]
    %v1971 = vld [vmem:[#allocation11 + $0xbb0] sm:$0xff]
    %v1972 = vld [vmem:[#allocation11 + $0xbb8] sm:$0xff]
    %v1973 = vld [vmem:[#allocation11 + $0xbc0] sm:$0xff]
    %v1974 = vld [vmem:[#allocation11 + $0xbc8] sm:$0xff]
    %v1975 = vld [vmem:[#allocation11 + $0xbd0] sm:$0xff]
    %v1976 = vld [vmem:[#allocation11 + $0xbd8] sm:$0xff]
    %v1977 = vld [vmem:[#allocation11 + $0xbe0] sm:$0xff]
    %v1978 = vld [vmem:[#allocation11 + $0xbe8] sm:$0xff]
    %v1979 = vld [vmem:[#allocation11 + $0xbf0] sm:$0xff]
    %v1980 = vld [vmem:[#allocation11 + $0xbf8] sm:$0xff]
    %v1981 = vld [vmem:[#allocation11 + $0xc00] sm:$0xff]
    %v1982 = vld [vmem:[#allocation11 + $0xc08] sm:$0xff]
    %v1983 = vld [vmem:[#allocation11 + $0xc10] sm:$0xff]
    %v1984 = vld [vmem:[#allocation11 + $0xc18] sm:$0xff]
    %v1985 = vld [vmem:[#allocation11 + $0xc20] sm:$0xff]
    %v1986 = vld [vmem:[#allocation11 + $0xc28] sm:$0xff]
    %v1987 = vld [vmem:[#allocation11 + $0xc30] sm:$0xff]
    %v1988 = vld [vmem:[#allocation11 + $0xc38] sm:$0xff]
    %v1989 = vld [vmem:[#allocation11 + $0xc40] sm:$0xff]
    %v1990 = vld [vmem:[#allocation11 + $0xc48] sm:$0xff]
    %v1991 = vld [vmem:[#allocation11 + $0xc50] sm:$0xff]
    %v1992 = vld [vmem:[#allocation11 + $0xc58] sm:$0xff]
    %v1993 = vld [vmem:[#allocation11 + $0xc60] sm:$0xff]
    %v1994 = vld [vmem:[#allocation11 + $0xc68] sm:$0xff]
    %v1995 = vld [vmem:[#allocation11 + $0xc70] sm:$0xff]
    %v1996 = vld [vmem:[#allocation11 + $0xc78] sm:$0xff]
    %v1997 = vld [vmem:[#allocation11 + $0xc80] sm:$0xff]
    %v1998 = vld [vmem:[#allocation11 + $0xc88] sm:$0xff]
    %v1999 = vld [vmem:[#allocation11 + $0xc90] sm:$0xff]
    %v2000 = vld [vmem:[#allocation11 + $0xc98] sm:$0xff]
    %v2001 = vld [vmem:[#allocation11 + $0xca0] sm:$0xff]
    %v2002 = vld [vmem:[#allocation11 + $0xca8] sm:$0xff]
    %v2003 = vld [vmem:[#allocation11 + $0xcb0] sm:$0xff]
    %v2004 = vld [vmem:[#allocation11 + $0xcb8] sm:$0xff]
    %v2005 = vld [vmem:[#allocation11 + $0xcc0] sm:$0xff]
    %v2006 = vld [vmem:[#allocation11 + $0xcc8] sm:$0xff]
    %v2007 = vld [vmem:[#allocation11 + $0xcd0] sm:$0xff]
    %v2008 = vld [vmem:[#allocation11 + $0xcd8] sm:$0xff]
    %v2009 = vld [vmem:[#allocation11 + $0xce0] sm:$0xff]
    %v2010 = vld [vmem:[#allocation11 + $0xce8] sm:$0xff]
    %v2011 = vld [vmem:[#allocation11 + $0xcf0] sm:$0xff]
    %v2012 = vld [vmem:[#allocation11 + $0xcf8] sm:$0xff]
    %v2013 = vld [vmem:[#allocation11 + $0xd00] sm:$0xff]
    %v2014 = vld [vmem:[#allocation11 + $0xd08] sm:$0xff]
    %v2015 = vld [vmem:[#allocation11 + $0xd10] sm:$0xff]
    %v2016 = vld [vmem:[#allocation11 + $0xd18] sm:$0xff]
    %v2017 = vld [vmem:[#allocation11 + $0xd20] sm:$0xff]
    %v2018 = vld [vmem:[#allocation11 + $0xd28] sm:$0xff]
    %v2019 = vld [vmem:[#allocation11 + $0xd30] sm:$0xff]
    %v2020 = vld [vmem:[#allocation11 + $0xd38] sm:$0xff]
    %v2021 = vld [vmem:[#allocation11 + $0xd40] sm:$0xff]
    %v2022 = vld [vmem:[#allocation11 + $0xd48] sm:$0xff]
    %v2023 = vld [vmem:[#allocation11 + $0xd50] sm:$0xff]
    %v2024 = vld [vmem:[#allocation11 + $0xd58] sm:$0xff]
    %v2025 = vld [vmem:[#allocation11 + $0xd60] sm:$0xff]
    %v2026 = vld [vmem:[#allocation11 + $0xd68] sm:$0xff]
    %v2027 = vld [vmem:[#allocation11 + $0xd70] sm:$0xff]
    %v2028 = vld [vmem:[#allocation11 + $0xd78] sm:$0xff]
    %v2029 = vld [vmem:[#allocation11 + $0xd80] sm:$0xff]
    %v2030 = vld [vmem:[#allocation11 + $0xd88] sm:$0xff]
    %v2031 = vld [vmem:[#allocation11 + $0xd90] sm:$0xff]
    %v2032 = vld [vmem:[#allocation11 + $0xd98] sm:$0xff]
    %v2033 = vld [vmem:[#allocation11 + $0xda0] sm:$0xff]
    %v2034 = vld [vmem:[#allocation11 + $0xda8] sm:$0xff]
    %v2035 = vld [vmem:[#allocation11 + $0xdb0] sm:$0xff]
    %v2036 = vld [vmem:[#allocation11 + $0xdb8] sm:$0xff]
    %v2037 = vld [vmem:[#allocation11 + $0xdc0] sm:$0xff]
    %v2038 = vld [vmem:[#allocation11 + $0xdc8] sm:$0xff]
    %v2039 = vld [vmem:[#allocation11 + $0xdd0] sm:$0xff]
    %v2040 = vld [vmem:[#allocation11 + $0xdd8] sm:$0xff]
    %v2041 = vld [vmem:[#allocation11 + $0xde0] sm:$0xff]
    %v2042 = vld [vmem:[#allocation11 + $0xde8] sm:$0xff]
    %v2043 = vld [vmem:[#allocation11 + $0xdf0] sm:$0xff]
    %v2044 = vld [vmem:[#allocation11 + $0xdf8] sm:$0xff]
    %v2045 = vld [vmem:[#allocation11 + $0xe00] sm:$0xff]
    %v2046 = vld [vmem:[#allocation11 + $0xe08] sm:$0xff]
    %v2047 = vld [vmem:[#allocation11 + $0xe10] sm:$0xff]
    %v2048 = vld [vmem:[#allocation11 + $0xe18] sm:$0xff]
    %v2049 = vld [vmem:[#allocation11 + $0xe20] sm:$0xff]
    %v2050 = vld [vmem:[#allocation11 + $0xe28] sm:$0xff]
    %v2051 = vld [vmem:[#allocation11 + $0xe30] sm:$0xff]
    %v2052 = vld [vmem:[#allocation11 + $0xe38] sm:$0xff]
    %v2053 = vld [vmem:[#allocation11 + $0xe40] sm:$0xff]
    %v2054 = vld [vmem:[#allocation11 + $0xe48] sm:$0xff]
    %v2055 = vld [vmem:[#allocation11 + $0xe50] sm:$0xff]
    %v2056 = vld [vmem:[#allocation11 + $0xe58] sm:$0xff]
    %v2057 = vld [vmem:[#allocation11 + $0xe60] sm:$0xff]
    %v2058 = vld [vmem:[#allocation11 + $0xe68] sm:$0xff]
    %v2059 = vld [vmem:[#allocation11 + $0xe70] sm:$0xff]
    %v2060 = vld [vmem:[#allocation11 + $0xe78] sm:$0xff]
    %v2061 = vld [vmem:[#allocation11 + $0xe80] sm:$0xff]
    %v2062 = vld [vmem:[#allocation11 + $0xe88] sm:$0xff]
    %v2063 = vld [vmem:[#allocation11 + $0xe90] sm:$0xff]
    %v2064 = vld [vmem:[#allocation11 + $0xe98] sm:$0xff]
    %v2065 = vld [vmem:[#allocation11 + $0xea0] sm:$0xff]
    %v2066 = vld [vmem:[#allocation11 + $0xea8] sm:$0xff]
    %v2067 = vld [vmem:[#allocation11 + $0xeb0] sm:$0xff]
    %v2068 = vld [vmem:[#allocation11 + $0xeb8] sm:$0xff]
    %v2069 = vld [vmem:[#allocation11 + $0xec0] sm:$0xff]
    %v2070 = vld [vmem:[#allocation11 + $0xec8] sm:$0xff]
    %v2071 = vld [vmem:[#allocation11 + $0xed0] sm:$0xff]
    %v2072 = vld [vmem:[#allocation11 + $0xed8] sm:$0xff]
    %v2073 = vld [vmem:[#allocation11 + $0xee0] sm:$0xff]
    %v2074 = vld [vmem:[#allocation11 + $0xee8] sm:$0xff]
    %v2075 = vld [vmem:[#allocation11 + $0xef0] sm:$0xff]
    %v2076 = vld [vmem:[#allocation11 + $0xef8] sm:$0xff]
    %v2077 = vld [vmem:[#allocation11 + $0xf00] sm:$0xff]
    %v2078 = vld [vmem:[#allocation11 + $0xf08] sm:$0xff]
    %v2079 = vld [vmem:[#allocation11 + $0xf10] sm:$0xff]
    %v2080 = vld [vmem:[#allocation11 + $0xf18] sm:$0xff]
    %v2081 = vld [vmem:[#allocation11 + $0xf20] sm:$0xff]
    %v2082 = vld [vmem:[#allocation11 + $0xf28] sm:$0xff]
    %v2083 = vld [vmem:[#allocation11 + $0xf30] sm:$0xff]
    %v2084 = vld [vmem:[#allocation11 + $0xf38] sm:$0xff]
    %v2085 = vld [vmem:[#allocation11 + $0xf40] sm:$0xff]
    %v2086 = vld [vmem:[#allocation11 + $0xf48] sm:$0xff]
    %v2087 = vld [vmem:[#allocation11 + $0xf50] sm:$0xff]
    %v2088 = vld [vmem:[#allocation11 + $0xf58] sm:$0xff]
    %v2089 = vld [vmem:[#allocation11 + $0xf60] sm:$0xff]
    %v2090 = vld [vmem:[#allocation11 + $0xf68] sm:$0xff]
    %v2091 = vld [vmem:[#allocation11 + $0xf70] sm:$0xff]
    %v2092 = vld [vmem:[#allocation11 + $0xf78] sm:$0xff]
    %v2093 = vld [vmem:[#allocation11 + $0xf80] sm:$0xff]
    %v2094 = vld [vmem:[#allocation11 + $0xf88] sm:$0xff]
    %v2095 = vld [vmem:[#allocation11 + $0xf90] sm:$0xff]
    %v2096 = vld [vmem:[#allocation11 + $0xf98] sm:$0xff]
    %v2097 = vld [vmem:[#allocation11 + $0xfa0] sm:$0xff]
    %v2098 = vld [vmem:[#allocation11 + $0xfa8] sm:$0xff]
    %v2099 = vld [vmem:[#allocation11 + $0xfb0] sm:$0xff]
    %v2100 = vld [vmem:[#allocation11 + $0xfb8] sm:$0xff]
    %v2101 = vld [vmem:[#allocation11 + $0xfc0] sm:$0xff]
    %v2102 = vld [vmem:[#allocation11 + $0xfc8] sm:$0xff]
    %v2103 = vld [vmem:[#allocation11 + $0xfd0] sm:$0xff]
    %v2104 = vld [vmem:[#allocation11 + $0xfd8] sm:$0xff]
    %v2105 = vld [vmem:[#allocation11 + $0xfe0] sm:$0xff]
    %v2106 = vld [vmem:[#allocation11 + $0xfe8] sm:$0xff]
    %v2107 = vld [vmem:[#allocation11 + $0xff0] sm:$0xff]
    %v2108 = vld [vmem:[#allocation11 + $0xff8] sm:$0xff]
    %v2109 = vld [vmem:[#allocation11 + $0x1000] sm:$0xff]
    %v2110 = vld [vmem:[#allocation11 + $0x1008] sm:$0xff]
    %v2111 = vld [vmem:[#allocation11 + $0x1010] sm:$0xff]
    %v2112 = vld [vmem:[#allocation11 + $0x1018] sm:$0xff]
    %v2113 = vld [vmem:[#allocation11 + $0x1020] sm:$0xff]
    %v2114 = vld [vmem:[#allocation11 + $0x1028] sm:$0xff]
    %v2115 = vld [vmem:[#allocation11 + $0x1030] sm:$0xff]
    %v2116 = vld [vmem:[#allocation11 + $0x1038] sm:$0xff]
    %v2117 = vld [vmem:[#allocation11 + $0x1040] sm:$0xff]
    %v2118 = vld [vmem:[#allocation11 + $0x1048] sm:$0xff]
    %v2119 = vld [vmem:[#allocation11 + $0x1050] sm:$0xff]
    %v2120 = vld [vmem:[#allocation11 + $0x1058] sm:$0xff]
    %v2121 = vld [vmem:[#allocation11 + $0x1060] sm:$0xff]
    %v2122 = vld [vmem:[#allocation11 + $0x1068] sm:$0xff]
    %v2123 = vld [vmem:[#allocation11 + $0x1070] sm:$0xff]
    %v2124 = vld [vmem:[#allocation11 + $0x1078] sm:$0xff]
    %v2125 = vld [vmem:[#allocation11 + $0x1080] sm:$0xff]
    %v2126 = vld [vmem:[#allocation11 + $0x1088] sm:$0xff]
    %v2127 = vld [vmem:[#allocation11 + $0x1090] sm:$0xff]
    %v2128 = vld [vmem:[#allocation11 + $0x1098] sm:$0xff]
    %v2129 = vld [vmem:[#allocation11 + $0x10a0] sm:$0xff]
    %v2130 = vld [vmem:[#allocation11 + $0x10a8] sm:$0xff]
    %v2131 = vld [vmem:[#allocation11 + $0x10b0] sm:$0xff]
    %v2132 = vld [vmem:[#allocation11 + $0x10b8] sm:$0xff]
    %v2133 = vld [vmem:[#allocation11 + $0x10c0] sm:$0xff]
    %v2134 = vld [vmem:[#allocation11 + $0x10c8] sm:$0xff]
    %v2135 = vld [vmem:[#allocation11 + $0x10d0] sm:$0xff]
    %v2136 = vld [vmem:[#allocation11 + $0x10d8] sm:$0xff]
    %v2137 = vld [vmem:[#allocation11 + $0x10e0] sm:$0xff]
    %v2138 = vld [vmem:[#allocation11 + $0x10e8] sm:$0xff]
    %v2139 = vld [vmem:[#allocation11 + $0x10f0] sm:$0xff]
    %v2140 = vld [vmem:[#allocation11 + $0x10f8] sm:$0xff]
    %v2141 = vld [vmem:[#allocation11 + $0x1100] sm:$0xff]
    %v2142 = vld [vmem:[#allocation11 + $0x1108] sm:$0xff]
    %v2143 = vld [vmem:[#allocation11 + $0x1110] sm:$0xff]
    %v2144 = vld [vmem:[#allocation11 + $0x1118] sm:$0xff]
    %v2145 = vld [vmem:[#allocation11 + $0x1120] sm:$0xff]
    %v2146 = vld [vmem:[#allocation11 + $0x1128] sm:$0xff]
    %v2147 = vld [vmem:[#allocation11 + $0x1130] sm:$0xff]
    %v2148 = vld [vmem:[#allocation11 + $0x1138] sm:$0xff]
    %v2149 = vld [vmem:[#allocation11 + $0x1140] sm:$0xff]
    %v2150 = vld [vmem:[#allocation11 + $0x1148] sm:$0xff]
    %v2151 = vld [vmem:[#allocation11 + $0x1150] sm:$0xff]
    %v2152 = vld [vmem:[#allocation11 + $0x1158] sm:$0xff]
    %v2153 = vld [vmem:[#allocation11 + $0x1160] sm:$0xff]
    %v2154 = vld [vmem:[#allocation11 + $0x1168] sm:$0xff]
    %v2155 = vld [vmem:[#allocation11 + $0x1170] sm:$0xff]
    %v2156 = vld [vmem:[#allocation11 + $0x1178] sm:$0xff]
    %v2157 = vld [vmem:[#allocation11 + $0x1180] sm:$0xff]
    %v2158 = vld [vmem:[#allocation11 + $0x1188] sm:$0xff]
    %v2159 = vld [vmem:[#allocation11 + $0x1190] sm:$0xff]
    %v2160 = vld [vmem:[#allocation11 + $0x1198] sm:$0xff]
    %v2161 = vld [vmem:[#allocation11 + $0x11a0] sm:$0xff]
    %v2162 = vld [vmem:[#allocation11 + $0x11a8] sm:$0xff]
    %v2163 = vld [vmem:[#allocation11 + $0x11b0] sm:$0xff]
    %v2164 = vld [vmem:[#allocation11 + $0x11b8] sm:$0xff]
    %v2165 = vld [vmem:[#allocation11 + $0x11c0] sm:$0xff]
    %v2166 = vld [vmem:[#allocation11 + $0x11c8] sm:$0xff]
    %v2167 = vld [vmem:[#allocation11 + $0x11d0] sm:$0xff]
    %v2168 = vld [vmem:[#allocation11 + $0x11d8] sm:$0xff]
    %v2169 = vld [vmem:[#allocation11 + $0x11e0] sm:$0xff]
    %v2170 = vld [vmem:[#allocation11 + $0x11e8] sm:$0xff]
    %v2171 = vld [vmem:[#allocation11 + $0x11f0] sm:$0xff]
    %v2172 = vld [vmem:[#allocation11 + $0x11f8] sm:$0xff]
    %v2173 = vld [vmem:[#allocation11 + $0x1200] sm:$0xff]
    %v2174 = vld [vmem:[#allocation11 + $0x1208] sm:$0xff]
    %v2175 = vld [vmem:[#allocation11 + $0x1210] sm:$0xff]
    %v2176 = vld [vmem:[#allocation11 + $0x1218] sm:$0xff]
    %v2177 = vld [vmem:[#allocation11 + $0x1220] sm:$0xff]
    %v2178 = vld [vmem:[#allocation11 + $0x1228] sm:$0xff]
    %v2179 = vld [vmem:[#allocation11 + $0x1230] sm:$0xff]
    %v2180 = vld [vmem:[#allocation11 + $0x1238] sm:$0xff]
    %v2181 = vld [vmem:[#allocation11 + $0x1240] sm:$0xff]
    %v2182 = vld [vmem:[#allocation11 + $0x1248] sm:$0xff]
    %v2183 = vld [vmem:[#allocation11 + $0x1250] sm:$0xff]
    %v2184 = vld [vmem:[#allocation11 + $0x1258] sm:$0xff]
    %v2185 = vld [vmem:[#allocation11 + $0x1260] sm:$0xff]
    %v2186 = vld [vmem:[#allocation11 + $0x1268] sm:$0xff]
    %v2187 = vld [vmem:[#allocation11 + $0x1270] sm:$0xff]
    %v2188 = vld [vmem:[#allocation11 + $0x1278] sm:$0xff]
    %v2189 = vld [vmem:[#allocation11 + $0x1280] sm:$0xff]
    %v2190 = vld [vmem:[#allocation11 + $0x1288] sm:$0xff]
    %v2191 = vld [vmem:[#allocation11 + $0x1290] sm:$0xff]
    %v2192 = vld [vmem:[#allocation11 + $0x1298] sm:$0xff]
    %v2193 = vld [vmem:[#allocation11 + $0x12a0] sm:$0xff]
    %v2194 = vld [vmem:[#allocation11 + $0x12a8] sm:$0xff]
    %v2195 = vld [vmem:[#allocation11 + $0x12b0] sm:$0xff]
    %v2196 = vld [vmem:[#allocation11 + $0x12b8] sm:$0xff]
    %v2197 = vld [vmem:[#allocation11 + $0x12c0] sm:$0xff]
    %v2198 = vld [vmem:[#allocation11 + $0x12c8] sm:$0xff]
    %v2199 = vld [vmem:[#allocation11 + $0x12d0] sm:$0xff]
    %v2200 = vld [vmem:[#allocation11 + $0x12d8] sm:$0xff]
    %v2201 = vld [vmem:[#allocation11 + $0x12e0] sm:$0xff]
    %v2202 = vld [vmem:[#allocation11 + $0x12e8] sm:$0xff]
    %v2203 = vld [vmem:[#allocation11 + $0x12f0] sm:$0xff]
    %v2204 = vld [vmem:[#allocation11 + $0x12f8] sm:$0xff]
    %v2205 = vld [vmem:[#allocation11 + $0x1300] sm:$0xff]
    %v2206 = vld [vmem:[#allocation11 + $0x1308] sm:$0xff]
    %v2207 = vld [vmem:[#allocation11 + $0x1310] sm:$0xff]
    %v2208 = vld [vmem:[#allocation11 + $0x1318] sm:$0xff]
    %v2209 = vld [vmem:[#allocation11 + $0x1320] sm:$0xff]
    %v2210 = vld [vmem:[#allocation11 + $0x1328] sm:$0xff]
    %v2211 = vld [vmem:[#allocation11 + $0x1330] sm:$0xff]
    %v2212 = vld [vmem:[#allocation11 + $0x1338] sm:$0xff]
    %v2213 = vld [vmem:[#allocation11 + $0x1340] sm:$0xff]
    %v2214 = vld [vmem:[#allocation11 + $0x1348] sm:$0xff]
    %v2215 = vld [vmem:[#allocation11 + $0x1350] sm:$0xff]
    %v2216 = vld [vmem:[#allocation11 + $0x1358] sm:$0xff]
    %v2217 = vld [vmem:[#allocation11 + $0x1360] sm:$0xff]
    %v2218 = vld [vmem:[#allocation11 + $0x1368] sm:$0xff]
    %v2219 = vld [vmem:[#allocation11 + $0x1370] sm:$0xff]
    %v2220 = vld [vmem:[#allocation11 + $0x1378] sm:$0xff]
    %v2221 = vld [vmem:[#allocation11 + $0x1380] sm:$0xff]
    %v2222 = vld [vmem:[#allocation11 + $0x1388] sm:$0xff]
    %v2223 = vld [vmem:[#allocation11 + $0x1390] sm:$0xff]
    %v2224 = vld [vmem:[#allocation11 + $0x1398] sm:$0xff]
    %v2225 = vld [vmem:[#allocation11 + $0x13a0] sm:$0xff]
    %v2226 = vld [vmem:[#allocation11 + $0x13a8] sm:$0xff]
    %v2227 = vld [vmem:[#allocation11 + $0x13b0] sm:$0xff]
    %v2228 = vld [vmem:[#allocation11 + $0x13b8] sm:$0xff]
    %v2229 = vld [vmem:[#allocation11 + $0x13c0] sm:$0xff]
    %v2230 = vld [vmem:[#allocation11 + $0x13c8] sm:$0xff]
    %v2231 = vld [vmem:[#allocation11 + $0x13d0] sm:$0xff]
    %v2232 = vld [vmem:[#allocation11 + $0x13d8] sm:$0xff]
    %v2233 = vld [vmem:[#allocation11 + $0x13e0] sm:$0xff]
    %v2234 = vld [vmem:[#allocation11 + $0x13e8] sm:$0xff]
    %v2235 = vld [vmem:[#allocation11 + $0x13f0] sm:$0xff]
    %v2236 = vld [vmem:[#allocation11 + $0x13f8] sm:$0xff]
    %v2237 = vld [vmem:[#allocation11 + $0x1400] sm:$0xff]
    %v2238 = vld [vmem:[#allocation11 + $0x1408] sm:$0xff]
    %v2239 = vld [vmem:[#allocation11 + $0x1410] sm:$0xff]
    %v2240 = vld [vmem:[#allocation11 + $0x1418] sm:$0xff]
    %v2241 = vld [vmem:[#allocation11 + $0x1420] sm:$0xff]
    %v2242 = vld [vmem:[#allocation11 + $0x1428] sm:$0xff]
    %v2243 = vld [vmem:[#allocation11 + $0x1430] sm:$0xff]
    %v2244 = vld [vmem:[#allocation11 + $0x1438] sm:$0xff]
    %v2245 = vld [vmem:[#allocation11 + $0x1440] sm:$0xff]
    %v2246 = vld [vmem:[#allocation11 + $0x1448] sm:$0xff]
    %v2247 = vld [vmem:[#allocation11 + $0x1450] sm:$0xff]
    %v2248 = vld [vmem:[#allocation11 + $0x1458] sm:$0xff]
    %v2249 = vld [vmem:[#allocation11 + $0x1460] sm:$0xff]
    %v2250 = vld [vmem:[#allocation11 + $0x1468] sm:$0xff]
    %v2251 = vld [vmem:[#allocation11 + $0x1470] sm:$0xff]
    %v2252 = vld [vmem:[#allocation11 + $0x1478] sm:$0xff]
    %v2253 = vld [vmem:[#allocation11 + $0x1480] sm:$0xff]
    %v2254 = vld [vmem:[#allocation11 + $0x1488] sm:$0xff]
    %v2255 = vld [vmem:[#allocation11 + $0x1490] sm:$0xff]
    %v2256 = vld [vmem:[#allocation11 + $0x1498] sm:$0xff]
    %v2257 = vld [vmem:[#allocation11 + $0x14a0] sm:$0xff]
    %v2258 = vld [vmem:[#allocation11 + $0x14a8] sm:$0xff]
    %v2259 = vld [vmem:[#allocation11 + $0x14b0] sm:$0xff]
    %v2260 = vld [vmem:[#allocation11 + $0x14b8] sm:$0xff]
    %v2261 = vld [vmem:[#allocation11 + $0x14c0] sm:$0xff]
    %v2262 = vld [vmem:[#allocation11 + $0x14c8] sm:$0xff]
    %v2263 = vld [vmem:[#allocation11 + $0x14d0] sm:$0xff]
    %v2264 = vld [vmem:[#allocation11 + $0x14d8] sm:$0xff]
    %v2265 = vld [vmem:[#allocation11 + $0x14e0] sm:$0xff]
    %v2266 = vld [vmem:[#allocation11 + $0x14e8] sm:$0xff]
    %v2267 = vld [vmem:[#allocation11 + $0x14f0] sm:$0xff]
    %v2268 = vld [vmem:[#allocation11 + $0x14f8] sm:$0xff]
    %v2269 = vld [vmem:[#allocation11 + $0x1500] sm:$0xff]
    %v2270 = vld [vmem:[#allocation11 + $0x1508] sm:$0xff]
    %v2271 = vld [vmem:[#allocation11 + $0x1510] sm:$0xff]
    %v2272 = vld [vmem:[#allocation11 + $0x1518] sm:$0xff]
    %v2273 = vld [vmem:[#allocation11 + $0x1520] sm:$0xff]
    %v2274 = vld [vmem:[#allocation11 + $0x1528] sm:$0xff]
    %v2275 = vld [vmem:[#allocation11 + $0x1530] sm:$0xff]
    %v2276 = vld [vmem:[#allocation11 + $0x1538] sm:$0xff]
    %v2277 = vld [vmem:[#allocation11 + $0x1540] sm:$0xff]
    %v2278 = vld [vmem:[#allocation11 + $0x1548] sm:$0xff]
    %v2279 = vld [vmem:[#allocation11 + $0x1550] sm:$0xff]
    %v2280 = vld [vmem:[#allocation11 + $0x1558] sm:$0xff]
    %v2281 = vld [vmem:[#allocation11 + $0x1560] sm:$0xff]
    %v2282 = vld [vmem:[#allocation11 + $0x1568] sm:$0xff]
    %v2283 = vld [vmem:[#allocation11 + $0x1570] sm:$0xff]
    %v2284 = vld [vmem:[#allocation11 + $0x1578] sm:$0xff]
    %v2285 = vld [vmem:[#allocation11 + $0x1580] sm:$0xff]
    %v2286 = vld [vmem:[#allocation11 + $0x1588] sm:$0xff]
    %v2287 = vld [vmem:[#allocation11 + $0x1590] sm:$0xff]
    %v2288 = vld [vmem:[#allocation11 + $0x1598] sm:$0xff]
    %v2289 = vld [vmem:[#allocation11 + $0x15a0] sm:$0xff]
    %v2290 = vld [vmem:[#allocation11 + $0x15a8] sm:$0xff]
    %v2291 = vld [vmem:[#allocation11 + $0x15b0] sm:$0xff]
    %v2292 = vld [vmem:[#allocation11 + $0x15b8] sm:$0xff]
    %v2293 = vld [vmem:[#allocation11 + $0x15c0] sm:$0xff]
    %v2294 = vld [vmem:[#allocation11 + $0x15c8] sm:$0xff]
    %v2295 = vld [vmem:[#allocation11 + $0x15d0] sm:$0xff]
    %v2296 = vld [vmem:[#allocation11 + $0x15d8] sm:$0xff]
    %v2297 = vld [vmem:[#allocation11 + $0x15e0] sm:$0xff]
    %v2298 = vld [vmem:[#allocation11 + $0x15e8] sm:$0xff]
    %v2299 = vld [vmem:[#allocation11 + $0x15f0] sm:$0xff]
    %v2300 = vld [vmem:[#allocation11 + $0x15f8] sm:$0xff]
    %v2301 = vld [vmem:[#allocation11 + $0x1600] sm:$0xff]
    %v2302 = vld [vmem:[#allocation11 + $0x1608] sm:$0xff]
    %v2303 = vld [vmem:[#allocation11 + $0x1610] sm:$0xff]
    %v2304 = vld [vmem:[#allocation11 + $0x1618] sm:$0xff]
    %v2305 = vld [vmem:[#allocation11 + $0x1620] sm:$0xff]
    %v2306 = vld [vmem:[#allocation11 + $0x1628] sm:$0xff]
    %v2307 = vld [vmem:[#allocation11 + $0x1630] sm:$0xff]
    %v2308 = vld [vmem:[#allocation11 + $0x1638] sm:$0xff]
    %v2309 = vld [vmem:[#allocation11 + $0x1640] sm:$0xff]
    %v2310 = vld [vmem:[#allocation11 + $0x1648] sm:$0xff]
    %v2311 = vld [vmem:[#allocation11 + $0x1650] sm:$0xff]
    %v2312 = vld [vmem:[#allocation11 + $0x1658] sm:$0xff]
    %v2313 = vld [vmem:[#allocation11 + $0x1660] sm:$0xff]
    %v2314 = vld [vmem:[#allocation11 + $0x1668] sm:$0xff]
    %v2315 = vld [vmem:[#allocation11 + $0x1670] sm:$0xff]
    %v2316 = vld [vmem:[#allocation11 + $0x1678] sm:$0xff]
    %v2317 = vld [vmem:[#allocation11 + $0x1680] sm:$0xff]
    %v2318 = vld [vmem:[#allocation11 + $0x1688] sm:$0xff]
    %v2319 = vld [vmem:[#allocation11 + $0x1690] sm:$0xff]
    %v2320 = vld [vmem:[#allocation11 + $0x1698] sm:$0xff]
    %v2321 = vld [vmem:[#allocation11 + $0x16a0] sm:$0xff]
    %v2322 = vld [vmem:[#allocation11 + $0x16a8] sm:$0xff]
    %v2323 = vld [vmem:[#allocation11 + $0x16b0] sm:$0xff]
    %v2324 = vld [vmem:[#allocation11 + $0x16b8] sm:$0xff]
    %v2325 = vld [vmem:[#allocation11 + $0x16c0] sm:$0xff]
    %v2326 = vld [vmem:[#allocation11 + $0x16c8] sm:$0xff]
    %v2327 = vld [vmem:[#allocation11 + $0x16d0] sm:$0xff]
    %v2328 = vld [vmem:[#allocation11 + $0x16d8] sm:$0xff]
    %v2329 = vld [vmem:[#allocation11 + $0x16e0] sm:$0xff]
    %v2330 = vld [vmem:[#allocation11 + $0x16e8] sm:$0xff]
    %v2331 = vld [vmem:[#allocation11 + $0x16f0] sm:$0xff]
    %v2332 = vld [vmem:[#allocation11 + $0x16f8] sm:$0xff]
    %v2333 = vld [vmem:[#allocation11 + $0x1700] sm:$0xff]
    %v2334 = vld [vmem:[#allocation11 + $0x1708] sm:$0xff]
    %v2335 = vld [vmem:[#allocation11 + $0x1710] sm:$0xff]
    %v2336 = vld [vmem:[#allocation11 + $0x1718] sm:$0xff]
    %v2337 = vld [vmem:[#allocation11 + $0x1720] sm:$0xff]
    %v2338 = vld [vmem:[#allocation11 + $0x1728] sm:$0xff]
    %v2339 = vld [vmem:[#allocation11 + $0x1730] sm:$0xff]
    %v2340 = vld [vmem:[#allocation11 + $0x1738] sm:$0xff]
    %v2341 = vld [vmem:[#allocation11 + $0x1740] sm:$0xff]
    %v2342 = vld [vmem:[#allocation11 + $0x1748] sm:$0xff]
    %v2343 = vld [vmem:[#allocation11 + $0x1750] sm:$0xff]
    %v2344 = vld [vmem:[#allocation11 + $0x1758] sm:$0xff]
    %v2345 = vld [vmem:[#allocation11 + $0x1760] sm:$0xff]
    %v2346 = vld [vmem:[#allocation11 + $0x1768] sm:$0xff]
    %v2347 = vld [vmem:[#allocation11 + $0x1770] sm:$0xff]
    %v2348 = vld [vmem:[#allocation11 + $0x1778] sm:$0xff]
    %v2349 = vld [vmem:[#allocation11 + $0x1780] sm:$0xff]
    %v2350 = vld [vmem:[#allocation11 + $0x1788] sm:$0xff]
    %v2351 = vld [vmem:[#allocation11 + $0x1790] sm:$0xff]
    %v2352 = vld [vmem:[#allocation11 + $0x1798] sm:$0xff]
    %v2353 = vld [vmem:[#allocation11 + $0x17a0] sm:$0xff]
    %v2354 = vld [vmem:[#allocation11 + $0x17a8] sm:$0xff]
    %v2355 = vld [vmem:[#allocation11 + $0x17b0] sm:$0xff]
    %v2356 = vld [vmem:[#allocation11 + $0x17b8] sm:$0xff]
    %v2357 = vld [vmem:[#allocation11 + $0x17c0] sm:$0xff]
    %v2358 = vld [vmem:[#allocation11 + $0x17c8] sm:$0xff]
    %v2359 = vld [vmem:[#allocation11 + $0x17d0] sm:$0xff]
    %v2360 = vld [vmem:[#allocation11 + $0x17d8] sm:$0xff]
    %v2361 = vld [vmem:[#allocation11 + $0x17e0] sm:$0xff]
    %v2362 = vld [vmem:[#allocation11 + $0x17e8] sm:$0xff]
    %v2363 = vld [vmem:[#allocation11 + $0x17f0] sm:$0xff]
    %v2364 = vld [vmem:[#allocation11 + $0x17f8] sm:$0xff]
    %v2365 = vld [vmem:[#allocation11 + $0x1800] sm:$0xff]
    %v2366 = vld [vmem:[#allocation11 + $0x1808] sm:$0xff]
    %v2367 = vld [vmem:[#allocation11 + $0x1810] sm:$0xff]
    %v2368 = vld [vmem:[#allocation11 + $0x1818] sm:$0xff]
    %v2369 = vld [vmem:[#allocation11 + $0x1820] sm:$0xff]
    %v2370 = vld [vmem:[#allocation11 + $0x1828] sm:$0xff]
    %v2371 = vld [vmem:[#allocation11 + $0x1830] sm:$0xff]
    %v2372 = vld [vmem:[#allocation11 + $0x1838] sm:$0xff]
    %v2373 = vld [vmem:[#allocation11 + $0x1840] sm:$0xff]
    %v2374 = vld [vmem:[#allocation11 + $0x1848] sm:$0xff]
    %v2375 = vld [vmem:[#allocation11 + $0x1850] sm:$0xff]
    %v2376 = vld [vmem:[#allocation11 + $0x1858] sm:$0xff]
    %v2377 = vld [vmem:[#allocation11 + $0x1860] sm:$0xff]
    %v2378 = vld [vmem:[#allocation11 + $0x1868] sm:$0xff]
    %v2379 = vld [vmem:[#allocation11 + $0x1870] sm:$0xff]
    %v2380 = vld [vmem:[#allocation11 + $0x1878] sm:$0xff]
    %v2381 = vld [vmem:[#allocation11 + $0x1880] sm:$0xff]
    %v2382 = vld [vmem:[#allocation11 + $0x1888] sm:$0xff]
    %v2383 = vld [vmem:[#allocation11 + $0x1890] sm:$0xff]
    %v2384 = vld [vmem:[#allocation11 + $0x1898] sm:$0xff]
    %v2385 = vld [vmem:[#allocation11 + $0x18a0] sm:$0xff]
    %v2386 = vld [vmem:[#allocation11 + $0x18a8] sm:$0xff]
    %v2387 = vld [vmem:[#allocation11 + $0x18b0] sm:$0xff]
    %v2388 = vld [vmem:[#allocation11 + $0x18b8] sm:$0xff]
    %v2389 = vld [vmem:[#allocation11 + $0x18c0] sm:$0xff]
    %v2390 = vld [vmem:[#allocation11 + $0x18c8] sm:$0xff]
    %v2391 = vld [vmem:[#allocation11 + $0x18d0] sm:$0xff]
    %v2392 = vld [vmem:[#allocation11 + $0x18d8] sm:$0xff]
    %v2393 = vld [vmem:[#allocation11 + $0x18e0] sm:$0xff]
    %v2394 = vld [vmem:[#allocation11 + $0x18e8] sm:$0xff]
    %v2395 = vld [vmem:[#allocation11 + $0x18f0] sm:$0xff]
    %v2396 = vld [vmem:[#allocation11 + $0x18f8] sm:$0xff]
    %v2397 = vld [vmem:[#allocation11 + $0x1900] sm:$0xff]
    %v2398 = vld [vmem:[#allocation11 + $0x1908] sm:$0xff]
    %v2399 = vld [vmem:[#allocation11 + $0x1910] sm:$0xff]
    %v2400 = vld [vmem:[#allocation11 + $0x1918] sm:$0xff]
    %v2401 = vld [vmem:[#allocation11 + $0x1920] sm:$0xff]
    %v2402 = vld [vmem:[#allocation11 + $0x1928] sm:$0xff]
    %v2403 = vld [vmem:[#allocation11 + $0x1930] sm:$0xff]
    %v2404 = vld [vmem:[#allocation11 + $0x1938] sm:$0xff]
    %v2405 = vld [vmem:[#allocation11 + $0x1940] sm:$0xff]
    %v2406 = vld [vmem:[#allocation11 + $0x1948] sm:$0xff]
    %v2407 = vld [vmem:[#allocation11 + $0x1950] sm:$0xff]
    %v2408 = vld [vmem:[#allocation11 + $0x1958] sm:$0xff]
    %v2409 = vld [vmem:[#allocation11 + $0x1960] sm:$0xff]
    %v2410 = vld [vmem:[#allocation11 + $0x1968] sm:$0xff]
    %v2411 = vld [vmem:[#allocation11 + $0x1970] sm:$0xff]
    %v2412 = vld [vmem:[#allocation11 + $0x1978] sm:$0xff]
    %v2413 = vld [vmem:[#allocation11 + $0x1980] sm:$0xff]
    %v2414 = vld [vmem:[#allocation11 + $0x1988] sm:$0xff]
    %v2415 = vld [vmem:[#allocation11 + $0x1990] sm:$0xff]
    %v2416 = vld [vmem:[#allocation11 + $0x1998] sm:$0xff]
    %v2417 = vld [vmem:[#allocation11 + $0x19a0] sm:$0xff]
    %v2418 = vld [vmem:[#allocation11 + $0x19a8] sm:$0xff]
    %v2419 = vld [vmem:[#allocation11 + $0x19b0] sm:$0xff]
    %v2420 = vld [vmem:[#allocation11 + $0x19b8] sm:$0xff]
    %v2421 = vld [vmem:[#allocation11 + $0x19c0] sm:$0xff]
    %v2422 = vld [vmem:[#allocation11 + $0x19c8] sm:$0xff]
    %v2423 = vld [vmem:[#allocation11 + $0x19d0] sm:$0xff]
    %v2424 = vld [vmem:[#allocation11 + $0x19d8] sm:$0xff]
    %v2425 = vld [vmem:[#allocation11 + $0x19e0] sm:$0xff]
    %v2426 = vld [vmem:[#allocation11 + $0x19e8] sm:$0xff]
    %v2427 = vld [vmem:[#allocation11 + $0x19f0] sm:$0xff]
    %v2428 = vld [vmem:[#allocation11 + $0x19f8] sm:$0xff]
    %v2429 = vld [vmem:[#allocation11 + $0x1a00] sm:$0xff]
    %v2430 = vld [vmem:[#allocation11 + $0x1a08] sm:$0xff]
    %v2431 = vld [vmem:[#allocation11 + $0x1a10] sm:$0xff]
    %v2432 = vld [vmem:[#allocation11 + $0x1a18] sm:$0xff]
    %v2433 = vld [vmem:[#allocation11 + $0x1a20] sm:$0xff]
    %v2434 = vld [vmem:[#allocation11 + $0x1a28] sm:$0xff]
    %v2435 = vld [vmem:[#allocation11 + $0x1a30] sm:$0xff]
    %v2436 = vld [vmem:[#allocation11 + $0x1a38] sm:$0xff]
    %v2437 = vld [vmem:[#allocation11 + $0x1a40] sm:$0xff]
    %v2438 = vld [vmem:[#allocation11 + $0x1a48] sm:$0xff]
    %v2439 = vld [vmem:[#allocation11 + $0x1a50] sm:$0xff]
    %v2440 = vld [vmem:[#allocation11 + $0x1a58] sm:$0xff]
    %v2441 = vld [vmem:[#allocation11 + $0x1a60] sm:$0xff]
    %v2442 = vld [vmem:[#allocation11 + $0x1a68] sm:$0xff]
    %v2443 = vld [vmem:[#allocation11 + $0x1a70] sm:$0xff]
    %v2444 = vld [vmem:[#allocation11 + $0x1a78] sm:$0xff]
    %v2445 = vld [vmem:[#allocation11 + $0x1a80] sm:$0xff]
    %v2446 = vld [vmem:[#allocation11 + $0x1a88] sm:$0xff]
    %v2447 = vld [vmem:[#allocation11 + $0x1a90] sm:$0xff]
    %v2448 = vld [vmem:[#allocation11 + $0x1a98] sm:$0xff]
    %v2449 = vld [vmem:[#allocation11 + $0x1aa0] sm:$0xff]
    %v2450 = vld [vmem:[#allocation11 + $0x1aa8] sm:$0xff]
    %v2451 = vld [vmem:[#allocation11 + $0x1ab0] sm:$0xff]
    %v2452 = vld [vmem:[#allocation11 + $0x1ab8] sm:$0xff]
    %v2453 = vld [vmem:[#allocation11 + $0x1ac0] sm:$0xff]
    %v2454 = vld [vmem:[#allocation11 + $0x1ac8] sm:$0xff]
    %v2455 = vld [vmem:[#allocation11 + $0x1ad0] sm:$0xff]
    %v2456 = vld [vmem:[#allocation11 + $0x1ad8] sm:$0xff]
    %v2457 = vld [vmem:[#allocation11 + $0x1ae0] sm:$0xff]
    %v2458 = vld [vmem:[#allocation11 + $0x1ae8] sm:$0xff]
    %v2459 = vld [vmem:[#allocation11 + $0x1af0] sm:$0xff]
    %v2460 = vld [vmem:[#allocation11 + $0x1af8] sm:$0xff]
    %v2461 = vld [vmem:[#allocation11 + $0x1b00] sm:$0xff]
    %v2462 = vld [vmem:[#allocation11 + $0x1b08] sm:$0xff]
    %v2463 = vld [vmem:[#allocation11 + $0x1b10] sm:$0xff]
    %v2464 = vld [vmem:[#allocation11 + $0x1b18] sm:$0xff]
    %v2465 = vld [vmem:[#allocation11 + $0x1b20] sm:$0xff]
    %v2466 = vld [vmem:[#allocation11 + $0x1b28] sm:$0xff]
    %v2467 = vld [vmem:[#allocation11 + $0x1b30] sm:$0xff]
    %v2468 = vld [vmem:[#allocation11 + $0x1b38] sm:$0xff]
    %v2469 = vld [vmem:[#allocation11 + $0x1b40] sm:$0xff]
    %v2470 = vld [vmem:[#allocation11 + $0x1b48] sm:$0xff]
    %v2471 = vld [vmem:[#allocation11 + $0x1b50] sm:$0xff]
    %v2472 = vld [vmem:[#allocation11 + $0x1b58] sm:$0xff]
    %v2473 = vld [vmem:[#allocation11 + $0x1b60] sm:$0xff]
    %v2474 = vld [vmem:[#allocation11 + $0x1b68] sm:$0xff]
    %v2475 = vld [vmem:[#allocation11 + $0x1b70] sm:$0xff]
    %v2476 = vld [vmem:[#allocation11 + $0x1b78] sm:$0xff]
    %v2477 = vld [vmem:[#allocation11 + $0x1b80] sm:$0xff]
    %v2478 = vld [vmem:[#allocation11 + $0x1b88] sm:$0xff]
    %v2479 = vld [vmem:[#allocation11 + $0x1b90] sm:$0xff]
    %v2480 = vld [vmem:[#allocation11 + $0x1b98] sm:$0xff]
    %v2481 = vld [vmem:[#allocation11 + $0x1ba0] sm:$0xff]
    %v2482 = vld [vmem:[#allocation11 + $0x1ba8] sm:$0xff]
    %v2483 = vld [vmem:[#allocation11 + $0x1bb0] sm:$0xff]
    %v2484 = vld [vmem:[#allocation11 + $0x1bb8] sm:$0xff]
    %v2485 = vld [vmem:[#allocation11 + $0x1bc0] sm:$0xff]
    %v2486 = vld [vmem:[#allocation11 + $0x1bc8] sm:$0xff]
    %v2487 = vld [vmem:[#allocation11 + $0x1bd0] sm:$0xff]
    %v2488 = vld [vmem:[#allocation11 + $0x1bd8] sm:$0xff]
    %v2489 = vld [vmem:[#allocation11 + $0x1be0] sm:$0xff]
    %v2490 = vld [vmem:[#allocation11 + $0x1be8] sm:$0xff]
    %v2491 = vld [vmem:[#allocation11 + $0x1bf0] sm:$0xff]
    %v2492 = vld [vmem:[#allocation11 + $0x1bf8] sm:$0xff]
    %v2493 = vld [vmem:[#allocation11 + $0x1c00] sm:$0xff]
    %v2494 = vld [vmem:[#allocation11 + $0x1c08] sm:$0xff]
    %v2495 = vld [vmem:[#allocation11 + $0x1c10] sm:$0xff]
    %v2496 = vld [vmem:[#allocation11 + $0x1c18] sm:$0xff]
    %v2497 = vld [vmem:[#allocation11 + $0x1c20] sm:$0xff]
    %v2498 = vld [vmem:[#allocation11 + $0x1c28] sm:$0xff]
    %v2499 = vld [vmem:[#allocation11 + $0x1c30] sm:$0xff]
    %v2500 = vld [vmem:[#allocation11 + $0x1c38] sm:$0xff]
    %v2501 = vld [vmem:[#allocation11 + $0x1c40] sm:$0xff]
    %v2502 = vld [vmem:[#allocation11 + $0x1c48] sm:$0xff]
    %v2503 = vld [vmem:[#allocation11 + $0x1c50] sm:$0xff]
    %v2504 = vld [vmem:[#allocation11 + $0x1c58] sm:$0xff]
    %v2505 = vld [vmem:[#allocation11 + $0x1c60] sm:$0xff]
    %v2506 = vld [vmem:[#allocation11 + $0x1c68] sm:$0xff]
    %v2507 = vld [vmem:[#allocation11 + $0x1c70] sm:$0xff]
    %v2508 = vld [vmem:[#allocation11 + $0x1c78] sm:$0xff]
    %v2509 = vld [vmem:[#allocation11 + $0x1c80] sm:$0xff]
    %v2510 = vld [vmem:[#allocation11 + $0x1c88] sm:$0xff]
    %v2511 = vld [vmem:[#allocation11 + $0x1c90] sm:$0xff]
    %v2512 = vld [vmem:[#allocation11 + $0x1c98] sm:$0xff]
    %v2513 = vld [vmem:[#allocation11 + $0x1ca0] sm:$0xff]
    %v2514 = vld [vmem:[#allocation11 + $0x1ca8] sm:$0xff]
    %v2515 = vld [vmem:[#allocation11 + $0x1cb0] sm:$0xff]
    %v2516 = vld [vmem:[#allocation11 + $0x1cb8] sm:$0xff]
    %v2517 = vld [vmem:[#allocation11 + $0x1cc0] sm:$0xff]
    %v2518 = vld [vmem:[#allocation11 + $0x1cc8] sm:$0xff]
    %v2519 = vld [vmem:[#allocation11 + $0x1cd0] sm:$0xff]
    %v2520 = vld [vmem:[#allocation11 + $0x1cd8] sm:$0xff]
    %v2521 = vld [vmem:[#allocation11 + $0x1ce0] sm:$0xff]
    %v2522 = vld [vmem:[#allocation11 + $0x1ce8] sm:$0xff]
    %v2523 = vld [vmem:[#allocation11 + $0x1cf0] sm:$0xff]
    %v2524 = vld [vmem:[#allocation11 + $0x1cf8] sm:$0xff]
    %v2525 = vld [vmem:[#allocation11 + $0x1d00] sm:$0xff]
    %v2526 = vld [vmem:[#allocation11 + $0x1d08] sm:$0xff]
    %v2527 = vld [vmem:[#allocation11 + $0x1d10] sm:$0xff]
    %v2528 = vld [vmem:[#allocation11 + $0x1d18] sm:$0xff]
    %v2529 = vld [vmem:[#allocation11 + $0x1d20] sm:$0xff]
    %v2530 = vld [vmem:[#allocation11 + $0x1d28] sm:$0xff]
    %v2531 = vld [vmem:[#allocation11 + $0x1d30] sm:$0xff]
    %v2532 = vld [vmem:[#allocation11 + $0x1d38] sm:$0xff]
    %v2533 = vld [vmem:[#allocation11 + $0x1d40] sm:$0xff]
    %v2534 = vld [vmem:[#allocation11 + $0x1d48] sm:$0xff]
    %v2535 = vld [vmem:[#allocation11 + $0x1d50] sm:$0xff]
    %v2536 = vld [vmem:[#allocation11 + $0x1d58] sm:$0xff]
    %v2537 = vld [vmem:[#allocation11 + $0x1d60] sm:$0xff]
    %v2538 = vld [vmem:[#allocation11 + $0x1d68] sm:$0xff]
    %v2539 = vld [vmem:[#allocation11 + $0x1d70] sm:$0xff]
    %v2540 = vld [vmem:[#allocation11 + $0x1d78] sm:$0xff]
    %v2541 = vld [vmem:[#allocation11 + $0x1d80] sm:$0xff]
    %v2542 = vld [vmem:[#allocation11 + $0x1d88] sm:$0xff]
    %v2543 = vld [vmem:[#allocation11 + $0x1d90] sm:$0xff]
    %v2544 = vld [vmem:[#allocation11 + $0x1d98] sm:$0xff]
    %v2545 = vld [vmem:[#allocation11 + $0x1da0] sm:$0xff]
    %v2546 = vld [vmem:[#allocation11 + $0x1da8] sm:$0xff]
    %v2547 = vld [vmem:[#allocation11 + $0x1db0] sm:$0xff]
    %v2548 = vld [vmem:[#allocation11 + $0x1db8] sm:$0xff]
    %v2549 = vld [vmem:[#allocation11 + $0x1dc0] sm:$0xff]
    %v2550 = vld [vmem:[#allocation11 + $0x1dc8] sm:$0xff]
    %v2551 = vld [vmem:[#allocation11 + $0x1dd0] sm:$0xff]
    %v2552 = vld [vmem:[#allocation11 + $0x1dd8] sm:$0xff]
    %v2553 = vld [vmem:[#allocation11 + $0x1de0] sm:$0xff]
    %v2554 = vld [vmem:[#allocation11 + $0x1de8] sm:$0xff]
    %v2555 = vld [vmem:[#allocation11 + $0x1df0] sm:$0xff]
    %v2556 = vld [vmem:[#allocation11 + $0x1df8] sm:$0xff]
    %v2557 = vld [vmem:[#allocation11 + $0x1e00] sm:$0xff]
    %v2558 = vld [vmem:[#allocation11 + $0x1e08] sm:$0xff]
    %v2559 = vld [vmem:[#allocation11 + $0x1e10] sm:$0xff]
    %v2560 = vld [vmem:[#allocation11 + $0x1e18] sm:$0xff]
    %v2561 = vld [vmem:[#allocation11 + $0x1e20] sm:$0xff]
    %v2562 = vld [vmem:[#allocation11 + $0x1e28] sm:$0xff]
    %v2563 = vld [vmem:[#allocation11 + $0x1e30] sm:$0xff]
    %v2564 = vld [vmem:[#allocation11 + $0x1e38] sm:$0xff]
    %v2565 = vld [vmem:[#allocation11 + $0x1e40] sm:$0xff]
    %v2566 = vld [vmem:[#allocation11 + $0x1e48] sm:$0xff]
    %v2567 = vld [vmem:[#allocation11 + $0x1e50] sm:$0xff]
    %v2568 = vld [vmem:[#allocation11 + $0x1e58] sm:$0xff]
    %v2569 = vld [vmem:[#allocation11 + $0x1e60] sm:$0xff]
    %v2570 = vld [vmem:[#allocation11 + $0x1e68] sm:$0xff]
    %v2571 = vld [vmem:[#allocation11 + $0x1e70] sm:$0xff]
    %v2572 = vld [vmem:[#allocation11 + $0x1e78] sm:$0xff]
    %v2573 = vld [vmem:[#allocation11 + $0x1e80] sm:$0xff]
    %v2574 = vld [vmem:[#allocation11 + $0x1e88] sm:$0xff]
    %v2575 = vld [vmem:[#allocation11 + $0x1e90] sm:$0xff]
    %v2576 = vld [vmem:[#allocation11 + $0x1e98] sm:$0xff]
    %v2577 = vld [vmem:[#allocation11 + $0x1ea0] sm:$0xff]
    %v2578 = vld [vmem:[#allocation11 + $0x1ea8] sm:$0xff]
    %v2579 = vld [vmem:[#allocation11 + $0x1eb0] sm:$0xff]
    %v2580 = vld [vmem:[#allocation11 + $0x1eb8] sm:$0xff]
    %v2581 = vld [vmem:[#allocation11 + $0x1ec0] sm:$0xff]
    %v2582 = vld [vmem:[#allocation11 + $0x1ec8] sm:$0xff]
    %v2583 = vld [vmem:[#allocation11 + $0x1ed0] sm:$0xff]
    %v2584 = vld [vmem:[#allocation11 + $0x1ed8] sm:$0xff]
    %v2585 = vld [vmem:[#allocation11 + $0x1ee0] sm:$0xff]
    %v2586 = vld [vmem:[#allocation11 + $0x1ee8] sm:$0xff]
    %v2587 = vld [vmem:[#allocation11 + $0x1ef0] sm:$0xff]
    %v2588 = vld [vmem:[#allocation11 + $0x1ef8] sm:$0xff]
    %v2589 = vld [vmem:[#allocation11 + $0x1f00] sm:$0xff]
    %v2590 = vld [vmem:[#allocation11 + $0x1f08] sm:$0xff]
    %v2591 = vld [vmem:[#allocation11 + $0x1f10] sm:$0xff]
    %v2592 = vld [vmem:[#allocation11 + $0x1f18] sm:$0xff]
    %v2593 = vld [vmem:[#allocation11 + $0x1f20] sm:$0xff]
    %v2594 = vld [vmem:[#allocation11 + $0x1f28] sm:$0xff]
    %v2595 = vld [vmem:[#allocation11 + $0x1f30] sm:$0xff]
    %v2596 = vld [vmem:[#allocation11 + $0x1f38] sm:$0xff]
    %v2597 = vld [vmem:[#allocation11 + $0x1f40] sm:$0xff]
    %v2598 = vld [vmem:[#allocation11 + $0x1f48] sm:$0xff]
    %v2599 = vld [vmem:[#allocation11 + $0x1f50] sm:$0xff]
    %v2600 = vld [vmem:[#allocation11 + $0x1f58] sm:$0xff]
    %v2601 = vld [vmem:[#allocation11 + $0x1f60] sm:$0xff]
    %v2602 = vld [vmem:[#allocation11 + $0x1f68] sm:$0xff]
    %v2603 = vld [vmem:[#allocation11 + $0x1f70] sm:$0xff]
    %v2604 = vld [vmem:[#allocation11 + $0x1f78] sm:$0xff]
    %v2605 = vld [vmem:[#allocation11 + $0x1f80] sm:$0xff]
    %v2606 = vld [vmem:[#allocation11 + $0x1f88] sm:$0xff]
    %v2607 = vld [vmem:[#allocation11 + $0x1f90] sm:$0xff]
    %v2608 = vld [vmem:[#allocation11 + $0x1f98] sm:$0xff]
    %v2609 = vld [vmem:[#allocation11 + $0x1fa0] sm:$0xff]
    %v2610 = vld [vmem:[#allocation11 + $0x1fa8] sm:$0xff]
    %v2611 = vld [vmem:[#allocation11 + $0x1fb0] sm:$0xff]
    %v2612 = vld [vmem:[#allocation11 + $0x1fb8] sm:$0xff]
    %v2613 = vld [vmem:[#allocation11 + $0x1fc0] sm:$0xff]
    %v2614 = vld [vmem:[#allocation11 + $0x1fc8] sm:$0xff]
    %v2615 = vld [vmem:[#allocation11 + $0x1fd0] sm:$0xff]
    %v2616 = vld [vmem:[#allocation11 + $0x1fd8] sm:$0xff]
    %v2617 = vld [vmem:[#allocation11 + $0x1fe0] sm:$0xff]
    %v2618 = vld [vmem:[#allocation11 + $0x1fe8] sm:$0xff]
    %v2619 = vld [vmem:[#allocation11 + $0x1ff0] sm:$0xff]
    %v2620 = vld [vmem:[#allocation11 + $0x1ff8] sm:$0xff]
    %v2621 = vld [vmem:[#allocation11 + $0x2000] sm:$0xff]
    %v2622 = vld [vmem:[#allocation11 + $0x2008] sm:$0xff]
    %v2623 = vld [vmem:[#allocation11 + $0x2010] sm:$0xff]
    %v2624 = vld [vmem:[#allocation11 + $0x2018] sm:$0xff]
    %v2625 = vld [vmem:[#allocation11 + $0x2020] sm:$0xff]
    %v2626 = vld [vmem:[#allocation11 + $0x2028] sm:$0xff]
    %v2627 = vld [vmem:[#allocation11 + $0x2030] sm:$0xff]
    %v2628 = vld [vmem:[#allocation11 + $0x2038] sm:$0xff]
    %v2629 = vld [vmem:[#allocation11 + $0x2040] sm:$0xff]
    %v2630 = vld [vmem:[#allocation11 + $0x2048] sm:$0xff]
    %v2631 = vld [vmem:[#allocation11 + $0x2050] sm:$0xff]
    %v2632 = vld [vmem:[#allocation11 + $0x2058] sm:$0xff]
    %v2633 = vld [vmem:[#allocation11 + $0x2060] sm:$0xff]
    %v2634 = vld [vmem:[#allocation11 + $0x2068] sm:$0xff]
    %v2635 = vld [vmem:[#allocation11 + $0x2070] sm:$0xff]
    %v2636 = vld [vmem:[#allocation11 + $0x2078] sm:$0xff]
    %v2637 = vld [vmem:[#allocation11 + $0x2080] sm:$0xff]
    %v2638 = vld [vmem:[#allocation11 + $0x2088] sm:$0xff]
    %v2639 = vld [vmem:[#allocation11 + $0x2090] sm:$0xff]
    %v2640 = vld [vmem:[#allocation11 + $0x2098] sm:$0xff]
    %v2641 = vld [vmem:[#allocation11 + $0x20a0] sm:$0xff]
    %v2642 = vld [vmem:[#allocation11 + $0x20a8] sm:$0xff]
    %v2643 = vld [vmem:[#allocation11 + $0x20b0] sm:$0xff]
    %v2644 = vld [vmem:[#allocation11 + $0x20b8] sm:$0xff]
    %v2645 = vld [vmem:[#allocation11 + $0x20c0] sm:$0xff]
    %v2646 = vld [vmem:[#allocation11 + $0x20c8] sm:$0xff]
    %v2647 = vld [vmem:[#allocation11 + $0x20d0] sm:$0xff]
    %v2648 = vld [vmem:[#allocation11 + $0x20d8] sm:$0xff]
    %v2649 = vld [vmem:[#allocation11 + $0x20e0] sm:$0xff]
    %v2650 = vld [vmem:[#allocation11 + $0x20e8] sm:$0xff]
    %v2651 = vld [vmem:[#allocation11 + $0x20f0] sm:$0xff]
    %v2652 = vld [vmem:[#allocation11 + $0x20f8] sm:$0xff]
    %v2653 = vld [vmem:[#allocation11 + $0x2100] sm:$0xff]
    %v2654 = vld [vmem:[#allocation11 + $0x2108] sm:$0xff]
    %v2655 = vld [vmem:[#allocation11 + $0x2110] sm:$0xff]
    %v2656 = vld [vmem:[#allocation11 + $0x2118] sm:$0xff]
    %v2657 = vld [vmem:[#allocation11 + $0x2120] sm:$0xff]
    %v2658 = vld [vmem:[#allocation11 + $0x2128] sm:$0xff]
    %v2659 = vld [vmem:[#allocation11 + $0x2130] sm:$0xff]
    %v2660 = vld [vmem:[#allocation11 + $0x2138] sm:$0xff]
    %v2661 = vld [vmem:[#allocation11 + $0x2140] sm:$0xff]
    %v2662 = vld [vmem:[#allocation11 + $0x2148] sm:$0xff]
    %v2663 = vld [vmem:[#allocation11 + $0x2150] sm:$0xff]
    %v2664 = vld [vmem:[#allocation11 + $0x2158] sm:$0xff]
    %v2665 = vld [vmem:[#allocation11 + $0x2160] sm:$0xff]
    %v2666 = vld [vmem:[#allocation11 + $0x2168] sm:$0xff]
    %v2667 = vld [vmem:[#allocation11 + $0x2170] sm:$0xff]
    %v2668 = vld [vmem:[#allocation11 + $0x2178] sm:$0xff]
    %v2669 = vld [vmem:[#allocation11 + $0x2180] sm:$0xff]
    %v2670 = vld [vmem:[#allocation11 + $0x2188] sm:$0xff]
    %v2671 = vld [vmem:[#allocation11 + $0x2190] sm:$0xff]
    %v2672 = vld [vmem:[#allocation11 + $0x2198] sm:$0xff]
    %v2673 = vld [vmem:[#allocation11 + $0x21a0] sm:$0xff]
    %v2674 = vld [vmem:[#allocation11 + $0x21a8] sm:$0xff]
    %v2675 = vld [vmem:[#allocation11 + $0x21b0] sm:$0xff]
    %v2676 = vld [vmem:[#allocation11 + $0x21b8] sm:$0xff]
    %v2677 = vld [vmem:[#allocation11 + $0x21c0] sm:$0xff]
    %v2678 = vld [vmem:[#allocation11 + $0x21c8] sm:$0xff]
    %v2679 = vld [vmem:[#allocation11 + $0x21d0] sm:$0xff]
    %v2680 = vld [vmem:[#allocation11 + $0x21d8] sm:$0xff]
    %v2681 = vld [vmem:[#allocation11 + $0x21e0] sm:$0xff]
    %v2682 = vld [vmem:[#allocation11 + $0x21e8] sm:$0xff]
    %v2683 = vld [vmem:[#allocation11 + $0x21f0] sm:$0xff]
    %v2684 = vld [vmem:[#allocation11 + $0x21f8] sm:$0xff]
    %v2685 = vld [vmem:[#allocation11 + $0x2200] sm:$0xff]
    %v2686 = vld [vmem:[#allocation11 + $0x2208] sm:$0xff]
    %v2687 = vld [vmem:[#allocation11 + $0x2210] sm:$0xff]
    %v2688 = vld [vmem:[#allocation11 + $0x2218] sm:$0xff]
    %v2689 = vld [vmem:[#allocation11 + $0x2220] sm:$0xff]
    %v2690 = vld [vmem:[#allocation11 + $0x2228] sm:$0xff]
    %v2691 = vld [vmem:[#allocation11 + $0x2230] sm:$0xff]
    %v2692 = vld [vmem:[#allocation11 + $0x2238] sm:$0xff]
    %v2693 = vld [vmem:[#allocation11 + $0x2240] sm:$0xff]
    %v2694 = vld [vmem:[#allocation11 + $0x2248] sm:$0xff]
    %v2695 = vld [vmem:[#allocation11 + $0x2250] sm:$0xff]
    %v2696 = vld [vmem:[#allocation11 + $0x2258] sm:$0xff]
    %v2697 = vld [vmem:[#allocation11 + $0x2260] sm:$0xff]
    %v2698 = vld [vmem:[#allocation11 + $0x2268] sm:$0xff]
    %v2699 = vld [vmem:[#allocation11 + $0x2270] sm:$0xff]
    %v2700 = vld [vmem:[#allocation11 + $0x2278] sm:$0xff]
    %v2701 = vld [vmem:[#allocation11 + $0x2280] sm:$0xff]
    %v2702 = vld [vmem:[#allocation11 + $0x2288] sm:$0xff]
    %v2703 = vld [vmem:[#allocation11 + $0x2290] sm:$0xff]
    %v2704 = vld [vmem:[#allocation11 + $0x2298] sm:$0xff]
    %v2705 = vld [vmem:[#allocation11 + $0x22a0] sm:$0xff]
    %v2706 = vld [vmem:[#allocation11 + $0x22a8] sm:$0xff]
    %v2707 = vld [vmem:[#allocation11 + $0x22b0] sm:$0xff]
    %v2708 = vld [vmem:[#allocation11 + $0x22b8] sm:$0xff]
    %v2709 = vld [vmem:[#allocation11 + $0x22c0] sm:$0xff]
    %v2710 = vld [vmem:[#allocation11 + $0x22c8] sm:$0xff]
    %v2711 = vld [vmem:[#allocation11 + $0x22d0] sm:$0xff]
    %v2712 = vld [vmem:[#allocation11 + $0x22d8] sm:$0xff]
    %v2713 = vld [vmem:[#allocation11 + $0x22e0] sm:$0xff]
    %v2714 = vld [vmem:[#allocation11 + $0x22e8] sm:$0xff]
    %v2715 = vld [vmem:[#allocation11 + $0x22f0] sm:$0xff]
    %v2716 = vld [vmem:[#allocation11 + $0x22f8] sm:$0xff]
    %v2717 = vld [vmem:[#allocation11 + $0x2300] sm:$0xff]
    %v2718 = vld [vmem:[#allocation11 + $0x2308] sm:$0xff]
    %v2719 = vld [vmem:[#allocation11 + $0x2310] sm:$0xff]
    %v2720 = vld [vmem:[#allocation11 + $0x2318] sm:$0xff]
    %v2721 = vld [vmem:[#allocation11 + $0x2320] sm:$0xff]
    %v2722 = vld [vmem:[#allocation11 + $0x2328] sm:$0xff]
    %v2723 = vld [vmem:[#allocation11 + $0x2330] sm:$0xff]
    %v2724 = vld [vmem:[#allocation11 + $0x2338] sm:$0xff]
    %v2725 = vld [vmem:[#allocation11 + $0x2340] sm:$0xff]
    %v2726 = vld [vmem:[#allocation11 + $0x2348] sm:$0xff]
    %v2727 = vld [vmem:[#allocation11 + $0x2350] sm:$0xff]
    %v2728 = vld [vmem:[#allocation11 + $0x2358] sm:$0xff]
    %v2729 = vld [vmem:[#allocation11 + $0x2360] sm:$0xff]
    %v2730 = vld [vmem:[#allocation11 + $0x2368] sm:$0xff]
    %v2731 = vld [vmem:[#allocation11 + $0x2370] sm:$0xff]
    %v2732 = vld [vmem:[#allocation11 + $0x2378] sm:$0xff]
    %v2733 = vld [vmem:[#allocation11 + $0x2380] sm:$0xff]
    %v2734 = vld [vmem:[#allocation11 + $0x2388] sm:$0xff]
    %v2735 = vld [vmem:[#allocation11 + $0x2390] sm:$0xff]
    %v2736 = vld [vmem:[#allocation11 + $0x2398] sm:$0xff]
    %v2737 = vld [vmem:[#allocation11 + $0x23a0] sm:$0xff]
    %v2738 = vld [vmem:[#allocation11 + $0x23a8] sm:$0xff]
    %v2739 = vld [vmem:[#allocation11 + $0x23b0] sm:$0xff]
    %v2740 = vld [vmem:[#allocation11 + $0x23b8] sm:$0xff]
    %v2741 = vld [vmem:[#allocation11 + $0x23c0] sm:$0xff]
    %v2742 = vld [vmem:[#allocation11 + $0x23c8] sm:$0xff]
    %v2743 = vld [vmem:[#allocation11 + $0x23d0] sm:$0xff]
    %v2744 = vld [vmem:[#allocation11 + $0x23d8] sm:$0xff]
    %v2745 = vld [vmem:[#allocation11 + $0x23e0] sm:$0xff]
    %v2746 = vld [vmem:[#allocation11 + $0x23e8] sm:$0xff]
    %v2747 = vld [vmem:[#allocation11 + $0x23f0] sm:$0xff]
    %v2748 = vld [vmem:[#allocation11 + $0x23f8] sm:$0xff]
    %v2749 = vld [vmem:[#allocation11 + $0x2400] sm:$0xff]
    %v2750 = vld [vmem:[#allocation11 + $0x2408] sm:$0xff]
    %v2751 = vld [vmem:[#allocation11 + $0x2410] sm:$0xff]
    %v2752 = vld [vmem:[#allocation11 + $0x2418] sm:$0xff]
    %v2753 = vld [vmem:[#allocation11 + $0x2420] sm:$0xff]
    %v2754 = vld [vmem:[#allocation11 + $0x2428] sm:$0xff]
    %v2755 = vld [vmem:[#allocation11 + $0x2430] sm:$0xff]
    %v2756 = vld [vmem:[#allocation11 + $0x2438] sm:$0xff]
    %v2757 = vld [vmem:[#allocation11 + $0x2440] sm:$0xff]
    %v2758 = vld [vmem:[#allocation11 + $0x2448] sm:$0xff]
    %v2759 = vld [vmem:[#allocation11 + $0x2450] sm:$0xff]
    %v2760 = vld [vmem:[#allocation11 + $0x2458] sm:$0xff]
    %v2761 = vld [vmem:[#allocation11 + $0x2460] sm:$0xff]
    %v2762 = vld [vmem:[#allocation11 + $0x2468] sm:$0xff]
    %v2763 = vld [vmem:[#allocation11 + $0x2470] sm:$0xff]
    %v2764 = vld [vmem:[#allocation11 + $0x2478] sm:$0xff]
    %v2765 = vld [vmem:[#allocation11 + $0x2480] sm:$0xff]
    %v2766 = vld [vmem:[#allocation11 + $0x2488] sm:$0xff]
    %v2767 = vld [vmem:[#allocation11 + $0x2490] sm:$0xff]
    %v2768 = vld [vmem:[#allocation11 + $0x2498] sm:$0xff]
    %v2769 = vld [vmem:[#allocation11 + $0x24a0] sm:$0xff]
    %v2770 = vld [vmem:[#allocation11 + $0x24a8] sm:$0xff]
    %v2771 = vld [vmem:[#allocation11 + $0x24b0] sm:$0xff]
    %v2772 = vld [vmem:[#allocation11 + $0x24b8] sm:$0xff]
    %v2773 = vld [vmem:[#allocation11 + $0x24c0] sm:$0xff]
    %v2774 = vld [vmem:[#allocation11 + $0x24c8] sm:$0xff]
    %v2775 = vld [vmem:[#allocation11 + $0x24d0] sm:$0xff]
    %v2776 = vld [vmem:[#allocation11 + $0x24d8] sm:$0xff]
    %v2777 = vld [vmem:[#allocation11 + $0x24e0] sm:$0xff]
    %v2778 = vld [vmem:[#allocation11 + $0x24e8] sm:$0xff]
    %v2779 = vld [vmem:[#allocation11 + $0x24f0] sm:$0xff]
    %v2780 = vld [vmem:[#allocation11 + $0x24f8] sm:$0xff]
    %v2781 = vld [vmem:[#allocation11 + $0x2500] sm:$0xff]
    %v2782 = vld [vmem:[#allocation11 + $0x2508] sm:$0xff]
    %v2783 = vld [vmem:[#allocation11 + $0x2510] sm:$0xff]
    %v2784 = vld [vmem:[#allocation11 + $0x2518] sm:$0xff]
    %v2785 = vld [vmem:[#allocation11 + $0x2520] sm:$0xff]
    %v2786 = vld [vmem:[#allocation11 + $0x2528] sm:$0xff]
    %v2787 = vld [vmem:[#allocation11 + $0x2530] sm:$0xff]
    %v2788 = vld [vmem:[#allocation11 + $0x2538] sm:$0xff]
    %v2789 = vld [vmem:[#allocation11 + $0x2540] sm:$0xff]
    %v2790 = vld [vmem:[#allocation11 + $0x2548] sm:$0xff]
    %v2791 = vld [vmem:[#allocation11 + $0x2550] sm:$0xff]
    %v2792 = vld [vmem:[#allocation11 + $0x2558] sm:$0xff]
    %v2793 = vld [vmem:[#allocation11 + $0x2560] sm:$0xff]
    %v2794 = vld [vmem:[#allocation11 + $0x2568] sm:$0xff]
    %v2795 = vld [vmem:[#allocation11 + $0x2570] sm:$0xff]
    %v2796 = vld [vmem:[#allocation11 + $0x2578] sm:$0xff]
    %v2797 = vld [vmem:[#allocation11 + $0x2580] sm:$0xff]
    %v2798 = vld [vmem:[#allocation11 + $0x2588] sm:$0xff]
    %v2799 = vld [vmem:[#allocation11 + $0x2590] sm:$0xff]
    %v2800 = vld [vmem:[#allocation11 + $0x2598] sm:$0xff]
    %v2801 = vld [vmem:[#allocation11 + $0x25a0] sm:$0xff]
    %v2802 = vld [vmem:[#allocation11 + $0x25a8] sm:$0xff]
    %v2803 = vld [vmem:[#allocation11 + $0x25b0] sm:$0xff]
    %v2804 = vld [vmem:[#allocation11 + $0x25b8] sm:$0xff]
    %v2805 = vld [vmem:[#allocation11 + $0x25c0] sm:$0xff]
    %v2806 = vld [vmem:[#allocation11 + $0x25c8] sm:$0xff]
    %v2807 = vld [vmem:[#allocation11 + $0x25d0] sm:$0xff]
    %v2808 = vld [vmem:[#allocation11 + $0x25d8] sm:$0xff]
    %v2809 = vld [vmem:[#allocation11 + $0x25e0] sm:$0xff]
    %v2810 = vld [vmem:[#allocation11 + $0x25e8] sm:$0xff]
    %v2811 = vld [vmem:[#allocation11 + $0x25f0] sm:$0xff]
    %v2812 = vld [vmem:[#allocation11 + $0x25f8] sm:$0xff]
    %v2813 = vld [vmem:[#allocation11 + $0x2600] sm:$0xff]
    %v2814 = vld [vmem:[#allocation11 + $0x2608] sm:$0xff]
    %v2815 = vld [vmem:[#allocation11 + $0x2610] sm:$0xff]
    %v2816 = vld [vmem:[#allocation11 + $0x2618] sm:$0xff]
    %v2817 = vld [vmem:[#allocation11 + $0x2620] sm:$0xff]
    %v2818 = vld [vmem:[#allocation11 + $0x2628] sm:$0xff]
    %v2819 = vld [vmem:[#allocation11 + $0x2630] sm:$0xff]
    %v2820 = vld [vmem:[#allocation11 + $0x2638] sm:$0xff]
    %v2821 = vld [vmem:[#allocation11 + $0x2640] sm:$0xff]
    %v2822 = vld [vmem:[#allocation11 + $0x2648] sm:$0xff]
    %v2823 = vld [vmem:[#allocation11 + $0x2650] sm:$0xff]
    %v2824 = vld [vmem:[#allocation11 + $0x2658] sm:$0xff]
    %v2825 = vld [vmem:[#allocation11 + $0x2660] sm:$0xff]
    %v2826 = vld [vmem:[#allocation11 + $0x2668] sm:$0xff]
    %v2827 = vld [vmem:[#allocation11 + $0x2670] sm:$0xff]
    %v2828 = vld [vmem:[#allocation11 + $0x2678] sm:$0xff]
    %v2829 = vld [vmem:[#allocation11 + $0x2680] sm:$0xff]
    %v2830 = vld [vmem:[#allocation11 + $0x2688] sm:$0xff]
    %v2831 = vld [vmem:[#allocation11 + $0x2690] sm:$0xff]
    %v2832 = vld [vmem:[#allocation11 + $0x2698] sm:$0xff]
    %v2833 = vld [vmem:[#allocation11 + $0x26a0] sm:$0xff]
    %v2834 = vld [vmem:[#allocation11 + $0x26a8] sm:$0xff]
    %v2835 = vld [vmem:[#allocation11 + $0x26b0] sm:$0xff]
    %v2836 = vld [vmem:[#allocation11 + $0x26b8] sm:$0xff]
    %v2837 = vld [vmem:[#allocation11 + $0x26c0] sm:$0xff]
    %v2838 = vld [vmem:[#allocation11 + $0x26c8] sm:$0xff]
    %v2839 = vld [vmem:[#allocation11 + $0x26d0] sm:$0xff]
    %v2840 = vld [vmem:[#allocation11 + $0x26d8] sm:$0xff]
    %v2841 = vld [vmem:[#allocation11 + $0x26e0] sm:$0xff]
    %v2842 = vld [vmem:[#allocation11 + $0x26e8] sm:$0xff]
    %v2843 = vld [vmem:[#allocation11 + $0x26f0] sm:$0xff]
    %v2844 = vld [vmem:[#allocation11 + $0x26f8] sm:$0xff]
    %v2845 = vld [vmem:[#allocation11 + $0x2700] sm:$0xff]
    %v2846 = vld [vmem:[#allocation11 + $0x2708] sm:$0xff]
    %v2847 = vld [vmem:[#allocation11 + $0x2710] sm:$0xff]
    %v2848 = vld [vmem:[#allocation11 + $0x2718] sm:$0xff]
    %v2849 = vld [vmem:[#allocation11 + $0x2720] sm:$0xff]
    %v2850 = vld [vmem:[#allocation11 + $0x2728] sm:$0xff]
    %v2851 = vld [vmem:[#allocation11 + $0x2730] sm:$0xff]
    %v2852 = vld [vmem:[#allocation11 + $0x2738] sm:$0xff]
    %v2853 = vld [vmem:[#allocation11 + $0x2740] sm:$0xff]
    %v2854 = vld [vmem:[#allocation11 + $0x2748] sm:$0xff]
    %v2855 = vld [vmem:[#allocation11 + $0x2750] sm:$0xff]
    %v2856 = vld [vmem:[#allocation11 + $0x2758] sm:$0xff]
    %v2857 = vld [vmem:[#allocation11 + $0x2760] sm:$0xff]
    %v2858 = vld [vmem:[#allocation11 + $0x2768] sm:$0xff]
    %v2859 = vld [vmem:[#allocation11 + $0x2770] sm:$0xff]
    %v2860 = vld [vmem:[#allocation11 + $0x2778] sm:$0xff]
    %v2861 = vld [vmem:[#allocation11 + $0x2780] sm:$0xff]
    %v2862 = vld [vmem:[#allocation11 + $0x2788] sm:$0xff]
    %v2863 = vld [vmem:[#allocation11 + $0x2790] sm:$0xff]
    %v2864 = vld [vmem:[#allocation11 + $0x2798] sm:$0xff]
    %v2865 = vld [vmem:[#allocation11 + $0x27a0] sm:$0xff]
    %v2866 = vld [vmem:[#allocation11 + $0x27a8] sm:$0xff]
    %v2867 = vld [vmem:[#allocation11 + $0x27b0] sm:$0xff]
    %v2868 = vld [vmem:[#allocation11 + $0x27b8] sm:$0xff]
    %v2869 = vld [vmem:[#allocation11 + $0x27c0] sm:$0xff]
    %v2870 = vld [vmem:[#allocation11 + $0x27c8] sm:$0xff]
    %v2871 = vld [vmem:[#allocation11 + $0x27d0] sm:$0xff]
    %v2872 = vld [vmem:[#allocation11 + $0x27d8] sm:$0xff]
    %v2873 = vld [vmem:[#allocation11 + $0x27e0] sm:$0xff]
    %v2874 = vld [vmem:[#allocation11 + $0x27e8] sm:$0xff]
    %v2875 = vld [vmem:[#allocation11 + $0x27f0] sm:$0xff]
    %v2876 = vld [vmem:[#allocation11 + $0x27f8] sm:$0xff]
    %v2877 = vld [vmem:[#allocation11 + $0x2800] sm:$0xff]
    %v2878 = vld [vmem:[#allocation11 + $0x2808] sm:$0xff]
    %v2879 = vld [vmem:[#allocation11 + $0x2810] sm:$0xff]
    %v2880 = vld [vmem:[#allocation11 + $0x2818] sm:$0xff]
    %v2881 = vld [vmem:[#allocation11 + $0x2820] sm:$0xff]
    %v2882 = vld [vmem:[#allocation11 + $0x2828] sm:$0xff]
    %v2883 = vld [vmem:[#allocation11 + $0x2830] sm:$0xff]
    %v2884 = vld [vmem:[#allocation11 + $0x2838] sm:$0xff]
    %v2885 = vld [vmem:[#allocation11 + $0x2840] sm:$0xff]
    %v2886 = vld [vmem:[#allocation11 + $0x2848] sm:$0xff]
    %v2887 = vld [vmem:[#allocation11 + $0x2850] sm:$0xff]
    %v2888 = vld [vmem:[#allocation11 + $0x2858] sm:$0xff]
    %v2889 = vld [vmem:[#allocation11 + $0x2860] sm:$0xff]
    %v2890 = vld [vmem:[#allocation11 + $0x2868] sm:$0xff]
    %v2891 = vld [vmem:[#allocation11 + $0x2870] sm:$0xff]
    %v2892 = vld [vmem:[#allocation11 + $0x2878] sm:$0xff]
    %v2893 = vld [vmem:[#allocation11 + $0x2880] sm:$0xff]
    %v2894 = vld [vmem:[#allocation11 + $0x2888] sm:$0xff]
    %v2895 = vld [vmem:[#allocation11 + $0x2890] sm:$0xff]
    %v2896 = vld [vmem:[#allocation11 + $0x2898] sm:$0xff]
    %v2897 = vld [vmem:[#allocation11 + $0x28a0] sm:$0xff]
    %v2898 = vld [vmem:[#allocation11 + $0x28a8] sm:$0xff]
    %v2899 = vld [vmem:[#allocation11 + $0x28b0] sm:$0xff]
    %v2900 = vld [vmem:[#allocation11 + $0x28b8] sm:$0xff]
    %v2901 = vld [vmem:[#allocation11 + $0x28c0] sm:$0xff]
    %v2902 = vld [vmem:[#allocation11 + $0x28c8] sm:$0xff]
    %v2903 = vld [vmem:[#allocation11 + $0x28d0] sm:$0xff]
    %v2904 = vld [vmem:[#allocation11 + $0x28d8] sm:$0xff]
    %v2905 = vld [vmem:[#allocation11 + $0x28e0] sm:$0xff]
    %v2906 = vld [vmem:[#allocation11 + $0x28e8] sm:$0xff]
    %v2907 = vld [vmem:[#allocation11 + $0x28f0] sm:$0xff]
    %v2908 = vld [vmem:[#allocation11 + $0x28f8] sm:$0xff]
    %v2909 = vld [vmem:[#allocation11 + $0x2900] sm:$0xff]
    %v2910 = vld [vmem:[#allocation11 + $0x2908] sm:$0xff]
    %v2911 = vld [vmem:[#allocation11 + $0x2910] sm:$0xff]
    %v2912 = vld [vmem:[#allocation11 + $0x2918] sm:$0xff]
    %v2913 = vld [vmem:[#allocation11 + $0x2920] sm:$0xff]
    %v2914 = vld [vmem:[#allocation11 + $0x2928] sm:$0xff]
    %v2915 = vld [vmem:[#allocation11 + $0x2930] sm:$0xff]
    %v2916 = vld [vmem:[#allocation11 + $0x2938] sm:$0xff]
    %v2917 = vld [vmem:[#allocation11 + $0x2940] sm:$0xff]
    %v2918 = vld [vmem:[#allocation11 + $0x2948] sm:$0xff]
    %v2919 = vld [vmem:[#allocation11 + $0x2950] sm:$0xff]
    %v2920 = vld [vmem:[#allocation11 + $0x2958] sm:$0xff]
    %v2921 = vld [vmem:[#allocation11 + $0x2960] sm:$0xff]
    %v2922 = vld [vmem:[#allocation11 + $0x2968] sm:$0xff]
    %v2923 = vld [vmem:[#allocation11 + $0x2970] sm:$0xff]
    %v2924 = vld [vmem:[#allocation11 + $0x2978] sm:$0xff]
    %v2925 = vld [vmem:[#allocation11 + $0x2980] sm:$0xff]
    %v2926 = vld [vmem:[#allocation11 + $0x2988] sm:$0xff]
    %v2927 = vld [vmem:[#allocation11 + $0x2990] sm:$0xff]
    %v2928 = vld [vmem:[#allocation11 + $0x2998] sm:$0xff]
    %v2929 = vld [vmem:[#allocation11 + $0x29a0] sm:$0xff]
    %v2930 = vld [vmem:[#allocation11 + $0x29a8] sm:$0xff]
    %v2931 = vld [vmem:[#allocation11 + $0x29b0] sm:$0xff]
    %v2932 = vld [vmem:[#allocation11 + $0x29b8] sm:$0xff]
    %v2933 = vld [vmem:[#allocation11 + $0x29c0] sm:$0xff]
    %v2934 = vld [vmem:[#allocation11 + $0x29c8] sm:$0xff]
    %v2935 = vld [vmem:[#allocation11 + $0x29d0] sm:$0xff]
    %v2936 = vld [vmem:[#allocation11 + $0x29d8] sm:$0xff]
    %v2937 = vld [vmem:[#allocation11 + $0x29e0] sm:$0xff]
    %v2938 = vld [vmem:[#allocation11 + $0x29e8] sm:$0xff]
    %v2939 = vld [vmem:[#allocation11 + $0x29f0] sm:$0xff]
    %v2940 = vld [vmem:[#allocation11 + $0x29f8] sm:$0xff]
    %v2941 = vld [vmem:[#allocation11 + $0x2a00] sm:$0xff]
    %v2942 = vld [vmem:[#allocation11 + $0x2a08] sm:$0xff]
    %v2943 = vld [vmem:[#allocation11 + $0x2a10] sm:$0xff]
    %v2944 = vld [vmem:[#allocation11 + $0x2a18] sm:$0xff]
    %v2945 = vld [vmem:[#allocation11 + $0x2a20] sm:$0xff]
    %v2946 = vld [vmem:[#allocation11 + $0x2a28] sm:$0xff]
    %v2947 = vld [vmem:[#allocation11 + $0x2a30] sm:$0xff]
    %v2948 = vld [vmem:[#allocation11 + $0x2a38] sm:$0xff]
    %v2949 = vld [vmem:[#allocation11 + $0x2a40] sm:$0xff]
    %v2950 = vld [vmem:[#allocation11 + $0x2a48] sm:$0xff]
    %v2951 = vld [vmem:[#allocation11 + $0x2a50] sm:$0xff]
    %v2952 = vld [vmem:[#allocation11 + $0x2a58] sm:$0xff]
    %v2953 = vld [vmem:[#allocation11 + $0x2a60] sm:$0xff]
    %v2954 = vld [vmem:[#allocation11 + $0x2a68] sm:$0xff]
    %v2955 = vld [vmem:[#allocation11 + $0x2a70] sm:$0xff]
    %v2956 = vld [vmem:[#allocation11 + $0x2a78] sm:$0xff]
    %v2957 = vld [vmem:[#allocation11 + $0x2a80] sm:$0xff]
    %v2958 = vld [vmem:[#allocation11 + $0x2a88] sm:$0xff]
    %v2959 = vld [vmem:[#allocation11 + $0x2a90] sm:$0xff]
    %v2960 = vld [vmem:[#allocation11 + $0x2a98] sm:$0xff]
    %v2961 = vld [vmem:[#allocation11 + $0x2aa0] sm:$0xff]
    %v2962 = vld [vmem:[#allocation11 + $0x2aa8] sm:$0xff]
    %v2963 = vld [vmem:[#allocation11 + $0x2ab0] sm:$0xff]
    %v2964 = vld [vmem:[#allocation11 + $0x2ab8] sm:$0xff]
    %v2965 = vld [vmem:[#allocation11 + $0x2ac0] sm:$0xff]
    %v2966 = vld [vmem:[#allocation11 + $0x2ac8] sm:$0xff]
    %v2967 = vld [vmem:[#allocation11 + $0x2ad0] sm:$0xff]
    %v2968 = vld [vmem:[#allocation11 + $0x2ad8] sm:$0xff]
    %v2969 = vld [vmem:[#allocation11 + $0x2ae0] sm:$0xff]
    %v2970 = vld [vmem:[#allocation11 + $0x2ae8] sm:$0xff]
    %v2971 = vld [vmem:[#allocation11 + $0x2af0] sm:$0xff]
    %v2972 = vld [vmem:[#allocation11 + $0x2af8] sm:$0xff]
    %v2973 = vld [vmem:[#allocation11 + $0x2b00] sm:$0xff]
    %v2974 = vld [vmem:[#allocation11 + $0x2b08] sm:$0xff]
    %v2975 = vld [vmem:[#allocation11 + $0x2b10] sm:$0xff]
    %v2976 = vld [vmem:[#allocation11 + $0x2b18] sm:$0xff]
    %v2977 = vld [vmem:[#allocation11 + $0x2b20] sm:$0xff]
    %v2978 = vld [vmem:[#allocation11 + $0x2b28] sm:$0xff]
    %v2979 = vld [vmem:[#allocation11 + $0x2b30] sm:$0xff]
    %v2980 = vld [vmem:[#allocation11 + $0x2b38] sm:$0xff]
    %v2981 = vld [vmem:[#allocation11 + $0x2b40] sm:$0xff]
    %v2982 = vld [vmem:[#allocation11 + $0x2b48] sm:$0xff]
    %v2983 = vld [vmem:[#allocation11 + $0x2b50] sm:$0xff]
    %v2984 = vld [vmem:[#allocation11 + $0x2b58] sm:$0xff]
    %v2985 = vld [vmem:[#allocation11 + $0x2b60] sm:$0xff]
    %v2986 = vld [vmem:[#allocation11 + $0x2b68] sm:$0xff]
    %v2987 = vld [vmem:[#allocation11 + $0x2b70] sm:$0xff]
    %v2988 = vld [vmem:[#allocation11 + $0x2b78] sm:$0xff]
    %v2989 = vld [vmem:[#allocation11 + $0x2b80] sm:$0xff]
    %v2990 = vld [vmem:[#allocation11 + $0x2b88] sm:$0xff]
    %v2991 = vld [vmem:[#allocation11 + $0x2b90] sm:$0xff]
    %v2992 = vld [vmem:[#allocation11 + $0x2b98] sm:$0xff]
    %v2993 = vld [vmem:[#allocation11 + $0x2ba0] sm:$0xff]
    %v2994 = vld [vmem:[#allocation11 + $0x2ba8] sm:$0xff]
    %v2995 = vld [vmem:[#allocation11 + $0x2bb0] sm:$0xff]
    %v2996 = vld [vmem:[#allocation11 + $0x2bb8] sm:$0xff]
    %v2997 = vld [vmem:[#allocation11 + $0x2bc0] sm:$0xff]
    %v2998 = vld [vmem:[#allocation11 + $0x2bc8] sm:$0xff]
    %v2999 = vld [vmem:[#allocation11 + $0x2bd0] sm:$0xff]
    %v3000 = vld [vmem:[#allocation11 + $0x2bd8] sm:$0xff]
    %v3001 = vld [vmem:[#allocation11 + $0x2be0] sm:$0xff]
    %v3002 = vld [vmem:[#allocation11 + $0x2be8] sm:$0xff]
    %v3003 = vld [vmem:[#allocation11 + $0x2bf0] sm:$0xff]
    %v3004 = vld [vmem:[#allocation11 + $0x2bf8] sm:$0xff]
    %v3005 = vld [vmem:[#allocation11 + $0x2c00] sm:$0xff]
    %v3006 = vld [vmem:[#allocation11 + $0x2c08] sm:$0xff]
    %v3007 = vld [vmem:[#allocation11 + $0x2c10] sm:$0xff]
    %v3008 = vld [vmem:[#allocation11 + $0x2c18] sm:$0xff]
    %v3009 = vld [vmem:[#allocation11 + $0x2c20] sm:$0xff]
    %v3010 = vld [vmem:[#allocation11 + $0x2c28] sm:$0xff]
    %v3011 = vld [vmem:[#allocation11 + $0x2c30] sm:$0xff]
    %v3012 = vld [vmem:[#allocation11 + $0x2c38] sm:$0xff]
    %v3013 = vld [vmem:[#allocation11 + $0x2c40] sm:$0xff]
    %v3014 = vld [vmem:[#allocation11 + $0x2c48] sm:$0xff]
    %v3015 = vld [vmem:[#allocation11 + $0x2c50] sm:$0xff]
    %v3016 = vld [vmem:[#allocation11 + $0x2c58] sm:$0xff]
    %v3017 = vld [vmem:[#allocation11 + $0x2c60] sm:$0xff]
    %v3018 = vld [vmem:[#allocation11 + $0x2c68] sm:$0xff]
    %v3019 = vld [vmem:[#allocation11 + $0x2c70] sm:$0xff]
    %v3020 = vld [vmem:[#allocation11 + $0x2c78] sm:$0xff]
    %v3021 = vld [vmem:[#allocation11 + $0x2c80] sm:$0xff]
    %v3022 = vld [vmem:[#allocation11 + $0x2c88] sm:$0xff]
    %v3023 = vld [vmem:[#allocation11 + $0x2c90] sm:$0xff]
    %v3024 = vld [vmem:[#allocation11 + $0x2c98] sm:$0xff]
    %v3025 = vld [vmem:[#allocation11 + $0x2ca0] sm:$0xff]
    %v3026 = vld [vmem:[#allocation11 + $0x2ca8] sm:$0xff]
    %v3027 = vld [vmem:[#allocation11 + $0x2cb0] sm:$0xff]
    %v3028 = vld [vmem:[#allocation11 + $0x2cb8] sm:$0xff]
    %v3029 = vld [vmem:[#allocation11 + $0x2cc0] sm:$0xff]
    %v3030 = vld [vmem:[#allocation11 + $0x2cc8] sm:$0xff]
    %v3031 = vld [vmem:[#allocation11 + $0x2cd0] sm:$0xff]
    %v3032 = vld [vmem:[#allocation11 + $0x2cd8] sm:$0xff]
    %v3033 = vld [vmem:[#allocation11 + $0x2ce0] sm:$0xff]
    %v3034 = vld [vmem:[#allocation11 + $0x2ce8] sm:$0xff]
    %v3035 = vld [vmem:[#allocation11 + $0x2cf0] sm:$0xff]
    %v3036 = vld [vmem:[#allocation11 + $0x2cf8] sm:$0xff]
    %v3037 = vld [vmem:[#allocation11 + $0x2d00] sm:$0xff]
    %v3038 = vld [vmem:[#allocation11 + $0x2d08] sm:$0xff]
    %v3039 = vld [vmem:[#allocation11 + $0x2d10] sm:$0xff]
    %v3040 = vld [vmem:[#allocation11 + $0x2d18] sm:$0xff]
    %v3041 = vld [vmem:[#allocation11 + $0x2d20] sm:$0xff]
    %v3042 = vld [vmem:[#allocation11 + $0x2d28] sm:$0xff]
    %v3043 = vld [vmem:[#allocation11 + $0x2d30] sm:$0xff]
    %v3044 = vld [vmem:[#allocation11 + $0x2d38] sm:$0xff]
    %v3045 = vld [vmem:[#allocation11 + $0x2d40] sm:$0xff]
    %v3046 = vld [vmem:[#allocation11 + $0x2d48] sm:$0xff]
    %v3047 = vld [vmem:[#allocation11 + $0x2d50] sm:$0xff]
    %v3048 = vld [vmem:[#allocation11 + $0x2d58] sm:$0xff]
    %v3049 = vld [vmem:[#allocation11 + $0x2d60] sm:$0xff]
    %v3050 = vld [vmem:[#allocation11 + $0x2d68] sm:$0xff]
    %v3051 = vld [vmem:[#allocation11 + $0x2d70] sm:$0xff]
    %v3052 = vld [vmem:[#allocation11 + $0x2d78] sm:$0xff]
    %v3053 = vld [vmem:[#allocation11 + $0x2d80] sm:$0xff]
    %v3054 = vld [vmem:[#allocation11 + $0x2d88] sm:$0xff]
    %v3055 = vld [vmem:[#allocation11 + $0x2d90] sm:$0xff]
    %v3056 = vld [vmem:[#allocation11 + $0x2d98] sm:$0xff]
    %v3057 = vld [vmem:[#allocation11 + $0x2da0] sm:$0xff]
    %v3058 = vld [vmem:[#allocation11 + $0x2da8] sm:$0xff]
    %v3059 = vld [vmem:[#allocation11 + $0x2db0] sm:$0xff]
    %v3060 = vld [vmem:[#allocation11 + $0x2db8] sm:$0xff]
    %v3061 = vld [vmem:[#allocation11 + $0x2dc0] sm:$0xff]
    %v3062 = vld [vmem:[#allocation11 + $0x2dc8] sm:$0xff]
    %v3063 = vld [vmem:[#allocation11 + $0x2dd0] sm:$0xff]
    %v3064 = vld [vmem:[#allocation11 + $0x2dd8] sm:$0xff]
    %v3065 = vld [vmem:[#allocation11 + $0x2de0] sm:$0xff]
    %v3066 = vld [vmem:[#allocation11 + $0x2de8] sm:$0xff]
    %v3067 = vld [vmem:[#allocation11 + $0x2df0] sm:$0xff]
    %v3068 = vld [vmem:[#allocation11 + $0x2df8] sm:$0xff]
    %v3069 = vld [vmem:[#allocation11 + $0x2e00] sm:$0xff]
    %v3070 = vld [vmem:[#allocation11 + $0x2e08] sm:$0xff]
    %v3071 = vld [vmem:[#allocation11 + $0x2e10] sm:$0xff]
    %v3072 = vld [vmem:[#allocation11 + $0x2e18] sm:$0xff]
    %v3073 = vld [vmem:[#allocation11 + $0x2e20] sm:$0xff]
    %v3074 = vld [vmem:[#allocation11 + $0x2e28] sm:$0xff]
    %v3075 = vld [vmem:[#allocation11 + $0x2e30] sm:$0xff]
    %v3076 = vld [vmem:[#allocation11 + $0x2e38] sm:$0xff]
    %v3077 = vld [vmem:[#allocation11 + $0x2e40] sm:$0xff]
    %v3078 = vld [vmem:[#allocation11 + $0x2e48] sm:$0xff]
    %v3079 = vld [vmem:[#allocation11 + $0x2e50] sm:$0xff]
    %v3080 = vld [vmem:[#allocation11 + $0x2e58] sm:$0xff]
    %v3081 = vld [vmem:[#allocation11 + $0x2e60] sm:$0xff]
    %v3082 = vld [vmem:[#allocation11 + $0x2e68] sm:$0xff]
    %v3083 = vld [vmem:[#allocation11 + $0x2e70] sm:$0xff]
    %v3084 = vld [vmem:[#allocation11 + $0x2e78] sm:$0xff]
    %v3085 = vld [vmem:[#allocation11 + $0x2e80] sm:$0xff]
    %v3086 = vld [vmem:[#allocation11 + $0x2e88] sm:$0xff]
    %v3087 = vld [vmem:[#allocation11 + $0x2e90] sm:$0xff]
    %v3088 = vld [vmem:[#allocation11 + $0x2e98] sm:$0xff]
    %v3089 = vld [vmem:[#allocation11 + $0x2ea0] sm:$0xff]
    %v3090 = vld [vmem:[#allocation11 + $0x2ea8] sm:$0xff]
    %v3091 = vld [vmem:[#allocation11 + $0x2eb0] sm:$0xff]
    %v3092 = vld [vmem:[#allocation11 + $0x2eb8] sm:$0xff]
    %v3093 = vld [vmem:[#allocation11 + $0x2ec0] sm:$0xff]
    %v3094 = vld [vmem:[#allocation11 + $0x2ec8] sm:$0xff]
    %v3095 = vld [vmem:[#allocation11 + $0x2ed0] sm:$0xff]
    %v3096 = vld [vmem:[#allocation11 + $0x2ed8] sm:$0xff]
    %v3097 = vld [vmem:[#allocation11 + $0x2ee0] sm:$0xff]
    %v3098 = vld [vmem:[#allocation11 + $0x2ee8] sm:$0xff]
    %v3099 = vld [vmem:[#allocation11 + $0x2ef0] sm:$0xff]
    %v3100 = vld [vmem:[#allocation11 + $0x2ef8] sm:$0xff]
    %v3101 = vld [vmem:[#allocation11 + $0x2f00] sm:$0xff]
    %v3102 = vld [vmem:[#allocation11 + $0x2f08] sm:$0xff]
    %v3103 = vld [vmem:[#allocation11 + $0x2f10] sm:$0xff]
    %v3104 = vld [vmem:[#allocation11 + $0x2f18] sm:$0xff]
    %v3105 = vld [vmem:[#allocation11 + $0x2f20] sm:$0xff]
    %v3106 = vld [vmem:[#allocation11 + $0x2f28] sm:$0xff]
    %v3107 = vld [vmem:[#allocation11 + $0x2f30] sm:$0xff]
    %v3108 = vld [vmem:[#allocation11 + $0x2f38] sm:$0xff]
    %v3109 = vld [vmem:[#allocation11 + $0x2f40] sm:$0xff]
    %v3110 = vld [vmem:[#allocation11 + $0x2f48] sm:$0xff]
    %v3111 = vld [vmem:[#allocation11 + $0x2f50] sm:$0xff]
    %v3112 = vld [vmem:[#allocation11 + $0x2f58] sm:$0xff]
    %v3113 = vld [vmem:[#allocation11 + $0x2f60] sm:$0xff]
    %v3114 = vld [vmem:[#allocation11 + $0x2f68] sm:$0xff]
    %v3115 = vld [vmem:[#allocation11 + $0x2f70] sm:$0xff]
    %v3116 = vld [vmem:[#allocation11 + $0x2f78] sm:$0xff]
    %v3117 = vld [vmem:[#allocation11 + $0x2f80] sm:$0xff]
    %v3118 = vld [vmem:[#allocation11 + $0x2f88] sm:$0xff]
    %v3119 = vld [vmem:[#allocation11 + $0x2f90] sm:$0xff]
    %v3120 = vld [vmem:[#allocation11 + $0x2f98] sm:$0xff]
    %v3121 = vld [vmem:[#allocation11 + $0x2fa0] sm:$0xff]
    %v3122 = vld [vmem:[#allocation11 + $0x2fa8] sm:$0xff]
    %v3123 = vld [vmem:[#allocation11 + $0x2fb0] sm:$0xff]
    %v3124 = vld [vmem:[#allocation11 + $0x2fb8] sm:$0xff]
    %v3125 = vld [vmem:[#allocation11 + $0x2fc0] sm:$0xff]
    %v3126 = vld [vmem:[#allocation11 + $0x2fc8] sm:$0xff]
    %v3127 = vld [vmem:[#allocation11 + $0x2fd0] sm:$0xff]
    %v3128 = vld [vmem:[#allocation11 + $0x2fd8] sm:$0xff]
    %v3129 = vld [vmem:[#allocation11 + $0x2fe0] sm:$0xff]
    %v3130 = vld [vmem:[#allocation11 + $0x2fe8] sm:$0xff]
    %v3131 = vld [vmem:[#allocation11 + $0x2ff0] sm:$0xff]
    %v3132 = vld [vmem:[#allocation11 + $0x2ff8] sm:$0xff]
    %v3133 = vld [vmem:[#allocation11 + $0x3000] sm:$0xff]
    %v3134 = vld [vmem:[#allocation11 + $0x3008] sm:$0xff]
    %v3135 = vld [vmem:[#allocation11 + $0x3010] sm:$0xff]
    %v3136 = vld [vmem:[#allocation11 + $0x3018] sm:$0xff]
    %v3137 = vld [vmem:[#allocation11 + $0x3020] sm:$0xff]
    %v3138 = vld [vmem:[#allocation11 + $0x3028] sm:$0xff]
    %v3139 = vld [vmem:[#allocation11 + $0x3030] sm:$0xff]
    %v3140 = vld [vmem:[#allocation11 + $0x3038] sm:$0xff]
    %v3141 = vld [vmem:[#allocation11 + $0x3040] sm:$0xff]
    %v3142 = vld [vmem:[#allocation11 + $0x3048] sm:$0xff]
    %v3143 = vld [vmem:[#allocation11 + $0x3050] sm:$0xff]
    %v3144 = vld [vmem:[#allocation11 + $0x3058] sm:$0xff]
    %v3145 = vld [vmem:[#allocation11 + $0x3060] sm:$0xff]
    %v3146 = vld [vmem:[#allocation11 + $0x3068] sm:$0xff]
    %v3147 = vld [vmem:[#allocation11 + $0x3070] sm:$0xff]
    %v3148 = vld [vmem:[#allocation11 + $0x3078] sm:$0xff]
    %v3149 = vld [vmem:[#allocation11 + $0x3080] sm:$0xff]
    %v3150 = vld [vmem:[#allocation11 + $0x3088] sm:$0xff]
    %v3151 = vld [vmem:[#allocation11 + $0x3090] sm:$0xff]
    %v3152 = vld [vmem:[#allocation11 + $0x3098] sm:$0xff]
    %v3153 = vld [vmem:[#allocation11 + $0x30a0] sm:$0xff]
    %v3154 = vld [vmem:[#allocation11 + $0x30a8] sm:$0xff]
    %v3155 = vld [vmem:[#allocation11 + $0x30b0] sm:$0xff]
    %v3156 = vld [vmem:[#allocation11 + $0x30b8] sm:$0xff]
    %v3157 = vld [vmem:[#allocation11 + $0x30c0] sm:$0xff]
    %v3158 = vld [vmem:[#allocation11 + $0x30c8] sm:$0xff]
    %v3159 = vld [vmem:[#allocation11 + $0x30d0] sm:$0xff]
    %v3160 = vld [vmem:[#allocation11 + $0x30d8] sm:$0xff]
    %v3161 = vld [vmem:[#allocation11 + $0x30e0] sm:$0xff]
    %v3162 = vld [vmem:[#allocation11 + $0x30e8] sm:$0xff]
    %v3163 = vld [vmem:[#allocation11 + $0x30f0] sm:$0xff]
    %v3164 = vld [vmem:[#allocation11 + $0x30f8] sm:$0xff]
    %v3165 = vld [vmem:[#allocation11 + $0x3100] sm:$0xff]
    %v3166 = vld [vmem:[#allocation11 + $0x3108] sm:$0xff]
    %v3167 = vld [vmem:[#allocation11 + $0x3110] sm:$0xff]
    %v3168 = vld [vmem:[#allocation11 + $0x3118] sm:$0xff]
    %v3169 = vld [vmem:[#allocation11 + $0x3120] sm:$0xff]
    %v3170 = vld [vmem:[#allocation11 + $0x3128] sm:$0xff]
    %v3171 = vld [vmem:[#allocation11 + $0x3130] sm:$0xff]
    %v3172 = vld [vmem:[#allocation11 + $0x3138] sm:$0xff]
    %v3173 = vld [vmem:[#allocation11 + $0x3140] sm:$0xff]
    %v3174 = vld [vmem:[#allocation11 + $0x3148] sm:$0xff]
    %v3175 = vld [vmem:[#allocation11 + $0x3150] sm:$0xff]
    %v3176 = vld [vmem:[#allocation11 + $0x3158] sm:$0xff]
    %v3177 = vld [vmem:[#allocation11 + $0x3160] sm:$0xff]
    %v3178 = vld [vmem:[#allocation11 + $0x3168] sm:$0xff]
    %v3179 = vld [vmem:[#allocation11 + $0x3170] sm:$0xff]
    %v3180 = vld [vmem:[#allocation11 + $0x3178] sm:$0xff]
    %v3181 = vld [vmem:[#allocation11 + $0x3180] sm:$0xff]
    %v3182 = vld [vmem:[#allocation11 + $0x3188] sm:$0xff]
    %v3183 = vld [vmem:[#allocation11 + $0x3190] sm:$0xff]
    %v3184 = vld [vmem:[#allocation11 + $0x3198] sm:$0xff]
    %v3185 = vld [vmem:[#allocation11 + $0x31a0] sm:$0xff]
    %v3186 = vld [vmem:[#allocation11 + $0x31a8] sm:$0xff]
    %v3187 = vld [vmem:[#allocation11 + $0x31b0] sm:$0xff]
    %v3188 = vld [vmem:[#allocation11 + $0x31b8] sm:$0xff]
    %v3189 = vld [vmem:[#allocation11 + $0x31c0] sm:$0xff]
    %v3190 = vld [vmem:[#allocation11 + $0x31c8] sm:$0xff]
    %v3191 = vld [vmem:[#allocation11 + $0x31d0] sm:$0xff]
    %v3192 = vld [vmem:[#allocation11 + $0x31d8] sm:$0xff]
    %v3193 = vld [vmem:[#allocation11 + $0x31e0] sm:$0xff]
    %v3194 = vld [vmem:[#allocation11 + $0x31e8] sm:$0xff]
    %v3195 = vld [vmem:[#allocation11 + $0x31f0] sm:$0xff]
    %v3196 = vld [vmem:[#allocation11 + $0x31f8] sm:$0xff]
    %v3197 = vld [vmem:[#allocation11 + $0x3200] sm:$0xff]
    %v3198 = vld [vmem:[#allocation11 + $0x3208] sm:$0xff]
    %v3199 = vld [vmem:[#allocation11 + $0x3210] sm:$0xff]
    %v3200 = vld [vmem:[#allocation11 + $0x3218] sm:$0xff]
    %v3201 = vld [vmem:[#allocation11 + $0x3220] sm:$0xff]
    %v3202 = vld [vmem:[#allocation11 + $0x3228] sm:$0xff]
    %v3203 = vld [vmem:[#allocation11 + $0x3230] sm:$0xff]
    %v3204 = vld [vmem:[#allocation11 + $0x3238] sm:$0xff]
    %v3205 = vld [vmem:[#allocation11 + $0x3240] sm:$0xff]
    %v3206 = vld [vmem:[#allocation11 + $0x3248] sm:$0xff]
    %v3207 = vld [vmem:[#allocation11 + $0x3250] sm:$0xff]
    %v3208 = vld [vmem:[#allocation11 + $0x3258] sm:$0xff]
    %v3209 = vld [vmem:[#allocation11 + $0x3260] sm:$0xff]
    %v3210 = vld [vmem:[#allocation11 + $0x3268] sm:$0xff]
    %v3211 = vld [vmem:[#allocation11 + $0x3270] sm:$0xff]
    %v3212 = vld [vmem:[#allocation11 + $0x3278] sm:$0xff]
    %v3213 = vld [vmem:[#allocation11 + $0x3280] sm:$0xff]
    %v3214 = vld [vmem:[#allocation11 + $0x3288] sm:$0xff]
    %v3215 = vld [vmem:[#allocation11 + $0x3290] sm:$0xff]
    %v3216 = vld [vmem:[#allocation11 + $0x3298] sm:$0xff]
    %v3217 = vld [vmem:[#allocation11 + $0x32a0] sm:$0xff]
    %v3218 = vld [vmem:[#allocation11 + $0x32a8] sm:$0xff]
    %v3219 = vld [vmem:[#allocation11 + $0x32b0] sm:$0xff]
    %v3220 = vld [vmem:[#allocation11 + $0x32b8] sm:$0xff]
    %v3221 = vld [vmem:[#allocation11 + $0x32c0] sm:$0xff]
    %v3222 = vld [vmem:[#allocation11 + $0x32c8] sm:$0xff]
    %v3223 = vld [vmem:[#allocation11 + $0x32d0] sm:$0xff]
    %v3224 = vld [vmem:[#allocation11 + $0x32d8] sm:$0xff]
    %v3225 = vld [vmem:[#allocation11 + $0x32e0] sm:$0xff]
    %v3226 = vld [vmem:[#allocation11 + $0x32e8] sm:$0xff]
    %v3227 = vld [vmem:[#allocation11 + $0x32f0] sm:$0xff]
    %v3228 = vld [vmem:[#allocation11 + $0x32f8] sm:$0xff]
    %v3229 = vld [vmem:[#allocation11 + $0x3300] sm:$0xff]
    %v3230 = vld [vmem:[#allocation11 + $0x3308] sm:$0xff]
    %v3231 = vld [vmem:[#allocation11 + $0x3310] sm:$0xff]
    %v3232 = vld [vmem:[#allocation11 + $0x3318] sm:$0xff]
    %v3233 = vld [vmem:[#allocation11 + $0x3320] sm:$0xff]
    %v3234 = vld [vmem:[#allocation11 + $0x3328] sm:$0xff]
    %v3235 = vld [vmem:[#allocation11 + $0x3330] sm:$0xff]
    %v3236 = vld [vmem:[#allocation11 + $0x3338] sm:$0xff]
    %v3237 = vld [vmem:[#allocation11 + $0x3340] sm:$0xff]
    %v3238 = vld [vmem:[#allocation11 + $0x3348] sm:$0xff]
    %v3239 = vld [vmem:[#allocation11 + $0x3350] sm:$0xff]
    %v3240 = vld [vmem:[#allocation11 + $0x3358] sm:$0xff]
    %v3241 = vld [vmem:[#allocation11 + $0x3360] sm:$0xff]
    %v3242 = vld [vmem:[#allocation11 + $0x3368] sm:$0xff]
    %v3243 = vld [vmem:[#allocation11 + $0x3370] sm:$0xff]
    %v3244 = vld [vmem:[#allocation11 + $0x3378] sm:$0xff]
    %v3245 = vld [vmem:[#allocation11 + $0x3380] sm:$0xff]
    %v3246 = vld [vmem:[#allocation11 + $0x3388] sm:$0xff]
    %v3247 = vld [vmem:[#allocation11 + $0x3390] sm:$0xff]
    %v3248 = vld [vmem:[#allocation11 + $0x3398] sm:$0xff]
    %v3249 = vld [vmem:[#allocation11 + $0x33a0] sm:$0xff]
    %v3250 = vld [vmem:[#allocation11 + $0x33a8] sm:$0xff]
    %v3251 = vld [vmem:[#allocation11 + $0x33b0] sm:$0xff]
    %v3252 = vld [vmem:[#allocation11 + $0x33b8] sm:$0xff]
    %v3253 = vld [vmem:[#allocation11 + $0x33c0] sm:$0xff]
    %v3254 = vld [vmem:[#allocation11 + $0x33c8] sm:$0xff]
    %v3255 = vld [vmem:[#allocation11 + $0x33d0] sm:$0xff]
    %v3256 = vld [vmem:[#allocation11 + $0x33d8] sm:$0xff]
    %v3257 = vld [vmem:[#allocation11 + $0x33e0] sm:$0xff]
    %v3258 = vld [vmem:[#allocation11 + $0x33e8] sm:$0xff]
    %v3259 = vld [vmem:[#allocation11 + $0x33f0] sm:$0xff]
    %v3260 = vld [vmem:[#allocation11 + $0x33f8] sm:$0xff]
    %v3261 = vld [vmem:[#allocation11 + $0x3400] sm:$0xff]
    %v3262 = vld [vmem:[#allocation11 + $0x3408] sm:$0xff]
    %v3263 = vld [vmem:[#allocation11 + $0x3410] sm:$0xff]
    %v3264 = vld [vmem:[#allocation11 + $0x3418] sm:$0xff]
    %v3265 = vld [vmem:[#allocation11 + $0x3420] sm:$0xff]
    %v3266 = vld [vmem:[#allocation11 + $0x3428] sm:$0xff]
    %v3267 = vld [vmem:[#allocation11 + $0x3430] sm:$0xff]
    %v3268 = vld [vmem:[#allocation11 + $0x3438] sm:$0xff]
    %v3269 = vld [vmem:[#allocation11 + $0x3440] sm:$0xff]
    %v3270 = vld [vmem:[#allocation11 + $0x3448] sm:$0xff]
    %v3271 = vld [vmem:[#allocation11 + $0x3450] sm:$0xff]
    %v3272 = vld [vmem:[#allocation11 + $0x3458] sm:$0xff]
    %v3273 = vld [vmem:[#allocation11 + $0x3460] sm:$0xff]
    %v3274 = vld [vmem:[#allocation11 + $0x3468] sm:$0xff]
    %v3275 = vld [vmem:[#allocation11 + $0x3470] sm:$0xff]
    %v3276 = vld [vmem:[#allocation11 + $0x3478] sm:$0xff]
    %v3277 = vld [vmem:[#allocation11 + $0x3480] sm:$0xff]
    %v3278 = vld [vmem:[#allocation11 + $0x3488] sm:$0xff]
    %v3279 = vld [vmem:[#allocation11 + $0x3490] sm:$0xff]
    %v3280 = vld [vmem:[#allocation11 + $0x3498] sm:$0xff]
    %v3281 = vld [vmem:[#allocation11 + $0x34a0] sm:$0xff]
    %v3282 = vld [vmem:[#allocation11 + $0x34a8] sm:$0xff]
    %v3283 = vld [vmem:[#allocation11 + $0x34b0] sm:$0xff]
    %v3284 = vld [vmem:[#allocation11 + $0x34b8] sm:$0xff]
    %v3285 = vld [vmem:[#allocation11 + $0x34c0] sm:$0xff]
    %v3286 = vld [vmem:[#allocation11 + $0x34c8] sm:$0xff]
    %v3287 = vld [vmem:[#allocation11 + $0x34d0] sm:$0xff]
    %v3288 = vld [vmem:[#allocation11 + $0x34d8] sm:$0xff]
    %v3289 = vld [vmem:[#allocation11 + $0x34e0] sm:$0xff]
    %v3290 = vld [vmem:[#allocation11 + $0x34e8] sm:$0xff]
    %v3291 = vld [vmem:[#allocation11 + $0x34f0] sm:$0xff]
    %v3292 = vld [vmem:[#allocation11 + $0x34f8] sm:$0xff]
    %v3293 = vld [vmem:[#allocation11 + $0x3500] sm:$0xff]
    %v3294 = vld [vmem:[#allocation11 + $0x3508] sm:$0xff]
    %v3295 = vld [vmem:[#allocation11 + $0x3510] sm:$0xff]
    %v3296 = vld [vmem:[#allocation11 + $0x3518] sm:$0xff]
    %v3297 = vld [vmem:[#allocation11 + $0x3520] sm:$0xff]
    %v3298 = vld [vmem:[#allocation11 + $0x3528] sm:$0xff]
    %v3299 = vld [vmem:[#allocation11 + $0x3530] sm:$0xff]
    %v3300 = vld [vmem:[#allocation11 + $0x3538] sm:$0xff]
    %v3301 = vld [vmem:[#allocation11 + $0x3540] sm:$0xff]
    %v3302 = vld [vmem:[#allocation11 + $0x3548] sm:$0xff]
    %v3303 = vld [vmem:[#allocation11 + $0x3550] sm:$0xff]
    %v3304 = vld [vmem:[#allocation11 + $0x3558] sm:$0xff]
    %v3305 = vld [vmem:[#allocation11 + $0x3560] sm:$0xff]
    %v3306 = vld [vmem:[#allocation11 + $0x3568] sm:$0xff]
    %v3307 = vld [vmem:[#allocation11 + $0x3570] sm:$0xff]
    %v3308 = vld [vmem:[#allocation11 + $0x3578] sm:$0xff]
    %v3309 = vld [vmem:[#allocation11 + $0x3580] sm:$0xff]
    %v3310 = vld [vmem:[#allocation11 + $0x3588] sm:$0xff]
    %v3311 = vld [vmem:[#allocation11 + $0x3590] sm:$0xff]
    %v3312 = vld [vmem:[#allocation11 + $0x3598] sm:$0xff]
    %v3313 = vld [vmem:[#allocation11 + $0x35a0] sm:$0xff]
    %v3314 = vld [vmem:[#allocation11 + $0x35a8] sm:$0xff]
    %v3315 = vld [vmem:[#allocation11 + $0x35b0] sm:$0xff]
    %v3316 = vld [vmem:[#allocation11 + $0x35b8] sm:$0xff]
    %v3317 = vld [vmem:[#allocation11 + $0x35c0] sm:$0xff]
    %v3318 = vld [vmem:[#allocation11 + $0x35c8] sm:$0xff]
    %v3319 = vld [vmem:[#allocation11 + $0x35d0] sm:$0xff]
    %v3320 = vld [vmem:[#allocation11 + $0x35d8] sm:$0xff]
    %v3321 = vld [vmem:[#allocation11 + $0x35e0] sm:$0xff]
    %v3322 = vld [vmem:[#allocation11 + $0x35e8] sm:$0xff]
    %v3323 = vld [vmem:[#allocation11 + $0x35f0] sm:$0xff]
    %v3324 = vld [vmem:[#allocation11 + $0x35f8] sm:$0xff]
    %v3325 = vld [vmem:[#allocation11 + $0x3600] sm:$0xff]
    %v3326 = vld [vmem:[#allocation11 + $0x3608] sm:$0xff]
    %v3327 = vld [vmem:[#allocation11 + $0x3610] sm:$0xff]
    %v3328 = vld [vmem:[#allocation11 + $0x3618] sm:$0xff]
    %v3329 = vld [vmem:[#allocation11 + $0x3620] sm:$0xff]
    %v3330 = vld [vmem:[#allocation11 + $0x3628] sm:$0xff]
    %v3331 = vld [vmem:[#allocation11 + $0x3630] sm:$0xff]
    %v3332 = vld [vmem:[#allocation11 + $0x3638] sm:$0xff]
    %v3333 = vld [vmem:[#allocation11 + $0x3640] sm:$0xff]
    %v3334 = vld [vmem:[#allocation11 + $0x3648] sm:$0xff]
    %v3335 = vld [vmem:[#allocation11 + $0x3650] sm:$0xff]
    %v3336 = vld [vmem:[#allocation11 + $0x3658] sm:$0xff]
    %v3337 = vld [vmem:[#allocation11 + $0x3660] sm:$0xff]
    %v3338 = vld [vmem:[#allocation11 + $0x3668] sm:$0xff]
    %v3339 = vld [vmem:[#allocation11 + $0x3670] sm:$0xff]
    %v3340 = vld [vmem:[#allocation11 + $0x3678] sm:$0xff]
    %v3341 = vld [vmem:[#allocation11 + $0x3680] sm:$0xff]
    %v3342 = vld [vmem:[#allocation11 + $0x3688] sm:$0xff]
    %v3343 = vld [vmem:[#allocation11 + $0x3690] sm:$0xff]
    %v3344 = vld [vmem:[#allocation11 + $0x3698] sm:$0xff]
    %v3345 = vld [vmem:[#allocation11 + $0x36a0] sm:$0xff]
    %v3346 = vld [vmem:[#allocation11 + $0x36a8] sm:$0xff]
    %v3347 = vld [vmem:[#allocation11 + $0x36b0] sm:$0xff]
    %v3348 = vld [vmem:[#allocation11 + $0x36b8] sm:$0xff]
    %v3349 = vld [vmem:[#allocation11 + $0x36c0] sm:$0xff]
    %v3350 = vld [vmem:[#allocation11 + $0x36c8] sm:$0xff]
    %v3351 = vld [vmem:[#allocation11 + $0x36d0] sm:$0xff]
    %v3352 = vld [vmem:[#allocation11 + $0x36d8] sm:$0xff]
    %v3353 = vld [vmem:[#allocation11 + $0x36e0] sm:$0xff]
    %v3354 = vld [vmem:[#allocation11 + $0x36e8] sm:$0xff]
    %v3355 = vld [vmem:[#allocation11 + $0x36f0] sm:$0xff]
    %v3356 = vld [vmem:[#allocation11 + $0x36f8] sm:$0xff]
    %v3357 = vld [vmem:[#allocation11 + $0x3700] sm:$0xff]
    %v3358 = vld [vmem:[#allocation11 + $0x3708] sm:$0xff]
    %v3359 = vld [vmem:[#allocation11 + $0x3710] sm:$0xff]
    %v3360 = vld [vmem:[#allocation11 + $0x3718] sm:$0xff]
    %v3361 = vld [vmem:[#allocation11 + $0x3720] sm:$0xff]
    %v3362 = vld [vmem:[#allocation11 + $0x3728] sm:$0xff]
    %v3363 = vld [vmem:[#allocation11 + $0x3730] sm:$0xff]
    %v3364 = vld [vmem:[#allocation11 + $0x3738] sm:$0xff]
    %v3365 = vld [vmem:[#allocation11 + $0x3740] sm:$0xff]
    %v3366 = vld [vmem:[#allocation11 + $0x3748] sm:$0xff]
    %v3367 = vld [vmem:[#allocation11 + $0x3750] sm:$0xff]
    %v3368 = vld [vmem:[#allocation11 + $0x3758] sm:$0xff]
    %v3369 = vld [vmem:[#allocation11 + $0x3760] sm:$0xff]
    %v3370 = vld [vmem:[#allocation11 + $0x3768] sm:$0xff]
    %v3371 = vld [vmem:[#allocation11 + $0x3770] sm:$0xff]
    %v3372 = vld [vmem:[#allocation11 + $0x3778] sm:$0xff]
    %v3373 = vld [vmem:[#allocation11 + $0x3780] sm:$0xff]
    %v3374 = vld [vmem:[#allocation11 + $0x3788] sm:$0xff]
    %v3375 = vld [vmem:[#allocation11 + $0x3790] sm:$0xff]
    %v3376 = vld [vmem:[#allocation11 + $0x3798] sm:$0xff]
    %v3377 = vld [vmem:[#allocation11 + $0x37a0] sm:$0xff]
    %v3378 = vld [vmem:[#allocation11 + $0x37a8] sm:$0xff]
    %v3379 = vld [vmem:[#allocation11 + $0x37b0] sm:$0xff]
    %v3380 = vld [vmem:[#allocation11 + $0x37b8] sm:$0xff]
    %v3381 = vld [vmem:[#allocation11 + $0x37c0] sm:$0xff]
    %v3382 = vld [vmem:[#allocation11 + $0x37c8] sm:$0xff]
    %v3383 = vld [vmem:[#allocation11 + $0x37d0] sm:$0xff]
    %v3384 = vld [vmem:[#allocation11 + $0x37d8] sm:$0xff]
    %v3385 = vld [vmem:[#allocation11 + $0x37e0] sm:$0xff]
    %v3386 = vld [vmem:[#allocation11 + $0x37e8] sm:$0xff]
    %v3387 = vld [vmem:[#allocation11 + $0x37f0] sm:$0xff]
    %v3388 = vld [vmem:[#allocation11 + $0x37f8] sm:$0xff]
    %v3389 = vld [vmem:[#allocation11 + $0x3800] sm:$0xff]
    %v3390 = vld [vmem:[#allocation11 + $0x3808] sm:$0xff]
    %v3391 = vld [vmem:[#allocation11 + $0x3810] sm:$0xff]
    %v3392 = vld [vmem:[#allocation11 + $0x3818] sm:$0xff]
    %v3393 = vld [vmem:[#allocation11 + $0x3820] sm:$0xff]
    %v3394 = vld [vmem:[#allocation11 + $0x3828] sm:$0xff]
    %v3395 = vld [vmem:[#allocation11 + $0x3830] sm:$0xff]
    %v3396 = vld [vmem:[#allocation11 + $0x3838] sm:$0xff]
    %v3397 = vld [vmem:[#allocation11 + $0x3840] sm:$0xff]
    %v3398 = vld [vmem:[#allocation11 + $0x3848] sm:$0xff]
    %v3399 = vld [vmem:[#allocation11 + $0x3850] sm:$0xff]
    %v3400 = vld [vmem:[#allocation11 + $0x3858] sm:$0xff]
    %v3401 = vld [vmem:[#allocation11 + $0x3860] sm:$0xff]
    %v3402 = vld [vmem:[#allocation11 + $0x3868] sm:$0xff]
    %v3403 = vld [vmem:[#allocation11 + $0x3870] sm:$0xff]
    %v3404 = vld [vmem:[#allocation11 + $0x3878] sm:$0xff]
    %v3405 = vld [vmem:[#allocation11 + $0x3880] sm:$0xff]
    %v3406 = vld [vmem:[#allocation11 + $0x3888] sm:$0xff]
    %v3407 = vld [vmem:[#allocation11 + $0x3890] sm:$0xff]
    %v3408 = vld [vmem:[#allocation11 + $0x3898] sm:$0xff]
    %v3409 = vld [vmem:[#allocation11 + $0x38a0] sm:$0xff]
    %v3410 = vld [vmem:[#allocation11 + $0x38a8] sm:$0xff]
    %v3411 = vld [vmem:[#allocation11 + $0x38b0] sm:$0xff]
    %v3412 = vld [vmem:[#allocation11 + $0x38b8] sm:$0xff]
    %v3413 = vld [vmem:[#allocation11 + $0x38c0] sm:$0xff]
    %v3414 = vld [vmem:[#allocation11 + $0x38c8] sm:$0xff]
    %v3415 = vld [vmem:[#allocation11 + $0x38d0] sm:$0xff]
    %v3416 = vld [vmem:[#allocation11 + $0x38d8] sm:$0xff]
    %v3417 = vld [vmem:[#allocation11 + $0x38e0] sm:$0xff]
    %v3418 = vld [vmem:[#allocation11 + $0x38e8] sm:$0xff]
    %v3419 = vld [vmem:[#allocation11 + $0x38f0] sm:$0xff]
    %v3420 = vld [vmem:[#allocation11 + $0x38f8] sm:$0xff]
    %v3421 = vld [vmem:[#allocation11 + $0x3900] sm:$0xff]
    %v3422 = vld [vmem:[#allocation11 + $0x3908] sm:$0xff]
    %v3423 = vld [vmem:[#allocation11 + $0x3910] sm:$0xff]
    %v3424 = vld [vmem:[#allocation11 + $0x3918] sm:$0xff]
    %v3425 = vld [vmem:[#allocation11 + $0x3920] sm:$0xff]
    %v3426 = vld [vmem:[#allocation11 + $0x3928] sm:$0xff]
    %v3427 = vld [vmem:[#allocation11 + $0x3930] sm:$0xff]
    %v3428 = vld [vmem:[#allocation11 + $0x3938] sm:$0xff]
    %v3429 = vld [vmem:[#allocation11 + $0x3940] sm:$0xff]
    %v3430 = vld [vmem:[#allocation11 + $0x3948] sm:$0xff]
    %v3431 = vld [vmem:[#allocation11 + $0x3950] sm:$0xff]
    %v3432 = vld [vmem:[#allocation11 + $0x3958] sm:$0xff]
    %v3433 = vld [vmem:[#allocation11 + $0x3960] sm:$0xff]
    %v3434 = vld [vmem:[#allocation11 + $0x3968] sm:$0xff]
    %v3435 = vld [vmem:[#allocation11 + $0x3970] sm:$0xff]
    %v3436 = vld [vmem:[#allocation11 + $0x3978] sm:$0xff]
    %v3437 = vld [vmem:[#allocation11 + $0x3980] sm:$0xff]
    %v3438 = vld [vmem:[#allocation11 + $0x3988] sm:$0xff]
    %v3439 = vld [vmem:[#allocation11 + $0x3990] sm:$0xff]
    %v3440 = vld [vmem:[#allocation11 + $0x3998] sm:$0xff]
    %v3441 = vld [vmem:[#allocation11 + $0x39a0] sm:$0xff]
    %v3442 = vld [vmem:[#allocation11 + $0x39a8] sm:$0xff]
    %v3443 = vld [vmem:[#allocation11 + $0x39b0] sm:$0xff]
    %v3444 = vld [vmem:[#allocation11 + $0x39b8] sm:$0xff]
    %v3445 = vld [vmem:[#allocation11 + $0x39c0] sm:$0xff]
    %v3446 = vld [vmem:[#allocation11 + $0x39c8] sm:$0xff]
    %v3447 = vld [vmem:[#allocation11 + $0x39d0] sm:$0xff]
    %v3448 = vld [vmem:[#allocation11 + $0x39d8] sm:$0xff]
    %v3449 = vld [vmem:[#allocation11 + $0x39e0] sm:$0xff]
    %v3450 = vld [vmem:[#allocation11 + $0x39e8] sm:$0xff]
    %v3451 = vld [vmem:[#allocation11 + $0x39f0] sm:$0xff]
    %v3452 = vld [vmem:[#allocation11 + $0x39f8] sm:$0xff]
    %v3453 = vld [vmem:[#allocation11 + $0x3a00] sm:$0xff]
    %v3454 = vld [vmem:[#allocation11 + $0x3a08] sm:$0xff]
    %v3455 = vld [vmem:[#allocation11 + $0x3a10] sm:$0xff]
    %v3456 = vld [vmem:[#allocation11 + $0x3a18] sm:$0xff]
    %v3457 = vld [vmem:[#allocation11 + $0x3a20] sm:$0xff]
    %v3458 = vld [vmem:[#allocation11 + $0x3a28] sm:$0xff]
    %v3459 = vld [vmem:[#allocation11 + $0x3a30] sm:$0xff]
    %v3460 = vld [vmem:[#allocation11 + $0x3a38] sm:$0xff]
    %v3461 = vld [vmem:[#allocation11 + $0x3a40] sm:$0xff]
    %v3462 = vld [vmem:[#allocation11 + $0x3a48] sm:$0xff]
    %v3463 = vld [vmem:[#allocation11 + $0x3a50] sm:$0xff]
    %v3464 = vld [vmem:[#allocation11 + $0x3a58] sm:$0xff]
    %v3465 = vld [vmem:[#allocation11 + $0x3a60] sm:$0xff]
    %v3466 = vld [vmem:[#allocation11 + $0x3a68] sm:$0xff]
    %v3467 = vld [vmem:[#allocation11 + $0x3a70] sm:$0xff]
    %v3468 = vld [vmem:[#allocation11 + $0x3a78] sm:$0xff]
    %v3469 = vld [vmem:[#allocation11 + $0x3a80] sm:$0xff]
    %v3470 = vld [vmem:[#allocation11 + $0x3a88] sm:$0xff]
    %v3471 = vld [vmem:[#allocation11 + $0x3a90] sm:$0xff]
    %v3472 = vld [vmem:[#allocation11 + $0x3a98] sm:$0xff]
    %v3473 = vld [vmem:[#allocation11 + $0x3aa0] sm:$0xff]
    %v3474 = vld [vmem:[#allocation11 + $0x3aa8] sm:$0xff]
    %v3475 = vld [vmem:[#allocation11 + $0x3ab0] sm:$0xff]
    %v3476 = vld [vmem:[#allocation11 + $0x3ab8] sm:$0xff]
    %v3477 = vld [vmem:[#allocation11 + $0x3ac0] sm:$0xff]
    %v3478 = vld [vmem:[#allocation11 + $0x3ac8] sm:$0xff]
    %v3479 = vld [vmem:[#allocation11 + $0x3ad0] sm:$0xff]
    %v3480 = vld [vmem:[#allocation11 + $0x3ad8] sm:$0xff]
    %v3481 = vld [vmem:[#allocation11 + $0x3ae0] sm:$0xff]
    %v3482 = vld [vmem:[#allocation11 + $0x3ae8] sm:$0xff]
    %v3483 = vld [vmem:[#allocation11 + $0x3af0] sm:$0xff]
    %v3484 = vld [vmem:[#allocation11 + $0x3af8] sm:$0xff]
    %v3485 = vld [vmem:[#allocation11 + $0x3b00] sm:$0xff]
    %v3486 = vld [vmem:[#allocation11 + $0x3b08] sm:$0xff]
    %v3487 = vld [vmem:[#allocation11 + $0x3b10] sm:$0xff]
    %v3488 = vld [vmem:[#allocation11 + $0x3b18] sm:$0xff]
    %v3489 = vld [vmem:[#allocation11 + $0x3b20] sm:$0xff]
    %v3490 = vld [vmem:[#allocation11 + $0x3b28] sm:$0xff]
    %v3491 = vld [vmem:[#allocation11 + $0x3b30] sm:$0xff]
    %v3492 = vld [vmem:[#allocation11 + $0x3b38] sm:$0xff]
    %v3493 = vld [vmem:[#allocation11 + $0x3b40] sm:$0xff]
    %v3494 = vld [vmem:[#allocation11 + $0x3b48] sm:$0xff]
    %v3495 = vld [vmem:[#allocation11 + $0x3b50] sm:$0xff]
    %v3496 = vld [vmem:[#allocation11 + $0x3b58] sm:$0xff]
    %v3497 = vld [vmem:[#allocation11 + $0x3b60] sm:$0xff]
    %v3498 = vld [vmem:[#allocation11 + $0x3b68] sm:$0xff]
    %v3499 = vld [vmem:[#allocation11 + $0x3b70] sm:$0xff]
    %v3500 = vld [vmem:[#allocation11 + $0x3b78] sm:$0xff]
    %v3501 = vld [vmem:[#allocation11 + $0x3b80] sm:$0xff]
    %v3502 = vld [vmem:[#allocation11 + $0x3b88] sm:$0xff]
    %v3503 = vld [vmem:[#allocation11 + $0x3b90] sm:$0xff]
    %v3504 = vld [vmem:[#allocation11 + $0x3b98] sm:$0xff]
    %v3505 = vld [vmem:[#allocation11 + $0x3ba0] sm:$0xff]
    %v3506 = vld [vmem:[#allocation11 + $0x3ba8] sm:$0xff]
    %v3507 = vld [vmem:[#allocation11 + $0x3bb0] sm:$0xff]
    %v3508 = vld [vmem:[#allocation11 + $0x3bb8] sm:$0xff]
    %v3509 = vld [vmem:[#allocation11 + $0x3bc0] sm:$0xff]
    %v3510 = vld [vmem:[#allocation11 + $0x3bc8] sm:$0xff]
    %v3511 = vld [vmem:[#allocation11 + $0x3bd0] sm:$0xff]
    %v3512 = vld [vmem:[#allocation11 + $0x3bd8] sm:$0xff]
    %v3513 = vld [vmem:[#allocation11 + $0x3be0] sm:$0xff]
    %v3514 = vld [vmem:[#allocation11 + $0x3be8] sm:$0xff]
    %v3515 = vld [vmem:[#allocation11 + $0x3bf0] sm:$0xff]
    %v3516 = vld [vmem:[#allocation11 + $0x3bf8] sm:$0xff]
    %v3517 = vld [vmem:[#allocation11 + $0x3c00] sm:$0xff]
    %v3518 = vld [vmem:[#allocation11 + $0x3c08] sm:$0xff]
    %v3519 = vld [vmem:[#allocation11 + $0x3c10] sm:$0xff]
    %v3520 = vld [vmem:[#allocation11 + $0x3c18] sm:$0xff]
    %v3521 = vld [vmem:[#allocation11 + $0x3c20] sm:$0xff]
    %v3522 = vld [vmem:[#allocation11 + $0x3c28] sm:$0xff]
    %v3523 = vld [vmem:[#allocation11 + $0x3c30] sm:$0xff]
    %v3524 = vld [vmem:[#allocation11 + $0x3c38] sm:$0xff]
    %v3525 = vld [vmem:[#allocation11 + $0x3c40] sm:$0xff]
    %v3526 = vld [vmem:[#allocation11 + $0x3c48] sm:$0xff]
    %v3527 = vld [vmem:[#allocation11 + $0x3c50] sm:$0xff]
    %v3528 = vld [vmem:[#allocation11 + $0x3c58] sm:$0xff]
    %v3529 = vld [vmem:[#allocation11 + $0x3c60] sm:$0xff]
    %v3530 = vld [vmem:[#allocation11 + $0x3c68] sm:$0xff]
    %v3531 = vld [vmem:[#allocation11 + $0x3c70] sm:$0xff]
    %v3532 = vld [vmem:[#allocation11 + $0x3c78] sm:$0xff]
    %v3533 = vld [vmem:[#allocation11 + $0x3c80] sm:$0xff]
    %v3534 = vld [vmem:[#allocation11 + $0x3c88] sm:$0xff]
    %v3535 = vld [vmem:[#allocation11 + $0x3c90] sm:$0xff]
    %v3536 = vld [vmem:[#allocation11 + $0x3c98] sm:$0xff]
    %v3537 = vld [vmem:[#allocation11 + $0x3ca0] sm:$0xff]
    %v3538 = vld [vmem:[#allocation11 + $0x3ca8] sm:$0xff]
    %v3539 = vld [vmem:[#allocation11 + $0x3cb0] sm:$0xff]
    %v3540 = vld [vmem:[#allocation11 + $0x3cb8] sm:$0xff]
    %v3541 = vld [vmem:[#allocation11 + $0x3cc0] sm:$0xff]
    %v3542 = vld [vmem:[#allocation11 + $0x3cc8] sm:$0xff]
    %v3543 = vld [vmem:[#allocation11 + $0x3cd0] sm:$0xff]
    %v3544 = vld [vmem:[#allocation11 + $0x3cd8] sm:$0xff]
    %v3545 = vld [vmem:[#allocation11 + $0x3ce0] sm:$0xff]
    %v3546 = vld [vmem:[#allocation11 + $0x3ce8] sm:$0xff]
    %v3547 = vld [vmem:[#allocation11 + $0x3cf0] sm:$0xff]
    %v3548 = vld [vmem:[#allocation11 + $0x3cf8] sm:$0xff]
    %v3549 = vld [vmem:[#allocation11 + $0x3d00] sm:$0xff]
    %v3550 = vld [vmem:[#allocation11 + $0x3d08] sm:$0xff]
    %v3551 = vld [vmem:[#allocation11 + $0x3d10] sm:$0xff]
    %v3552 = vld [vmem:[#allocation11 + $0x3d18] sm:$0xff]
    %v3553 = vld [vmem:[#allocation11 + $0x3d20] sm:$0xff]
    %v3554 = vld [vmem:[#allocation11 + $0x3d28] sm:$0xff]
    %v3555 = vld [vmem:[#allocation11 + $0x3d30] sm:$0xff]
    %v3556 = vld [vmem:[#allocation11 + $0x3d38] sm:$0xff]
    %v3557 = vld [vmem:[#allocation11 + $0x3d40] sm:$0xff]
    %v3558 = vld [vmem:[#allocation11 + $0x3d48] sm:$0xff]
    %v3559 = vld [vmem:[#allocation11 + $0x3d50] sm:$0xff]
    %v3560 = vld [vmem:[#allocation11 + $0x3d58] sm:$0xff]
    %v3561 = vld [vmem:[#allocation11 + $0x3d60] sm:$0xff]
    %v3562 = vld [vmem:[#allocation11 + $0x3d68] sm:$0xff]
    %v3563 = vld [vmem:[#allocation11 + $0x3d70] sm:$0xff]
    %v3564 = vld [vmem:[#allocation11 + $0x3d78] sm:$0xff]
    %v3565 = vld [vmem:[#allocation11 + $0x3d80] sm:$0xff]
    %v3566 = vld [vmem:[#allocation11 + $0x3d88] sm:$0xff]
    %v3567 = vld [vmem:[#allocation11 + $0x3d90] sm:$0xff]
    %v3568 = vld [vmem:[#allocation11 + $0x3d98] sm:$0xff]
    %v3569 = vld [vmem:[#allocation11 + $0x3da0] sm:$0xff]
    %v3570 = vld [vmem:[#allocation11 + $0x3da8] sm:$0xff]
    %v3571 = vld [vmem:[#allocation11 + $0x3db0] sm:$0xff]
    %v3572 = vld [vmem:[#allocation11 + $0x3db8] sm:$0xff]
    %v3573 = vld [vmem:[#allocation11 + $0x3dc0] sm:$0xff]
    %v3574 = vld [vmem:[#allocation11 + $0x3dc8] sm:$0xff]
    %v3575 = vld [vmem:[#allocation11 + $0x3dd0] sm:$0xff]
    %v3576 = vld [vmem:[#allocation11 + $0x3dd8] sm:$0xff]
    %v3577 = vld [vmem:[#allocation11 + $0x3de0] sm:$0xff]
    %v3578 = vld [vmem:[#allocation11 + $0x3de8] sm:$0xff]
    %v3579 = vld [vmem:[#allocation11 + $0x3df0] sm:$0xff]
    %v3580 = vld [vmem:[#allocation11 + $0x3df8] sm:$0xff]
    %v3581 = vld [vmem:[#allocation11 + $0x3e00] sm:$0xff]
    %v3582 = vld [vmem:[#allocation11 + $0x3e08] sm:$0xff]
    %v3583 = vld [vmem:[#allocation11 + $0x3e10] sm:$0xff]
    %v3584 = vld [vmem:[#allocation11 + $0x3e18] sm:$0xff]
    %v3585 = vld [vmem:[#allocation11 + $0x3e20] sm:$0xff]
    %v3586 = vld [vmem:[#allocation11 + $0x3e28] sm:$0xff]
    %v3587 = vld [vmem:[#allocation11 + $0x3e30] sm:$0xff]
    %v3588 = vld [vmem:[#allocation11 + $0x3e38] sm:$0xff]
    %v3589 = vld [vmem:[#allocation11 + $0x3e40] sm:$0xff]
    %v3590 = vld [vmem:[#allocation11 + $0x3e48] sm:$0xff]
    %v3591 = vld [vmem:[#allocation11 + $0x3e50] sm:$0xff]
    %v3592 = vld [vmem:[#allocation11 + $0x3e58] sm:$0xff]
    %v3593 = vld [vmem:[#allocation11 + $0x3e60] sm:$0xff]
    %v3594 = vld [vmem:[#allocation11 + $0x3e68] sm:$0xff]
    %v3595 = vld [vmem:[#allocation11 + $0x3e70] sm:$0xff]
    %v3596 = vld [vmem:[#allocation11 + $0x3e78] sm:$0xff]
    %v3597 = vld [vmem:[#allocation11 + $0x3e80] sm:$0xff]
    %v3598 = vld [vmem:[#allocation11 + $0x3e88] sm:$0xff]
    %v3599 = vld [vmem:[#allocation11 + $0x3e90] sm:$0xff]
    %v3600 = vld [vmem:[#allocation11 + $0x3e98] sm:$0xff]
    %v3601 = vld [vmem:[#allocation11 + $0x3ea0] sm:$0xff]
    %v3602 = vld [vmem:[#allocation11 + $0x3ea8] sm:$0xff]
    %v3603 = vld [vmem:[#allocation11 + $0x3eb0] sm:$0xff]
    %v3604 = vld [vmem:[#allocation11 + $0x3eb8] sm:$0xff]
    %v3605 = vld [vmem:[#allocation11 + $0x3ec0] sm:$0xff]
    %v3606 = vld [vmem:[#allocation11 + $0x3ec8] sm:$0xff]
    %v3607 = vld [vmem:[#allocation11 + $0x3ed0] sm:$0xff]
    %v3608 = vld [vmem:[#allocation11 + $0x3ed8] sm:$0xff]
    %v3609 = vld [vmem:[#allocation11 + $0x3ee0] sm:$0xff]
    %v3610 = vld [vmem:[#allocation11 + $0x3ee8] sm:$0xff]
    %v3611 = vld [vmem:[#allocation11 + $0x3ef0] sm:$0xff]
    %v3612 = vld [vmem:[#allocation11 + $0x3ef8] sm:$0xff]
    %v3613 = vld [vmem:[#allocation11 + $0x3f00] sm:$0xff]
    %v3614 = vld [vmem:[#allocation11 + $0x3f08] sm:$0xff]
    %v3615 = vld [vmem:[#allocation11 + $0x3f10] sm:$0xff]
    %v3616 = vld [vmem:[#allocation11 + $0x3f18] sm:$0xff]
    %v3617 = vld [vmem:[#allocation11 + $0x3f20] sm:$0xff]
    %v3618 = vld [vmem:[#allocation11 + $0x3f28] sm:$0xff]
    %v3619 = vld [vmem:[#allocation11 + $0x3f30] sm:$0xff]
    %v3620 = vld [vmem:[#allocation11 + $0x3f38] sm:$0xff]
    %v3621 = vld [vmem:[#allocation11 + $0x3f40] sm:$0xff]
    %v3622 = vld [vmem:[#allocation11 + $0x3f48] sm:$0xff]
    %v3623 = vld [vmem:[#allocation11 + $0x3f50] sm:$0xff]
    %v3624 = vld [vmem:[#allocation11 + $0x3f58] sm:$0xff]
    %v3625 = vld [vmem:[#allocation11 + $0x3f60] sm:$0xff]
    %v3626 = vld [vmem:[#allocation11 + $0x3f68] sm:$0xff]
    %v3627 = vld [vmem:[#allocation11 + $0x3f70] sm:$0xff]
    %v3628 = vld [vmem:[#allocation11 + $0x3f78] sm:$0xff]
    %v3629 = vld [vmem:[#allocation11 + $0x3f80] sm:$0xff]
    %v3630 = vld [vmem:[#allocation11 + $0x3f88] sm:$0xff]
    %v3631 = vld [vmem:[#allocation11 + $0x3f90] sm:$0xff]
    %v3632 = vld [vmem:[#allocation11 + $0x3f98] sm:$0xff]
    %v3633 = vld [vmem:[#allocation11 + $0x3fa0] sm:$0xff]
    %v3634 = vld [vmem:[#allocation11 + $0x3fa8] sm:$0xff]
    %v3635 = vld [vmem:[#allocation11 + $0x3fb0] sm:$0xff]
    %v3636 = vld [vmem:[#allocation11 + $0x3fb8] sm:$0xff]
    %v3637 = vld [vmem:[#allocation11 + $0x3fc0] sm:$0xff]
    %v3638 = vld [vmem:[#allocation11 + $0x3fc8] sm:$0xff]
    %v3639 = vld [vmem:[#allocation11 + $0x3fd0] sm:$0xff]
    %v3640 = vld [vmem:[#allocation11 + $0x3fd8] sm:$0xff]
    %v3641 = vld [vmem:[#allocation11 + $0x3fe0] sm:$0xff]
    %v3642 = vld [vmem:[#allocation11 + $0x3fe8] sm:$0xff]
    %v3643 = vld [vmem:[#allocation11 + $0x3ff0] sm:$0xff]
    %v3644 = vld [vmem:[#allocation11 + $0x3ff8] sm:$0xff]
    %v3645 = vld [vmem:[#allocation13] sm:$0xff]
    %v3646 = vld [vmem:[#allocation13 + $0x8] sm:$0xff]
    %v3649 = vlaneseq
    %v3650 = vshrl.u32 %v3649, 7
    %v3651 = vsub.s32 0, %v3650
    %v3652 = vrot.slane %v3645, %v3651
    %v3653 = vlaneseq
    %v3654 = vshrl.u32 %v3653, 7
    %v3655 = vsub.s32 1, %v3654
    %v3656 = vrot.slane %v3645, %v3655
    %v3657 = vlaneseq
    %v3658 = vshrl.u32 %v3657, 7
    %v3659 = vsub.s32 2, %v3658
    %v3660 = vrot.slane %v3645, %v3659
    %v3661 = vlaneseq
    %v3662 = vshrl.u32 %v3661, 7
    %v3663 = vsub.s32 3, %v3662
    %v3664 = vrot.slane %v3645, %v3663
    %v3665 = vlaneseq
    %v3666 = vshrl.u32 %v3665, 7
    %v3667 = vsub.s32 4, %v3666
    %v3668 = vrot.slane %v3645, %v3667
    %v3669 = vlaneseq
    %v3670 = vshrl.u32 %v3669, 7
    %v3671 = vsub.s32 5, %v3670
    %v3672 = vrot.slane %v3645, %v3671
    %v3673 = vlaneseq
    %v3674 = vshrl.u32 %v3673, 7
    %v3675 = vsub.s32 6, %v3674
    %v3676 = vrot.slane %v3645, %v3675
    %v3677 = vlaneseq
    %v3678 = vshrl.u32 %v3677, 7
    %v3679 = vsub.s32 7, %v3678
    %v3680 = vrot.slane %v3645, %v3679
    %v3681 = vlaneseq
    %v3682 = vshrl.u32 %v3681, 7
    %v3683 = vsub.s32 0, %v3682
    %v3684 = vrot.slane %v3646, %v3683
    %v3685 = vlaneseq
    %v3686 = vshrl.u32 %v3685, 7
    %v3687 = vsub.s32 1, %v3686
    %v3688 = vrot.slane %v3646, %v3687
    %v3689 = vlaneseq
    %v3690 = vshrl.u32 %v3689, 7
    %v3691 = vsub.s32 2, %v3690
    %v3692 = vrot.slane %v3646, %v3691
    %v3693 = vlaneseq
    %v3694 = vshrl.u32 %v3693, 7
    %v3695 = vsub.s32 3, %v3694
    %v3696 = vrot.slane %v3646, %v3695
    %v3697 = vlaneseq
    %v3698 = vshrl.u32 %v3697, 7
    %v3699 = vsub.s32 4, %v3698
    %v3700 = vrot.slane %v3646, %v3699
    %v3701 = vlaneseq
    %v3702 = vshrl.u32 %v3701, 7
    %v3703 = vsub.s32 5, %v3702
    %v3704 = vrot.slane %v3646, %v3703
    %v3705 = vlaneseq
    %v3706 = vshrl.u32 %v3705, 7
    %v3707 = vsub.s32 6, %v3706
    %v3708 = vrot.slane %v3646, %v3707
    %v3709 = vlaneseq
    %v3710 = vshrl.u32 %v3709, 7
    %v3711 = vsub.s32 7, %v3710
    %v3712 = vrot.slane %v3646, %v3711
    %3729 = vmatprep.subr.mxu0 %v1598
    %3730 = vmatpush1.msra.mxu0 %v1597
    %3731 = vmatprep.subr.mxu0 %v1614
    %3732 = vmatpush1.msra.mxu0 %v1613
    %3733 = vmatprep.subr.mxu0 %v1630
    %3734 = vmatpush1.msra.mxu0 %v1629
    %3735 = vmatprep.subr.mxu0 %v1646
    %3736 = vmatpush1.msra.mxu0 %v1645
    %3737 = vmatprep.subr.mxu0 %v1662
    %3738 = vmatpush1.msra.mxu0 %v1661
    %3739 = vmatprep.subr.mxu0 %v1678
    %3740 = vmatpush1.msra.mxu0 %v1677
    %3741 = vmatprep.subr.mxu0 %v1694
    %3742 = vmatpush1.msra.mxu0 %v1693
    %3743 = vmatprep.subr.mxu0 %v1710
    %3744 = vmatpush1.msra.mxu0 %v1709
    %3745 = vmatprep.subr.mxu0 %v1726
    %3746 = vmatpush1.msra.mxu0 %v1725
    %3747 = vmatprep.subr.mxu0 %v1742
    %3748 = vmatpush1.msra.mxu0 %v1741
    %3749 = vmatprep.subr.mxu0 %v1758
    %3750 = vmatpush1.msra.mxu0 %v1757
    %3751 = vmatprep.subr.mxu0 %v1774
    %3752 = vmatpush1.msra.mxu0 %v1773
    %3753 = vmatprep.subr.mxu0 %v1790
    %3754 = vmatpush1.msra.mxu0 %v1789
    %3755 = vmatprep.subr.mxu0 %v1806
    %3756 = vmatpush1.msra.mxu0 %v1805
    %3757 = vmatprep.subr.mxu0 %v1822
    %3758 = vmatpush1.msra.mxu0 %v1821
    %3759 = vmatprep.subr.mxu0 %v1838
    %3760 = vmatpush1.msra.mxu0 %v1837
    %3761 = vmatprep.subr.mxu0 %v1854
    %3762 = vmatpush1.msra.mxu0 %v1853
    %3763 = vmatprep.subr.mxu0 %v1870
    %3764 = vmatpush1.msra.mxu0 %v1869
    %3765 = vmatprep.subr.mxu0 %v1886
    %3766 = vmatpush1.msra.mxu0 %v1885
    %3767 = vmatprep.subr.mxu0 %v1902
    %3768 = vmatpush1.msra.mxu0 %v1901
    %3769 = vmatprep.subr.mxu0 %v1918
    %3770 = vmatpush1.msra.mxu0 %v1917
    %3771 = vmatprep.subr.mxu0 %v1934
    %3772 = vmatpush1.msra.mxu0 %v1933
    %3773 = vmatprep.subr.mxu0 %v1950
    %3774 = vmatpush1.msra.mxu0 %v1949
    %3775 = vmatprep.subr.mxu0 %v1966
    %3776 = vmatpush1.msra.mxu0 %v1965
    %3777 = vmatprep.subr.mxu0 %v1982
    %3778 = vmatpush1.msra.mxu0 %v1981
    %3779 = vmatprep.subr.mxu0 %v1998
    %3780 = vmatpush1.msra.mxu0 %v1997
    %3781 = vmatprep.subr.mxu0 %v2014
    %3782 = vmatpush1.msra.mxu0 %v2013
    %3783 = vmatprep.subr.mxu0 %v2030
    %3784 = vmatpush1.msra.mxu0 %v2029
    %3785 = vmatprep.subr.mxu0 %v2046
    %3786 = vmatpush1.msra.mxu0 %v2045
    %3787 = vmatprep.subr.mxu0 %v2062
    %3788 = vmatpush1.msra.mxu0 %v2061
    %3789 = vmatprep.subr.mxu0 %v2078
    %3790 = vmatpush1.msra.mxu0 %v2077
    %3791 = vmatprep.subr.mxu0 %v2094
    %3792 = vmatpush1.msra.mxu0 %v2093
    %3793 = vmatprep.mubr.f32.mxu0 %v1590
    %3794 = vmatmul.mubr.f32.gmra.mrb[0].mxu0 %v1589
    %v3795 = vpop.f32.mrb[0].mxu0
    %v3796 = vadd.f32 %v3652, %v3795
    %v3797 = vpop.f32.mrb[0].mxu0
    %v3798 = vadd.f32 %v3656, %v3797
    %3799 = vdwg.mxu0
    %3800 = vmatprep.subr.mxu0 %v2110
    %3801 = vmatpush1.msra.mxu0 %v2109
    %3802 = vmatprep.subr.mxu0 %v2126
    %3803 = vmatpush1.msra.mxu0 %v2125
    %3804 = vmatprep.subr.mxu0 %v2142
    %3805 = vmatpush1.msra.mxu0 %v2141
    %3806 = vmatprep.subr.mxu0 %v2158
    %3807 = vmatpush1.msra.mxu0 %v2157
    %3808 = vmatprep.subr.mxu0 %v2174
    %3809 = vmatpush1.msra.mxu0 %v2173
    %3810 = vmatprep.subr.mxu0 %v2190
    %3811 = vmatpush1.msra.mxu0 %v2189
    %3812 = vmatprep.subr.mxu0 %v2206
    %3813 = vmatpush1.msra.mxu0 %v2205
    %3814 = vmatprep.subr.mxu0 %v2222
    %3815 = vmatpush1.msra.mxu0 %v2221
    %3816 = vmatprep.subr.mxu0 %v2238
    %3817 = vmatpush1.msra.mxu0 %v2237
    %3818 = vmatprep.subr.mxu0 %v2254
    %3819 = vmatpush1.msra.mxu0 %v2253
    %3820 = vmatprep.subr.mxu0 %v2270
    %3821 = vmatpush1.msra.mxu0 %v2269
    %3822 = vmatprep.subr.mxu0 %v2286
    %3823 = vmatpush1.msra.mxu0 %v2285
    %3824 = vmatprep.subr.mxu0 %v2302
    %3825 = vmatpush1.msra.mxu0 %v2301
    %3826 = vmatprep.subr.mxu0 %v2318
    %3827 = vmatpush1.msra.mxu0 %v2317
    %3828 = vmatprep.subr.mxu0 %v2334
    %3829 = vmatpush1.msra.mxu0 %v2333
    %3830 = vmatprep.subr.mxu0 %v2350
    %3831 = vmatpush1.msra.mxu0 %v2349
    %3832 = vmatprep.subr.mxu0 %v2366
    %3833 = vmatpush1.msra.mxu0 %v2365
    %3834 = vmatprep.subr.mxu0 %v2382
    %3835 = vmatpush1.msra.mxu0 %v2381
    %3836 = vmatprep.subr.mxu0 %v2398
    %3837 = vmatpush1.msra.mxu0 %v2397
    %3838 = vmatprep.subr.mxu0 %v2414
    %3839 = vmatpush1.msra.mxu0 %v2413
    %3840 = vmatprep.subr.mxu0 %v2430
    %3841 = vmatpush1.msra.mxu0 %v2429
    %3842 = vmatprep.subr.mxu0 %v2446
    %3843 = vmatpush1.msra.mxu0 %v2445
    %3844 = vmatprep.subr.mxu0 %v2462
    %3845 = vmatpush1.msra.mxu0 %v2461
    %3846 = vmatprep.subr.mxu0 %v2478
    %3847 = vmatpush1.msra.mxu0 %v2477
    %3848 = vmatprep.subr.mxu0 %v2494
    %3849 = vmatpush1.msra.mxu0 %v2493
    %3850 = vmatprep.subr.mxu0 %v2510
    %3851 = vmatpush1.msra.mxu0 %v2509
    %3852 = vmatprep.subr.mxu0 %v2526
    %3853 = vmatpush1.msra.mxu0 %v2525
    %3854 = vmatprep.subr.mxu0 %v2542
    %3855 = vmatpush1.msra.mxu0 %v2541
    %3856 = vmatprep.subr.mxu0 %v2558
    %3857 = vmatpush1.msra.mxu0 %v2557
    %3858 = vmatprep.subr.mxu0 %v2574
    %3859 = vmatpush1.msra.mxu0 %v2573
    %3860 = vmatprep.subr.mxu0 %v2590
    %3861 = vmatpush1.msra.mxu0 %v2589
    %3862 = vmatprep.subr.mxu0 %v2606
    %3863 = vmatpush1.msra.mxu0 %v2605
    %3864 = vmatprep.mubr.f32.mxu0 %v1592
    %3865 = vmatmul.mubr.f32.gmra.mrb[0].mxu0 %v1591
    %v3866 = vpop.f32.mrb[0].mxu0
    %v3867 = vadd.f32 %v3796, %v3866
    %v3868 = vpop.f32.mrb[0].mxu0
    %v3869 = vadd.f32 %v3798, %v3868
    %3870 = vdwg.mxu0
    %3871 = vmatprep.subr.mxu0 %v2622
    %3872 = vmatpush1.msra.mxu0 %v2621
    %3873 = vmatprep.subr.mxu0 %v2638
    %3874 = vmatpush1.msra.mxu0 %v2637
    %3875 = vmatprep.subr.mxu0 %v2654
    %3876 = vmatpush1.msra.mxu0 %v2653
    %3877 = vmatprep.subr.mxu0 %v2670
    %3878 = vmatpush1.msra.mxu0 %v2669
    %3879 = vmatprep.subr.mxu0 %v2686
    %3880 = vmatpush1.msra.mxu0 %v2685
    %3881 = vmatprep.subr.mxu0 %v2702
    %3882 = vmatpush1.msra.mxu0 %v2701
    %3883 = vmatprep.subr.mxu0 %v2718
    %3884 = vmatpush1.msra.mxu0 %v2717
    %3885 = vmatprep.subr.mxu0 %v2734
    %3886 = vmatpush1.msra.mxu0 %v2733
    %3887 = vmatprep.subr.mxu0 %v2750
    %3888 = vmatpush1.msra.mxu0 %v2749
    %3889 = vmatprep.subr.mxu0 %v2766
    %3890 = vmatpush1.msra.mxu0 %v2765
    %3891 = vmatprep.subr.mxu0 %v2782
    %3892 = vmatpush1.msra.mxu0 %v2781
    %3893 = vmatprep.subr.mxu0 %v2798
    %3894 = vmatpush1.msra.mxu0 %v2797
    %3895 = vmatprep.subr.mxu0 %v2814
    %3896 = vmatpush1.msra.mxu0 %v2813
    %3897 = vmatprep.subr.mxu0 %v2830
    %3898 = vmatpush1.msra.mxu0 %v2829
    %3899 = vmatprep.subr.mxu0 %v2846
    %3900 = vmatpush1.msra.mxu0 %v2845
    %3901 = vmatprep.subr.mxu0 %v2862
    %3902 = vmatpush1.msra.mxu0 %v2861
    %3903 = vmatprep.subr.mxu0 %v2878
    %3904 = vmatpush1.msra.mxu0 %v2877
    %3905 = vmatprep.subr.mxu0 %v2894
    %3906 = vmatpush1.msra.mxu0 %v2893
    %3907 = vmatprep.subr.mxu0 %v2910
    %3908 = vmatpush1.msra.mxu0 %v2909
    %3909 = vmatprep.subr.mxu0 %v2926
    %3910 = vmatpush1.msra.mxu0 %v2925
    %3911 = vmatprep.subr.mxu0 %v2942
    %3912 = vmatpush1.msra.mxu0 %v2941
    %3913 = vmatprep.subr.mxu0 %v2958
    %3914 = vmatpush1.msra.mxu0 %v2957
    %3915 = vmatprep.subr.mxu0 %v2974
    %3916 = vmatpush1.msra.mxu0 %v2973
    %3917 = vmatprep.subr.mxu0 %v2990
    %3918 = vmatpush1.msra.mxu0 %v2989
    %3919 = vmatprep.subr.mxu0 %v3006
    %3920 = vmatpush1.msra.mxu0 %v3005
    %3921 = vmatprep.subr.mxu0 %v3022
    %3922 = vmatpush1.msra.mxu0 %v3021
    %3923 = vmatprep.subr.mxu0 %v3038
    %3924 = vmatpush1.msra.mxu0 %v3037
    %3925 = vmatprep.subr.mxu0 %v3054
    %3926 = vmatpush1.msra.mxu0 %v3053
    %3927 = vmatprep.subr.mxu0 %v3070
    %3928 = vmatpush1.msra.mxu0 %v3069
    %3929 = vmatprep.subr.mxu0 %v3086
    %3930 = vmatpush1.msra.mxu0 %v3085
    %3931 = vmatprep.subr.mxu0 %v3102
    %3932 = vmatpush1.msra.mxu0 %v3101
    %3933 = vmatprep.subr.mxu0 %v3118
    %3934 = vmatpush1.msra.mxu0 %v3117
    %3935 = vmatprep.mubr.f32.mxu0 %v1594
    %3936 = vmatmul.mubr.f32.gmra.mrb[0].mxu0 %v1593
    %v3937 = vpop.f32.mrb[0].mxu0
    %v3938 = vadd.f32 %v3867, %v3937
    %v3939 = vpop.f32.mrb[0].mxu0
    %v3940 = vadd.f32 %v3869, %v3939
    %3941 = vdwg.mxu0
    %3942 = vmatprep.subr.mxu0 %v3134
    %3943 = vmatpush1.msra.mxu0 %v3133
    %3944 = vmatprep.subr.mxu0 %v3150
    %3945 = vmatpush1.msra.mxu0 %v3149
    %3946 = vmatprep.subr.mxu0 %v3166
    %3947 = vmatpush1.msra.mxu0 %v3165
    %3948 = vmatprep.subr.mxu0 %v3182
    %3949 = vmatpush1.msra.mxu0 %v3181
    %3950 = vmatprep.subr.mxu0 %v3198
    %3951 = vmatpush1.msra.mxu0 %v3197
    %3952 = vmatprep.subr.mxu0 %v3214
    %3953 = vmatpush1.msra.mxu0 %v3213
    %3954 = vmatprep.subr.mxu0 %v3230
    %3955 = vmatpush1.msra.mxu0 %v3229
    %3956 = vmatprep.subr.mxu0 %v3246
    %3957 = vmatpush1.msra.mxu0 %v3245
    %3958 = vmatprep.subr.mxu0 %v3262
    %3959 = vmatpush1.msra.mxu0 %v3261
    %3960 = vmatprep.subr.mxu0 %v3278
    %3961 = vmatpush1.msra.mxu0 %v3277
    %3962 = vmatprep.subr.mxu0 %v3294
    %3963 = vmatpush1.msra.mxu0 %v3293
    %3964 = vmatprep.subr.mxu0 %v3310
    %3965 = vmatpush1.msra.mxu0 %v3309
    %3966 = vmatprep.subr.mxu0 %v3326
    %3967 = vmatpush1.msra.mxu0 %v3325
    %3968 = vmatprep.subr.mxu0 %v3342
    %3969 = vmatpush1.msra.mxu0 %v3341
    %3970 = vmatprep.subr.mxu0 %v3358
    %3971 = vmatpush1.msra.mxu0 %v3357
    %3972 = vmatprep.subr.mxu0 %v3374
    %3973 = vmatpush1.msra.mxu0 %v3373
    %3974 = vmatprep.subr.mxu0 %v3390
    %3975 = vmatpush1.msra.mxu0 %v3389
    %3976 = vmatprep.subr.mxu0 %v3406
    %3977 = vmatpush1.msra.mxu0 %v3405
    %3978 = vmatprep.subr.mxu0 %v3422
    %3979 = vmatpush1.msra.mxu0 %v3421
    %3980 = vmatprep.subr.mxu0 %v3438
    %3981 = vmatpush1.msra.mxu0 %v3437
    %3982 = vmatprep.subr.mxu0 %v3454
    %3983 = vmatpush1.msra.mxu0 %v3453
    %3984 = vmatprep.subr.mxu0 %v3470
    %3985 = vmatpush1.msra.mxu0 %v3469
    %3986 = vmatprep.subr.mxu0 %v3486
    %3987 = vmatpush1.msra.mxu0 %v3485
    %3988 = vmatprep.subr.mxu0 %v3502
    %3989 = vmatpush1.msra.mxu0 %v3501
    %3990 = vmatprep.subr.mxu0 %v3518
    %3991 = vmatpush1.msra.mxu0 %v3517
    %3992 = vmatprep.subr.mxu0 %v3534
    %3993 = vmatpush1.msra.mxu0 %v3533
    %3994 = vmatprep.subr.mxu0 %v3550
    %3995 = vmatpush1.msra.mxu0 %v3549
    %3996 = vmatprep.subr.mxu0 %v3566
    %3997 = vmatpush1.msra.mxu0 %v3565
    %3998 = vmatprep.subr.mxu0 %v3582
    %3999 = vmatpush1.msra.mxu0 %v3581
    %4000 = vmatprep.subr.mxu0 %v3598
    %4001 = vmatpush1.msra.mxu0 %v3597
    %4002 = vmatprep.subr.mxu0 %v3614
    %4003 = vmatpush1.msra.mxu0 %v3613
    %4004 = vmatprep.subr.mxu0 %v3630
    %4005 = vmatpush1.msra.mxu0 %v3629
    %4006 = vmatprep.mubr.f32.mxu0 %v1596
    %4007 = vmatmul.mubr.f32.gmra.mrb[0].mxu0 %v1595
    %v4008 = vpop.f32.mrb[0].mxu0
    %v4009 = vadd.f32 %v3938, %v4008
    %v4010 = vpop.f32.mrb[0].mxu0
    %v4011 = vadd.f32 %v3940, %v4010
    %4012 = vdwg.mxu0
    %4013 = vmatprep.subr.mxu0 %v1600
    %4014 = vmatpush1.msra.mxu0 %v1599
    %4015 = vmatprep.subr.mxu0 %v1616
    %4016 = vmatpush1.msra.mxu0 %v1615
    %4017 = vmatprep.subr.mxu0 %v1632
    %4018 = vmatpush1.msra.mxu0 %v1631
    %4019 = vmatprep.subr.mxu0 %v1648
    %4020 = vmatpush1.msra.mxu0 %v1647
    %4021 = vmatprep.subr.mxu0 %v1664
    %4022 = vmatpush1.msra.mxu0 %v1663
    %4023 = vmatprep.subr.mxu0 %v1680
    %4024 = vmatpush1.msra.mxu0 %v1679
    %4025 = vmatprep.subr.mxu0 %v1696
    %4026 = vmatpush1.msra.mxu0 %v1695
    %4027 = vmatprep.subr.mxu0 %v1712
    %4028 = vmatpush1.msra.mxu0 %v1711
    %4029 = vmatprep.subr.mxu0 %v1728
    %4030 = vmatpush1.msra.mxu0 %v1727
    %4031 = vmatprep.subr.mxu0 %v1744
    %4032 = vmatpush1.msra.mxu0 %v1743
    %4033 = vmatprep.subr.mxu0 %v1760
    %4034 = vmatpush1.msra.mxu0 %v1759
    %4035 = vmatprep.subr.mxu0 %v1776
    %4036 = vmatpush1.msra.mxu0 %v1775
    %4037 = vmatprep.subr.mxu0 %v1792
    %4038 = vmatpush1.msra.mxu0 %v1791
    %4039 = vmatprep.subr.mxu0 %v1808
    %4040 = vmatpush1.msra.mxu0 %v1807
    %4041 = vmatprep.subr.mxu0 %v1824
    %4042 = vmatpush1.msra.mxu0 %v1823
    %4043 = vmatprep.subr.mxu0 %v1840
    %4044 = vmatpush1.msra.mxu0 %v1839
    %4045 = vmatprep.subr.mxu0 %v1856
    %4046 = vmatpush1.msra.mxu0 %v1855
    %4047 = vmatprep.subr.mxu0 %v1872
    %4048 = vmatpush1.msra.mxu0 %v1871
    %4049 = vmatprep.subr.mxu0 %v1888
    %4050 = vmatpush1.msra.mxu0 %v1887
    %4051 = vmatprep.subr.mxu0 %v1904
    %4052 = vmatpush1.msra.mxu0 %v1903
    %4053 = vmatprep.subr.mxu0 %v1920
    %4054 = vmatpush1.msra.mxu0 %v1919
    %4055 = vmatprep.subr.mxu0 %v1936
    %4056 = vmatpush1.msra.mxu0 %v1935
    %4057 = vmatprep.subr.mxu0 %v1952
    %4058 = vmatpush1.msra.mxu0 %v1951
    %4059 = vmatprep.subr.mxu0 %v1968
    %4060 = vmatpush1.msra.mxu0 %v1967
    %4061 = vmatprep.subr.mxu0 %v1984
    %4062 = vmatpush1.msra.mxu0 %v1983
    %4063 = vmatprep.subr.mxu0 %v2000
    %4064 = vmatpush1.msra.mxu0 %v1999
    %4065 = vmatprep.subr.mxu0 %v2016
    %4066 = vmatpush1.msra.mxu0 %v2015
    %4067 = vmatprep.subr.mxu0 %v2032
    %4068 = vmatpush1.msra.mxu0 %v2031
    %4069 = vmatprep.subr.mxu0 %v2048
    %4070 = vmatpush1.msra.mxu0 %v2047
    %4071 = vmatprep.subr.mxu0 %v2064
    %4072 = vmatpush1.msra.mxu0 %v2063
    %4073 = vmatprep.subr.mxu0 %v2080
    %4074 = vmatpush1.msra.mxu0 %v2079
    %4075 = vmatprep.subr.mxu0 %v2096
    %4076 = vmatpush1.msra.mxu0 %v2095
    %4077 = vmatprep.mubr.f32.mxu0 %v1590
    %4078 = vmatmul.mubr.f32.gmra.mrb[0].mxu0 %v1589
    %v4079 = vpop.f32.mrb[0].mxu0
    %v4080 = vadd.f32 %v3660, %v4079
    %v4081 = vpop.f32.mrb[0].mxu0
    %v4082 = vadd.f32 %v3664, %v4081
    %4083 = vdwg.mxu0
    %4084 = vmatprep.subr.mxu0 %v2112
    %4085 = vmatpush1.msra.mxu0 %v2111
    %4086 = vmatprep.subr.mxu0 %v2128
    %4087 = vmatpush1.msra.mxu0 %v2127
    %4088 = vmatprep.subr.mxu0 %v2144
    %4089 = vmatpush1.msra.mxu0 %v2143
    %4090 = vmatprep.subr.mxu0 %v2160
    %4091 = vmatpush1.msra.mxu0 %v2159
    %4092 = vmatprep.subr.mxu0 %v2176
    %4093 = vmatpush1.msra.mxu0 %v2175
    %4094 = vmatprep.subr.mxu0 %v2192
    %4095 = vmatpush1.msra.mxu0 %v2191
    %4096 = vmatprep.subr.mxu0 %v2208
    %4097 = vmatpush1.msra.mxu0 %v2207
    %4098 = vmatprep.subr.mxu0 %v2224
    %4099 = vmatpush1.msra.mxu0 %v2223
    %4100 = vmatprep.subr.mxu0 %v2240
    %4101 = vmatpush1.msra.mxu0 %v2239
    %4102 = vmatprep.subr.mxu0 %v2256
    %4103 = vmatpush1.msra.mxu0 %v2255
    %4104 = vmatprep.subr.mxu0 %v2272
    %4105 = vmatpush1.msra.mxu0 %v2271
    %4106 = vmatprep.subr.mxu0 %v2288
    %4107 = vmatpush1.msra.mxu0 %v2287
    %4108 = vmatprep.subr.mxu0 %v2304
    %4109 = vmatpush1.msra.mxu0 %v2303
    %4110 = vmatprep.subr.mxu0 %v2320
    %4111 = vmatpush1.msra.mxu0 %v2319
    %4112 = vmatprep.subr.mxu0 %v2336
    %4113 = vmatpush1.msra.mxu0 %v2335
    %4114 = vmatprep.subr.mxu0 %v2352
    %4115 = vmatpush1.msra.mxu0 %v2351
    %4116 = vmatprep.subr.mxu0 %v2368
    %4117 = vmatpush1.msra.mxu0 %v2367
    %4118 = vmatprep.subr.mxu0 %v2384
    %4119 = vmatpush1.msra.mxu0 %v2383
    %4120 = vmatprep.subr.mxu0 %v2400
    %4121 = vmatpush1.msra.mxu0 %v2399
    %4122 = vmatprep.subr.mxu0 %v2416
    %4123 = vmatpush1.msra.mxu0 %v2415
    %4124 = vmatprep.subr.mxu0 %v2432
    %4125 = vmatpush1.msra.mxu0 %v2431
    %4126 = vmatprep.subr.mxu0 %v2448
    %4127 = vmatpush1.msra.mxu0 %v2447
    %4128 = vmatprep.subr.mxu0 %v2464
    %4129 = vmatpush1.msra.mxu0 %v2463
    %4130 = vmatprep.subr.mxu0 %v2480
    %4131 = vmatpush1.msra.mxu0 %v2479
    %4132 = vmatprep.subr.mxu0 %v2496
    %4133 = vmatpush1.msra.mxu0 %v2495
    %4134 = vmatprep.subr.mxu0 %v2512
    %4135 = vmatpush1.msra.mxu0 %v2511
    %4136 = vmatprep.subr.mxu0 %v2528
    %4137 = vmatpush1.msra.mxu0 %v2527
    %4138 = vmatprep.subr.mxu0 %v2544
    %4139 = vmatpush1.msra.mxu0 %v2543
    %4140 = vmatprep.subr.mxu0 %v2560
    %4141 = vmatpush1.msra.mxu0 %v2559
    %4142 = vmatprep.subr.mxu0 %v2576
    %4143 = vmatpush1.msra.mxu0 %v2575
    %4144 = vmatprep.subr.mxu0 %v2592
    %4145 = vmatpush1.msra.mxu0 %v2591
    %4146 = vmatprep.subr.mxu0 %v2608
    %4147 = vmatpush1.msra.mxu0 %v2607
    %4148 = vmatprep.mubr.f32.mxu0 %v1592
    %4149 = vmatmul.mubr.f32.gmra.mrb[0].mxu0 %v1591
    %v4150 = vpop.f32.mrb[0].mxu0
    %v4151 = vadd.f32 %v4080, %v4150
    %v4152 = vpop.f32.mrb[0].mxu0
    %v4153 = vadd.f32 %v4082, %v4152
    %4154 = vdwg.mxu0
    %4155 = vmatprep.subr.mxu0 %v2624
    %4156 = vmatpush1.msra.mxu0 %v2623
    %4157 = vmatprep.subr.mxu0 %v2640
    %4158 = vmatpush1.msra.mxu0 %v2639
    %4159 = vmatprep.subr.mxu0 %v2656
    %4160 = vmatpush1.msra.mxu0 %v2655
    %4161 = vmatprep.subr.mxu0 %v2672
    %4162 = vmatpush1.msra.mxu0 %v2671
    %4163 = vmatprep.subr.mxu0 %v2688
    %4164 = vmatpush1.msra.mxu0 %v2687
    %4165 = vmatprep.subr.mxu0 %v2704
    %4166 = vmatpush1.msra.mxu0 %v2703
    %4167 = vmatprep.subr.mxu0 %v2720
    %4168 = vmatpush1.msra.mxu0 %v2719
    %4169 = vmatprep.subr.mxu0 %v2736
    %4170 = vmatpush1.msra.mxu0 %v2735
    %4171 = vmatprep.subr.mxu0 %v2752
    %4172 = vmatpush1.msra.mxu0 %v2751
    %4173 = vmatprep.subr.mxu0 %v2768
    %4174 = vmatpush1.msra.mxu0 %v2767
    %4175 = vmatprep.subr.mxu0 %v2784
    %4176 = vmatpush1.msra.mxu0 %v2783
    %4177 = vmatprep.subr.mxu0 %v2800
    %4178 = vmatpush1.msra.mxu0 %v2799
    %4179 = vmatprep.subr.mxu0 %v2816
    %4180 = vmatpush1.msra.mxu0 %v2815
    %4181 = vmatprep.subr.mxu0 %v2832
    %4182 = vmatpush1.msra.mxu0 %v2831
    %4183 = vmatprep.subr.mxu0 %v2848
    %4184 = vmatpush1.msra.mxu0 %v2847
    %4185 = vmatprep.subr.mxu0 %v2864
    %4186 = vmatpush1.msra.mxu0 %v2863
    %4187 = vmatprep.subr.mxu0 %v2880
    %4188 = vmatpush1.msra.mxu0 %v2879
    %4189 = vmatprep.subr.mxu0 %v2896
    %4190 = vmatpush1.msra.mxu0 %v2895
    %4191 = vmatprep.subr.mxu0 %v2912
    %4192 = vmatpush1.msra.mxu0 %v2911
    %4193 = vmatprep.subr.mxu0 %v2928
    %4194 = vmatpush1.msra.mxu0 %v2927
    %4195 = vmatprep.subr.mxu0 %v2944
    %4196 = vmatpush1.msra.mxu0 %v2943
    %4197 = vmatprep.subr.mxu0 %v2960
    %4198 = vmatpush1.msra.mxu0 %v2959
    %4199 = vmatprep.subr.mxu0 %v2976
    %4200 = vmatpush1.msra.mxu0 %v2975
    %4201 = vmatprep.subr.mxu0 %v2992
    %4202 = vmatpush1.msra.mxu0 %v2991
    %4203 = vmatprep.subr.mxu0 %v3008
    %4204 = vmatpush1.msra.mxu0 %v3007
    %4205 = vmatprep.subr.mxu0 %v3024
    %4206 = vmatpush1.msra.mxu0 %v3023
    %4207 = vmatprep.subr.mxu0 %v3040
    %4208 = vmatpush1.msra.mxu0 %v3039
    %4209 = vmatprep.subr.mxu0 %v3056
    %4210 = vmatpush1.msra.mxu0 %v3055
    %4211 = vmatprep.subr.mxu0 %v3072
    %4212 = vmatpush1.msra.mxu0 %v3071
    %4213 = vmatprep.subr.mxu0 %v3088
    %4214 = vmatpush1.msra.mxu0 %v3087
    %4215 = vmatprep.subr.mxu0 %v3104
    %4216 = vmatpush1.msra.mxu0 %v3103
    %4217 = vmatprep.subr.mxu0 %v3120
    %4218 = vmatpush1.msra.mxu0 %v3119
    %4219 = vmatprep.mubr.f32.mxu0 %v1594
    %4220 = vmatmul.mubr.f32.gmra.mrb[0].mxu0 %v1593
    %v4221 = vpop.f32.mrb[0].mxu0
    %v4222 = vadd.f32 %v4151, %v4221
    %v4223 = vpop.f32.mrb[0].mxu0
    %v4224 = vadd.f32 %v4153, %v4223
    %4225 = vdwg.mxu0
    %4226 = vmatprep.subr.mxu0 %v3136
    %4227 = vmatpush1.msra.mxu0 %v3135
    %4228 = vmatprep.subr.mxu0 %v3152
    %4229 = vmatpush1.msra.mxu0 %v3151
    %4230 = vmatprep.subr.mxu0 %v3168
    %4231 = vmatpush1.msra.mxu0 %v3167
    %4232 = vmatprep.subr.mxu0 %v3184
    %4233 = vmatpush1.msra.mxu0 %v3183
    %4234 = vmatprep.subr.mxu0 %v3200
    %4235 = vmatpush1.msra.mxu0 %v3199
    %4236 = vmatprep.subr.mxu0 %v3216
    %4237 = vmatpush1.msra.mxu0 %v3215
    %4238 = vmatprep.subr.mxu0 %v3232
    %4239 = vmatpush1.msra.mxu0 %v3231
    %4240 = vmatprep.subr.mxu0 %v3248
    %4241 = vmatpush1.msra.mxu0 %v3247
    %4242 = vmatprep.subr.mxu0 %v3264
    %4243 = vmatpush1.msra.mxu0 %v3263
    %4244 = vmatprep.subr.mxu0 %v3280
    %4245 = vmatpush1.msra.mxu0 %v3279
    %4246 = vmatprep.subr.mxu0 %v3296
    %4247 = vmatpush1.msra.mxu0 %v3295
    %4248 = vmatprep.subr.mxu0 %v3312
    %4249 = vmatpush1.msra.mxu0 %v3311
    %4250 = vmatprep.subr.mxu0 %v3328
    %4251 = vmatpush1.msra.mxu0 %v3327
    %4252 = vmatprep.subr.mxu0 %v3344
    %4253 = vmatpush1.msra.mxu0 %v3343
    %4254 = vmatprep.subr.mxu0 %v3360
    %4255 = vmatpush1.msra.mxu0 %v3359
    %4256 = vmatprep.subr.mxu0 %v3376
    %4257 = vmatpush1.msra.mxu0 %v3375
    %4258 = vmatprep.subr.mxu0 %v3392
    %4259 = vmatpush1.msra.mxu0 %v3391
    %4260 = vmatprep.subr.mxu0 %v3408
    %4261 = vmatpush1.msra.mxu0 %v3407
    %4262 = vmatprep.subr.mxu0 %v3424
    %4263 = vmatpush1.msra.mxu0 %v3423
    %4264 = vmatprep.subr.mxu0 %v3440
    %4265 = vmatpush1.msra.mxu0 %v3439
    %4266 = vmatprep.subr.mxu0 %v3456
    %4267 = vmatpush1.msra.mxu0 %v3455
    %4268 = vmatprep.subr.mxu0 %v3472
    %4269 = vmatpush1.msra.mxu0 %v3471
    %4270 = vmatprep.subr.mxu0 %v3488
    %4271 = vmatpush1.msra.mxu0 %v3487
    %4272 = vmatprep.subr.mxu0 %v3504
    %4273 = vmatpush1.msra.mxu0 %v3503
    %4274 = vmatprep.subr.mxu0 %v3520
    %4275 = vmatpush1.msra.mxu0 %v3519
    %4276 = vmatprep.subr.mxu0 %v3536
    %4277 = vmatpush1.msra.mxu0 %v3535
    %4278 = vmatprep.subr.mxu0 %v3552
    %4279 = vmatpush1.msra.mxu0 %v3551
    %4280 = vmatprep.subr.mxu0 %v3568
    %4281 = vmatpush1.msra.mxu0 %v3567
    %4282 = vmatprep.subr.mxu0 %v3584
    %4283 = vmatpush1.msra.mxu0 %v3583
    %4284 = vmatprep.subr.mxu0 %v3600
    %4285 = vmatpush1.msra.mxu0 %v3599
    %4286 = vmatprep.subr.mxu0 %v3616
    %4287 = vmatpush1.msra.mxu0 %v3615
    %4288 = vmatprep.subr.mxu0 %v3632
    %4289 = vmatpush1.msra.mxu0 %v3631
    %4290 = vmatprep.mubr.f32.mxu0 %v1596
    %4291 = vmatmul.mubr.f32.gmra.mrb[0].mxu0 %v1595
    %v4292 = vpop.f32.mrb[0].mxu0
    %v4293 = vadd.f32 %v4222, %v4292
    %v4294 = vpop.f32.mrb[0].mxu0
    %v4295 = vadd.f32 %v4224, %v4294
    %4296 = vdwg.mxu0
    %4297 = vmatprep.subr.mxu0 %v1602
    %4298 = vmatpush1.msra.mxu0 %v1601
    %4299 = vmatprep.subr.mxu0 %v1618
    %4300 = vmatpush1.msra.mxu0 %v1617
    %4301 = vmatprep.subr.mxu0 %v1634
    %4302 = vmatpush1.msra.mxu0 %v1633
    %4303 = vmatprep.subr.mxu0 %v1650
    %4304 = vmatpush1.msra.mxu0 %v1649
    %4305 = vmatprep.subr.mxu0 %v1666
    %4306 = vmatpush1.msra.mxu0 %v1665
    %4307 = vmatprep.subr.mxu0 %v1682
    %4308 = vmatpush1.msra.mxu0 %v1681
    %4309 = vmatprep.subr.mxu0 %v1698
    %4310 = vmatpush1.msra.mxu0 %v1697
    %4311 = vmatprep.subr.mxu0 %v1714
    %4312 = vmatpush1.msra.mxu0 %v1713
    %4313 = vmatprep.subr.mxu0 %v1730
    %4314 = vmatpush1.msra.mxu0 %v1729
    %4315 = vmatprep.subr.mxu0 %v1746
    %4316 = vmatpush1.msra.mxu0 %v1745
    %4317 = vmatprep.subr.mxu0 %v1762
    %4318 = vmatpush1.msra.mxu0 %v1761
    %4319 = vmatprep.subr.mxu0 %v1778
    %4320 = vmatpush1.msra.mxu0 %v1777
    %4321 = vmatprep.subr.mxu0 %v1794
    %4322 = vmatpush1.msra.mxu0 %v1793
    %4323 = vmatprep.subr.mxu0 %v1810
    %4324 = vmatpush1.msra.mxu0 %v1809
    %4325 = vmatprep.subr.mxu0 %v1826
    %4326 = vmatpush1.msra.mxu0 %v1825
    %4327 = vmatprep.subr.mxu0 %v1842
    %4328 = vmatpush1.msra.mxu0 %v1841
    %4329 = vmatprep.subr.mxu0 %v1858
    %4330 = vmatpush1.msra.mxu0 %v1857
    %4331 = vmatprep.subr.mxu0 %v1874
    %4332 = vmatpush1.msra.mxu0 %v1873
    %4333 = vmatprep.subr.mxu0 %v1890
    %4334 = vmatpush1.msra.mxu0 %v1889
    %4335 = vmatprep.subr.mxu0 %v1906
    %4336 = vmatpush1.msra.mxu0 %v1905
    %4337 = vmatprep.subr.mxu0 %v1922
    %4338 = vmatpush1.msra.mxu0 %v1921
    %4339 = vmatprep.subr.mxu0 %v1938
    %4340 = vmatpush1.msra.mxu0 %v1937
    %4341 = vmatprep.subr.mxu0 %v1954
    %4342 = vmatpush1.msra.mxu0 %v1953
    %4343 = vmatprep.subr.mxu0 %v1970
    %4344 = vmatpush1.msra.mxu0 %v1969
    %4345 = vmatprep.subr.mxu0 %v1986
    %4346 = vmatpush1.msra.mxu0 %v1985
    %4347 = vmatprep.subr.mxu0 %v2002
    %4348 = vmatpush1.msra.mxu0 %v2001
    %4349 = vmatprep.subr.mxu0 %v2018
    %4350 = vmatpush1.msra.mxu0 %v2017
    %4351 = vmatprep.subr.mxu0 %v2034
    %4352 = vmatpush1.msra.mxu0 %v2033
    %4353 = vmatprep.subr.mxu0 %v2050
    %4354 = vmatpush1.msra.mxu0 %v2049
    %4355 = vmatprep.subr.mxu0 %v2066
    %4356 = vmatpush1.msra.mxu0 %v2065
    %4357 = vmatprep.subr.mxu0 %v2082
    %4358 = vmatpush1.msra.mxu0 %v2081
    %4359 = vmatprep.subr.mxu0 %v2098
    %4360 = vmatpush1.msra.mxu0 %v2097
    %4361 = vmatprep.mubr.f32.mxu0 %v1590
    %4362 = vmatmul.mubr.f32.gmra.mrb[0].mxu0 %v1589
    %v4363 = vpop.f32.mrb[0].mxu0
    %v4364 = vadd.f32 %v3668, %v4363
    %v4365 = vpop.f32.mrb[0].mxu0
    %v4366 = vadd.f32 %v3672, %v4365
    %4367 = vdwg.mxu0
    %4368 = vmatprep.subr.mxu0 %v2114
    %4369 = vmatpush1.msra.mxu0 %v2113
    %4370 = vmatprep.subr.mxu0 %v2130
    %4371 = vmatpush1.msra.mxu0 %v2129
    %4372 = vmatprep.subr.mxu0 %v2146
    %4373 = vmatpush1.msra.mxu0 %v2145
    %4374 = vmatprep.subr.mxu0 %v2162
    %4375 = vmatpush1.msra.mxu0 %v2161
    %4376 = vmatprep.subr.mxu0 %v2178
    %4377 = vmatpush1.msra.mxu0 %v2177
    %4378 = vmatprep.subr.mxu0 %v2194
    %4379 = vmatpush1.msra.mxu0 %v2193
    %4380 = vmatprep.subr.mxu0 %v2210
    %4381 = vmatpush1.msra.mxu0 %v2209
    %4382 = vmatprep.subr.mxu0 %v2226
    %4383 = vmatpush1.msra.mxu0 %v2225
    %4384 = vmatprep.subr.mxu0 %v2242
    %4385 = vmatpush1.msra.mxu0 %v2241
    %4386 = vmatprep.subr.mxu0 %v2258
    %4387 = vmatpush1.msra.mxu0 %v2257
    %4388 = vmatprep.subr.mxu0 %v2274
    %4389 = vmatpush1.msra.mxu0 %v2273
    %4390 = vmatprep.subr.mxu0 %v2290
    %4391 = vmatpush1.msra.mxu0 %v2289
    %4392 = vmatprep.subr.mxu0 %v2306
    %4393 = vmatpush1.msra.mxu0 %v2305
    %4394 = vmatprep.subr.mxu0 %v2322
    %4395 = vmatpush1.msra.mxu0 %v2321
    %4396 = vmatprep.subr.mxu0 %v2338
    %4397 = vmatpush1.msra.mxu0 %v2337
    %4398 = vmatprep.subr.mxu0 %v2354
    %4399 = vmatpush1.msra.mxu0 %v2353
    %4400 = vmatprep.subr.mxu0 %v2370
    %4401 = vmatpush1.msra.mxu0 %v2369
    %4402 = vmatprep.subr.mxu0 %v2386
    %4403 = vmatpush1.msra.mxu0 %v2385
    %4404 = vmatprep.subr.mxu0 %v2402
    %4405 = vmatpush1.msra.mxu0 %v2401
    %4406 = vmatprep.subr.mxu0 %v2418
    %4407 = vmatpush1.msra.mxu0 %v2417
    %4408 = vmatprep.subr.mxu0 %v2434
    %4409 = vmatpush1.msra.mxu0 %v2433
    %4410 = vmatprep.subr.mxu0 %v2450
    %4411 = vmatpush1.msra.mxu0 %v2449
    %4412 = vmatprep.subr.mxu0 %v2466
    %4413 = vmatpush1.msra.mxu0 %v2465
    %4414 = vmatprep.subr.mxu0 %v2482
    %4415 = vmatpush1.msra.mxu0 %v2481
    %4416 = vmatprep.subr.mxu0 %v2498
    %4417 = vmatpush1.msra.mxu0 %v2497
    %4418 = vmatprep.subr.mxu0 %v2514
    %4419 = vmatpush1.msra.mxu0 %v2513
    %4420 = vmatprep.subr.mxu0 %v2530
    %4421 = vmatpush1.msra.mxu0 %v2529
    %4422 = vmatprep.subr.mxu0 %v2546
    %4423 = vmatpush1.msra.mxu0 %v2545
    %4424 = vmatprep.subr.mxu0 %v2562
    %4425 = vmatpush1.msra.mxu0 %v2561
    %4426 = vmatprep.subr.mxu0 %v2578
    %4427 = vmatpush1.msra.mxu0 %v2577
    %4428 = vmatprep.subr.mxu0 %v2594
    %4429 = vmatpush1.msra.mxu0 %v2593
    %4430 = vmatprep.subr.mxu0 %v2610
    %4431 = vmatpush1.msra.mxu0 %v2609
    %4432 = vmatprep.mubr.f32.mxu0 %v1592
    %4433 = vmatmul.mubr.f32.gmra.mrb[0].mxu0 %v1591
    %v4434 = vpop.f32.mrb[0].mxu0
    %v4435 = vadd.f32 %v4364, %v4434
    %v4436 = vpop.f32.mrb[0].mxu0
    %v4437 = vadd.f32 %v4366, %v4436
    %4438 = vdwg.mxu0
    %4439 = vmatprep.subr.mxu0 %v2626
    %4440 = vmatpush1.msra.mxu0 %v2625
    %4441 = vmatprep.subr.mxu0 %v2642
    %4442 = vmatpush1.msra.mxu0 %v2641
    %4443 = vmatprep.subr.mxu0 %v2658
    %4444 = vmatpush1.msra.mxu0 %v2657
    %4445 = vmatprep.subr.mxu0 %v2674
    %4446 = vmatpush1.msra.mxu0 %v2673
    %4447 = vmatprep.subr.mxu0 %v2690
    %4448 = vmatpush1.msra.mxu0 %v2689
    %4449 = vmatprep.subr.mxu0 %v2706
    %4450 = vmatpush1.msra.mxu0 %v2705
    %4451 = vmatprep.subr.mxu0 %v2722
    %4452 = vmatpush1.msra.mxu0 %v2721
    %4453 = vmatprep.subr.mxu0 %v2738
    %4454 = vmatpush1.msra.mxu0 %v2737
    %4455 = vmatprep.subr.mxu0 %v2754
    %4456 = vmatpush1.msra.mxu0 %v2753
    %4457 = vmatprep.subr.mxu0 %v2770
    %4458 = vmatpush1.msra.mxu0 %v2769
    %4459 = vmatprep.subr.mxu0 %v2786
    %4460 = vmatpush1.msra.mxu0 %v2785
    %4461 = vmatprep.subr.mxu0 %v2802
    %4462 = vmatpush1.msra.mxu0 %v2801
    %4463 = vmatprep.subr.mxu0 %v2818
    %4464 = vmatpush1.msra.mxu0 %v2817
    %4465 = vmatprep.subr.mxu0 %v2834
    %4466 = vmatpush1.msra.mxu0 %v2833
    %4467 = vmatprep.subr.mxu0 %v2850
    %4468 = vmatpush1.msra.mxu0 %v2849
    %4469 = vmatprep.subr.mxu0 %v2866
    %4470 = vmatpush1.msra.mxu0 %v2865
    %4471 = vmatprep.subr.mxu0 %v2882
    %4472 = vmatpush1.msra.mxu0 %v2881
    %4473 = vmatprep.subr.mxu0 %v2898
    %4474 = vmatpush1.msra.mxu0 %v2897
    %4475 = vmatprep.subr.mxu0 %v2914
    %4476 = vmatpush1.msra.mxu0 %v2913
    %4477 = vmatprep.subr.mxu0 %v2930
    %4478 = vmatpush1.msra.mxu0 %v2929
    %4479 = vmatprep.subr.mxu0 %v2946
    %4480 = vmatpush1.msra.mxu0 %v2945
    %4481 = vmatprep.subr.mxu0 %v2962
    %4482 = vmatpush1.msra.mxu0 %v2961
    %4483 = vmatprep.subr.mxu0 %v2978
    %4484 = vmatpush1.msra.mxu0 %v2977
    %4485 = vmatprep.subr.mxu0 %v2994
    %4486 = vmatpush1.msra.mxu0 %v2993
    %4487 = vmatprep.subr.mxu0 %v3010
    %4488 = vmatpush1.msra.mxu0 %v3009
    %4489 = vmatprep.subr.mxu0 %v3026
    %4490 = vmatpush1.msra.mxu0 %v3025
    %4491 = vmatprep.subr.mxu0 %v3042
    %4492 = vmatpush1.msra.mxu0 %v3041
    %4493 = vmatprep.subr.mxu0 %v3058
    %4494 = vmatpush1.msra.mxu0 %v3057
    %4495 = vmatprep.subr.mxu0 %v3074
    %4496 = vmatpush1.msra.mxu0 %v3073
    %4497 = vmatprep.subr.mxu0 %v3090
    %4498 = vmatpush1.msra.mxu0 %v3089
    %4499 = vmatprep.subr.mxu0 %v3106
    %4500 = vmatpush1.msra.mxu0 %v3105
    %4501 = vmatprep.subr.mxu0 %v3122
    %4502 = vmatpush1.msra.mxu0 %v3121
    %4503 = vmatprep.mubr.f32.mxu0 %v1594
    %4504 = vmatmul.mubr.f32.gmra.mrb[0].mxu0 %v1593
    %v4505 = vpop.f32.mrb[0].mxu0
    %v4506 = vadd.f32 %v4435, %v4505
    %v4507 = vpop.f32.mrb[0].mxu0
    %v4508 = vadd.f32 %v4437, %v4507
    %4509 = vdwg.mxu0
    %4510 = vmatprep.subr.mxu0 %v3138
    %4511 = vmatpush1.msra.mxu0 %v3137
    %4512 = vmatprep.subr.mxu0 %v3154
    %4513 = vmatpush1.msra.mxu0 %v3153
    %4514 = vmatprep.subr.mxu0 %v3170
    %4515 = vmatpush1.msra.mxu0 %v3169
    %4516 = vmatprep.subr.mxu0 %v3186
    %4517 = vmatpush1.msra.mxu0 %v3185
    %4518 = vmatprep.subr.mxu0 %v3202
    %4519 = vmatpush1.msra.mxu0 %v3201
    %4520 = vmatprep.subr.mxu0 %v3218
    %4521 = vmatpush1.msra.mxu0 %v3217
    %4522 = vmatprep.subr.mxu0 %v3234
    %4523 = vmatpush1.msra.mxu0 %v3233
    %4524 = vmatprep.subr.mxu0 %v3250
    %4525 = vmatpush1.msra.mxu0 %v3249
    %4526 = vmatprep.subr.mxu0 %v3266
    %4527 = vmatpush1.msra.mxu0 %v3265
    %4528 = vmatprep.subr.mxu0 %v3282
    %4529 = vmatpush1.msra.mxu0 %v3281
    %4530 = vmatprep.subr.mxu0 %v3298
    %4531 = vmatpush1.msra.mxu0 %v3297
    %4532 = vmatprep.subr.mxu0 %v3314
    %4533 = vmatpush1.msra.mxu0 %v3313
    %4534 = vmatprep.subr.mxu0 %v3330
    %4535 = vmatpush1.msra.mxu0 %v3329
    %4536 = vmatprep.subr.mxu0 %v3346
    %4537 = vmatpush1.msra.mxu0 %v3345
    %4538 = vmatprep.subr.mxu0 %v3362
    %4539 = vmatpush1.msra.mxu0 %v3361
    %4540 = vmatprep.subr.mxu0 %v3378
    %4541 = vmatpush1.msra.mxu0 %v3377
    %4542 = vmatprep.subr.mxu0 %v3394
    %4543 = vmatpush1.msra.mxu0 %v3393
    %4544 = vmatprep.subr.mxu0 %v3410
    %4545 = vmatpush1.msra.mxu0 %v3409
    %4546 = vmatprep.subr.mxu0 %v3426
    %4547 = vmatpush1.msra.mxu0 %v3425
    %4548 = vmatprep.subr.mxu0 %v3442
    %4549 = vmatpush1.msra.mxu0 %v3441
    %4550 = vmatprep.subr.mxu0 %v3458
    %4551 = vmatpush1.msra.mxu0 %v3457
    %4552 = vmatprep.subr.mxu0 %v3474
    %4553 = vmatpush1.msra.mxu0 %v3473
    %4554 = vmatprep.subr.mxu0 %v3490
    %4555 = vmatpush1.msra.mxu0 %v3489
    %4556 = vmatprep.subr.mxu0 %v3506
    %4557 = vmatpush1.msra.mxu0 %v3505
    %4558 = vmatprep.subr.mxu0 %v3522
    %4559 = vmatpush1.msra.mxu0 %v3521
    %4560 = vmatprep.subr.mxu0 %v3538
    %4561 = vmatpush1.msra.mxu0 %v3537
    %4562 = vmatprep.subr.mxu0 %v3554
    %4563 = vmatpush1.msra.mxu0 %v3553
    %4564 = vmatprep.subr.mxu0 %v3570
    %4565 = vmatpush1.msra.mxu0 %v3569
    %4566 = vmatprep.subr.mxu0 %v3586
    %4567 = vmatpush1.msra.mxu0 %v3585
    %4568 = vmatprep.subr.mxu0 %v3602
    %4569 = vmatpush1.msra.mxu0 %v3601
    %4570 = vmatprep.subr.mxu0 %v3618
    %4571 = vmatpush1.msra.mxu0 %v3617
    %4572 = vmatprep.subr.mxu0 %v3634
    %4573 = vmatpush1.msra.mxu0 %v3633
    %4574 = vmatprep.mubr.f32.mxu0 %v1596
    %4575 = vmatmul.mubr.f32.gmra.mrb[0].mxu0 %v1595
    %v4576 = vpop.f32.mrb[0].mxu0
    %v4577 = vadd.f32 %v4506, %v4576
    %v4578 = vpop.f32.mrb[0].mxu0
    %v4579 = vadd.f32 %v4508, %v4578
    %4580 = vdwg.mxu0
    %4581 = vmatprep.subr.mxu0 %v1604
    %4582 = vmatpush1.msra.mxu0 %v1603
    %4583 = vmatprep.subr.mxu0 %v1620
    %4584 = vmatpush1.msra.mxu0 %v1619
    %4585 = vmatprep.subr.mxu0 %v1636
    %4586 = vmatpush1.msra.mxu0 %v1635
    %4587 = vmatprep.subr.mxu0 %v1652
    %4588 = vmatpush1.msra.mxu0 %v1651
    %4589 = vmatprep.subr.mxu0 %v1668
    %4590 = vmatpush1.msra.mxu0 %v1667
    %4591 = vmatprep.subr.mxu0 %v1684
    %4592 = vmatpush1.msra.mxu0 %v1683
    %4593 = vmatprep.subr.mxu0 %v1700
    %4594 = vmatpush1.msra.mxu0 %v1699
    %4595 = vmatprep.subr.mxu0 %v1716
    %4596 = vmatpush1.msra.mxu0 %v1715
    %4597 = vmatprep.subr.mxu0 %v1732
    %4598 = vmatpush1.msra.mxu0 %v1731
    %4599 = vmatprep.subr.mxu0 %v1748
    %4600 = vmatpush1.msra.mxu0 %v1747
    %4601 = vmatprep.subr.mxu0 %v1764
    %4602 = vmatpush1.msra.mxu0 %v1763
    %4603 = vmatprep.subr.mxu0 %v1780
    %4604 = vmatpush1.msra.mxu0 %v1779
    %4605 = vmatprep.subr.mxu0 %v1796
    %4606 = vmatpush1.msra.mxu0 %v1795
    %4607 = vmatprep.subr.mxu0 %v1812
    %4608 = vmatpush1.msra.mxu0 %v1811
    %4609 = vmatprep.subr.mxu0 %v1828
    %4610 = vmatpush1.msra.mxu0 %v1827
    %4611 = vmatprep.subr.mxu0 %v1844
    %4612 = vmatpush1.msra.mxu0 %v1843
    %4613 = vmatprep.subr.mxu0 %v1860
    %4614 = vmatpush1.msra.mxu0 %v1859
    %4615 = vmatprep.subr.mxu0 %v1876
    %4616 = vmatpush1.msra.mxu0 %v1875
    %4617 = vmatprep.subr.mxu0 %v1892
    %4618 = vmatpush1.msra.mxu0 %v1891
    %4619 = vmatprep.subr.mxu0 %v1908
    %4620 = vmatpush1.msra.mxu0 %v1907
    %4621 = vmatprep.subr.mxu0 %v1924
    %4622 = vmatpush1.msra.mxu0 %v1923
    %4623 = vmatprep.subr.mxu0 %v1940
    %4624 = vmatpush1.msra.mxu0 %v1939
    %4625 = vmatprep.subr.mxu0 %v1956
    %4626 = vmatpush1.msra.mxu0 %v1955
    %4627 = vmatprep.subr.mxu0 %v1972
    %4628 = vmatpush1.msra.mxu0 %v1971
    %4629 = vmatprep.subr.mxu0 %v1988
    %4630 = vmatpush1.msra.mxu0 %v1987
    %4631 = vmatprep.subr.mxu0 %v2004
    %4632 = vmatpush1.msra.mxu0 %v2003
    %4633 = vmatprep.subr.mxu0 %v2020
    %4634 = vmatpush1.msra.mxu0 %v2019
    %4635 = vmatprep.subr.mxu0 %v2036
    %4636 = vmatpush1.msra.mxu0 %v2035
    %4637 = vmatprep.subr.mxu0 %v2052
    %4638 = vmatpush1.msra.mxu0 %v2051
    %4639 = vmatprep.subr.mxu0 %v2068
    %4640 = vmatpush1.msra.mxu0 %v2067
    %4641 = vmatprep.subr.mxu0 %v2084
    %4642 = vmatpush1.msra.mxu0 %v2083
    %4643 = vmatprep.subr.mxu0 %v2100
    %4644 = vmatpush1.msra.mxu0 %v2099
    %4645 = vmatprep.mubr.f32.mxu0 %v1590
    %4646 = vmatmul.mubr.f32.gmra.mrb[0].mxu0 %v1589
    %v4647 = vpop.f32.mrb[0].mxu0
    %v4648 = vadd.f32 %v3676, %v4647
    %v4649 = vpop.f32.mrb[0].mxu0
    %v4650 = vadd.f32 %v3680, %v4649
    %4651 = vdwg.mxu0
    %4652 = vmatprep.subr.mxu0 %v2116
    %4653 = vmatpush1.msra.mxu0 %v2115
    %4654 = vmatprep.subr.mxu0 %v2132
    %4655 = vmatpush1.msra.mxu0 %v2131
    %4656 = vmatprep.subr.mxu0 %v2148
    %4657 = vmatpush1.msra.mxu0 %v2147
    %4658 = vmatprep.subr.mxu0 %v2164
    %4659 = vmatpush1.msra.mxu0 %v2163
    %4660 = vmatprep.subr.mxu0 %v2180
    %4661 = vmatpush1.msra.mxu0 %v2179
    %4662 = vmatprep.subr.mxu0 %v2196
    %4663 = vmatpush1.msra.mxu0 %v2195
    %4664 = vmatprep.subr.mxu0 %v2212
    %4665 = vmatpush1.msra.mxu0 %v2211
    %4666 = vmatprep.subr.mxu0 %v2228
    %4667 = vmatpush1.msra.mxu0 %v2227
    %4668 = vmatprep.subr.mxu0 %v2244
    %4669 = vmatpush1.msra.mxu0 %v2243
    %4670 = vmatprep.subr.mxu0 %v2260
    %4671 = vmatpush1.msra.mxu0 %v2259
    %4672 = vmatprep.subr.mxu0 %v2276
    %4673 = vmatpush1.msra.mxu0 %v2275
    %4674 = vmatprep.subr.mxu0 %v2292
    %4675 = vmatpush1.msra.mxu0 %v2291
    %4676 = vmatprep.subr.mxu0 %v2308
    %4677 = vmatpush1.msra.mxu0 %v2307
    %4678 = vmatprep.subr.mxu0 %v2324
    %4679 = vmatpush1.msra.mxu0 %v2323
    %4680 = vmatprep.subr.mxu0 %v2340
    %4681 = vmatpush1.msra.mxu0 %v2339
    %4682 = vmatprep.subr.mxu0 %v2356
    %4683 = vmatpush1.msra.mxu0 %v2355
    %4684 = vmatprep.subr.mxu0 %v2372
    %4685 = vmatpush1.msra.mxu0 %v2371
    %4686 = vmatprep.subr.mxu0 %v2388
    %4687 = vmatpush1.msra.mxu0 %v2387
    %4688 = vmatprep.subr.mxu0 %v2404
    %4689 = vmatpush1.msra.mxu0 %v2403
    %4690 = vmatprep.subr.mxu0 %v2420
    %4691 = vmatpush1.msra.mxu0 %v2419
    %4692 = vmatprep.subr.mxu0 %v2436
    %4693 = vmatpush1.msra.mxu0 %v2435
    %4694 = vmatprep.subr.mxu0 %v2452
    %4695 = vmatpush1.msra.mxu0 %v2451
    %4696 = vmatprep.subr.mxu0 %v2468
    %4697 = vmatpush1.msra.mxu0 %v2467
    %4698 = vmatprep.subr.mxu0 %v2484
    %4699 = vmatpush1.msra.mxu0 %v2483
    %4700 = vmatprep.subr.mxu0 %v2500
    %4701 = vmatpush1.msra.mxu0 %v2499
    %4702 = vmatprep.subr.mxu0 %v2516
    %4703 = vmatpush1.msra.mxu0 %v2515
    %4704 = vmatprep.subr.mxu0 %v2532
    %4705 = vmatpush1.msra.mxu0 %v2531
    %4706 = vmatprep.subr.mxu0 %v2548
    %4707 = vmatpush1.msra.mxu0 %v2547
    %4708 = vmatprep.subr.mxu0 %v2564
    %4709 = vmatpush1.msra.mxu0 %v2563
    %4710 = vmatprep.subr.mxu0 %v2580
    %4711 = vmatpush1.msra.mxu0 %v2579
    %4712 = vmatprep.subr.mxu0 %v2596
    %4713 = vmatpush1.msra.mxu0 %v2595
    %4714 = vmatprep.subr.mxu0 %v2612
    %4715 = vmatpush1.msra.mxu0 %v2611
    %4716 = vmatprep.mubr.f32.mxu0 %v1592
    %4717 = vmatmul.mubr.f32.gmra.mrb[0].mxu0 %v1591
    %v4718 = vpop.f32.mrb[0].mxu0
    %v4719 = vadd.f32 %v4648, %v4718
    %v4720 = vpop.f32.mrb[0].mxu0
    %v4721 = vadd.f32 %v4650, %v4720
    %4722 = vdwg.mxu0
    %4723 = vmatprep.subr.mxu0 %v2628
    %4724 = vmatpush1.msra.mxu0 %v2627
    %4725 = vmatprep.subr.mxu0 %v2644
    %4726 = vmatpush1.msra.mxu0 %v2643
    %4727 = vmatprep.subr.mxu0 %v2660
    %4728 = vmatpush1.msra.mxu0 %v2659
    %4729 = vmatprep.subr.mxu0 %v2676
    %4730 = vmatpush1.msra.mxu0 %v2675
    %4731 = vmatprep.subr.mxu0 %v2692
    %4732 = vmatpush1.msra.mxu0 %v2691
    %4733 = vmatprep.subr.mxu0 %v2708
    %4734 = vmatpush1.msra.mxu0 %v2707
    %4735 = vmatprep.subr.mxu0 %v2724
    %4736 = vmatpush1.msra.mxu0 %v2723
    %4737 = vmatprep.subr.mxu0 %v2740
    %4738 = vmatpush1.msra.mxu0 %v2739
    %4739 = vmatprep.subr.mxu0 %v2756
    %4740 = vmatpush1.msra.mxu0 %v2755
    %4741 = vmatprep.subr.mxu0 %v2772
    %4742 = vmatpush1.msra.mxu0 %v2771
    %4743 = vmatprep.subr.mxu0 %v2788
    %4744 = vmatpush1.msra.mxu0 %v2787
    %4745 = vmatprep.subr.mxu0 %v2804
    %4746 = vmatpush1.msra.mxu0 %v2803
    %4747 = vmatprep.subr.mxu0 %v2820
    %4748 = vmatpush1.msra.mxu0 %v2819
    %4749 = vmatprep.subr.mxu0 %v2836
    %4750 = vmatpush1.msra.mxu0 %v2835
    %4751 = vmatprep.subr.mxu0 %v2852
    %4752 = vmatpush1.msra.mxu0 %v2851
    %4753 = vmatprep.subr.mxu0 %v2868
    %4754 = vmatpush1.msra.mxu0 %v2867
    %4755 = vmatprep.subr.mxu0 %v2884
    %4756 = vmatpush1.msra.mxu0 %v2883
    %4757 = vmatprep.subr.mxu0 %v2900
    %4758 = vmatpush1.msra.mxu0 %v2899
    %4759 = vmatprep.subr.mxu0 %v2916
    %4760 = vmatpush1.msra.mxu0 %v2915
    %4761 = vmatprep.subr.mxu0 %v2932
    %4762 = vmatpush1.msra.mxu0 %v2931
    %4763 = vmatprep.subr.mxu0 %v2948
    %4764 = vmatpush1.msra.mxu0 %v2947
    %4765 = vmatprep.subr.mxu0 %v2964
    %4766 = vmatpush1.msra.mxu0 %v2963
    %4767 = vmatprep.subr.mxu0 %v2980
    %4768 = vmatpush1.msra.mxu0 %v2979
    %4769 = vmatprep.subr.mxu0 %v2996
    %4770 = vmatpush1.msra.mxu0 %v2995
    %4771 = vmatprep.subr.mxu0 %v3012
    %4772 = vmatpush1.msra.mxu0 %v3011
    %4773 = vmatprep.subr.mxu0 %v3028
    %4774 = vmatpush1.msra.mxu0 %v3027
    %4775 = vmatprep.subr.mxu0 %v3044
    %4776 = vmatpush1.msra.mxu0 %v3043
    %4777 = vmatprep.subr.mxu0 %v3060
    %4778 = vmatpush1.msra.mxu0 %v3059
    %4779 = vmatprep.subr.mxu0 %v3076
    %4780 = vmatpush1.msra.mxu0 %v3075
    %4781 = vmatprep.subr.mxu0 %v3092
    %4782 = vmatpush1.msra.mxu0 %v3091
    %4783 = vmatprep.subr.mxu0 %v3108
    %4784 = vmatpush1.msra.mxu0 %v3107
    %4785 = vmatprep.subr.mxu0 %v3124
    %4786 = vmatpush1.msra.mxu0 %v3123
    %4787 = vmatprep.mubr.f32.mxu0 %v1594
    %4788 = vmatmul.mubr.f32.gmra.mrb[0].mxu0 %v1593
    %v4789 = vpop.f32.mrb[0].mxu0
    %v4790 = vadd.f32 %v4719, %v4789
    %v4791 = vpop.f32.mrb[0].mxu0
    %v4792 = vadd.f32 %v4721, %v4791
    %4793 = vdwg.mxu0
    %4794 = vmatprep.subr.mxu0 %v3140
    %4795 = vmatpush1.msra.mxu0 %v3139
    %4796 = vmatprep.subr.mxu0 %v3156
    %4797 = vmatpush1.msra.mxu0 %v3155
    %4798 = vmatprep.subr.mxu0 %v3172
    %4799 = vmatpush1.msra.mxu0 %v3171
    %4800 = vmatprep.subr.mxu0 %v3188
    %4801 = vmatpush1.msra.mxu0 %v3187
    %4802 = vmatprep.subr.mxu0 %v3204
    %4803 = vmatpush1.msra.mxu0 %v3203
    %4804 = vmatprep.subr.mxu0 %v3220
    %4805 = vmatpush1.msra.mxu0 %v3219
    %4806 = vmatprep.subr.mxu0 %v3236
    %4807 = vmatpush1.msra.mxu0 %v3235
    %4808 = vmatprep.subr.mxu0 %v3252
    %4809 = vmatpush1.msra.mxu0 %v3251
    %4810 = vmatprep.subr.mxu0 %v3268
    %4811 = vmatpush1.msra.mxu0 %v3267
    %4812 = vmatprep.subr.mxu0 %v3284
    %4813 = vmatpush1.msra.mxu0 %v3283
    %4814 = vmatprep.subr.mxu0 %v3300
    %4815 = vmatpush1.msra.mxu0 %v3299
    %4816 = vmatprep.subr.mxu0 %v3316
    %4817 = vmatpush1.msra.mxu0 %v3315
    %4818 = vmatprep.subr.mxu0 %v3332
    %4819 = vmatpush1.msra.mxu0 %v3331
    %4820 = vmatprep.subr.mxu0 %v3348
    %4821 = vmatpush1.msra.mxu0 %v3347
    %4822 = vmatprep.subr.mxu0 %v3364
    %4823 = vmatpush1.msra.mxu0 %v3363
    %4824 = vmatprep.subr.mxu0 %v3380
    %4825 = vmatpush1.msra.mxu0 %v3379
    %4826 = vmatprep.subr.mxu0 %v3396
    %4827 = vmatpush1.msra.mxu0 %v3395
    %4828 = vmatprep.subr.mxu0 %v3412
    %4829 = vmatpush1.msra.mxu0 %v3411
    %4830 = vmatprep.subr.mxu0 %v3428
    %4831 = vmatpush1.msra.mxu0 %v3427
    %4832 = vmatprep.subr.mxu0 %v3444
    %4833 = vmatpush1.msra.mxu0 %v3443
    %4834 = vmatprep.subr.mxu0 %v3460
    %4835 = vmatpush1.msra.mxu0 %v3459
    %4836 = vmatprep.subr.mxu0 %v3476
    %4837 = vmatpush1.msra.mxu0 %v3475
    %4838 = vmatprep.subr.mxu0 %v3492
    %4839 = vmatpush1.msra.mxu0 %v3491
    %4840 = vmatprep.subr.mxu0 %v3508
    %4841 = vmatpush1.msra.mxu0 %v3507
    %4842 = vmatprep.subr.mxu0 %v3524
    %4843 = vmatpush1.msra.mxu0 %v3523
    %4844 = vmatprep.subr.mxu0 %v3540
    %4845 = vmatpush1.msra.mxu0 %v3539
    %4846 = vmatprep.subr.mxu0 %v3556
    %4847 = vmatpush1.msra.mxu0 %v3555
    %4848 = vmatprep.subr.mxu0 %v3572
    %4849 = vmatpush1.msra.mxu0 %v3571
    %4850 = vmatprep.subr.mxu0 %v3588
    %4851 = vmatpush1.msra.mxu0 %v3587
    %4852 = vmatprep.subr.mxu0 %v3604
    %4853 = vmatpush1.msra.mxu0 %v3603
    %4854 = vmatprep.subr.mxu0 %v3620
    %4855 = vmatpush1.msra.mxu0 %v3619
    %4856 = vmatprep.subr.mxu0 %v3636
    %4857 = vmatpush1.msra.mxu0 %v3635
    %4858 = vmatprep.mubr.f32.mxu0 %v1596
    %4859 = vmatmul.mubr.f32.gmra.mrb[0].mxu0 %v1595
    %v4860 = vpop.f32.mrb[0].mxu0
    %v4861 = vadd.f32 %v4790, %v4860
    %v4862 = vpop.f32.mrb[0].mxu0
    %v4863 = vadd.f32 %v4792, %v4862
    %4864 = vdwg.mxu0
    %4865 = vmatprep.subr.mxu0 %v1606
    %4866 = vmatpush1.msra.mxu0 %v1605
    %4867 = vmatprep.subr.mxu0 %v1622
    %4868 = vmatpush1.msra.mxu0 %v1621
    %4869 = vmatprep.subr.mxu0 %v1638
    %4870 = vmatpush1.msra.mxu0 %v1637
    %4871 = vmatprep.subr.mxu0 %v1654
    %4872 = vmatpush1.msra.mxu0 %v1653
    %4873 = vmatprep.subr.mxu0 %v1670
    %4874 = vmatpush1.msra.mxu0 %v1669
    %4875 = vmatprep.subr.mxu0 %v1686
    %4876 = vmatpush1.msra.mxu0 %v1685
    %4877 = vmatprep.subr.mxu0 %v1702
    %4878 = vmatpush1.msra.mxu0 %v1701
    %4879 = vmatprep.subr.mxu0 %v1718
    %4880 = vmatpush1.msra.mxu0 %v1717
    %4881 = vmatprep.subr.mxu0 %v1734
    %4882 = vmatpush1.msra.mxu0 %v1733
    %4883 = vmatprep.subr.mxu0 %v1750
    %4884 = vmatpush1.msra.mxu0 %v1749
    %4885 = vmatprep.subr.mxu0 %v1766
    %4886 = vmatpush1.msra.mxu0 %v1765
    %4887 = vmatprep.subr.mxu0 %v1782
    %4888 = vmatpush1.msra.mxu0 %v1781
    %4889 = vmatprep.subr.mxu0 %v1798
    %4890 = vmatpush1.msra.mxu0 %v1797
    %4891 = vmatprep.subr.mxu0 %v1814
    %4892 = vmatpush1.msra.mxu0 %v1813
    %4893 = vmatprep.subr.mxu0 %v1830
    %4894 = vmatpush1.msra.mxu0 %v1829
    %4895 = vmatprep.subr.mxu0 %v1846
    %4896 = vmatpush1.msra.mxu0 %v1845
    %4897 = vmatprep.subr.mxu0 %v1862
    %4898 = vmatpush1.msra.mxu0 %v1861
    %4899 = vmatprep.subr.mxu0 %v1878
    %4900 = vmatpush1.msra.mxu0 %v1877
    %4901 = vmatprep.subr.mxu0 %v1894
    %4902 = vmatpush1.msra.mxu0 %v1893
    %4903 = vmatprep.subr.mxu0 %v1910
    %4904 = vmatpush1.msra.mxu0 %v1909
    %4905 = vmatprep.subr.mxu0 %v1926
    %4906 = vmatpush1.msra.mxu0 %v1925
    %4907 = vmatprep.subr.mxu0 %v1942
    %4908 = vmatpush1.msra.mxu0 %v1941
    %4909 = vmatprep.subr.mxu0 %v1958
    %4910 = vmatpush1.msra.mxu0 %v1957
    %4911 = vmatprep.subr.mxu0 %v1974
    %4912 = vmatpush1.msra.mxu0 %v1973
    %4913 = vmatprep.subr.mxu0 %v1990
    %4914 = vmatpush1.msra.mxu0 %v1989
    %4915 = vmatprep.subr.mxu0 %v2006
    %4916 = vmatpush1.msra.mxu0 %v2005
    %4917 = vmatprep.subr.mxu0 %v2022
    %4918 = vmatpush1.msra.mxu0 %v2021
    %4919 = vmatprep.subr.mxu0 %v2038
    %4920 = vmatpush1.msra.mxu0 %v2037
    %4921 = vmatprep.subr.mxu0 %v2054
    %4922 = vmatpush1.msra.mxu0 %v2053
    %4923 = vmatprep.subr.mxu0 %v2070
    %4924 = vmatpush1.msra.mxu0 %v2069
    %4925 = vmatprep.subr.mxu0 %v2086
    %4926 = vmatpush1.msra.mxu0 %v2085
    %4927 = vmatprep.subr.mxu0 %v2102
    %4928 = vmatpush1.msra.mxu0 %v2101
    %4929 = vmatprep.mubr.f32.mxu0 %v1590
    %4930 = vmatmul.mubr.f32.gmra.mrb[0].mxu0 %v1589
    %v4931 = vpop.f32.mrb[0].mxu0
    %v4932 = vadd.f32 %v3684, %v4931
    %v4933 = vpop.f32.mrb[0].mxu0
    %v4934 = vadd.f32 %v3688, %v4933
    %4935 = vdwg.mxu0
    %4936 = vmatprep.subr.mxu0 %v2118
    %4937 = vmatpush1.msra.mxu0 %v2117
    %4938 = vmatprep.subr.mxu0 %v2134
    %4939 = vmatpush1.msra.mxu0 %v2133
    %4940 = vmatprep.subr.mxu0 %v2150
    %4941 = vmatpush1.msra.mxu0 %v2149
    %4942 = vmatprep.subr.mxu0 %v2166
    %4943 = vmatpush1.msra.mxu0 %v2165
    %4944 = vmatprep.subr.mxu0 %v2182
    %4945 = vmatpush1.msra.mxu0 %v2181
    %4946 = vmatprep.subr.mxu0 %v2198
    %4947 = vmatpush1.msra.mxu0 %v2197
    %4948 = vmatprep.subr.mxu0 %v2214
    %4949 = vmatpush1.msra.mxu0 %v2213
    %4950 = vmatprep.subr.mxu0 %v2230
    %4951 = vmatpush1.msra.mxu0 %v2229
    %4952 = vmatprep.subr.mxu0 %v2246
    %4953 = vmatpush1.msra.mxu0 %v2245
    %4954 = vmatprep.subr.mxu0 %v2262
    %4955 = vmatpush1.msra.mxu0 %v2261
    %4956 = vmatprep.subr.mxu0 %v2278
    %4957 = vmatpush1.msra.mxu0 %v2277
    %4958 = vmatprep.subr.mxu0 %v2294
    %4959 = vmatpush1.msra.mxu0 %v2293
    %4960 = vmatprep.subr.mxu0 %v2310
    %4961 = vmatpush1.msra.mxu0 %v2309
    %4962 = vmatprep.subr.mxu0 %v2326
    %4963 = vmatpush1.msra.mxu0 %v2325
    %4964 = vmatprep.subr.mxu0 %v2342
    %4965 = vmatpush1.msra.mxu0 %v2341
    %4966 = vmatprep.subr.mxu0 %v2358
    %4967 = vmatpush1.msra.mxu0 %v2357
    %4968 = vmatprep.subr.mxu0 %v2374
    %4969 = vmatpush1.msra.mxu0 %v2373
    %4970 = vmatprep.subr.mxu0 %v2390
    %4971 = vmatpush1.msra.mxu0 %v2389
    %4972 = vmatprep.subr.mxu0 %v2406
    %4973 = vmatpush1.msra.mxu0 %v2405
    %4974 = vmatprep.subr.mxu0 %v2422
    %4975 = vmatpush1.msra.mxu0 %v2421
    %4976 = vmatprep.subr.mxu0 %v2438
    %4977 = vmatpush1.msra.mxu0 %v2437
    %4978 = vmatprep.subr.mxu0 %v2454
    %4979 = vmatpush1.msra.mxu0 %v2453
    %4980 = vmatprep.subr.mxu0 %v2470
    %4981 = vmatpush1.msra.mxu0 %v2469
    %4982 = vmatprep.subr.mxu0 %v2486
    %4983 = vmatpush1.msra.mxu0 %v2485
    %4984 = vmatprep.subr.mxu0 %v2502
    %4985 = vmatpush1.msra.mxu0 %v2501
    %4986 = vmatprep.subr.mxu0 %v2518
    %4987 = vmatpush1.msra.mxu0 %v2517
    %4988 = vmatprep.subr.mxu0 %v2534
    %4989 = vmatpush1.msra.mxu0 %v2533
    %4990 = vmatprep.subr.mxu0 %v2550
    %4991 = vmatpush1.msra.mxu0 %v2549
    %4992 = vmatprep.subr.mxu0 %v2566
    %4993 = vmatpush1.msra.mxu0 %v2565
    %4994 = vmatprep.subr.mxu0 %v2582
    %4995 = vmatpush1.msra.mxu0 %v2581
    %4996 = vmatprep.subr.mxu0 %v2598
    %4997 = vmatpush1.msra.mxu0 %v2597
    %4998 = vmatprep.subr.mxu0 %v2614
    %4999 = vmatpush1.msra.mxu0 %v2613
    %5000 = vmatprep.mubr.f32.mxu0 %v1592
    %5001 = vmatmul.mubr.f32.gmra.mrb[0].mxu0 %v1591
    %v5002 = vpop.f32.mrb[0].mxu0
    %v5003 = vadd.f32 %v4932, %v5002
    %v5004 = vpop.f32.mrb[0].mxu0
    %v5005 = vadd.f32 %v4934, %v5004
    %5006 = vdwg.mxu0
    %5007 = vmatprep.subr.mxu0 %v2630
    %5008 = vmatpush1.msra.mxu0 %v2629
    %5009 = vmatprep.subr.mxu0 %v2646
    %5010 = vmatpush1.msra.mxu0 %v2645
    %5011 = vmatprep.subr.mxu0 %v2662
    %5012 = vmatpush1.msra.mxu0 %v2661
    %5013 = vmatprep.subr.mxu0 %v2678
    %5014 = vmatpush1.msra.mxu0 %v2677
    %5015 = vmatprep.subr.mxu0 %v2694
    %5016 = vmatpush1.msra.mxu0 %v2693
    %5017 = vmatprep.subr.mxu0 %v2710
    %5018 = vmatpush1.msra.mxu0 %v2709
    %5019 = vmatprep.subr.mxu0 %v2726
    %5020 = vmatpush1.msra.mxu0 %v2725
    %5021 = vmatprep.subr.mxu0 %v2742
    %5022 = vmatpush1.msra.mxu0 %v2741
    %5023 = vmatprep.subr.mxu0 %v2758
    %5024 = vmatpush1.msra.mxu0 %v2757
    %5025 = vmatprep.subr.mxu0 %v2774
    %5026 = vmatpush1.msra.mxu0 %v2773
    %5027 = vmatprep.subr.mxu0 %v2790
    %5028 = vmatpush1.msra.mxu0 %v2789
    %5029 = vmatprep.subr.mxu0 %v2806
    %5030 = vmatpush1.msra.mxu0 %v2805
    %5031 = vmatprep.subr.mxu0 %v2822
    %5032 = vmatpush1.msra.mxu0 %v2821
    %5033 = vmatprep.subr.mxu0 %v2838
    %5034 = vmatpush1.msra.mxu0 %v2837
    %5035 = vmatprep.subr.mxu0 %v2854
    %5036 = vmatpush1.msra.mxu0 %v2853
    %5037 = vmatprep.subr.mxu0 %v2870
    %5038 = vmatpush1.msra.mxu0 %v2869
    %5039 = vmatprep.subr.mxu0 %v2886
    %5040 = vmatpush1.msra.mxu0 %v2885
    %5041 = vmatprep.subr.mxu0 %v2902
    %5042 = vmatpush1.msra.mxu0 %v2901
    %5043 = vmatprep.subr.mxu0 %v2918
    %5044 = vmatpush1.msra.mxu0 %v2917
    %5045 = vmatprep.subr.mxu0 %v2934
    %5046 = vmatpush1.msra.mxu0 %v2933
    %5047 = vmatprep.subr.mxu0 %v2950
    %5048 = vmatpush1.msra.mxu0 %v2949
    %5049 = vmatprep.subr.mxu0 %v2966
    %5050 = vmatpush1.msra.mxu0 %v2965
    %5051 = vmatprep.subr.mxu0 %v2982
    %5052 = vmatpush1.msra.mxu0 %v2981
    %5053 = vmatprep.subr.mxu0 %v2998
    %5054 = vmatpush1.msra.mxu0 %v2997
    %5055 = vmatprep.subr.mxu0 %v3014
    %5056 = vmatpush1.msra.mxu0 %v3013
    %5057 = vmatprep.subr.mxu0 %v3030
    %5058 = vmatpush1.msra.mxu0 %v3029
    %5059 = vmatprep.subr.mxu0 %v3046
    %5060 = vmatpush1.msra.mxu0 %v3045
    %5061 = vmatprep.subr.mxu0 %v3062
    %5062 = vmatpush1.msra.mxu0 %v3061
    %5063 = vmatprep.subr.mxu0 %v3078
    %5064 = vmatpush1.msra.mxu0 %v3077
    %5065 = vmatprep.subr.mxu0 %v3094
    %5066 = vmatpush1.msra.mxu0 %v3093
    %5067 = vmatprep.subr.mxu0 %v3110
    %5068 = vmatpush1.msra.mxu0 %v3109
    %5069 = vmatprep.subr.mxu0 %v3126
    %5070 = vmatpush1.msra.mxu0 %v3125
    %5071 = vmatprep.mubr.f32.mxu0 %v1594
    %5072 = vmatmul.mubr.f32.gmra.mrb[0].mxu0 %v1593
    %v5073 = vpop.f32.mrb[0].mxu0
    %v5074 = vadd.f32 %v5003, %v5073
    %v5075 = vpop.f32.mrb[0].mxu0
    %v5076 = vadd.f32 %v5005, %v5075
    %5077 = vdwg.mxu0
    %5078 = vmatprep.subr.mxu0 %v3142
    %5079 = vmatpush1.msra.mxu0 %v3141
    %5080 = vmatprep.subr.mxu0 %v3158
    %5081 = vmatpush1.msra.mxu0 %v3157
    %5082 = vmatprep.subr.mxu0 %v3174
    %5083 = vmatpush1.msra.mxu0 %v3173
    %5084 = vmatprep.subr.mxu0 %v3190
    %5085 = vmatpush1.msra.mxu0 %v3189
    %5086 = vmatprep.subr.mxu0 %v3206
    %5087 = vmatpush1.msra.mxu0 %v3205
    %5088 = vmatprep.subr.mxu0 %v3222
    %5089 = vmatpush1.msra.mxu0 %v3221
    %5090 = vmatprep.subr.mxu0 %v3238
    %5091 = vmatpush1.msra.mxu0 %v3237
    %5092 = vmatprep.subr.mxu0 %v3254
    %5093 = vmatpush1.msra.mxu0 %v3253
    %5094 = vmatprep.subr.mxu0 %v3270
    %5095 = vmatpush1.msra.mxu0 %v3269
    %5096 = vmatprep.subr.mxu0 %v3286
    %5097 = vmatpush1.msra.mxu0 %v3285
    %5098 = vmatprep.subr.mxu0 %v3302
    %5099 = vmatpush1.msra.mxu0 %v3301
    %5100 = vmatprep.subr.mxu0 %v3318
    %5101 = vmatpush1.msra.mxu0 %v3317
    %5102 = vmatprep.subr.mxu0 %v3334
    %5103 = vmatpush1.msra.mxu0 %v3333
    %5104 = vmatprep.subr.mxu0 %v3350
    %5105 = vmatpush1.msra.mxu0 %v3349
    %5106 = vmatprep.subr.mxu0 %v3366
    %5107 = vmatpush1.msra.mxu0 %v3365
    %5108 = vmatprep.subr.mxu0 %v3382
    %5109 = vmatpush1.msra.mxu0 %v3381
    %5110 = vmatprep.subr.mxu0 %v3398
    %5111 = vmatpush1.msra.mxu0 %v3397
    %5112 = vmatprep.subr.mxu0 %v3414
    %5113 = vmatpush1.msra.mxu0 %v3413
    %5114 = vmatprep.subr.mxu0 %v3430
    %5115 = vmatpush1.msra.mxu0 %v3429
    %5116 = vmatprep.subr.mxu0 %v3446
    %5117 = vmatpush1.msra.mxu0 %v3445
    %5118 = vmatprep.subr.mxu0 %v3462
    %5119 = vmatpush1.msra.mxu0 %v3461
    %5120 = vmatprep.subr.mxu0 %v3478
    %5121 = vmatpush1.msra.mxu0 %v3477
    %5122 = vmatprep.subr.mxu0 %v3494
    %5123 = vmatpush1.msra.mxu0 %v3493
    %5124 = vmatprep.subr.mxu0 %v3510
    %5125 = vmatpush1.msra.mxu0 %v3509
    %5126 = vmatprep.subr.mxu0 %v3526
    %5127 = vmatpush1.msra.mxu0 %v3525
    %5128 = vmatprep.subr.mxu0 %v3542
    %5129 = vmatpush1.msra.mxu0 %v3541
    %5130 = vmatprep.subr.mxu0 %v3558
    %5131 = vmatpush1.msra.mxu0 %v3557
    %5132 = vmatprep.subr.mxu0 %v3574
    %5133 = vmatpush1.msra.mxu0 %v3573
    %5134 = vmatprep.subr.mxu0 %v3590
    %5135 = vmatpush1.msra.mxu0 %v3589
    %5136 = vmatprep.subr.mxu0 %v3606
    %5137 = vmatpush1.msra.mxu0 %v3605
    %5138 = vmatprep.subr.mxu0 %v3622
    %5139 = vmatpush1.msra.mxu0 %v3621
    %5140 = vmatprep.subr.mxu0 %v3638
    %5141 = vmatpush1.msra.mxu0 %v3637
    %5142 = vmatprep.mubr.f32.mxu0 %v1596
    %5143 = vmatmul.mubr.f32.gmra.mrb[0].mxu0 %v1595
    %v5144 = vpop.f32.mrb[0].mxu0
    %v5145 = vadd.f32 %v5074, %v5144
    %v5146 = vpop.f32.mrb[0].mxu0
    %v5147 = vadd.f32 %v5076, %v5146
    %5148 = vdwg.mxu0
    %5149 = vmatprep.subr.mxu0 %v1608
    %5150 = vmatpush1.msra.mxu0 %v1607
    %5151 = vmatprep.subr.mxu0 %v1624
    %5152 = vmatpush1.msra.mxu0 %v1623
    %5153 = vmatprep.subr.mxu0 %v1640
    %5154 = vmatpush1.msra.mxu0 %v1639
    %5155 = vmatprep.subr.mxu0 %v1656
    %5156 = vmatpush1.msra.mxu0 %v1655
    %5157 = vmatprep.subr.mxu0 %v1672
    %5158 = vmatpush1.msra.mxu0 %v1671
    %5159 = vmatprep.subr.mxu0 %v1688
    %5160 = vmatpush1.msra.mxu0 %v1687
    %5161 = vmatprep.subr.mxu0 %v1704
    %5162 = vmatpush1.msra.mxu0 %v1703
    %5163 = vmatprep.subr.mxu0 %v1720
    %5164 = vmatpush1.msra.mxu0 %v1719
    %5165 = vmatprep.subr.mxu0 %v1736
    %5166 = vmatpush1.msra.mxu0 %v1735
    %5167 = vmatprep.subr.mxu0 %v1752
    %5168 = vmatpush1.msra.mxu0 %v1751
    %5169 = vmatprep.subr.mxu0 %v1768
    %5170 = vmatpush1.msra.mxu0 %v1767
    %5171 = vmatprep.subr.mxu0 %v1784
    %5172 = vmatpush1.msra.mxu0 %v1783
    %5173 = vmatprep.subr.mxu0 %v1800
    %5174 = vmatpush1.msra.mxu0 %v1799
    %5175 = vmatprep.subr.mxu0 %v1816
    %5176 = vmatpush1.msra.mxu0 %v1815
    %5177 = vmatprep.subr.mxu0 %v1832
    %5178 = vmatpush1.msra.mxu0 %v1831
    %5179 = vmatprep.subr.mxu0 %v1848
    %5180 = vmatpush1.msra.mxu0 %v1847
    %5181 = vmatprep.subr.mxu0 %v1864
    %5182 = vmatpush1.msra.mxu0 %v1863
    %5183 = vmatprep.subr.mxu0 %v1880
    %5184 = vmatpush1.msra.mxu0 %v1879
    %5185 = vmatprep.subr.mxu0 %v1896
    %5186 = vmatpush1.msra.mxu0 %v1895
    %5187 = vmatprep.subr.mxu0 %v1912
    %5188 = vmatpush1.msra.mxu0 %v1911
    %5189 = vmatprep.subr.mxu0 %v1928
    %5190 = vmatpush1.msra.mxu0 %v1927
    %5191 = vmatprep.subr.mxu0 %v1944
    %5192 = vmatpush1.msra.mxu0 %v1943
    %5193 = vmatprep.subr.mxu0 %v1960
    %5194 = vmatpush1.msra.mxu0 %v1959
    %5195 = vmatprep.subr.mxu0 %v1976
    %5196 = vmatpush1.msra.mxu0 %v1975
    %5197 = vmatprep.subr.mxu0 %v1992
    %5198 = vmatpush1.msra.mxu0 %v1991
    %5199 = vmatprep.subr.mxu0 %v2008
    %5200 = vmatpush1.msra.mxu0 %v2007
    %5201 = vmatprep.subr.mxu0 %v2024
    %5202 = vmatpush1.msra.mxu0 %v2023
    %5203 = vmatprep.subr.mxu0 %v2040
    %5204 = vmatpush1.msra.mxu0 %v2039
    %5205 = vmatprep.subr.mxu0 %v2056
    %5206 = vmatpush1.msra.mxu0 %v2055
    %5207 = vmatprep.subr.mxu0 %v2072
    %5208 = vmatpush1.msra.mxu0 %v2071
    %5209 = vmatprep.subr.mxu0 %v2088
    %5210 = vmatpush1.msra.mxu0 %v2087
    %5211 = vmatprep.subr.mxu0 %v2104
    %5212 = vmatpush1.msra.mxu0 %v2103
    %5213 = vmatprep.mubr.f32.mxu0 %v1590
    %5214 = vmatmul.mubr.f32.gmra.mrb[0].mxu0 %v1589
    %v5215 = vpop.f32.mrb[0].mxu0
    %v5216 = vadd.f32 %v3692, %v5215
    %v5217 = vpop.f32.mrb[0].mxu0
    %v5218 = vadd.f32 %v3696, %v5217
    %5219 = vdwg.mxu0
    %5220 = vmatprep.subr.mxu0 %v2120
    %5221 = vmatpush1.msra.mxu0 %v2119
    %5222 = vmatprep.subr.mxu0 %v2136
    %5223 = vmatpush1.msra.mxu0 %v2135
    %5224 = vmatprep.subr.mxu0 %v2152
    %5225 = vmatpush1.msra.mxu0 %v2151
    %5226 = vmatprep.subr.mxu0 %v2168
    %5227 = vmatpush1.msra.mxu0 %v2167
    %5228 = vmatprep.subr.mxu0 %v2184
    %5229 = vmatpush1.msra.mxu0 %v2183
    %5230 = vmatprep.subr.mxu0 %v2200
    %5231 = vmatpush1.msra.mxu0 %v2199
    %5232 = vmatprep.subr.mxu0 %v2216
    %5233 = vmatpush1.msra.mxu0 %v2215
    %5234 = vmatprep.subr.mxu0 %v2232
    %5235 = vmatpush1.msra.mxu0 %v2231
    %5236 = vmatprep.subr.mxu0 %v2248
    %5237 = vmatpush1.msra.mxu0 %v2247
    %5238 = vmatprep.subr.mxu0 %v2264
    %5239 = vmatpush1.msra.mxu0 %v2263
    %5240 = vmatprep.subr.mxu0 %v2280
    %5241 = vmatpush1.msra.mxu0 %v2279
    %5242 = vmatprep.subr.mxu0 %v2296
    %5243 = vmatpush1.msra.mxu0 %v2295
    %5244 = vmatprep.subr.mxu0 %v2312
    %5245 = vmatpush1.msra.mxu0 %v2311
    %5246 = vmatprep.subr.mxu0 %v2328
    %5247 = vmatpush1.msra.mxu0 %v2327
    %5248 = vmatprep.subr.mxu0 %v2344
    %5249 = vmatpush1.msra.mxu0 %v2343
    %5250 = vmatprep.subr.mxu0 %v2360
    %5251 = vmatpush1.msra.mxu0 %v2359
    %5252 = vmatprep.subr.mxu0 %v2376
    %5253 = vmatpush1.msra.mxu0 %v2375
    %5254 = vmatprep.subr.mxu0 %v2392
    %5255 = vmatpush1.msra.mxu0 %v2391
    %5256 = vmatprep.subr.mxu0 %v2408
    %5257 = vmatpush1.msra.mxu0 %v2407
    %5258 = vmatprep.subr.mxu0 %v2424
    %5259 = vmatpush1.msra.mxu0 %v2423
    %5260 = vmatprep.subr.mxu0 %v2440
    %5261 = vmatpush1.msra.mxu0 %v2439
    %5262 = vmatprep.subr.mxu0 %v2456
    %5263 = vmatpush1.msra.mxu0 %v2455
    %5264 = vmatprep.subr.mxu0 %v2472
    %5265 = vmatpush1.msra.mxu0 %v2471
    %5266 = vmatprep.subr.mxu0 %v2488
    %5267 = vmatpush1.msra.mxu0 %v2487
    %5268 = vmatprep.subr.mxu0 %v2504
    %5269 = vmatpush1.msra.mxu0 %v2503
    %5270 = vmatprep.subr.mxu0 %v2520
    %5271 = vmatpush1.msra.mxu0 %v2519
    %5272 = vmatprep.subr.mxu0 %v2536
    %5273 = vmatpush1.msra.mxu0 %v2535
    %5274 = vmatprep.subr.mxu0 %v2552
    %5275 = vmatpush1.msra.mxu0 %v2551
    %5276 = vmatprep.subr.mxu0 %v2568
    %5277 = vmatpush1.msra.mxu0 %v2567
    %5278 = vmatprep.subr.mxu0 %v2584
    %5279 = vmatpush1.msra.mxu0 %v2583
    %5280 = vmatprep.subr.mxu0 %v2600
    %5281 = vmatpush1.msra.mxu0 %v2599
    %5282 = vmatprep.subr.mxu0 %v2616
    %5283 = vmatpush1.msra.mxu0 %v2615
    %5284 = vmatprep.mubr.f32.mxu0 %v1592
    %5285 = vmatmul.mubr.f32.gmra.mrb[0].mxu0 %v1591
    %v5286 = vpop.f32.mrb[0].mxu0
    %v5287 = vadd.f32 %v5216, %v5286
    %v5288 = vpop.f32.mrb[0].mxu0
    %v5289 = vadd.f32 %v5218, %v5288
    %5290 = vdwg.mxu0
    %5291 = vmatprep.subr.mxu0 %v2632
    %5292 = vmatpush1.msra.mxu0 %v2631
    %5293 = vmatprep.subr.mxu0 %v2648
    %5294 = vmatpush1.msra.mxu0 %v2647
    %5295 = vmatprep.subr.mxu0 %v2664
    %5296 = vmatpush1.msra.mxu0 %v2663
    %5297 = vmatprep.subr.mxu0 %v2680
    %5298 = vmatpush1.msra.mxu0 %v2679
    %5299 = vmatprep.subr.mxu0 %v2696
    %5300 = vmatpush1.msra.mxu0 %v2695
    %5301 = vmatprep.subr.mxu0 %v2712
    %5302 = vmatpush1.msra.mxu0 %v2711
    %5303 = vmatprep.subr.mxu0 %v2728
    %5304 = vmatpush1.msra.mxu0 %v2727
    %5305 = vmatprep.subr.mxu0 %v2744
    %5306 = vmatpush1.msra.mxu0 %v2743
    %5307 = vmatprep.subr.mxu0 %v2760
    %5308 = vmatpush1.msra.mxu0 %v2759
    %5309 = vmatprep.subr.mxu0 %v2776
    %5310 = vmatpush1.msra.mxu0 %v2775
    %5311 = vmatprep.subr.mxu0 %v2792
    %5312 = vmatpush1.msra.mxu0 %v2791
    %5313 = vmatprep.subr.mxu0 %v2808
    %5314 = vmatpush1.msra.mxu0 %v2807
    %5315 = vmatprep.subr.mxu0 %v2824
    %5316 = vmatpush1.msra.mxu0 %v2823
    %5317 = vmatprep.subr.mxu0 %v2840
    %5318 = vmatpush1.msra.mxu0 %v2839
    %5319 = vmatprep.subr.mxu0 %v2856
    %5320 = vmatpush1.msra.mxu0 %v2855
    %5321 = vmatprep.subr.mxu0 %v2872
    %5322 = vmatpush1.msra.mxu0 %v2871
    %5323 = vmatprep.subr.mxu0 %v2888
    %5324 = vmatpush1.msra.mxu0 %v2887
    %5325 = vmatprep.subr.mxu0 %v2904
    %5326 = vmatpush1.msra.mxu0 %v2903
    %5327 = vmatprep.subr.mxu0 %v2920
    %5328 = vmatpush1.msra.mxu0 %v2919
    %5329 = vmatprep.subr.mxu0 %v2936
    %5330 = vmatpush1.msra.mxu0 %v2935
    %5331 = vmatprep.subr.mxu0 %v2952
    %5332 = vmatpush1.msra.mxu0 %v2951
    %5333 = vmatprep.subr.mxu0 %v2968
    %5334 = vmatpush1.msra.mxu0 %v2967
    %5335 = vmatprep.subr.mxu0 %v2984
    %5336 = vmatpush1.msra.mxu0 %v2983
    %5337 = vmatprep.subr.mxu0 %v3000
    %5338 = vmatpush1.msra.mxu0 %v2999
    %5339 = vmatprep.subr.mxu0 %v3016
    %5340 = vmatpush1.msra.mxu0 %v3015
    %5341 = vmatprep.subr.mxu0 %v3032
    %5342 = vmatpush1.msra.mxu0 %v3031
    %5343 = vmatprep.subr.mxu0 %v3048
    %5344 = vmatpush1.msra.mxu0 %v3047
    %5345 = vmatprep.subr.mxu0 %v3064
    %5346 = vmatpush1.msra.mxu0 %v3063
    %5347 = vmatprep.subr.mxu0 %v3080
    %5348 = vmatpush1.msra.mxu0 %v3079
    %5349 = vmatprep.subr.mxu0 %v3096
    %5350 = vmatpush1.msra.mxu0 %v3095
    %5351 = vmatprep.subr.mxu0 %v3112
    %5352 = vmatpush1.msra.mxu0 %v3111
    %5353 = vmatprep.subr.mxu0 %v3128
    %5354 = vmatpush1.msra.mxu0 %v3127
    %5355 = vmatprep.mubr.f32.mxu0 %v1594
    %5356 = vmatmul.mubr.f32.gmra.mrb[0].mxu0 %v1593
    %v5357 = vpop.f32.mrb[0].mxu0
    %v5358 = vadd.f32 %v5287, %v5357
    %v5359 = vpop.f32.mrb[0].mxu0
    %v5360 = vadd.f32 %v5289, %v5359
    %5361 = vdwg.mxu0
    %5362 = vmatprep.subr.mxu0 %v3144
    %5363 = vmatpush1.msra.mxu0 %v3143
    %5364 = vmatprep.subr.mxu0 %v3160
    %5365 = vmatpush1.msra.mxu0 %v3159
    %5366 = vmatprep.subr.mxu0 %v3176
    %5367 = vmatpush1.msra.mxu0 %v3175
    %5368 = vmatprep.subr.mxu0 %v3192
    %5369 = vmatpush1.msra.mxu0 %v3191
    %5370 = vmatprep.subr.mxu0 %v3208
    %5371 = vmatpush1.msra.mxu0 %v3207
    %5372 = vmatprep.subr.mxu0 %v3224
    %5373 = vmatpush1.msra.mxu0 %v3223
    %5374 = vmatprep.subr.mxu0 %v3240
    %5375 = vmatpush1.msra.mxu0 %v3239
    %5376 = vmatprep.subr.mxu0 %v3256
    %5377 = vmatpush1.msra.mxu0 %v3255
    %5378 = vmatprep.subr.mxu0 %v3272
    %5379 = vmatpush1.msra.mxu0 %v3271
    %5380 = vmatprep.subr.mxu0 %v3288
    %5381 = vmatpush1.msra.mxu0 %v3287
    %5382 = vmatprep.subr.mxu0 %v3304
    %5383 = vmatpush1.msra.mxu0 %v3303
    %5384 = vmatprep.subr.mxu0 %v3320
    %5385 = vmatpush1.msra.mxu0 %v3319
    %5386 = vmatprep.subr.mxu0 %v3336
    %5387 = vmatpush1.msra.mxu0 %v3335
    %5388 = vmatprep.subr.mxu0 %v3352
    %5389 = vmatpush1.msra.mxu0 %v3351
    %5390 = vmatprep.subr.mxu0 %v3368
    %5391 = vmatpush1.msra.mxu0 %v3367
    %5392 = vmatprep.subr.mxu0 %v3384
    %5393 = vmatpush1.msra.mxu0 %v3383
    %5394 = vmatprep.subr.mxu0 %v3400
    %5395 = vmatpush1.msra.mxu0 %v3399
    %5396 = vmatprep.subr.mxu0 %v3416
    %5397 = vmatpush1.msra.mxu0 %v3415
    %5398 = vmatprep.subr.mxu0 %v3432
    %5399 = vmatpush1.msra.mxu0 %v3431
    %5400 = vmatprep.subr.mxu0 %v3448
    %5401 = vmatpush1.msra.mxu0 %v3447
    %5402 = vmatprep.subr.mxu0 %v3464
    %5403 = vmatpush1.msra.mxu0 %v3463
    %5404 = vmatprep.subr.mxu0 %v3480
    %5405 = vmatpush1.msra.mxu0 %v3479
    %5406 = vmatprep.subr.mxu0 %v3496
    %5407 = vmatpush1.msra.mxu0 %v3495
    %5408 = vmatprep.subr.mxu0 %v3512
    %5409 = vmatpush1.msra.mxu0 %v3511
    %5410 = vmatprep.subr.mxu0 %v3528
    %5411 = vmatpush1.msra.mxu0 %v3527
    %5412 = vmatprep.subr.mxu0 %v3544
    %5413 = vmatpush1.msra.mxu0 %v3543
    %5414 = vmatprep.subr.mxu0 %v3560
    %5415 = vmatpush1.msra.mxu0 %v3559
    %5416 = vmatprep.subr.mxu0 %v3576
    %5417 = vmatpush1.msra.mxu0 %v3575
    %5418 = vmatprep.subr.mxu0 %v3592
    %5419 = vmatpush1.msra.mxu0 %v3591
    %5420 = vmatprep.subr.mxu0 %v3608
    %5421 = vmatpush1.msra.mxu0 %v3607
    %5422 = vmatprep.subr.mxu0 %v3624
    %5423 = vmatpush1.msra.mxu0 %v3623
    %5424 = vmatprep.subr.mxu0 %v3640
    %5425 = vmatpush1.msra.mxu0 %v3639
    %5426 = vmatprep.mubr.f32.mxu0 %v1596
    %5427 = vmatmul.mubr.f32.gmra.mrb[0].mxu0 %v1595
    %v5428 = vpop.f32.mrb[0].mxu0
    %v5429 = vadd.f32 %v5358, %v5428
    %v5430 = vpop.f32.mrb[0].mxu0
    %v5431 = vadd.f32 %v5360, %v5430
    %5432 = vdwg.mxu0
    %5433 = vmatprep.subr.mxu0 %v1610
    %5434 = vmatpush1.msra.mxu0 %v1609
    %5435 = vmatprep.subr.mxu0 %v1626
    %5436 = vmatpush1.msra.mxu0 %v1625
    %5437 = vmatprep.subr.mxu0 %v1642
    %5438 = vmatpush1.msra.mxu0 %v1641
    %5439 = vmatprep.subr.mxu0 %v1658
    %5440 = vmatpush1.msra.mxu0 %v1657
    %5441 = vmatprep.subr.mxu0 %v1674
    %5442 = vmatpush1.msra.mxu0 %v1673
    %5443 = vmatprep.subr.mxu0 %v1690
    %5444 = vmatpush1.msra.mxu0 %v1689
    %5445 = vmatprep.subr.mxu0 %v1706
    %5446 = vmatpush1.msra.mxu0 %v1705
    %5447 = vmatprep.subr.mxu0 %v1722
    %5448 = vmatpush1.msra.mxu0 %v1721
    %5449 = vmatprep.subr.mxu0 %v1738
    %5450 = vmatpush1.msra.mxu0 %v1737
    %5451 = vmatprep.subr.mxu0 %v1754
    %5452 = vmatpush1.msra.mxu0 %v1753
    %5453 = vmatprep.subr.mxu0 %v1770
    %5454 = vmatpush1.msra.mxu0 %v1769
    %5455 = vmatprep.subr.mxu0 %v1786
    %5456 = vmatpush1.msra.mxu0 %v1785
    %5457 = vmatprep.subr.mxu0 %v1802
    %5458 = vmatpush1.msra.mxu0 %v1801
    %5459 = vmatprep.subr.mxu0 %v1818
    %5460 = vmatpush1.msra.mxu0 %v1817
    %5461 = vmatprep.subr.mxu0 %v1834
    %5462 = vmatpush1.msra.mxu0 %v1833
    %5463 = vmatprep.subr.mxu0 %v1850
    %5464 = vmatpush1.msra.mxu0 %v1849
    %5465 = vmatprep.subr.mxu0 %v1866
    %5466 = vmatpush1.msra.mxu0 %v1865
    %5467 = vmatprep.subr.mxu0 %v1882
    %5468 = vmatpush1.msra.mxu0 %v1881
    %5469 = vmatprep.subr.mxu0 %v1898
    %5470 = vmatpush1.msra.mxu0 %v1897
    %5471 = vmatprep.subr.mxu0 %v1914
    %5472 = vmatpush1.msra.mxu0 %v1913
    %5473 = vmatprep.subr.mxu0 %v1930
    %5474 = vmatpush1.msra.mxu0 %v1929
    %5475 = vmatprep.subr.mxu0 %v1946
    %5476 = vmatpush1.msra.mxu0 %v1945
    %5477 = vmatprep.subr.mxu0 %v1962
    %5478 = vmatpush1.msra.mxu0 %v1961
    %5479 = vmatprep.subr.mxu0 %v1978
    %5480 = vmatpush1.msra.mxu0 %v1977
    %5481 = vmatprep.subr.mxu0 %v1994
    %5482 = vmatpush1.msra.mxu0 %v1993
    %5483 = vmatprep.subr.mxu0 %v2010
    %5484 = vmatpush1.msra.mxu0 %v2009
    %5485 = vmatprep.subr.mxu0 %v2026
    %5486 = vmatpush1.msra.mxu0 %v2025
    %5487 = vmatprep.subr.mxu0 %v2042
    %5488 = vmatpush1.msra.mxu0 %v2041
    %5489 = vmatprep.subr.mxu0 %v2058
    %5490 = vmatpush1.msra.mxu0 %v2057
    %5491 = vmatprep.subr.mxu0 %v2074
    %5492 = vmatpush1.msra.mxu0 %v2073
    %5493 = vmatprep.subr.mxu0 %v2090
    %5494 = vmatpush1.msra.mxu0 %v2089
    %5495 = vmatprep.subr.mxu0 %v2106
    %5496 = vmatpush1.msra.mxu0 %v2105
    %5497 = vmatprep.mubr.f32.mxu0 %v1590
    %5498 = vmatmul.mubr.f32.gmra.mrb[0].mxu0 %v1589
    %v5499 = vpop.f32.mrb[0].mxu0
    %v5500 = vadd.f32 %v3700, %v5499
    %v5501 = vpop.f32.mrb[0].mxu0
    %v5502 = vadd.f32 %v3704, %v5501
    %5503 = vdwg.mxu0
    %5504 = vmatprep.subr.mxu0 %v2122
    %5505 = vmatpush1.msra.mxu0 %v2121
    %5506 = vmatprep.subr.mxu0 %v2138
    %5507 = vmatpush1.msra.mxu0 %v2137
    %5508 = vmatprep.subr.mxu0 %v2154
    %5509 = vmatpush1.msra.mxu0 %v2153
    %5510 = vmatprep.subr.mxu0 %v2170
    %5511 = vmatpush1.msra.mxu0 %v2169
    %5512 = vmatprep.subr.mxu0 %v2186
    %5513 = vmatpush1.msra.mxu0 %v2185
    %5514 = vmatprep.subr.mxu0 %v2202
    %5515 = vmatpush1.msra.mxu0 %v2201
    %5516 = vmatprep.subr.mxu0 %v2218
    %5517 = vmatpush1.msra.mxu0 %v2217
    %5518 = vmatprep.subr.mxu0 %v2234
    %5519 = vmatpush1.msra.mxu0 %v2233
    %5520 = vmatprep.subr.mxu0 %v2250
    %5521 = vmatpush1.msra.mxu0 %v2249
    %5522 = vmatprep.subr.mxu0 %v2266
    %5523 = vmatpush1.msra.mxu0 %v2265
    %5524 = vmatprep.subr.mxu0 %v2282
    %5525 = vmatpush1.msra.mxu0 %v2281
    %5526 = vmatprep.subr.mxu0 %v2298
    %5527 = vmatpush1.msra.mxu0 %v2297
    %5528 = vmatprep.subr.mxu0 %v2314
    %5529 = vmatpush1.msra.mxu0 %v2313
    %5530 = vmatprep.subr.mxu0 %v2330
    %5531 = vmatpush1.msra.mxu0 %v2329
    %5532 = vmatprep.subr.mxu0 %v2346
    %5533 = vmatpush1.msra.mxu0 %v2345
    %5534 = vmatprep.subr.mxu0 %v2362
    %5535 = vmatpush1.msra.mxu0 %v2361
    %5536 = vmatprep.subr.mxu0 %v2378
    %5537 = vmatpush1.msra.mxu0 %v2377
    %5538 = vmatprep.subr.mxu0 %v2394
    %5539 = vmatpush1.msra.mxu0 %v2393
    %5540 = vmatprep.subr.mxu0 %v2410
    %5541 = vmatpush1.msra.mxu0 %v2409
    %5542 = vmatprep.subr.mxu0 %v2426
    %5543 = vmatpush1.msra.mxu0 %v2425
    %5544 = vmatprep.subr.mxu0 %v2442
    %5545 = vmatpush1.msra.mxu0 %v2441
    %5546 = vmatprep.subr.mxu0 %v2458
    %5547 = vmatpush1.msra.mxu0 %v2457
    %5548 = vmatprep.subr.mxu0 %v2474
    %5549 = vmatpush1.msra.mxu0 %v2473
    %5550 = vmatprep.subr.mxu0 %v2490
    %5551 = vmatpush1.msra.mxu0 %v2489
    %5552 = vmatprep.subr.mxu0 %v2506
    %5553 = vmatpush1.msra.mxu0 %v2505
    %5554 = vmatprep.subr.mxu0 %v2522
    %5555 = vmatpush1.msra.mxu0 %v2521
    %5556 = vmatprep.subr.mxu0 %v2538
    %5557 = vmatpush1.msra.mxu0 %v2537
    %5558 = vmatprep.subr.mxu0 %v2554
    %5559 = vmatpush1.msra.mxu0 %v2553
    %5560 = vmatprep.subr.mxu0 %v2570
    %5561 = vmatpush1.msra.mxu0 %v2569
    %5562 = vmatprep.subr.mxu0 %v2586
    %5563 = vmatpush1.msra.mxu0 %v2585
    %5564 = vmatprep.subr.mxu0 %v2602
    %5565 = vmatpush1.msra.mxu0 %v2601
    %5566 = vmatprep.subr.mxu0 %v2618
    %5567 = vmatpush1.msra.mxu0 %v2617
    %5568 = vmatprep.mubr.f32.mxu0 %v1592
    %5569 = vmatmul.mubr.f32.gmra.mrb[0].mxu0 %v1591
    %v5570 = vpop.f32.mrb[0].mxu0
    %v5571 = vadd.f32 %v5500, %v5570
    %v5572 = vpop.f32.mrb[0].mxu0
    %v5573 = vadd.f32 %v5502, %v5572
    %5574 = vdwg.mxu0
    %5575 = vmatprep.subr.mxu0 %v2634
    %5576 = vmatpush1.msra.mxu0 %v2633
    %5577 = vmatprep.subr.mxu0 %v2650
    %5578 = vmatpush1.msra.mxu0 %v2649
    %5579 = vmatprep.subr.mxu0 %v2666
    %5580 = vmatpush1.msra.mxu0 %v2665
    %5581 = vmatprep.subr.mxu0 %v2682
    %5582 = vmatpush1.msra.mxu0 %v2681
    %5583 = vmatprep.subr.mxu0 %v2698
    %5584 = vmatpush1.msra.mxu0 %v2697
    %5585 = vmatprep.subr.mxu0 %v2714
    %5586 = vmatpush1.msra.mxu0 %v2713
    %5587 = vmatprep.subr.mxu0 %v2730
    %5588 = vmatpush1.msra.mxu0 %v2729
    %5589 = vmatprep.subr.mxu0 %v2746
    %5590 = vmatpush1.msra.mxu0 %v2745
    %5591 = vmatprep.subr.mxu0 %v2762
    %5592 = vmatpush1.msra.mxu0 %v2761
    %5593 = vmatprep.subr.mxu0 %v2778
    %5594 = vmatpush1.msra.mxu0 %v2777
    %5595 = vmatprep.subr.mxu0 %v2794
    %5596 = vmatpush1.msra.mxu0 %v2793
    %5597 = vmatprep.subr.mxu0 %v2810
    %5598 = vmatpush1.msra.mxu0 %v2809
    %5599 = vmatprep.subr.mxu0 %v2826
    %5600 = vmatpush1.msra.mxu0 %v2825
    %5601 = vmatprep.subr.mxu0 %v2842
    %5602 = vmatpush1.msra.mxu0 %v2841
    %5603 = vmatprep.subr.mxu0 %v2858
    %5604 = vmatpush1.msra.mxu0 %v2857
    %5605 = vmatprep.subr.mxu0 %v2874
    %5606 = vmatpush1.msra.mxu0 %v2873
    %5607 = vmatprep.subr.mxu0 %v2890
    %5608 = vmatpush1.msra.mxu0 %v2889
    %5609 = vmatprep.subr.mxu0 %v2906
    %5610 = vmatpush1.msra.mxu0 %v2905
    %5611 = vmatprep.subr.mxu0 %v2922
    %5612 = vmatpush1.msra.mxu0 %v2921
    %5613 = vmatprep.subr.mxu0 %v2938
    %5614 = vmatpush1.msra.mxu0 %v2937
    %5615 = vmatprep.subr.mxu0 %v2954
    %5616 = vmatpush1.msra.mxu0 %v2953
    %5617 = vmatprep.subr.mxu0 %v2970
    %5618 = vmatpush1.msra.mxu0 %v2969
    %5619 = vmatprep.subr.mxu0 %v2986
    %5620 = vmatpush1.msra.mxu0 %v2985
    %5621 = vmatprep.subr.mxu0 %v3002
    %5622 = vmatpush1.msra.mxu0 %v3001
    %5623 = vmatprep.subr.mxu0 %v3018
    %5624 = vmatpush1.msra.mxu0 %v3017
    %5625 = vmatprep.subr.mxu0 %v3034
    %5626 = vmatpush1.msra.mxu0 %v3033
    %5627 = vmatprep.subr.mxu0 %v3050
    %5628 = vmatpush1.msra.mxu0 %v3049
    %5629 = vmatprep.subr.mxu0 %v3066
    %5630 = vmatpush1.msra.mxu0 %v3065
    %5631 = vmatprep.subr.mxu0 %v3082
    %5632 = vmatpush1.msra.mxu0 %v3081
    %5633 = vmatprep.subr.mxu0 %v3098
    %5634 = vmatpush1.msra.mxu0 %v3097
    %5635 = vmatprep.subr.mxu0 %v3114
    %5636 = vmatpush1.msra.mxu0 %v3113
    %5637 = vmatprep.subr.mxu0 %v3130
    %5638 = vmatpush1.msra.mxu0 %v3129
    %5639 = vmatprep.mubr.f32.mxu0 %v1594
    %5640 = vmatmul.mubr.f32.gmra.mrb[0].mxu0 %v1593
    %v5641 = vpop.f32.mrb[0].mxu0
    %v5642 = vadd.f32 %v5571, %v5641
    %v5643 = vpop.f32.mrb[0].mxu0
    %v5644 = vadd.f32 %v5573, %v5643
    %5645 = vdwg.mxu0
    %5646 = vmatprep.subr.mxu0 %v3146
    %5647 = vmatpush1.msra.mxu0 %v3145
    %5648 = vmatprep.subr.mxu0 %v3162
    %5649 = vmatpush1.msra.mxu0 %v3161
    %5650 = vmatprep.subr.mxu0 %v3178
    %5651 = vmatpush1.msra.mxu0 %v3177
    %5652 = vmatprep.subr.mxu0 %v3194
    %5653 = vmatpush1.msra.mxu0 %v3193
    %5654 = vmatprep.subr.mxu0 %v3210
    %5655 = vmatpush1.msra.mxu0 %v3209
    %5656 = vmatprep.subr.mxu0 %v3226
    %5657 = vmatpush1.msra.mxu0 %v3225
    %5658 = vmatprep.subr.mxu0 %v3242
    %5659 = vmatpush1.msra.mxu0 %v3241
    %5660 = vmatprep.subr.mxu0 %v3258
    %5661 = vmatpush1.msra.mxu0 %v3257
    %5662 = vmatprep.subr.mxu0 %v3274
    %5663 = vmatpush1.msra.mxu0 %v3273
    %5664 = vmatprep.subr.mxu0 %v3290
    %5665 = vmatpush1.msra.mxu0 %v3289
    %5666 = vmatprep.subr.mxu0 %v3306
    %5667 = vmatpush1.msra.mxu0 %v3305
    %5668 = vmatprep.subr.mxu0 %v3322
    %5669 = vmatpush1.msra.mxu0 %v3321
    %5670 = vmatprep.subr.mxu0 %v3338
    %5671 = vmatpush1.msra.mxu0 %v3337
    %5672 = vmatprep.subr.mxu0 %v3354
    %5673 = vmatpush1.msra.mxu0 %v3353
    %5674 = vmatprep.subr.mxu0 %v3370
    %5675 = vmatpush1.msra.mxu0 %v3369
    %5676 = vmatprep.subr.mxu0 %v3386
    %5677 = vmatpush1.msra.mxu0 %v3385
    %5678 = vmatprep.subr.mxu0 %v3402
    %5679 = vmatpush1.msra.mxu0 %v3401
    %5680 = vmatprep.subr.mxu0 %v3418
    %5681 = vmatpush1.msra.mxu0 %v3417
    %5682 = vmatprep.subr.mxu0 %v3434
    %5683 = vmatpush1.msra.mxu0 %v3433
    %5684 = vmatprep.subr.mxu0 %v3450
    %5685 = vmatpush1.msra.mxu0 %v3449
    %5686 = vmatprep.subr.mxu0 %v3466
    %5687 = vmatpush1.msra.mxu0 %v3465
    %5688 = vmatprep.subr.mxu0 %v3482
    %5689 = vmatpush1.msra.mxu0 %v3481
    %5690 = vmatprep.subr.mxu0 %v3498
    %5691 = vmatpush1.msra.mxu0 %v3497
    %5692 = vmatprep.subr.mxu0 %v3514
    %5693 = vmatpush1.msra.mxu0 %v3513
    %5694 = vmatprep.subr.mxu0 %v3530
    %5695 = vmatpush1.msra.mxu0 %v3529
    %5696 = vmatprep.subr.mxu0 %v3546
    %5697 = vmatpush1.msra.mxu0 %v3545
    %5698 = vmatprep.subr.mxu0 %v3562
    %5699 = vmatpush1.msra.mxu0 %v3561
    %5700 = vmatprep.subr.mxu0 %v3578
    %5701 = vmatpush1.msra.mxu0 %v3577
    %5702 = vmatprep.subr.mxu0 %v3594
    %5703 = vmatpush1.msra.mxu0 %v3593
    %5704 = vmatprep.subr.mxu0 %v3610
    %5705 = vmatpush1.msra.mxu0 %v3609
    %5706 = vmatprep.subr.mxu0 %v3626
    %5707 = vmatpush1.msra.mxu0 %v3625
    %5708 = vmatprep.subr.mxu0 %v3642
    %5709 = vmatpush1.msra.mxu0 %v3641
    %5710 = vmatprep.mubr.f32.mxu0 %v1596
    %5711 = vmatmul.mubr.f32.gmra.mrb[0].mxu0 %v1595
    %v5712 = vpop.f32.mrb[0].mxu0
    %v5713 = vadd.f32 %v5642, %v5712
    %v5714 = vpop.f32.mrb[0].mxu0
    %v5715 = vadd.f32 %v5644, %v5714
    %5716 = vdwg.mxu0
    %5717 = vmatprep.subr.mxu0 %v1612
    %5718 = vmatpush1.msra.mxu0 %v1611
    %5719 = vmatprep.subr.mxu0 %v1628
    %5720 = vmatpush1.msra.mxu0 %v1627
    %5721 = vmatprep.subr.mxu0 %v1644
    %5722 = vmatpush1.msra.mxu0 %v1643
    %5723 = vmatprep.subr.mxu0 %v1660
    %5724 = vmatpush1.msra.mxu0 %v1659
    %5725 = vmatprep.subr.mxu0 %v1676
    %5726 = vmatpush1.msra.mxu0 %v1675
    %5727 = vmatprep.subr.mxu0 %v1692
    %5728 = vmatpush1.msra.mxu0 %v1691
    %5729 = vmatprep.subr.mxu0 %v1708
    %5730 = vmatpush1.msra.mxu0 %v1707
    %5731 = vmatprep.subr.mxu0 %v1724
    %5732 = vmatpush1.msra.mxu0 %v1723
    %5733 = vmatprep.subr.mxu0 %v1740
    %5734 = vmatpush1.msra.mxu0 %v1739
    %5735 = vmatprep.subr.mxu0 %v1756
    %5736 = vmatpush1.msra.mxu0 %v1755
    %5737 = vmatprep.subr.mxu0 %v1772
    %5738 = vmatpush1.msra.mxu0 %v1771
    %5739 = vmatprep.subr.mxu0 %v1788
    %5740 = vmatpush1.msra.mxu0 %v1787
    %5741 = vmatprep.subr.mxu0 %v1804
    %5742 = vmatpush1.msra.mxu0 %v1803
    %5743 = vmatprep.subr.mxu0 %v1820
    %5744 = vmatpush1.msra.mxu0 %v1819
    %5745 = vmatprep.subr.mxu0 %v1836
    %5746 = vmatpush1.msra.mxu0 %v1835
    %5747 = vmatprep.subr.mxu0 %v1852
    %5748 = vmatpush1.msra.mxu0 %v1851
    %5749 = vmatprep.subr.mxu0 %v1868
    %5750 = vmatpush1.msra.mxu0 %v1867
    %5751 = vmatprep.subr.mxu0 %v1884
    %5752 = vmatpush1.msra.mxu0 %v1883
    %5753 = vmatprep.subr.mxu0 %v1900
    %5754 = vmatpush1.msra.mxu0 %v1899
    %5755 = vmatprep.subr.mxu0 %v1916
    %5756 = vmatpush1.msra.mxu0 %v1915
    %5757 = vmatprep.subr.mxu0 %v1932
    %5758 = vmatpush1.msra.mxu0 %v1931
    %5759 = vmatprep.subr.mxu0 %v1948
    %5760 = vmatpush1.msra.mxu0 %v1947
    %5761 = vmatprep.subr.mxu0 %v1964
    %5762 = vmatpush1.msra.mxu0 %v1963
    %5763 = vmatprep.subr.mxu0 %v1980
    %5764 = vmatpush1.msra.mxu0 %v1979
    %5765 = vmatprep.subr.mxu0 %v1996
    %5766 = vmatpush1.msra.mxu0 %v1995
    %5767 = vmatprep.subr.mxu0 %v2012
    %5768 = vmatpush1.msra.mxu0 %v2011
    %5769 = vmatprep.subr.mxu0 %v2028
    %5770 = vmatpush1.msra.mxu0 %v2027
    %5771 = vmatprep.subr.mxu0 %v2044
    %5772 = vmatpush1.msra.mxu0 %v2043
    %5773 = vmatprep.subr.mxu0 %v2060
    %5774 = vmatpush1.msra.mxu0 %v2059
    %5775 = vmatprep.subr.mxu0 %v2076
    %5776 = vmatpush1.msra.mxu0 %v2075
    %5777 = vmatprep.subr.mxu0 %v2092
    %5778 = vmatpush1.msra.mxu0 %v2091
    %5779 = vmatprep.subr.mxu0 %v2108
    %5780 = vmatpush1.msra.mxu0 %v2107
    %5781 = vmatprep.mubr.f32.mxu0 %v1590
    %5782 = vmatmul.mubr.f32.gmra.mrb[0].mxu0 %v1589
    %v5783 = vpop.f32.mrb[0].mxu0
    %v5784 = vadd.f32 %v3708, %v5783
    %v5785 = vpop.f32.mrb[0].mxu0
    %v5786 = vadd.f32 %v3712, %v5785
    %5787 = vdwg.mxu0
    %5788 = vmatprep.subr.mxu0 %v2124
    %5789 = vmatpush1.msra.mxu0 %v2123
    %5790 = vmatprep.subr.mxu0 %v2140
    %5791 = vmatpush1.msra.mxu0 %v2139
    %5792 = vmatprep.subr.mxu0 %v2156
    %5793 = vmatpush1.msra.mxu0 %v2155
    %5794 = vmatprep.subr.mxu0 %v2172
    %5795 = vmatpush1.msra.mxu0 %v2171
    %5796 = vmatprep.subr.mxu0 %v2188
    %5797 = vmatpush1.msra.mxu0 %v2187
    %5798 = vmatprep.subr.mxu0 %v2204
    %5799 = vmatpush1.msra.mxu0 %v2203
    %5800 = vmatprep.subr.mxu0 %v2220
    %5801 = vmatpush1.msra.mxu0 %v2219
    %5802 = vmatprep.subr.mxu0 %v2236
    %5803 = vmatpush1.msra.mxu0 %v2235
    %5804 = vmatprep.subr.mxu0 %v2252
    %5805 = vmatpush1.msra.mxu0 %v2251
    %5806 = vmatprep.subr.mxu0 %v2268
    %5807 = vmatpush1.msra.mxu0 %v2267
    %5808 = vmatprep.subr.mxu0 %v2284
    %5809 = vmatpush1.msra.mxu0 %v2283
    %5810 = vmatprep.subr.mxu0 %v2300
    %5811 = vmatpush1.msra.mxu0 %v2299
    %5812 = vmatprep.subr.mxu0 %v2316
    %5813 = vmatpush1.msra.mxu0 %v2315
    %5814 = vmatprep.subr.mxu0 %v2332
    %5815 = vmatpush1.msra.mxu0 %v2331
    %5816 = vmatprep.subr.mxu0 %v2348
    %5817 = vmatpush1.msra.mxu0 %v2347
    %5818 = vmatprep.subr.mxu0 %v2364
    %5819 = vmatpush1.msra.mxu0 %v2363
    %5820 = vmatprep.subr.mxu0 %v2380
    %5821 = vmatpush1.msra.mxu0 %v2379
    %5822 = vmatprep.subr.mxu0 %v2396
    %5823 = vmatpush1.msra.mxu0 %v2395
    %5824 = vmatprep.subr.mxu0 %v2412
    %5825 = vmatpush1.msra.mxu0 %v2411
    %5826 = vmatprep.subr.mxu0 %v2428
    %5827 = vmatpush1.msra.mxu0 %v2427
    %5828 = vmatprep.subr.mxu0 %v2444
    %5829 = vmatpush1.msra.mxu0 %v2443
    %5830 = vmatprep.subr.mxu0 %v2460
    %5831 = vmatpush1.msra.mxu0 %v2459
    %5832 = vmatprep.subr.mxu0 %v2476
    %5833 = vmatpush1.msra.mxu0 %v2475
    %5834 = vmatprep.subr.mxu0 %v2492
    %5835 = vmatpush1.msra.mxu0 %v2491
    %5836 = vmatprep.subr.mxu0 %v2508
    %5837 = vmatpush1.msra.mxu0 %v2507
    %5838 = vmatprep.subr.mxu0 %v2524
    %5839 = vmatpush1.msra.mxu0 %v2523
    %5840 = vmatprep.subr.mxu0 %v2540
    %5841 = vmatpush1.msra.mxu0 %v2539
    %5842 = vmatprep.subr.mxu0 %v2556
    %5843 = vmatpush1.msra.mxu0 %v2555
    %5844 = vmatprep.subr.mxu0 %v2572
    %5845 = vmatpush1.msra.mxu0 %v2571
    %5846 = vmatprep.subr.mxu0 %v2588
    %5847 = vmatpush1.msra.mxu0 %v2587
    %5848 = vmatprep.subr.mxu0 %v2604
    %5849 = vmatpush1.msra.mxu0 %v2603
    %5850 = vmatprep.subr.mxu0 %v2620
    %5851 = vmatpush1.msra.mxu0 %v2619
    %5852 = vmatprep.mubr.f32.mxu0 %v1592
    %5853 = vmatmul.mubr.f32.gmra.mrb[0].mxu0 %v1591
    %v5854 = vpop.f32.mrb[0].mxu0
    %v5855 = vadd.f32 %v5784, %v5854
    %v5856 = vpop.f32.mrb[0].mxu0
    %v5857 = vadd.f32 %v5786, %v5856
    %5858 = vdwg.mxu0
    %5859 = vmatprep.subr.mxu0 %v2636
    %5860 = vmatpush1.msra.mxu0 %v2635
    %5861 = vmatprep.subr.mxu0 %v2652
    %5862 = vmatpush1.msra.mxu0 %v2651
    %5863 = vmatprep.subr.mxu0 %v2668
    %5864 = vmatpush1.msra.mxu0 %v2667
    %5865 = vmatprep.subr.mxu0 %v2684
    %5866 = vmatpush1.msra.mxu0 %v2683
    %5867 = vmatprep.subr.mxu0 %v2700
    %5868 = vmatpush1.msra.mxu0 %v2699
    %5869 = vmatprep.subr.mxu0 %v2716
    %5870 = vmatpush1.msra.mxu0 %v2715
    %5871 = vmatprep.subr.mxu0 %v2732
    %5872 = vmatpush1.msra.mxu0 %v2731
    %5873 = vmatprep.subr.mxu0 %v2748
    %5874 = vmatpush1.msra.mxu0 %v2747
    %5875 = vmatprep.subr.mxu0 %v2764
    %5876 = vmatpush1.msra.mxu0 %v2763
    %5877 = vmatprep.subr.mxu0 %v2780
    %5878 = vmatpush1.msra.mxu0 %v2779
    %5879 = vmatprep.subr.mxu0 %v2796
    %5880 = vmatpush1.msra.mxu0 %v2795
    %5881 = vmatprep.subr.mxu0 %v2812
    %5882 = vmatpush1.msra.mxu0 %v2811
    %5883 = vmatprep.subr.mxu0 %v2828
    %5884 = vmatpush1.msra.mxu0 %v2827
    %5885 = vmatprep.subr.mxu0 %v2844
    %5886 = vmatpush1.msra.mxu0 %v2843
    %5887 = vmatprep.subr.mxu0 %v2860
    %5888 = vmatpush1.msra.mxu0 %v2859
    %5889 = vmatprep.subr.mxu0 %v2876
    %5890 = vmatpush1.msra.mxu0 %v2875
    %5891 = vmatprep.subr.mxu0 %v2892
    %5892 = vmatpush1.msra.mxu0 %v2891
    %5893 = vmatprep.subr.mxu0 %v2908
    %5894 = vmatpush1.msra.mxu0 %v2907
    %5895 = vmatprep.subr.mxu0 %v2924
    %5896 = vmatpush1.msra.mxu0 %v2923
    %5897 = vmatprep.subr.mxu0 %v2940
    %5898 = vmatpush1.msra.mxu0 %v2939
    %5899 = vmatprep.subr.mxu0 %v2956
    %5900 = vmatpush1.msra.mxu0 %v2955
    %5901 = vmatprep.subr.mxu0 %v2972
    %5902 = vmatpush1.msra.mxu0 %v2971
    %5903 = vmatprep.subr.mxu0 %v2988
    %5904 = vmatpush1.msra.mxu0 %v2987
    %5905 = vmatprep.subr.mxu0 %v3004
    %5906 = vmatpush1.msra.mxu0 %v3003
    %5907 = vmatprep.subr.mxu0 %v3020
    %5908 = vmatpush1.msra.mxu0 %v3019
    %5909 = vmatprep.subr.mxu0 %v3036
    %5910 = vmatpush1.msra.mxu0 %v3035
    %5911 = vmatprep.subr.mxu0 %v3052
    %5912 = vmatpush1.msra.mxu0 %v3051
    %5913 = vmatprep.subr.mxu0 %v3068
    %5914 = vmatpush1.msra.mxu0 %v3067
    %5915 = vmatprep.subr.mxu0 %v3084
    %5916 = vmatpush1.msra.mxu0 %v3083
    %5917 = vmatprep.subr.mxu0 %v3100
    %5918 = vmatpush1.msra.mxu0 %v3099
    %5919 = vmatprep.subr.mxu0 %v3116
    %5920 = vmatpush1.msra.mxu0 %v3115
    %5921 = vmatprep.subr.mxu0 %v3132
    %5922 = vmatpush1.msra.mxu0 %v3131
    %5923 = vmatprep.mubr.f32.mxu0 %v1594
    %5924 = vmatmul.mubr.f32.gmra.mrb[0].mxu0 %v1593
    %v5925 = vpop.f32.mrb[0].mxu0
    %v5926 = vadd.f32 %v5855, %v5925
    %v5927 = vpop.f32.mrb[0].mxu0
    %v5928 = vadd.f32 %v5857, %v5927
    %5929 = vdwg.mxu0
    %5930 = vmatprep.subr.mxu0 %v3148
    %5931 = vmatpush1.msra.mxu0 %v3147
    %5932 = vmatprep.subr.mxu0 %v3164
    %5933 = vmatpush1.msra.mxu0 %v3163
    %5934 = vmatprep.subr.mxu0 %v3180
    %5935 = vmatpush1.msra.mxu0 %v3179
    %5936 = vmatprep.subr.mxu0 %v3196
    %5937 = vmatpush1.msra.mxu0 %v3195
    %5938 = vmatprep.subr.mxu0 %v3212
    %5939 = vmatpush1.msra.mxu0 %v3211
    %5940 = vmatprep.subr.mxu0 %v3228
    %5941 = vmatpush1.msra.mxu0 %v3227
    %5942 = vmatprep.subr.mxu0 %v3244
    %5943 = vmatpush1.msra.mxu0 %v3243
    %5944 = vmatprep.subr.mxu0 %v3260
    %5945 = vmatpush1.msra.mxu0 %v3259
    %5946 = vmatprep.subr.mxu0 %v3276
    %5947 = vmatpush1.msra.mxu0 %v3275
    %5948 = vmatprep.subr.mxu0 %v3292
    %5949 = vmatpush1.msra.mxu0 %v3291
    %5950 = vmatprep.subr.mxu0 %v3308
    %5951 = vmatpush1.msra.mxu0 %v3307
    %5952 = vmatprep.subr.mxu0 %v3324
    %5953 = vmatpush1.msra.mxu0 %v3323
    %5954 = vmatprep.subr.mxu0 %v3340
    %5955 = vmatpush1.msra.mxu0 %v3339
    %5956 = vmatprep.subr.mxu0 %v3356
    %5957 = vmatpush1.msra.mxu0 %v3355
    %5958 = vmatprep.subr.mxu0 %v3372
    %5959 = vmatpush1.msra.mxu0 %v3371
    %5960 = vmatprep.subr.mxu0 %v3388
    %5961 = vmatpush1.msra.mxu0 %v3387
    %5962 = vmatprep.subr.mxu0 %v3404
    %5963 = vmatpush1.msra.mxu0 %v3403
    %5964 = vmatprep.subr.mxu0 %v3420
    %5965 = vmatpush1.msra.mxu0 %v3419
    %5966 = vmatprep.subr.mxu0 %v3436
    %5967 = vmatpush1.msra.mxu0 %v3435
    %5968 = vmatprep.subr.mxu0 %v3452
    %5969 = vmatpush1.msra.mxu0 %v3451
    %5970 = vmatprep.subr.mxu0 %v3468
    %5971 = vmatpush1.msra.mxu0 %v3467
    %5972 = vmatprep.subr.mxu0 %v3484
    %5973 = vmatpush1.msra.mxu0 %v3483
    %5974 = vmatprep.subr.mxu0 %v3500
    %5975 = vmatpush1.msra.mxu0 %v3499
    %5976 = vmatprep.subr.mxu0 %v3516
    %5977 = vmatpush1.msra.mxu0 %v3515
    %5978 = vmatprep.subr.mxu0 %v3532
    %5979 = vmatpush1.msra.mxu0 %v3531
    %5980 = vmatprep.subr.mxu0 %v3548
    %5981 = vmatpush1.msra.mxu0 %v3547
    %5982 = vmatprep.subr.mxu0 %v3564
    %5983 = vmatpush1.msra.mxu0 %v3563
    %5984 = vmatprep.subr.mxu0 %v3580
    %5985 = vmatpush1.msra.mxu0 %v3579
    %5986 = vmatprep.subr.mxu0 %v3596
    %5987 = vmatpush1.msra.mxu0 %v3595
    %5988 = vmatprep.subr.mxu0 %v3612
    %5989 = vmatpush1.msra.mxu0 %v3611
    %5990 = vmatprep.subr.mxu0 %v3628
    %5991 = vmatpush1.msra.mxu0 %v3627
    %5992 = vmatprep.subr.mxu0 %v3644
    %5993 = vmatpush1.msra.mxu0 %v3643
    %5994 = vmatprep.mubr.f32.mxu0 %v1596
    %5995 = vmatmul.mubr.f32.gmra.mrb[0].mxu0 %v1595
    %v5996 = vpop.f32.mrb[0].mxu0
    %v5997 = vadd.f32 %v5926, %v5996
    %v5998 = vpop.f32.mrb[0].mxu0
    %v5999 = vadd.f32 %v5928, %v5998
    %6000 = vdwg.mxu0
    %vm6001 = vcmp.ge.f32.partialorder %v4009, 0.0
    %vm6002 = vcmp.ge.f32.partialorder %v4011, 0.0
    %vm6003 = vcmp.ge.f32.partialorder %v4293, 0.0
    %vm6004 = vcmp.ge.f32.partialorder %v4295, 0.0
    %vm6005 = vcmp.ge.f32.partialorder %v4577, 0.0
    %vm6006 = vcmp.ge.f32.partialorder %v4579, 0.0
    %vm6007 = vcmp.ge.f32.partialorder %v4861, 0.0
    %vm6008 = vcmp.ge.f32.partialorder %v4863, 0.0
    %vm6009 = vcmp.ge.f32.partialorder %v5145, 0.0
    %vm6010 = vcmp.ge.f32.partialorder %v5147, 0.0
    %vm6011 = vcmp.ge.f32.partialorder %v5429, 0.0
    %vm6012 = vcmp.ge.f32.partialorder %v5431, 0.0
    %vm6013 = vcmp.ge.f32.partialorder %v5713, 0.0
    %vm6014 = vcmp.ge.f32.partialorder %v5715, 0.0
    %vm6015 = vcmp.ge.f32.partialorder %v5997, 0.0
    %vm6016 = vcmp.ge.f32.partialorder %v5999, 0.0
    %v6017 = vmul.f32 %v4009, 0.2
    %v6018 = vmul.f32 %v4011, 0.2
    %v6019 = vmul.f32 %v4293, 0.2
    %v6020 = vmul.f32 %v4295, 0.2
    %v6021 = vmul.f32 %v4577, 0.2
    %v6022 = vmul.f32 %v4579, 0.2
    %v6023 = vmul.f32 %v4861, 0.2
    %v6024 = vmul.f32 %v4863, 0.2
    %v6025 = vmul.f32 %v5145, 0.2
    %v6026 = vmul.f32 %v5147, 0.2
    %v6027 = vmul.f32 %v5429, 0.2
    %v6028 = vmul.f32 %v5431, 0.2
    %v6029 = vmul.f32 %v5713, 0.2
    %v6030 = vmul.f32 %v5715, 0.2
    %v6031 = vmul.f32 %v5997, 0.2
    %v6032 = vmul.f32 %v5999, 0.2
    %v6033 = vsel %vm6001, %v4009, %v6017
    %v6034 = vsel %vm6002, %v4011, %v6018
    %v6035 = vsel %vm6003, %v4293, %v6019
    %v6036 = vsel %vm6004, %v4295, %v6020
    %v6037 = vsel %vm6005, %v4577, %v6021
    %v6038 = vsel %vm6006, %v4579, %v6022
    %v6039 = vsel %vm6007, %v4861, %v6023
    %v6040 = vsel %vm6008, %v4863, %v6024
    %v6041 = vsel %vm6009, %v5145, %v6025
    %v6042 = vsel %vm6010, %v5147, %v6026
    %v6043 = vsel %vm6011, %v5429, %v6027
    %v6044 = vsel %vm6012, %v5431, %v6028
    %v6045 = vsel %vm6013, %v5713, %v6029
    %v6046 = vsel %vm6014, %v5715, %v6030
    %v6047 = vsel %vm6015, %v5997, %v6031
    %v6048 = vsel %vm6016, %v5999, %v6032
    %v6049 = vld [vmem:[#allocation14] sm:$0xff]
    %v6050 = vld [vmem:[#allocation14 + $0x8] sm:$0xff]
    %v6051 = vld [vmem:[#allocation14 + $0x10] sm:$0xff]
    %v6052 = vld [vmem:[#allocation14 + $0x18] sm:$0xff]
    %v6053 = vld [vmem:[#allocation14 + $0x20] sm:$0xff]
    %v6054 = vld [vmem:[#allocation14 + $0x28] sm:$0xff]
    %v6055 = vld [vmem:[#allocation14 + $0x30] sm:$0xff]
    %v6056 = vld [vmem:[#allocation14 + $0x38] sm:$0xff]
    %v6057 = vld [vmem:[#allocation14 + $0x40] sm:$0xff]
    %v6058 = vld [vmem:[#allocation14 + $0x48] sm:$0xff]
    %v6059 = vld [vmem:[#allocation14 + $0x50] sm:$0xff]
    %v6060 = vld [vmem:[#allocation14 + $0x58] sm:$0xff]
    %v6061 = vld [vmem:[#allocation14 + $0x60] sm:$0xff]
    %v6062 = vld [vmem:[#allocation14 + $0x68] sm:$0xff]
    %v6063 = vld [vmem:[#allocation14 + $0x70] sm:$0xff]
    %v6064 = vld [vmem:[#allocation14 + $0x78] sm:$0xff]
    %v6065 = vld [vmem:[#allocation14 + $0x80] sm:$0xff]
    %v6066 = vld [vmem:[#allocation14 + $0x88] sm:$0xff]
    %v6067 = vld [vmem:[#allocation14 + $0x90] sm:$0xff]
    %v6068 = vld [vmem:[#allocation14 + $0x98] sm:$0xff]
    %v6069 = vld [vmem:[#allocation14 + $0xa0] sm:$0xff]
    %v6070 = vld [vmem:[#allocation14 + $0xa8] sm:$0xff]
    %v6071 = vld [vmem:[#allocation14 + $0xb0] sm:$0xff]
    %v6072 = vld [vmem:[#allocation14 + $0xb8] sm:$0xff]
    %v6073 = vld [vmem:[#allocation14 + $0xc0] sm:$0xff]
    %v6074 = vld [vmem:[#allocation14 + $0xc8] sm:$0xff]
    %v6075 = vld [vmem:[#allocation14 + $0xd0] sm:$0xff]
    %v6076 = vld [vmem:[#allocation14 + $0xd8] sm:$0xff]
    %v6077 = vld [vmem:[#allocation14 + $0xe0] sm:$0xff]
    %v6078 = vld [vmem:[#allocation14 + $0xe8] sm:$0xff]
    %v6079 = vld [vmem:[#allocation14 + $0xf0] sm:$0xff]
    %v6080 = vld [vmem:[#allocation14 + $0xf8] sm:$0xff]
    %v6081 = vld [vmem:[#allocation14 + $0x100] sm:$0xff]
    %v6082 = vld [vmem:[#allocation14 + $0x108] sm:$0xff]
    %v6083 = vld [vmem:[#allocation14 + $0x110] sm:$0xff]
    %v6084 = vld [vmem:[#allocation14 + $0x118] sm:$0xff]
    %v6085 = vld [vmem:[#allocation14 + $0x120] sm:$0xff]
    %v6086 = vld [vmem:[#allocation14 + $0x128] sm:$0xff]
    %v6087 = vld [vmem:[#allocation14 + $0x130] sm:$0xff]
    %v6088 = vld [vmem:[#allocation14 + $0x138] sm:$0xff]
    %v6089 = vld [vmem:[#allocation14 + $0x140] sm:$0xff]
    %v6090 = vld [vmem:[#allocation14 + $0x148] sm:$0xff]
    %v6091 = vld [vmem:[#allocation14 + $0x150] sm:$0xff]
    %v6092 = vld [vmem:[#allocation14 + $0x158] sm:$0xff]
    %v6093 = vld [vmem:[#allocation14 + $0x160] sm:$0xff]
    %v6094 = vld [vmem:[#allocation14 + $0x168] sm:$0xff]
    %v6095 = vld [vmem:[#allocation14 + $0x170] sm:$0xff]
    %v6096 = vld [vmem:[#allocation14 + $0x178] sm:$0xff]
    %v6097 = vld [vmem:[#allocation14 + $0x180] sm:$0xff]
    %v6098 = vld [vmem:[#allocation14 + $0x188] sm:$0xff]
    %v6099 = vld [vmem:[#allocation14 + $0x190] sm:$0xff]
    %v6100 = vld [vmem:[#allocation14 + $0x198] sm:$0xff]
    %v6101 = vld [vmem:[#allocation14 + $0x1a0] sm:$0xff]
    %v6102 = vld [vmem:[#allocation14 + $0x1a8] sm:$0xff]
    %v6103 = vld [vmem:[#allocation14 + $0x1b0] sm:$0xff]
    %v6104 = vld [vmem:[#allocation14 + $0x1b8] sm:$0xff]
    %v6105 = vld [vmem:[#allocation14 + $0x1c0] sm:$0xff]
    %v6106 = vld [vmem:[#allocation14 + $0x1c8] sm:$0xff]
    %v6107 = vld [vmem:[#allocation14 + $0x1d0] sm:$0xff]
    %v6108 = vld [vmem:[#allocation14 + $0x1d8] sm:$0xff]
    %v6109 = vld [vmem:[#allocation14 + $0x1e0] sm:$0xff]
    %v6110 = vld [vmem:[#allocation14 + $0x1e8] sm:$0xff]
    %v6111 = vld [vmem:[#allocation14 + $0x1f0] sm:$0xff]
    %v6112 = vld [vmem:[#allocation14 + $0x1f8] sm:$0xff]
    %v6113 = vld [vmem:[#allocation14 + $0x200] sm:$0xff]
    %v6114 = vld [vmem:[#allocation14 + $0x208] sm:$0xff]
    %v6115 = vld [vmem:[#allocation14 + $0x210] sm:$0xff]
    %v6116 = vld [vmem:[#allocation14 + $0x218] sm:$0xff]
    %v6117 = vld [vmem:[#allocation14 + $0x220] sm:$0xff]
    %v6118 = vld [vmem:[#allocation14 + $0x228] sm:$0xff]
    %v6119 = vld [vmem:[#allocation14 + $0x230] sm:$0xff]
    %v6120 = vld [vmem:[#allocation14 + $0x238] sm:$0xff]
    %v6121 = vld [vmem:[#allocation14 + $0x240] sm:$0xff]
    %v6122 = vld [vmem:[#allocation14 + $0x248] sm:$0xff]
    %v6123 = vld [vmem:[#allocation14 + $0x250] sm:$0xff]
    %v6124 = vld [vmem:[#allocation14 + $0x258] sm:$0xff]
    %v6125 = vld [vmem:[#allocation14 + $0x260] sm:$0xff]
    %v6126 = vld [vmem:[#allocation14 + $0x268] sm:$0xff]
    %v6127 = vld [vmem:[#allocation14 + $0x270] sm:$0xff]
    %v6128 = vld [vmem:[#allocation14 + $0x278] sm:$0xff]
    %v6129 = vld [vmem:[#allocation14 + $0x280] sm:$0xff]
    %v6130 = vld [vmem:[#allocation14 + $0x288] sm:$0xff]
    %v6131 = vld [vmem:[#allocation14 + $0x290] sm:$0xff]
    %v6132 = vld [vmem:[#allocation14 + $0x298] sm:$0xff]
    %v6133 = vld [vmem:[#allocation14 + $0x2a0] sm:$0xff]
    %v6134 = vld [vmem:[#allocation14 + $0x2a8] sm:$0xff]
    %v6135 = vld [vmem:[#allocation14 + $0x2b0] sm:$0xff]
    %v6136 = vld [vmem:[#allocation14 + $0x2b8] sm:$0xff]
    %v6137 = vld [vmem:[#allocation14 + $0x2c0] sm:$0xff]
    %v6138 = vld [vmem:[#allocation14 + $0x2c8] sm:$0xff]
    %v6139 = vld [vmem:[#allocation14 + $0x2d0] sm:$0xff]
    %v6140 = vld [vmem:[#allocation14 + $0x2d8] sm:$0xff]
    %v6141 = vld [vmem:[#allocation14 + $0x2e0] sm:$0xff]
    %v6142 = vld [vmem:[#allocation14 + $0x2e8] sm:$0xff]
    %v6143 = vld [vmem:[#allocation14 + $0x2f0] sm:$0xff]
    %v6144 = vld [vmem:[#allocation14 + $0x2f8] sm:$0xff]
    %v6145 = vld [vmem:[#allocation14 + $0x300] sm:$0xff]
    %v6146 = vld [vmem:[#allocation14 + $0x308] sm:$0xff]
    %v6147 = vld [vmem:[#allocation14 + $0x310] sm:$0xff]
    %v6148 = vld [vmem:[#allocation14 + $0x318] sm:$0xff]
    %v6149 = vld [vmem:[#allocation14 + $0x320] sm:$0xff]
    %v6150 = vld [vmem:[#allocation14 + $0x328] sm:$0xff]
    %v6151 = vld [vmem:[#allocation14 + $0x330] sm:$0xff]
    %v6152 = vld [vmem:[#allocation14 + $0x338] sm:$0xff]
    %v6153 = vld [vmem:[#allocation14 + $0x340] sm:$0xff]
    %v6154 = vld [vmem:[#allocation14 + $0x348] sm:$0xff]
    %v6155 = vld [vmem:[#allocation14 + $0x350] sm:$0xff]
    %v6156 = vld [vmem:[#allocation14 + $0x358] sm:$0xff]
    %v6157 = vld [vmem:[#allocation14 + $0x360] sm:$0xff]
    %v6158 = vld [vmem:[#allocation14 + $0x368] sm:$0xff]
    %v6159 = vld [vmem:[#allocation14 + $0x370] sm:$0xff]
    %v6160 = vld [vmem:[#allocation14 + $0x378] sm:$0xff]
    %v6161 = vld [vmem:[#allocation14 + $0x380] sm:$0xff]
    %v6162 = vld [vmem:[#allocation14 + $0x388] sm:$0xff]
    %v6163 = vld [vmem:[#allocation14 + $0x390] sm:$0xff]
    %v6164 = vld [vmem:[#allocation14 + $0x398] sm:$0xff]
    %v6165 = vld [vmem:[#allocation14 + $0x3a0] sm:$0xff]
    %v6166 = vld [vmem:[#allocation14 + $0x3a8] sm:$0xff]
    %v6167 = vld [vmem:[#allocation14 + $0x3b0] sm:$0xff]
    %v6168 = vld [vmem:[#allocation14 + $0x3b8] sm:$0xff]
    %v6169 = vld [vmem:[#allocation14 + $0x3c0] sm:$0xff]
    %v6170 = vld [vmem:[#allocation14 + $0x3c8] sm:$0xff]
    %v6171 = vld [vmem:[#allocation14 + $0x3d0] sm:$0xff]
    %v6172 = vld [vmem:[#allocation14 + $0x3d8] sm:$0xff]
    %v6173 = vld [vmem:[#allocation14 + $0x3e0] sm:$0xff]
    %v6174 = vld [vmem:[#allocation14 + $0x3e8] sm:$0xff]
    %v6175 = vld [vmem:[#allocation14 + $0x3f0] sm:$0xff]
    %v6176 = vld [vmem:[#allocation14 + $0x3f8] sm:$0xff]
    %v6177 = vld [vmem:[#allocation14 + $0x400] sm:$0xff]
    %v6178 = vld [vmem:[#allocation14 + $0x408] sm:$0xff]
    %v6179 = vld [vmem:[#allocation14 + $0x410] sm:$0xff]
    %v6180 = vld [vmem:[#allocation14 + $0x418] sm:$0xff]
    %v6181 = vld [vmem:[#allocation14 + $0x420] sm:$0xff]
    %v6182 = vld [vmem:[#allocation14 + $0x428] sm:$0xff]
    %v6183 = vld [vmem:[#allocation14 + $0x430] sm:$0xff]
    %v6184 = vld [vmem:[#allocation14 + $0x438] sm:$0xff]
    %v6185 = vld [vmem:[#allocation14 + $0x440] sm:$0xff]
    %v6186 = vld [vmem:[#allocation14 + $0x448] sm:$0xff]
    %v6187 = vld [vmem:[#allocation14 + $0x450] sm:$0xff]
    %v6188 = vld [vmem:[#allocation14 + $0x458] sm:$0xff]
    %v6189 = vld [vmem:[#allocation14 + $0x460] sm:$0xff]
    %v6190 = vld [vmem:[#allocation14 + $0x468] sm:$0xff]
    %v6191 = vld [vmem:[#allocation14 + $0x470] sm:$0xff]
    %v6192 = vld [vmem:[#allocation14 + $0x478] sm:$0xff]
    %v6193 = vld [vmem:[#allocation14 + $0x480] sm:$0xff]
    %v6194 = vld [vmem:[#allocation14 + $0x488] sm:$0xff]
    %v6195 = vld [vmem:[#allocation14 + $0x490] sm:$0xff]
    %v6196 = vld [vmem:[#allocation14 + $0x498] sm:$0xff]
    %v6197 = vld [vmem:[#allocation14 + $0x4a0] sm:$0xff]
    %v6198 = vld [vmem:[#allocation14 + $0x4a8] sm:$0xff]
    %v6199 = vld [vmem:[#allocation14 + $0x4b0] sm:$0xff]
    %v6200 = vld [vmem:[#allocation14 + $0x4b8] sm:$0xff]
    %v6201 = vld [vmem:[#allocation14 + $0x4c0] sm:$0xff]
    %v6202 = vld [vmem:[#allocation14 + $0x4c8] sm:$0xff]
    %v6203 = vld [vmem:[#allocation14 + $0x4d0] sm:$0xff]
    %v6204 = vld [vmem:[#allocation14 + $0x4d8] sm:$0xff]
    %v6205 = vld [vmem:[#allocation14 + $0x4e0] sm:$0xff]
    %v6206 = vld [vmem:[#allocation14 + $0x4e8] sm:$0xff]
    %v6207 = vld [vmem:[#allocation14 + $0x4f0] sm:$0xff]
    %v6208 = vld [vmem:[#allocation14 + $0x4f8] sm:$0xff]
    %v6209 = vld [vmem:[#allocation14 + $0x500] sm:$0xff]
    %v6210 = vld [vmem:[#allocation14 + $0x508] sm:$0xff]
    %v6211 = vld [vmem:[#allocation14 + $0x510] sm:$0xff]
    %v6212 = vld [vmem:[#allocation14 + $0x518] sm:$0xff]
    %v6213 = vld [vmem:[#allocation14 + $0x520] sm:$0xff]
    %v6214 = vld [vmem:[#allocation14 + $0x528] sm:$0xff]
    %v6215 = vld [vmem:[#allocation14 + $0x530] sm:$0xff]
    %v6216 = vld [vmem:[#allocation14 + $0x538] sm:$0xff]
    %v6217 = vld [vmem:[#allocation14 + $0x540] sm:$0xff]
    %v6218 = vld [vmem:[#allocation14 + $0x548] sm:$0xff]
    %v6219 = vld [vmem:[#allocation14 + $0x550] sm:$0xff]
    %v6220 = vld [vmem:[#allocation14 + $0x558] sm:$0xff]
    %v6221 = vld [vmem:[#allocation14 + $0x560] sm:$0xff]
    %v6222 = vld [vmem:[#allocation14 + $0x568] sm:$0xff]
    %v6223 = vld [vmem:[#allocation14 + $0x570] sm:$0xff]
    %v6224 = vld [vmem:[#allocation14 + $0x578] sm:$0xff]
    %v6225 = vld [vmem:[#allocation14 + $0x580] sm:$0xff]
    %v6226 = vld [vmem:[#allocation14 + $0x588] sm:$0xff]
    %v6227 = vld [vmem:[#allocation14 + $0x590] sm:$0xff]
    %v6228 = vld [vmem:[#allocation14 + $0x598] sm:$0xff]
    %v6229 = vld [vmem:[#allocation14 + $0x5a0] sm:$0xff]
    %v6230 = vld [vmem:[#allocation14 + $0x5a8] sm:$0xff]
    %v6231 = vld [vmem:[#allocation14 + $0x5b0] sm:$0xff]
    %v6232 = vld [vmem:[#allocation14 + $0x5b8] sm:$0xff]
    %v6233 = vld [vmem:[#allocation14 + $0x5c0] sm:$0xff]
    %v6234 = vld [vmem:[#allocation14 + $0x5c8] sm:$0xff]
    %v6235 = vld [vmem:[#allocation14 + $0x5d0] sm:$0xff]
    %v6236 = vld [vmem:[#allocation14 + $0x5d8] sm:$0xff]
    %v6237 = vld [vmem:[#allocation14 + $0x5e0] sm:$0xff]
    %v6238 = vld [vmem:[#allocation14 + $0x5e8] sm:$0xff]
    %v6239 = vld [vmem:[#allocation14 + $0x5f0] sm:$0xff]
    %v6240 = vld [vmem:[#allocation14 + $0x5f8] sm:$0xff]
    %v6241 = vld [vmem:[#allocation14 + $0x600] sm:$0xff]
    %v6242 = vld [vmem:[#allocation14 + $0x608] sm:$0xff]
    %v6243 = vld [vmem:[#allocation14 + $0x610] sm:$0xff]
    %v6244 = vld [vmem:[#allocation14 + $0x618] sm:$0xff]
    %v6245 = vld [vmem:[#allocation14 + $0x620] sm:$0xff]
    %v6246 = vld [vmem:[#allocation14 + $0x628] sm:$0xff]
    %v6247 = vld [vmem:[#allocation14 + $0x630] sm:$0xff]
    %v6248 = vld [vmem:[#allocation14 + $0x638] sm:$0xff]
    %v6249 = vld [vmem:[#allocation14 + $0x640] sm:$0xff]
    %v6250 = vld [vmem:[#allocation14 + $0x648] sm:$0xff]
    %v6251 = vld [vmem:[#allocation14 + $0x650] sm:$0xff]
    %v6252 = vld [vmem:[#allocation14 + $0x658] sm:$0xff]
    %v6253 = vld [vmem:[#allocation14 + $0x660] sm:$0xff]
    %v6254 = vld [vmem:[#allocation14 + $0x668] sm:$0xff]
    %v6255 = vld [vmem:[#allocation14 + $0x670] sm:$0xff]
    %v6256 = vld [vmem:[#allocation14 + $0x678] sm:$0xff]
    %v6257 = vld [vmem:[#allocation14 + $0x680] sm:$0xff]
    %v6258 = vld [vmem:[#allocation14 + $0x688] sm:$0xff]
    %v6259 = vld [vmem:[#allocation14 + $0x690] sm:$0xff]
    %v6260 = vld [vmem:[#allocation14 + $0x698] sm:$0xff]
    %v6261 = vld [vmem:[#allocation14 + $0x6a0] sm:$0xff]
    %v6262 = vld [vmem:[#allocation14 + $0x6a8] sm:$0xff]
    %v6263 = vld [vmem:[#allocation14 + $0x6b0] sm:$0xff]
    %v6264 = vld [vmem:[#allocation14 + $0x6b8] sm:$0xff]
    %v6265 = vld [vmem:[#allocation14 + $0x6c0] sm:$0xff]
    %v6266 = vld [vmem:[#allocation14 + $0x6c8] sm:$0xff]
    %v6267 = vld [vmem:[#allocation14 + $0x6d0] sm:$0xff]
    %v6268 = vld [vmem:[#allocation14 + $0x6d8] sm:$0xff]
    %v6269 = vld [vmem:[#allocation14 + $0x6e0] sm:$0xff]
    %v6270 = vld [vmem:[#allocation14 + $0x6e8] sm:$0xff]
    %v6271 = vld [vmem:[#allocation14 + $0x6f0] sm:$0xff]
    %v6272 = vld [vmem:[#allocation14 + $0x6f8] sm:$0xff]
    %v6273 = vld [vmem:[#allocation14 + $0x700] sm:$0xff]
    %v6274 = vld [vmem:[#allocation14 + $0x708] sm:$0xff]
    %v6275 = vld [vmem:[#allocation14 + $0x710] sm:$0xff]
    %v6276 = vld [vmem:[#allocation14 + $0x718] sm:$0xff]
    %v6277 = vld [vmem:[#allocation14 + $0x720] sm:$0xff]
    %v6278 = vld [vmem:[#allocation14 + $0x728] sm:$0xff]
    %v6279 = vld [vmem:[#allocation14 + $0x730] sm:$0xff]
    %v6280 = vld [vmem:[#allocation14 + $0x738] sm:$0xff]
    %v6281 = vld [vmem:[#allocation14 + $0x740] sm:$0xff]
    %v6282 = vld [vmem:[#allocation14 + $0x748] sm:$0xff]
    %v6283 = vld [vmem:[#allocation14 + $0x750] sm:$0xff]
    %v6284 = vld [vmem:[#allocation14 + $0x758] sm:$0xff]
    %v6285 = vld [vmem:[#allocation14 + $0x760] sm:$0xff]
    %v6286 = vld [vmem:[#allocation14 + $0x768] sm:$0xff]
    %v6287 = vld [vmem:[#allocation14 + $0x770] sm:$0xff]
    %v6288 = vld [vmem:[#allocation14 + $0x778] sm:$0xff]
    %v6289 = vld [vmem:[#allocation14 + $0x780] sm:$0xff]
    %v6290 = vld [vmem:[#allocation14 + $0x788] sm:$0xff]
    %v6291 = vld [vmem:[#allocation14 + $0x790] sm:$0xff]
    %v6292 = vld [vmem:[#allocation14 + $0x798] sm:$0xff]
    %v6293 = vld [vmem:[#allocation14 + $0x7a0] sm:$0xff]
    %v6294 = vld [vmem:[#allocation14 + $0x7a8] sm:$0xff]
    %v6295 = vld [vmem:[#allocation14 + $0x7b0] sm:$0xff]
    %v6296 = vld [vmem:[#allocation14 + $0x7b8] sm:$0xff]
    %v6297 = vld [vmem:[#allocation14 + $0x7c0] sm:$0xff]
    %v6298 = vld [vmem:[#allocation14 + $0x7c8] sm:$0xff]
    %v6299 = vld [vmem:[#allocation14 + $0x7d0] sm:$0xff]
    %v6300 = vld [vmem:[#allocation14 + $0x7d8] sm:$0xff]
    %v6301 = vld [vmem:[#allocation14 + $0x7e0] sm:$0xff]
    %v6302 = vld [vmem:[#allocation14 + $0x7e8] sm:$0xff]
    %v6303 = vld [vmem:[#allocation14 + $0x7f0] sm:$0xff]
    %v6304 = vld [vmem:[#allocation14 + $0x7f8] sm:$0xff]
    %v6305 = vld [vmem:[#allocation14 + $0x800] sm:$0xff]
    %v6306 = vld [vmem:[#allocation14 + $0x808] sm:$0xff]
    %v6307 = vld [vmem:[#allocation14 + $0x810] sm:$0xff]
    %v6308 = vld [vmem:[#allocation14 + $0x818] sm:$0xff]
    %v6309 = vld [vmem:[#allocation14 + $0x820] sm:$0xff]
    %v6310 = vld [vmem:[#allocation14 + $0x828] sm:$0xff]
    %v6311 = vld [vmem:[#allocation14 + $0x830] sm:$0xff]
    %v6312 = vld [vmem:[#allocation14 + $0x838] sm:$0xff]
    %v6313 = vld [vmem:[#allocation14 + $0x840] sm:$0xff]
    %v6314 = vld [vmem:[#allocation14 + $0x848] sm:$0xff]
    %v6315 = vld [vmem:[#allocation14 + $0x850] sm:$0xff]
    %v6316 = vld [vmem:[#allocation14 + $0x858] sm:$0xff]
    %v6317 = vld [vmem:[#allocation14 + $0x860] sm:$0xff]
    %v6318 = vld [vmem:[#allocation14 + $0x868] sm:$0xff]
    %v6319 = vld [vmem:[#allocation14 + $0x870] sm:$0xff]
    %v6320 = vld [vmem:[#allocation14 + $0x878] sm:$0xff]
    %v6321 = vld [vmem:[#allocation14 + $0x880] sm:$0xff]
    %v6322 = vld [vmem:[#allocation14 + $0x888] sm:$0xff]
    %v6323 = vld [vmem:[#allocation14 + $0x890] sm:$0xff]
    %v6324 = vld [vmem:[#allocation14 + $0x898] sm:$0xff]
    %v6325 = vld [vmem:[#allocation14 + $0x8a0] sm:$0xff]
    %v6326 = vld [vmem:[#allocation14 + $0x8a8] sm:$0xff]
    %v6327 = vld [vmem:[#allocation14 + $0x8b0] sm:$0xff]
    %v6328 = vld [vmem:[#allocation14 + $0x8b8] sm:$0xff]
    %v6329 = vld [vmem:[#allocation14 + $0x8c0] sm:$0xff]
    %v6330 = vld [vmem:[#allocation14 + $0x8c8] sm:$0xff]
    %v6331 = vld [vmem:[#allocation14 + $0x8d0] sm:$0xff]
    %v6332 = vld [vmem:[#allocation14 + $0x8d8] sm:$0xff]
    %v6333 = vld [vmem:[#allocation14 + $0x8e0] sm:$0xff]
    %v6334 = vld [vmem:[#allocation14 + $0x8e8] sm:$0xff]
    %v6335 = vld [vmem:[#allocation14 + $0x8f0] sm:$0xff]
    %v6336 = vld [vmem:[#allocation14 + $0x8f8] sm:$0xff]
    %v6337 = vld [vmem:[#allocation14 + $0x900] sm:$0xff]
    %v6338 = vld [vmem:[#allocation14 + $0x908] sm:$0xff]
    %v6339 = vld [vmem:[#allocation14 + $0x910] sm:$0xff]
    %v6340 = vld [vmem:[#allocation14 + $0x918] sm:$0xff]
    %v6341 = vld [vmem:[#allocation14 + $0x920] sm:$0xff]
    %v6342 = vld [vmem:[#allocation14 + $0x928] sm:$0xff]
    %v6343 = vld [vmem:[#allocation14 + $0x930] sm:$0xff]
    %v6344 = vld [vmem:[#allocation14 + $0x938] sm:$0xff]
    %v6345 = vld [vmem:[#allocation14 + $0x940] sm:$0xff]
    %v6346 = vld [vmem:[#allocation14 + $0x948] sm:$0xff]
    %v6347 = vld [vmem:[#allocation14 + $0x950] sm:$0xff]
    %v6348 = vld [vmem:[#allocation14 + $0x958] sm:$0xff]
    %v6349 = vld [vmem:[#allocation14 + $0x960] sm:$0xff]
    %v6350 = vld [vmem:[#allocation14 + $0x968] sm:$0xff]
    %v6351 = vld [vmem:[#allocation14 + $0x970] sm:$0xff]
    %v6352 = vld [vmem:[#allocation14 + $0x978] sm:$0xff]
    %v6353 = vld [vmem:[#allocation14 + $0x980] sm:$0xff]
    %v6354 = vld [vmem:[#allocation14 + $0x988] sm:$0xff]
    %v6355 = vld [vmem:[#allocation14 + $0x990] sm:$0xff]
    %v6356 = vld [vmem:[#allocation14 + $0x998] sm:$0xff]
    %v6357 = vld [vmem:[#allocation14 + $0x9a0] sm:$0xff]
    %v6358 = vld [vmem:[#allocation14 + $0x9a8] sm:$0xff]
    %v6359 = vld [vmem:[#allocation14 + $0x9b0] sm:$0xff]
    %v6360 = vld [vmem:[#allocation14 + $0x9b8] sm:$0xff]
    %v6361 = vld [vmem:[#allocation14 + $0x9c0] sm:$0xff]
    %v6362 = vld [vmem:[#allocation14 + $0x9c8] sm:$0xff]
    %v6363 = vld [vmem:[#allocation14 + $0x9d0] sm:$0xff]
    %v6364 = vld [vmem:[#allocation14 + $0x9d8] sm:$0xff]
    %v6365 = vld [vmem:[#allocation14 + $0x9e0] sm:$0xff]
    %v6366 = vld [vmem:[#allocation14 + $0x9e8] sm:$0xff]
    %v6367 = vld [vmem:[#allocation14 + $0x9f0] sm:$0xff]
    %v6368 = vld [vmem:[#allocation14 + $0x9f8] sm:$0xff]
    %v6369 = vld [vmem:[#allocation14 + $0xa00] sm:$0xff]
    %v6370 = vld [vmem:[#allocation14 + $0xa08] sm:$0xff]
    %v6371 = vld [vmem:[#allocation14 + $0xa10] sm:$0xff]
    %v6372 = vld [vmem:[#allocation14 + $0xa18] sm:$0xff]
    %v6373 = vld [vmem:[#allocation14 + $0xa20] sm:$0xff]
    %v6374 = vld [vmem:[#allocation14 + $0xa28] sm:$0xff]
    %v6375 = vld [vmem:[#allocation14 + $0xa30] sm:$0xff]
    %v6376 = vld [vmem:[#allocation14 + $0xa38] sm:$0xff]
    %v6377 = vld [vmem:[#allocation14 + $0xa40] sm:$0xff]
    %v6378 = vld [vmem:[#allocation14 + $0xa48] sm:$0xff]
    %v6379 = vld [vmem:[#allocation14 + $0xa50] sm:$0xff]
    %v6380 = vld [vmem:[#allocation14 + $0xa58] sm:$0xff]
    %v6381 = vld [vmem:[#allocation14 + $0xa60] sm:$0xff]
    %v6382 = vld [vmem:[#allocation14 + $0xa68] sm:$0xff]
    %v6383 = vld [vmem:[#allocation14 + $0xa70] sm:$0xff]
    %v6384 = vld [vmem:[#allocation14 + $0xa78] sm:$0xff]
    %v6385 = vld [vmem:[#allocation14 + $0xa80] sm:$0xff]
    %v6386 = vld [vmem:[#allocation14 + $0xa88] sm:$0xff]
    %v6387 = vld [vmem:[#allocation14 + $0xa90] sm:$0xff]
    %v6388 = vld [vmem:[#allocation14 + $0xa98] sm:$0xff]
    %v6389 = vld [vmem:[#allocation14 + $0xaa0] sm:$0xff]
    %v6390 = vld [vmem:[#allocation14 + $0xaa8] sm:$0xff]
    %v6391 = vld [vmem:[#allocation14 + $0xab0] sm:$0xff]
    %v6392 = vld [vmem:[#allocation14 + $0xab8] sm:$0xff]
    %v6393 = vld [vmem:[#allocation14 + $0xac0] sm:$0xff]
    %v6394 = vld [vmem:[#allocation14 + $0xac8] sm:$0xff]
    %v6395 = vld [vmem:[#allocation14 + $0xad0] sm:$0xff]
    %v6396 = vld [vmem:[#allocation14 + $0xad8] sm:$0xff]
    %v6397 = vld [vmem:[#allocation14 + $0xae0] sm:$0xff]
    %v6398 = vld [vmem:[#allocation14 + $0xae8] sm:$0xff]
    %v6399 = vld [vmem:[#allocation14 + $0xaf0] sm:$0xff]
    %v6400 = vld [vmem:[#allocation14 + $0xaf8] sm:$0xff]
    %v6401 = vld [vmem:[#allocation14 + $0xb00] sm:$0xff]
    %v6402 = vld [vmem:[#allocation14 + $0xb08] sm:$0xff]
    %v6403 = vld [vmem:[#allocation14 + $0xb10] sm:$0xff]
    %v6404 = vld [vmem:[#allocation14 + $0xb18] sm:$0xff]
    %v6405 = vld [vmem:[#allocation14 + $0xb20] sm:$0xff]
    %v6406 = vld [vmem:[#allocation14 + $0xb28] sm:$0xff]
    %v6407 = vld [vmem:[#allocation14 + $0xb30] sm:$0xff]
    %v6408 = vld [vmem:[#allocation14 + $0xb38] sm:$0xff]
    %v6409 = vld [vmem:[#allocation14 + $0xb40] sm:$0xff]
    %v6410 = vld [vmem:[#allocation14 + $0xb48] sm:$0xff]
    %v6411 = vld [vmem:[#allocation14 + $0xb50] sm:$0xff]
    %v6412 = vld [vmem:[#allocation14 + $0xb58] sm:$0xff]
    %v6413 = vld [vmem:[#allocation14 + $0xb60] sm:$0xff]
    %v6414 = vld [vmem:[#allocation14 + $0xb68] sm:$0xff]
    %v6415 = vld [vmem:[#allocation14 + $0xb70] sm:$0xff]
    %v6416 = vld [vmem:[#allocation14 + $0xb78] sm:$0xff]
    %v6417 = vld [vmem:[#allocation14 + $0xb80] sm:$0xff]
    %v6418 = vld [vmem:[#allocation14 + $0xb88] sm:$0xff]
    %v6419 = vld [vmem:[#allocation14 + $0xb90] sm:$0xff]
    %v6420 = vld [vmem:[#allocation14 + $0xb98] sm:$0xff]
    %v6421 = vld [vmem:[#allocation14 + $0xba0] sm:$0xff]
    %v6422 = vld [vmem:[#allocation14 + $0xba8] sm:$0xff]
    %v6423 = vld [vmem:[#allocation14 + $0xbb0] sm:$0xff]
    %v6424 = vld [vmem:[#allocation14 + $0xbb8] sm:$0xff]
    %v6425 = vld [vmem:[#allocation14 + $0xbc0] sm:$0xff]
    %v6426 = vld [vmem:[#allocation14 + $0xbc8] sm:$0xff]
    %v6427 = vld [vmem:[#allocation14 + $0xbd0] sm:$0xff]
    %v6428 = vld [vmem:[#allocation14 + $0xbd8] sm:$0xff]
    %v6429 = vld [vmem:[#allocation14 + $0xbe0] sm:$0xff]
    %v6430 = vld [vmem:[#allocation14 + $0xbe8] sm:$0xff]
    %v6431 = vld [vmem:[#allocation14 + $0xbf0] sm:$0xff]
    %v6432 = vld [vmem:[#allocation14 + $0xbf8] sm:$0xff]
    %v6433 = vld [vmem:[#allocation14 + $0xc00] sm:$0xff]
    %v6434 = vld [vmem:[#allocation14 + $0xc08] sm:$0xff]
    %v6435 = vld [vmem:[#allocation14 + $0xc10] sm:$0xff]
    %v6436 = vld [vmem:[#allocation14 + $0xc18] sm:$0xff]
    %v6437 = vld [vmem:[#allocation14 + $0xc20] sm:$0xff]
    %v6438 = vld [vmem:[#allocation14 + $0xc28] sm:$0xff]
    %v6439 = vld [vmem:[#allocation14 + $0xc30] sm:$0xff]
    %v6440 = vld [vmem:[#allocation14 + $0xc38] sm:$0xff]
    %v6441 = vld [vmem:[#allocation14 + $0xc40] sm:$0xff]
    %v6442 = vld [vmem:[#allocation14 + $0xc48] sm:$0xff]
    %v6443 = vld [vmem:[#allocation14 + $0xc50] sm:$0xff]
    %v6444 = vld [vmem:[#allocation14 + $0xc58] sm:$0xff]
    %v6445 = vld [vmem:[#allocation14 + $0xc60] sm:$0xff]
    %v6446 = vld [vmem:[#allocation14 + $0xc68] sm:$0xff]
    %v6447 = vld [vmem:[#allocation14 + $0xc70] sm:$0xff]
    %v6448 = vld [vmem:[#allocation14 + $0xc78] sm:$0xff]
    %v6449 = vld [vmem:[#allocation14 + $0xc80] sm:$0xff]
    %v6450 = vld [vmem:[#allocation14 + $0xc88] sm:$0xff]
    %v6451 = vld [vmem:[#allocation14 + $0xc90] sm:$0xff]
    %v6452 = vld [vmem:[#allocation14 + $0xc98] sm:$0xff]
    %v6453 = vld [vmem:[#allocation14 + $0xca0] sm:$0xff]
    %v6454 = vld [vmem:[#allocation14 + $0xca8] sm:$0xff]
    %v6455 = vld [vmem:[#allocation14 + $0xcb0] sm:$0xff]
    %v6456 = vld [vmem:[#allocation14 + $0xcb8] sm:$0xff]
    %v6457 = vld [vmem:[#allocation14 + $0xcc0] sm:$0xff]
    %v6458 = vld [vmem:[#allocation14 + $0xcc8] sm:$0xff]
    %v6459 = vld [vmem:[#allocation14 + $0xcd0] sm:$0xff]
    %v6460 = vld [vmem:[#allocation14 + $0xcd8] sm:$0xff]
    %v6461 = vld [vmem:[#allocation14 + $0xce0] sm:$0xff]
    %v6462 = vld [vmem:[#allocation14 + $0xce8] sm:$0xff]
    %v6463 = vld [vmem:[#allocation14 + $0xcf0] sm:$0xff]
    %v6464 = vld [vmem:[#allocation14 + $0xcf8] sm:$0xff]
    %v6465 = vld [vmem:[#allocation14 + $0xd00] sm:$0xff]
    %v6466 = vld [vmem:[#allocation14 + $0xd08] sm:$0xff]
    %v6467 = vld [vmem:[#allocation14 + $0xd10] sm:$0xff]
    %v6468 = vld [vmem:[#allocation14 + $0xd18] sm:$0xff]
    %v6469 = vld [vmem:[#allocation14 + $0xd20] sm:$0xff]
    %v6470 = vld [vmem:[#allocation14 + $0xd28] sm:$0xff]
    %v6471 = vld [vmem:[#allocation14 + $0xd30] sm:$0xff]
    %v6472 = vld [vmem:[#allocation14 + $0xd38] sm:$0xff]
    %v6473 = vld [vmem:[#allocation14 + $0xd40] sm:$0xff]
    %v6474 = vld [vmem:[#allocation14 + $0xd48] sm:$0xff]
    %v6475 = vld [vmem:[#allocation14 + $0xd50] sm:$0xff]
    %v6476 = vld [vmem:[#allocation14 + $0xd58] sm:$0xff]
    %v6477 = vld [vmem:[#allocation14 + $0xd60] sm:$0xff]
    %v6478 = vld [vmem:[#allocation14 + $0xd68] sm:$0xff]
    %v6479 = vld [vmem:[#allocation14 + $0xd70] sm:$0xff]
    %v6480 = vld [vmem:[#allocation14 + $0xd78] sm:$0xff]
    %v6481 = vld [vmem:[#allocation14 + $0xd80] sm:$0xff]
    %v6482 = vld [vmem:[#allocation14 + $0xd88] sm:$0xff]
    %v6483 = vld [vmem:[#allocation14 + $0xd90] sm:$0xff]
    %v6484 = vld [vmem:[#allocation14 + $0xd98] sm:$0xff]
    %v6485 = vld [vmem:[#allocation14 + $0xda0] sm:$0xff]
    %v6486 = vld [vmem:[#allocation14 + $0xda8] sm:$0xff]
    %v6487 = vld [vmem:[#allocation14 + $0xdb0] sm:$0xff]
    %v6488 = vld [vmem:[#allocation14 + $0xdb8] sm:$0xff]
    %v6489 = vld [vmem:[#allocation14 + $0xdc0] sm:$0xff]
    %v6490 = vld [vmem:[#allocation14 + $0xdc8] sm:$0xff]
    %v6491 = vld [vmem:[#allocation14 + $0xdd0] sm:$0xff]
    %v6492 = vld [vmem:[#allocation14 + $0xdd8] sm:$0xff]
    %v6493 = vld [vmem:[#allocation14 + $0xde0] sm:$0xff]
    %v6494 = vld [vmem:[#allocation14 + $0xde8] sm:$0xff]
    %v6495 = vld [vmem:[#allocation14 + $0xdf0] sm:$0xff]
    %v6496 = vld [vmem:[#allocation14 + $0xdf8] sm:$0xff]
    %v6497 = vld [vmem:[#allocation14 + $0xe00] sm:$0xff]
    %v6498 = vld [vmem:[#allocation14 + $0xe08] sm:$0xff]
    %v6499 = vld [vmem:[#allocation14 + $0xe10] sm:$0xff]
    %v6500 = vld [vmem:[#allocation14 + $0xe18] sm:$0xff]
    %v6501 = vld [vmem:[#allocation14 + $0xe20] sm:$0xff]
    %v6502 = vld [vmem:[#allocation14 + $0xe28] sm:$0xff]
    %v6503 = vld [vmem:[#allocation14 + $0xe30] sm:$0xff]
    %v6504 = vld [vmem:[#allocation14 + $0xe38] sm:$0xff]
    %v6505 = vld [vmem:[#allocation14 + $0xe40] sm:$0xff]
    %v6506 = vld [vmem:[#allocation14 + $0xe48] sm:$0xff]
    %v6507 = vld [vmem:[#allocation14 + $0xe50] sm:$0xff]
    %v6508 = vld [vmem:[#allocation14 + $0xe58] sm:$0xff]
    %v6509 = vld [vmem:[#allocation14 + $0xe60] sm:$0xff]
    %v6510 = vld [vmem:[#allocation14 + $0xe68] sm:$0xff]
    %v6511 = vld [vmem:[#allocation14 + $0xe70] sm:$0xff]
    %v6512 = vld [vmem:[#allocation14 + $0xe78] sm:$0xff]
    %v6513 = vld [vmem:[#allocation14 + $0xe80] sm:$0xff]
    %v6514 = vld [vmem:[#allocation14 + $0xe88] sm:$0xff]
    %v6515 = vld [vmem:[#allocation14 + $0xe90] sm:$0xff]
    %v6516 = vld [vmem:[#allocation14 + $0xe98] sm:$0xff]
    %v6517 = vld [vmem:[#allocation14 + $0xea0] sm:$0xff]
    %v6518 = vld [vmem:[#allocation14 + $0xea8] sm:$0xff]
    %v6519 = vld [vmem:[#allocation14 + $0xeb0] sm:$0xff]
    %v6520 = vld [vmem:[#allocation14 + $0xeb8] sm:$0xff]
    %v6521 = vld [vmem:[#allocation14 + $0xec0] sm:$0xff]
    %v6522 = vld [vmem:[#allocation14 + $0xec8] sm:$0xff]
    %v6523 = vld [vmem:[#allocation14 + $0xed0] sm:$0xff]
    %v6524 = vld [vmem:[#allocation14 + $0xed8] sm:$0xff]
    %v6525 = vld [vmem:[#allocation14 + $0xee0] sm:$0xff]
    %v6526 = vld [vmem:[#allocation14 + $0xee8] sm:$0xff]
    %v6527 = vld [vmem:[#allocation14 + $0xef0] sm:$0xff]
    %v6528 = vld [vmem:[#allocation14 + $0xef8] sm:$0xff]
    %v6529 = vld [vmem:[#allocation14 + $0xf00] sm:$0xff]
    %v6530 = vld [vmem:[#allocation14 + $0xf08] sm:$0xff]
    %v6531 = vld [vmem:[#allocation14 + $0xf10] sm:$0xff]
    %v6532 = vld [vmem:[#allocation14 + $0xf18] sm:$0xff]
    %v6533 = vld [vmem:[#allocation14 + $0xf20] sm:$0xff]
    %v6534 = vld [vmem:[#allocation14 + $0xf28] sm:$0xff]
    %v6535 = vld [vmem:[#allocation14 + $0xf30] sm:$0xff]
    %v6536 = vld [vmem:[#allocation14 + $0xf38] sm:$0xff]
    %v6537 = vld [vmem:[#allocation14 + $0xf40] sm:$0xff]
    %v6538 = vld [vmem:[#allocation14 + $0xf48] sm:$0xff]
    %v6539 = vld [vmem:[#allocation14 + $0xf50] sm:$0xff]
    %v6540 = vld [vmem:[#allocation14 + $0xf58] sm:$0xff]
    %v6541 = vld [vmem:[#allocation14 + $0xf60] sm:$0xff]
    %v6542 = vld [vmem:[#allocation14 + $0xf68] sm:$0xff]
    %v6543 = vld [vmem:[#allocation14 + $0xf70] sm:$0xff]
    %v6544 = vld [vmem:[#allocation14 + $0xf78] sm:$0xff]
    %v6545 = vld [vmem:[#allocation14 + $0xf80] sm:$0xff]
    %v6546 = vld [vmem:[#allocation14 + $0xf88] sm:$0xff]
    %v6547 = vld [vmem:[#allocation14 + $0xf90] sm:$0xff]
    %v6548 = vld [vmem:[#allocation14 + $0xf98] sm:$0xff]
    %v6549 = vld [vmem:[#allocation14 + $0xfa0] sm:$0xff]
    %v6550 = vld [vmem:[#allocation14 + $0xfa8] sm:$0xff]
    %v6551 = vld [vmem:[#allocation14 + $0xfb0] sm:$0xff]
    %v6552 = vld [vmem:[#allocation14 + $0xfb8] sm:$0xff]
    %v6553 = vld [vmem:[#allocation14 + $0xfc0] sm:$0xff]
    %v6554 = vld [vmem:[#allocation14 + $0xfc8] sm:$0xff]
    %v6555 = vld [vmem:[#allocation14 + $0xfd0] sm:$0xff]
    %v6556 = vld [vmem:[#allocation14 + $0xfd8] sm:$0xff]
    %v6557 = vld [vmem:[#allocation14 + $0xfe0] sm:$0xff]
    %v6558 = vld [vmem:[#allocation14 + $0xfe8] sm:$0xff]
    %v6559 = vld [vmem:[#allocation14 + $0xff0] sm:$0xff]
    %v6560 = vld [vmem:[#allocation14 + $0xff8] sm:$0xff]
    %v6561 = vld [vmem:[#allocation14 + $0x1000] sm:$0xff]
    %v6562 = vld [vmem:[#allocation14 + $0x1008] sm:$0xff]
    %v6563 = vld [vmem:[#allocation14 + $0x1010] sm:$0xff]
    %v6564 = vld [vmem:[#allocation14 + $0x1018] sm:$0xff]
    %v6565 = vld [vmem:[#allocation14 + $0x1020] sm:$0xff]
    %v6566 = vld [vmem:[#allocation14 + $0x1028] sm:$0xff]
    %v6567 = vld [vmem:[#allocation14 + $0x1030] sm:$0xff]
    %v6568 = vld [vmem:[#allocation14 + $0x1038] sm:$0xff]
    %v6569 = vld [vmem:[#allocation14 + $0x1040] sm:$0xff]
    %v6570 = vld [vmem:[#allocation14 + $0x1048] sm:$0xff]
    %v6571 = vld [vmem:[#allocation14 + $0x1050] sm:$0xff]
    %v6572 = vld [vmem:[#allocation14 + $0x1058] sm:$0xff]
    %v6573 = vld [vmem:[#allocation14 + $0x1060] sm:$0xff]
    %v6574 = vld [vmem:[#allocation14 + $0x1068] sm:$0xff]
    %v6575 = vld [vmem:[#allocation14 + $0x1070] sm:$0xff]
    %v6576 = vld [vmem:[#allocation14 + $0x1078] sm:$0xff]
    %v6577 = vld [vmem:[#allocation14 + $0x1080] sm:$0xff]
    %v6578 = vld [vmem:[#allocation14 + $0x1088] sm:$0xff]
    %v6579 = vld [vmem:[#allocation14 + $0x1090] sm:$0xff]
    %v6580 = vld [vmem:[#allocation14 + $0x1098] sm:$0xff]
    %v6581 = vld [vmem:[#allocation14 + $0x10a0] sm:$0xff]
    %v6582 = vld [vmem:[#allocation14 + $0x10a8] sm:$0xff]
    %v6583 = vld [vmem:[#allocation14 + $0x10b0] sm:$0xff]
    %v6584 = vld [vmem:[#allocation14 + $0x10b8] sm:$0xff]
    %v6585 = vld [vmem:[#allocation14 + $0x10c0] sm:$0xff]
    %v6586 = vld [vmem:[#allocation14 + $0x10c8] sm:$0xff]
    %v6587 = vld [vmem:[#allocation14 + $0x10d0] sm:$0xff]
    %v6588 = vld [vmem:[#allocation14 + $0x10d8] sm:$0xff]
    %v6589 = vld [vmem:[#allocation14 + $0x10e0] sm:$0xff]
    %v6590 = vld [vmem:[#allocation14 + $0x10e8] sm:$0xff]
    %v6591 = vld [vmem:[#allocation14 + $0x10f0] sm:$0xff]
    %v6592 = vld [vmem:[#allocation14 + $0x10f8] sm:$0xff]
    %v6593 = vld [vmem:[#allocation14 + $0x1100] sm:$0xff]
    %v6594 = vld [vmem:[#allocation14 + $0x1108] sm:$0xff]
    %v6595 = vld [vmem:[#allocation14 + $0x1110] sm:$0xff]
    %v6596 = vld [vmem:[#allocation14 + $0x1118] sm:$0xff]
    %v6597 = vld [vmem:[#allocation14 + $0x1120] sm:$0xff]
    %v6598 = vld [vmem:[#allocation14 + $0x1128] sm:$0xff]
    %v6599 = vld [vmem:[#allocation14 + $0x1130] sm:$0xff]
    %v6600 = vld [vmem:[#allocation14 + $0x1138] sm:$0xff]
    %v6601 = vld [vmem:[#allocation14 + $0x1140] sm:$0xff]
    %v6602 = vld [vmem:[#allocation14 + $0x1148] sm:$0xff]
    %v6603 = vld [vmem:[#allocation14 + $0x1150] sm:$0xff]
    %v6604 = vld [vmem:[#allocation14 + $0x1158] sm:$0xff]
    %v6605 = vld [vmem:[#allocation14 + $0x1160] sm:$0xff]
    %v6606 = vld [vmem:[#allocation14 + $0x1168] sm:$0xff]
    %v6607 = vld [vmem:[#allocation14 + $0x1170] sm:$0xff]
    %v6608 = vld [vmem:[#allocation14 + $0x1178] sm:$0xff]
    %v6609 = vld [vmem:[#allocation14 + $0x1180] sm:$0xff]
    %v6610 = vld [vmem:[#allocation14 + $0x1188] sm:$0xff]
    %v6611 = vld [vmem:[#allocation14 + $0x1190] sm:$0xff]
    %v6612 = vld [vmem:[#allocation14 + $0x1198] sm:$0xff]
    %v6613 = vld [vmem:[#allocation14 + $0x11a0] sm:$0xff]
    %v6614 = vld [vmem:[#allocation14 + $0x11a8] sm:$0xff]
    %v6615 = vld [vmem:[#allocation14 + $0x11b0] sm:$0xff]
    %v6616 = vld [vmem:[#allocation14 + $0x11b8] sm:$0xff]
    %v6617 = vld [vmem:[#allocation14 + $0x11c0] sm:$0xff]
    %v6618 = vld [vmem:[#allocation14 + $0x11c8] sm:$0xff]
    %v6619 = vld [vmem:[#allocation14 + $0x11d0] sm:$0xff]
    %v6620 = vld [vmem:[#allocation14 + $0x11d8] sm:$0xff]
    %v6621 = vld [vmem:[#allocation14 + $0x11e0] sm:$0xff]
    %v6622 = vld [vmem:[#allocation14 + $0x11e8] sm:$0xff]
    %v6623 = vld [vmem:[#allocation14 + $0x11f0] sm:$0xff]
    %v6624 = vld [vmem:[#allocation14 + $0x11f8] sm:$0xff]
    %v6625 = vld [vmem:[#allocation14 + $0x1200] sm:$0xff]
    %v6626 = vld [vmem:[#allocation14 + $0x1208] sm:$0xff]
    %v6627 = vld [vmem:[#allocation14 + $0x1210] sm:$0xff]
    %v6628 = vld [vmem:[#allocation14 + $0x1218] sm:$0xff]
    %v6629 = vld [vmem:[#allocation14 + $0x1220] sm:$0xff]
    %v6630 = vld [vmem:[#allocation14 + $0x1228] sm:$0xff]
    %v6631 = vld [vmem:[#allocation14 + $0x1230] sm:$0xff]
    %v6632 = vld [vmem:[#allocation14 + $0x1238] sm:$0xff]
    %v6633 = vld [vmem:[#allocation14 + $0x1240] sm:$0xff]
    %v6634 = vld [vmem:[#allocation14 + $0x1248] sm:$0xff]
    %v6635 = vld [vmem:[#allocation14 + $0x1250] sm:$0xff]
    %v6636 = vld [vmem:[#allocation14 + $0x1258] sm:$0xff]
    %v6637 = vld [vmem:[#allocation14 + $0x1260] sm:$0xff]
    %v6638 = vld [vmem:[#allocation14 + $0x1268] sm:$0xff]
    %v6639 = vld [vmem:[#allocation14 + $0x1270] sm:$0xff]
    %v6640 = vld [vmem:[#allocation14 + $0x1278] sm:$0xff]
    %v6641 = vld [vmem:[#allocation14 + $0x1280] sm:$0xff]
    %v6642 = vld [vmem:[#allocation14 + $0x1288] sm:$0xff]
    %v6643 = vld [vmem:[#allocation14 + $0x1290] sm:$0xff]
    %v6644 = vld [vmem:[#allocation14 + $0x1298] sm:$0xff]
    %v6645 = vld [vmem:[#allocation14 + $0x12a0] sm:$0xff]
    %v6646 = vld [vmem:[#allocation14 + $0x12a8] sm:$0xff]
    %v6647 = vld [vmem:[#allocation14 + $0x12b0] sm:$0xff]
    %v6648 = vld [vmem:[#allocation14 + $0x12b8] sm:$0xff]
    %v6649 = vld [vmem:[#allocation14 + $0x12c0] sm:$0xff]
    %v6650 = vld [vmem:[#allocation14 + $0x12c8] sm:$0xff]
    %v6651 = vld [vmem:[#allocation14 + $0x12d0] sm:$0xff]
    %v6652 = vld [vmem:[#allocation14 + $0x12d8] sm:$0xff]
    %v6653 = vld [vmem:[#allocation14 + $0x12e0] sm:$0xff]
    %v6654 = vld [vmem:[#allocation14 + $0x12e8] sm:$0xff]
    %v6655 = vld [vmem:[#allocation14 + $0x12f0] sm:$0xff]
    %v6656 = vld [vmem:[#allocation14 + $0x12f8] sm:$0xff]
    %v6657 = vld [vmem:[#allocation14 + $0x1300] sm:$0xff]
    %v6658 = vld [vmem:[#allocation14 + $0x1308] sm:$0xff]
    %v6659 = vld [vmem:[#allocation14 + $0x1310] sm:$0xff]
    %v6660 = vld [vmem:[#allocation14 + $0x1318] sm:$0xff]
    %v6661 = vld [vmem:[#allocation14 + $0x1320] sm:$0xff]
    %v6662 = vld [vmem:[#allocation14 + $0x1328] sm:$0xff]
    %v6663 = vld [vmem:[#allocation14 + $0x1330] sm:$0xff]
    %v6664 = vld [vmem:[#allocation14 + $0x1338] sm:$0xff]
    %v6665 = vld [vmem:[#allocation14 + $0x1340] sm:$0xff]
    %v6666 = vld [vmem:[#allocation14 + $0x1348] sm:$0xff]
    %v6667 = vld [vmem:[#allocation14 + $0x1350] sm:$0xff]
    %v6668 = vld [vmem:[#allocation14 + $0x1358] sm:$0xff]
    %v6669 = vld [vmem:[#allocation14 + $0x1360] sm:$0xff]
    %v6670 = vld [vmem:[#allocation14 + $0x1368] sm:$0xff]
    %v6671 = vld [vmem:[#allocation14 + $0x1370] sm:$0xff]
    %v6672 = vld [vmem:[#allocation14 + $0x1378] sm:$0xff]
    %v6673 = vld [vmem:[#allocation14 + $0x1380] sm:$0xff]
    %v6674 = vld [vmem:[#allocation14 + $0x1388] sm:$0xff]
    %v6675 = vld [vmem:[#allocation14 + $0x1390] sm:$0xff]
    %v6676 = vld [vmem:[#allocation14 + $0x1398] sm:$0xff]
    %v6677 = vld [vmem:[#allocation14 + $0x13a0] sm:$0xff]
    %v6678 = vld [vmem:[#allocation14 + $0x13a8] sm:$0xff]
    %v6679 = vld [vmem:[#allocation14 + $0x13b0] sm:$0xff]
    %v6680 = vld [vmem:[#allocation14 + $0x13b8] sm:$0xff]
    %v6681 = vld [vmem:[#allocation14 + $0x13c0] sm:$0xff]
    %v6682 = vld [vmem:[#allocation14 + $0x13c8] sm:$0xff]
    %v6683 = vld [vmem:[#allocation14 + $0x13d0] sm:$0xff]
    %v6684 = vld [vmem:[#allocation14 + $0x13d8] sm:$0xff]
    %v6685 = vld [vmem:[#allocation14 + $0x13e0] sm:$0xff]
    %v6686 = vld [vmem:[#allocation14 + $0x13e8] sm:$0xff]
    %v6687 = vld [vmem:[#allocation14 + $0x13f0] sm:$0xff]
    %v6688 = vld [vmem:[#allocation14 + $0x13f8] sm:$0xff]
    %v6689 = vld [vmem:[#allocation14 + $0x1400] sm:$0xff]
    %v6690 = vld [vmem:[#allocation14 + $0x1408] sm:$0xff]
    %v6691 = vld [vmem:[#allocation14 + $0x1410] sm:$0xff]
    %v6692 = vld [vmem:[#allocation14 + $0x1418] sm:$0xff]
    %v6693 = vld [vmem:[#allocation14 + $0x1420] sm:$0xff]
    %v6694 = vld [vmem:[#allocation14 + $0x1428] sm:$0xff]
    %v6695 = vld [vmem:[#allocation14 + $0x1430] sm:$0xff]
    %v6696 = vld [vmem:[#allocation14 + $0x1438] sm:$0xff]
    %v6697 = vld [vmem:[#allocation14 + $0x1440] sm:$0xff]
    %v6698 = vld [vmem:[#allocation14 + $0x1448] sm:$0xff]
    %v6699 = vld [vmem:[#allocation14 + $0x1450] sm:$0xff]
    %v6700 = vld [vmem:[#allocation14 + $0x1458] sm:$0xff]
    %v6701 = vld [vmem:[#allocation14 + $0x1460] sm:$0xff]
    %v6702 = vld [vmem:[#allocation14 + $0x1468] sm:$0xff]
    %v6703 = vld [vmem:[#allocation14 + $0x1470] sm:$0xff]
    %v6704 = vld [vmem:[#allocation14 + $0x1478] sm:$0xff]
    %v6705 = vld [vmem:[#allocation14 + $0x1480] sm:$0xff]
    %v6706 = vld [vmem:[#allocation14 + $0x1488] sm:$0xff]
    %v6707 = vld [vmem:[#allocation14 + $0x1490] sm:$0xff]
    %v6708 = vld [vmem:[#allocation14 + $0x1498] sm:$0xff]
    %v6709 = vld [vmem:[#allocation14 + $0x14a0] sm:$0xff]
    %v6710 = vld [vmem:[#allocation14 + $0x14a8] sm:$0xff]
    %v6711 = vld [vmem:[#allocation14 + $0x14b0] sm:$0xff]
    %v6712 = vld [vmem:[#allocation14 + $0x14b8] sm:$0xff]
    %v6713 = vld [vmem:[#allocation14 + $0x14c0] sm:$0xff]
    %v6714 = vld [vmem:[#allocation14 + $0x14c8] sm:$0xff]
    %v6715 = vld [vmem:[#allocation14 + $0x14d0] sm:$0xff]
    %v6716 = vld [vmem:[#allocation14 + $0x14d8] sm:$0xff]
    %v6717 = vld [vmem:[#allocation14 + $0x14e0] sm:$0xff]
    %v6718 = vld [vmem:[#allocation14 + $0x14e8] sm:$0xff]
    %v6719 = vld [vmem:[#allocation14 + $0x14f0] sm:$0xff]
    %v6720 = vld [vmem:[#allocation14 + $0x14f8] sm:$0xff]
    %v6721 = vld [vmem:[#allocation14 + $0x1500] sm:$0xff]
    %v6722 = vld [vmem:[#allocation14 + $0x1508] sm:$0xff]
    %v6723 = vld [vmem:[#allocation14 + $0x1510] sm:$0xff]
    %v6724 = vld [vmem:[#allocation14 + $0x1518] sm:$0xff]
    %v6725 = vld [vmem:[#allocation14 + $0x1520] sm:$0xff]
    %v6726 = vld [vmem:[#allocation14 + $0x1528] sm:$0xff]
    %v6727 = vld [vmem:[#allocation14 + $0x1530] sm:$0xff]
    %v6728 = vld [vmem:[#allocation14 + $0x1538] sm:$0xff]
    %v6729 = vld [vmem:[#allocation14 + $0x1540] sm:$0xff]
    %v6730 = vld [vmem:[#allocation14 + $0x1548] sm:$0xff]
    %v6731 = vld [vmem:[#allocation14 + $0x1550] sm:$0xff]
    %v6732 = vld [vmem:[#allocation14 + $0x1558] sm:$0xff]
    %v6733 = vld [vmem:[#allocation14 + $0x1560] sm:$0xff]
    %v6734 = vld [vmem:[#allocation14 + $0x1568] sm:$0xff]
    %v6735 = vld [vmem:[#allocation14 + $0x1570] sm:$0xff]
    %v6736 = vld [vmem:[#allocation14 + $0x1578] sm:$0xff]
    %v6737 = vld [vmem:[#allocation14 + $0x1580] sm:$0xff]
    %v6738 = vld [vmem:[#allocation14 + $0x1588] sm:$0xff]
    %v6739 = vld [vmem:[#allocation14 + $0x1590] sm:$0xff]
    %v6740 = vld [vmem:[#allocation14 + $0x1598] sm:$0xff]
    %v6741 = vld [vmem:[#allocation14 + $0x15a0] sm:$0xff]
    %v6742 = vld [vmem:[#allocation14 + $0x15a8] sm:$0xff]
    %v6743 = vld [vmem:[#allocation14 + $0x15b0] sm:$0xff]
    %v6744 = vld [vmem:[#allocation14 + $0x15b8] sm:$0xff]
    %v6745 = vld [vmem:[#allocation14 + $0x15c0] sm:$0xff]
    %v6746 = vld [vmem:[#allocation14 + $0x15c8] sm:$0xff]
    %v6747 = vld [vmem:[#allocation14 + $0x15d0] sm:$0xff]
    %v6748 = vld [vmem:[#allocation14 + $0x15d8] sm:$0xff]
    %v6749 = vld [vmem:[#allocation14 + $0x15e0] sm:$0xff]
    %v6750 = vld [vmem:[#allocation14 + $0x15e8] sm:$0xff]
    %v6751 = vld [vmem:[#allocation14 + $0x15f0] sm:$0xff]
    %v6752 = vld [vmem:[#allocation14 + $0x15f8] sm:$0xff]
    %v6753 = vld [vmem:[#allocation14 + $0x1600] sm:$0xff]
    %v6754 = vld [vmem:[#allocation14 + $0x1608] sm:$0xff]
    %v6755 = vld [vmem:[#allocation14 + $0x1610] sm:$0xff]
    %v6756 = vld [vmem:[#allocation14 + $0x1618] sm:$0xff]
    %v6757 = vld [vmem:[#allocation14 + $0x1620] sm:$0xff]
    %v6758 = vld [vmem:[#allocation14 + $0x1628] sm:$0xff]
    %v6759 = vld [vmem:[#allocation14 + $0x1630] sm:$0xff]
    %v6760 = vld [vmem:[#allocation14 + $0x1638] sm:$0xff]
    %v6761 = vld [vmem:[#allocation14 + $0x1640] sm:$0xff]
    %v6762 = vld [vmem:[#allocation14 + $0x1648] sm:$0xff]
    %v6763 = vld [vmem:[#allocation14 + $0x1650] sm:$0xff]
    %v6764 = vld [vmem:[#allocation14 + $0x1658] sm:$0xff]
    %v6765 = vld [vmem:[#allocation14 + $0x1660] sm:$0xff]
    %v6766 = vld [vmem:[#allocation14 + $0x1668] sm:$0xff]
    %v6767 = vld [vmem:[#allocation14 + $0x1670] sm:$0xff]
    %v6768 = vld [vmem:[#allocation14 + $0x1678] sm:$0xff]
    %v6769 = vld [vmem:[#allocation14 + $0x1680] sm:$0xff]
    %v6770 = vld [vmem:[#allocation14 + $0x1688] sm:$0xff]
    %v6771 = vld [vmem:[#allocation14 + $0x1690] sm:$0xff]
    %v6772 = vld [vmem:[#allocation14 + $0x1698] sm:$0xff]
    %v6773 = vld [vmem:[#allocation14 + $0x16a0] sm:$0xff]
    %v6774 = vld [vmem:[#allocation14 + $0x16a8] sm:$0xff]
    %v6775 = vld [vmem:[#allocation14 + $0x16b0] sm:$0xff]
    %v6776 = vld [vmem:[#allocation14 + $0x16b8] sm:$0xff]
    %v6777 = vld [vmem:[#allocation14 + $0x16c0] sm:$0xff]
    %v6778 = vld [vmem:[#allocation14 + $0x16c8] sm:$0xff]
    %v6779 = vld [vmem:[#allocation14 + $0x16d0] sm:$0xff]
    %v6780 = vld [vmem:[#allocation14 + $0x16d8] sm:$0xff]
    %v6781 = vld [vmem:[#allocation14 + $0x16e0] sm:$0xff]
    %v6782 = vld [vmem:[#allocation14 + $0x16e8] sm:$0xff]
    %v6783 = vld [vmem:[#allocation14 + $0x16f0] sm:$0xff]
    %v6784 = vld [vmem:[#allocation14 + $0x16f8] sm:$0xff]
    %v6785 = vld [vmem:[#allocation14 + $0x1700] sm:$0xff]
    %v6786 = vld [vmem:[#allocation14 + $0x1708] sm:$0xff]
    %v6787 = vld [vmem:[#allocation14 + $0x1710] sm:$0xff]
    %v6788 = vld [vmem:[#allocation14 + $0x1718] sm:$0xff]
    %v6789 = vld [vmem:[#allocation14 + $0x1720] sm:$0xff]
    %v6790 = vld [vmem:[#allocation14 + $0x1728] sm:$0xff]
    %v6791 = vld [vmem:[#allocation14 + $0x1730] sm:$0xff]
    %v6792 = vld [vmem:[#allocation14 + $0x1738] sm:$0xff]
    %v6793 = vld [vmem:[#allocation14 + $0x1740] sm:$0xff]
    %v6794 = vld [vmem:[#allocation14 + $0x1748] sm:$0xff]
    %v6795 = vld [vmem:[#allocation14 + $0x1750] sm:$0xff]
    %v6796 = vld [vmem:[#allocation14 + $0x1758] sm:$0xff]
    %v6797 = vld [vmem:[#allocation14 + $0x1760] sm:$0xff]
    %v6798 = vld [vmem:[#allocation14 + $0x1768] sm:$0xff]
    %v6799 = vld [vmem:[#allocation14 + $0x1770] sm:$0xff]
    %v6800 = vld [vmem:[#allocation14 + $0x1778] sm:$0xff]
    %v6801 = vld [vmem:[#allocation14 + $0x1780] sm:$0xff]
    %v6802 = vld [vmem:[#allocation14 + $0x1788] sm:$0xff]
    %v6803 = vld [vmem:[#allocation14 + $0x1790] sm:$0xff]
    %v6804 = vld [vmem:[#allocation14 + $0x1798] sm:$0xff]
    %v6805 = vld [vmem:[#allocation14 + $0x17a0] sm:$0xff]
    %v6806 = vld [vmem:[#allocation14 + $0x17a8] sm:$0xff]
    %v6807 = vld [vmem:[#allocation14 + $0x17b0] sm:$0xff]
    %v6808 = vld [vmem:[#allocation14 + $0x17b8] sm:$0xff]
    %v6809 = vld [vmem:[#allocation14 + $0x17c0] sm:$0xff]
    %v6810 = vld [vmem:[#allocation14 + $0x17c8] sm:$0xff]
    %v6811 = vld [vmem:[#allocation14 + $0x17d0] sm:$0xff]
    %v6812 = vld [vmem:[#allocation14 + $0x17d8] sm:$0xff]
    %v6813 = vld [vmem:[#allocation14 + $0x17e0] sm:$0xff]
    %v6814 = vld [vmem:[#allocation14 + $0x17e8] sm:$0xff]
    %v6815 = vld [vmem:[#allocation14 + $0x17f0] sm:$0xff]
    %v6816 = vld [vmem:[#allocation14 + $0x17f8] sm:$0xff]
    %v6817 = vld [vmem:[#allocation14 + $0x1800] sm:$0xff]
    %v6818 = vld [vmem:[#allocation14 + $0x1808] sm:$0xff]
    %v6819 = vld [vmem:[#allocation14 + $0x1810] sm:$0xff]
    %v6820 = vld [vmem:[#allocation14 + $0x1818] sm:$0xff]
    %v6821 = vld [vmem:[#allocation14 + $0x1820] sm:$0xff]
    %v6822 = vld [vmem:[#allocation14 + $0x1828] sm:$0xff]
    %v6823 = vld [vmem:[#allocation14 + $0x1830] sm:$0xff]
    %v6824 = vld [vmem:[#allocation14 + $0x1838] sm:$0xff]
    %v6825 = vld [vmem:[#allocation14 + $0x1840] sm:$0xff]
    %v6826 = vld [vmem:[#allocation14 + $0x1848] sm:$0xff]
    %v6827 = vld [vmem:[#allocation14 + $0x1850] sm:$0xff]
    %v6828 = vld [vmem:[#allocation14 + $0x1858] sm:$0xff]
    %v6829 = vld [vmem:[#allocation14 + $0x1860] sm:$0xff]
    %v6830 = vld [vmem:[#allocation14 + $0x1868] sm:$0xff]
    %v6831 = vld [vmem:[#allocation14 + $0x1870] sm:$0xff]
    %v6832 = vld [vmem:[#allocation14 + $0x1878] sm:$0xff]
    %v6833 = vld [vmem:[#allocation14 + $0x1880] sm:$0xff]
    %v6834 = vld [vmem:[#allocation14 + $0x1888] sm:$0xff]
    %v6835 = vld [vmem:[#allocation14 + $0x1890] sm:$0xff]
    %v6836 = vld [vmem:[#allocation14 + $0x1898] sm:$0xff]
    %v6837 = vld [vmem:[#allocation14 + $0x18a0] sm:$0xff]
    %v6838 = vld [vmem:[#allocation14 + $0x18a8] sm:$0xff]
    %v6839 = vld [vmem:[#allocation14 + $0x18b0] sm:$0xff]
    %v6840 = vld [vmem:[#allocation14 + $0x18b8] sm:$0xff]
    %v6841 = vld [vmem:[#allocation14 + $0x18c0] sm:$0xff]
    %v6842 = vld [vmem:[#allocation14 + $0x18c8] sm:$0xff]
    %v6843 = vld [vmem:[#allocation14 + $0x18d0] sm:$0xff]
    %v6844 = vld [vmem:[#allocation14 + $0x18d8] sm:$0xff]
    %v6845 = vld [vmem:[#allocation14 + $0x18e0] sm:$0xff]
    %v6846 = vld [vmem:[#allocation14 + $0x18e8] sm:$0xff]
    %v6847 = vld [vmem:[#allocation14 + $0x18f0] sm:$0xff]
    %v6848 = vld [vmem:[#allocation14 + $0x18f8] sm:$0xff]
    %v6849 = vld [vmem:[#allocation14 + $0x1900] sm:$0xff]
    %v6850 = vld [vmem:[#allocation14 + $0x1908] sm:$0xff]
    %v6851 = vld [vmem:[#allocation14 + $0x1910] sm:$0xff]
    %v6852 = vld [vmem:[#allocation14 + $0x1918] sm:$0xff]
    %v6853 = vld [vmem:[#allocation14 + $0x1920] sm:$0xff]
    %v6854 = vld [vmem:[#allocation14 + $0x1928] sm:$0xff]
    %v6855 = vld [vmem:[#allocation14 + $0x1930] sm:$0xff]
    %v6856 = vld [vmem:[#allocation14 + $0x1938] sm:$0xff]
    %v6857 = vld [vmem:[#allocation14 + $0x1940] sm:$0xff]
    %v6858 = vld [vmem:[#allocation14 + $0x1948] sm:$0xff]
    %v6859 = vld [vmem:[#allocation14 + $0x1950] sm:$0xff]
    %v6860 = vld [vmem:[#allocation14 + $0x1958] sm:$0xff]
    %v6861 = vld [vmem:[#allocation14 + $0x1960] sm:$0xff]
    %v6862 = vld [vmem:[#allocation14 + $0x1968] sm:$0xff]
    %v6863 = vld [vmem:[#allocation14 + $0x1970] sm:$0xff]
    %v6864 = vld [vmem:[#allocation14 + $0x1978] sm:$0xff]
    %v6865 = vld [vmem:[#allocation14 + $0x1980] sm:$0xff]
    %v6866 = vld [vmem:[#allocation14 + $0x1988] sm:$0xff]
    %v6867 = vld [vmem:[#allocation14 + $0x1990] sm:$0xff]
    %v6868 = vld [vmem:[#allocation14 + $0x1998] sm:$0xff]
    %v6869 = vld [vmem:[#allocation14 + $0x19a0] sm:$0xff]
    %v6870 = vld [vmem:[#allocation14 + $0x19a8] sm:$0xff]
    %v6871 = vld [vmem:[#allocation14 + $0x19b0] sm:$0xff]
    %v6872 = vld [vmem:[#allocation14 + $0x19b8] sm:$0xff]
    %v6873 = vld [vmem:[#allocation14 + $0x19c0] sm:$0xff]
    %v6874 = vld [vmem:[#allocation14 + $0x19c8] sm:$0xff]
    %v6875 = vld [vmem:[#allocation14 + $0x19d0] sm:$0xff]
    %v6876 = vld [vmem:[#allocation14 + $0x19d8] sm:$0xff]
    %v6877 = vld [vmem:[#allocation14 + $0x19e0] sm:$0xff]
    %v6878 = vld [vmem:[#allocation14 + $0x19e8] sm:$0xff]
    %v6879 = vld [vmem:[#allocation14 + $0x19f0] sm:$0xff]
    %v6880 = vld [vmem:[#allocation14 + $0x19f8] sm:$0xff]
    %v6881 = vld [vmem:[#allocation14 + $0x1a00] sm:$0xff]
    %v6882 = vld [vmem:[#allocation14 + $0x1a08] sm:$0xff]
    %v6883 = vld [vmem:[#allocation14 + $0x1a10] sm:$0xff]
    %v6884 = vld [vmem:[#allocation14 + $0x1a18] sm:$0xff]
    %v6885 = vld [vmem:[#allocation14 + $0x1a20] sm:$0xff]
    %v6886 = vld [vmem:[#allocation14 + $0x1a28] sm:$0xff]
    %v6887 = vld [vmem:[#allocation14 + $0x1a30] sm:$0xff]
    %v6888 = vld [vmem:[#allocation14 + $0x1a38] sm:$0xff]
    %v6889 = vld [vmem:[#allocation14 + $0x1a40] sm:$0xff]
    %v6890 = vld [vmem:[#allocation14 + $0x1a48] sm:$0xff]
    %v6891 = vld [vmem:[#allocation14 + $0x1a50] sm:$0xff]
    %v6892 = vld [vmem:[#allocation14 + $0x1a58] sm:$0xff]
    %v6893 = vld [vmem:[#allocation14 + $0x1a60] sm:$0xff]
    %v6894 = vld [vmem:[#allocation14 + $0x1a68] sm:$0xff]
    %v6895 = vld [vmem:[#allocation14 + $0x1a70] sm:$0xff]
    %v6896 = vld [vmem:[#allocation14 + $0x1a78] sm:$0xff]
    %v6897 = vld [vmem:[#allocation14 + $0x1a80] sm:$0xff]
    %v6898 = vld [vmem:[#allocation14 + $0x1a88] sm:$0xff]
    %v6899 = vld [vmem:[#allocation14 + $0x1a90] sm:$0xff]
    %v6900 = vld [vmem:[#allocation14 + $0x1a98] sm:$0xff]
    %v6901 = vld [vmem:[#allocation14 + $0x1aa0] sm:$0xff]
    %v6902 = vld [vmem:[#allocation14 + $0x1aa8] sm:$0xff]
    %v6903 = vld [vmem:[#allocation14 + $0x1ab0] sm:$0xff]
    %v6904 = vld [vmem:[#allocation14 + $0x1ab8] sm:$0xff]
    %v6905 = vld [vmem:[#allocation14 + $0x1ac0] sm:$0xff]
    %v6906 = vld [vmem:[#allocation14 + $0x1ac8] sm:$0xff]
    %v6907 = vld [vmem:[#allocation14 + $0x1ad0] sm:$0xff]
    %v6908 = vld [vmem:[#allocation14 + $0x1ad8] sm:$0xff]
    %v6909 = vld [vmem:[#allocation14 + $0x1ae0] sm:$0xff]
    %v6910 = vld [vmem:[#allocation14 + $0x1ae8] sm:$0xff]
    %v6911 = vld [vmem:[#allocation14 + $0x1af0] sm:$0xff]
    %v6912 = vld [vmem:[#allocation14 + $0x1af8] sm:$0xff]
    %v6913 = vld [vmem:[#allocation14 + $0x1b00] sm:$0xff]
    %v6914 = vld [vmem:[#allocation14 + $0x1b08] sm:$0xff]
    %v6915 = vld [vmem:[#allocation14 + $0x1b10] sm:$0xff]
    %v6916 = vld [vmem:[#allocation14 + $0x1b18] sm:$0xff]
    %v6917 = vld [vmem:[#allocation14 + $0x1b20] sm:$0xff]
    %v6918 = vld [vmem:[#allocation14 + $0x1b28] sm:$0xff]
    %v6919 = vld [vmem:[#allocation14 + $0x1b30] sm:$0xff]
    %v6920 = vld [vmem:[#allocation14 + $0x1b38] sm:$0xff]
    %v6921 = vld [vmem:[#allocation14 + $0x1b40] sm:$0xff]
    %v6922 = vld [vmem:[#allocation14 + $0x1b48] sm:$0xff]
    %v6923 = vld [vmem:[#allocation14 + $0x1b50] sm:$0xff]
    %v6924 = vld [vmem:[#allocation14 + $0x1b58] sm:$0xff]
    %v6925 = vld [vmem:[#allocation14 + $0x1b60] sm:$0xff]
    %v6926 = vld [vmem:[#allocation14 + $0x1b68] sm:$0xff]
    %v6927 = vld [vmem:[#allocation14 + $0x1b70] sm:$0xff]
    %v6928 = vld [vmem:[#allocation14 + $0x1b78] sm:$0xff]
    %v6929 = vld [vmem:[#allocation14 + $0x1b80] sm:$0xff]
    %v6930 = vld [vmem:[#allocation14 + $0x1b88] sm:$0xff]
    %v6931 = vld [vmem:[#allocation14 + $0x1b90] sm:$0xff]
    %v6932 = vld [vmem:[#allocation14 + $0x1b98] sm:$0xff]
    %v6933 = vld [vmem:[#allocation14 + $0x1ba0] sm:$0xff]
    %v6934 = vld [vmem:[#allocation14 + $0x1ba8] sm:$0xff]
    %v6935 = vld [vmem:[#allocation14 + $0x1bb0] sm:$0xff]
    %v6936 = vld [vmem:[#allocation14 + $0x1bb8] sm:$0xff]
    %v6937 = vld [vmem:[#allocation14 + $0x1bc0] sm:$0xff]
    %v6938 = vld [vmem:[#allocation14 + $0x1bc8] sm:$0xff]
    %v6939 = vld [vmem:[#allocation14 + $0x1bd0] sm:$0xff]
    %v6940 = vld [vmem:[#allocation14 + $0x1bd8] sm:$0xff]
    %v6941 = vld [vmem:[#allocation14 + $0x1be0] sm:$0xff]
    %v6942 = vld [vmem:[#allocation14 + $0x1be8] sm:$0xff]
    %v6943 = vld [vmem:[#allocation14 + $0x1bf0] sm:$0xff]
    %v6944 = vld [vmem:[#allocation14 + $0x1bf8] sm:$0xff]
    %v6945 = vld [vmem:[#allocation14 + $0x1c00] sm:$0xff]
    %v6946 = vld [vmem:[#allocation14 + $0x1c08] sm:$0xff]
    %v6947 = vld [vmem:[#allocation14 + $0x1c10] sm:$0xff]
    %v6948 = vld [vmem:[#allocation14 + $0x1c18] sm:$0xff]
    %v6949 = vld [vmem:[#allocation14 + $0x1c20] sm:$0xff]
    %v6950 = vld [vmem:[#allocation14 + $0x1c28] sm:$0xff]
    %v6951 = vld [vmem:[#allocation14 + $0x1c30] sm:$0xff]
    %v6952 = vld [vmem:[#allocation14 + $0x1c38] sm:$0xff]
    %v6953 = vld [vmem:[#allocation14 + $0x1c40] sm:$0xff]
    %v6954 = vld [vmem:[#allocation14 + $0x1c48] sm:$0xff]
    %v6955 = vld [vmem:[#allocation14 + $0x1c50] sm:$0xff]
    %v6956 = vld [vmem:[#allocation14 + $0x1c58] sm:$0xff]
    %v6957 = vld [vmem:[#allocation14 + $0x1c60] sm:$0xff]
    %v6958 = vld [vmem:[#allocation14 + $0x1c68] sm:$0xff]
    %v6959 = vld [vmem:[#allocation14 + $0x1c70] sm:$0xff]
    %v6960 = vld [vmem:[#allocation14 + $0x1c78] sm:$0xff]
    %v6961 = vld [vmem:[#allocation14 + $0x1c80] sm:$0xff]
    %v6962 = vld [vmem:[#allocation14 + $0x1c88] sm:$0xff]
    %v6963 = vld [vmem:[#allocation14 + $0x1c90] sm:$0xff]
    %v6964 = vld [vmem:[#allocation14 + $0x1c98] sm:$0xff]
    %v6965 = vld [vmem:[#allocation14 + $0x1ca0] sm:$0xff]
    %v6966 = vld [vmem:[#allocation14 + $0x1ca8] sm:$0xff]
    %v6967 = vld [vmem:[#allocation14 + $0x1cb0] sm:$0xff]
    %v6968 = vld [vmem:[#allocation14 + $0x1cb8] sm:$0xff]
    %v6969 = vld [vmem:[#allocation14 + $0x1cc0] sm:$0xff]
    %v6970 = vld [vmem:[#allocation14 + $0x1cc8] sm:$0xff]
    %v6971 = vld [vmem:[#allocation14 + $0x1cd0] sm:$0xff]
    %v6972 = vld [vmem:[#allocation14 + $0x1cd8] sm:$0xff]
    %v6973 = vld [vmem:[#allocation14 + $0x1ce0] sm:$0xff]
    %v6974 = vld [vmem:[#allocation14 + $0x1ce8] sm:$0xff]
    %v6975 = vld [vmem:[#allocation14 + $0x1cf0] sm:$0xff]
    %v6976 = vld [vmem:[#allocation14 + $0x1cf8] sm:$0xff]
    %v6977 = vld [vmem:[#allocation14 + $0x1d00] sm:$0xff]
    %v6978 = vld [vmem:[#allocation14 + $0x1d08] sm:$0xff]
    %v6979 = vld [vmem:[#allocation14 + $0x1d10] sm:$0xff]
    %v6980 = vld [vmem:[#allocation14 + $0x1d18] sm:$0xff]
    %v6981 = vld [vmem:[#allocation14 + $0x1d20] sm:$0xff]
    %v6982 = vld [vmem:[#allocation14 + $0x1d28] sm:$0xff]
    %v6983 = vld [vmem:[#allocation14 + $0x1d30] sm:$0xff]
    %v6984 = vld [vmem:[#allocation14 + $0x1d38] sm:$0xff]
    %v6985 = vld [vmem:[#allocation14 + $0x1d40] sm:$0xff]
    %v6986 = vld [vmem:[#allocation14 + $0x1d48] sm:$0xff]
    %v6987 = vld [vmem:[#allocation14 + $0x1d50] sm:$0xff]
    %v6988 = vld [vmem:[#allocation14 + $0x1d58] sm:$0xff]
    %v6989 = vld [vmem:[#allocation14 + $0x1d60] sm:$0xff]
    %v6990 = vld [vmem:[#allocation14 + $0x1d68] sm:$0xff]
    %v6991 = vld [vmem:[#allocation14 + $0x1d70] sm:$0xff]
    %v6992 = vld [vmem:[#allocation14 + $0x1d78] sm:$0xff]
    %v6993 = vld [vmem:[#allocation14 + $0x1d80] sm:$0xff]
    %v6994 = vld [vmem:[#allocation14 + $0x1d88] sm:$0xff]
    %v6995 = vld [vmem:[#allocation14 + $0x1d90] sm:$0xff]
    %v6996 = vld [vmem:[#allocation14 + $0x1d98] sm:$0xff]
    %v6997 = vld [vmem:[#allocation14 + $0x1da0] sm:$0xff]
    %v6998 = vld [vmem:[#allocation14 + $0x1da8] sm:$0xff]
    %v6999 = vld [vmem:[#allocation14 + $0x1db0] sm:$0xff]
    %v7000 = vld [vmem:[#allocation14 + $0x1db8] sm:$0xff]
    %v7001 = vld [vmem:[#allocation14 + $0x1dc0] sm:$0xff]
    %v7002 = vld [vmem:[#allocation14 + $0x1dc8] sm:$0xff]
    %v7003 = vld [vmem:[#allocation14 + $0x1dd0] sm:$0xff]
    %v7004 = vld [vmem:[#allocation14 + $0x1dd8] sm:$0xff]
    %v7005 = vld [vmem:[#allocation14 + $0x1de0] sm:$0xff]
    %v7006 = vld [vmem:[#allocation14 + $0x1de8] sm:$0xff]
    %v7007 = vld [vmem:[#allocation14 + $0x1df0] sm:$0xff]
    %v7008 = vld [vmem:[#allocation14 + $0x1df8] sm:$0xff]
    %v7009 = vld [vmem:[#allocation14 + $0x1e00] sm:$0xff]
    %v7010 = vld [vmem:[#allocation14 + $0x1e08] sm:$0xff]
    %v7011 = vld [vmem:[#allocation14 + $0x1e10] sm:$0xff]
    %v7012 = vld [vmem:[#allocation14 + $0x1e18] sm:$0xff]
    %v7013 = vld [vmem:[#allocation14 + $0x1e20] sm:$0xff]
    %v7014 = vld [vmem:[#allocation14 + $0x1e28] sm:$0xff]
    %v7015 = vld [vmem:[#allocation14 + $0x1e30] sm:$0xff]
    %v7016 = vld [vmem:[#allocation14 + $0x1e38] sm:$0xff]
    %v7017 = vld [vmem:[#allocation14 + $0x1e40] sm:$0xff]
    %v7018 = vld [vmem:[#allocation14 + $0x1e48] sm:$0xff]
    %v7019 = vld [vmem:[#allocation14 + $0x1e50] sm:$0xff]
    %v7020 = vld [vmem:[#allocation14 + $0x1e58] sm:$0xff]
    %v7021 = vld [vmem:[#allocation14 + $0x1e60] sm:$0xff]
    %v7022 = vld [vmem:[#allocation14 + $0x1e68] sm:$0xff]
    %v7023 = vld [vmem:[#allocation14 + $0x1e70] sm:$0xff]
    %v7024 = vld [vmem:[#allocation14 + $0x1e78] sm:$0xff]
    %v7025 = vld [vmem:[#allocation14 + $0x1e80] sm:$0xff]
    %v7026 = vld [vmem:[#allocation14 + $0x1e88] sm:$0xff]
    %v7027 = vld [vmem:[#allocation14 + $0x1e90] sm:$0xff]
    %v7028 = vld [vmem:[#allocation14 + $0x1e98] sm:$0xff]
    %v7029 = vld [vmem:[#allocation14 + $0x1ea0] sm:$0xff]
    %v7030 = vld [vmem:[#allocation14 + $0x1ea8] sm:$0xff]
    %v7031 = vld [vmem:[#allocation14 + $0x1eb0] sm:$0xff]
    %v7032 = vld [vmem:[#allocation14 + $0x1eb8] sm:$0xff]
    %v7033 = vld [vmem:[#allocation14 + $0x1ec0] sm:$0xff]
    %v7034 = vld [vmem:[#allocation14 + $0x1ec8] sm:$0xff]
    %v7035 = vld [vmem:[#allocation14 + $0x1ed0] sm:$0xff]
    %v7036 = vld [vmem:[#allocation14 + $0x1ed8] sm:$0xff]
    %v7037 = vld [vmem:[#allocation14 + $0x1ee0] sm:$0xff]
    %v7038 = vld [vmem:[#allocation14 + $0x1ee8] sm:$0xff]
    %v7039 = vld [vmem:[#allocation14 + $0x1ef0] sm:$0xff]
    %v7040 = vld [vmem:[#allocation14 + $0x1ef8] sm:$0xff]
    %v7041 = vld [vmem:[#allocation14 + $0x1f00] sm:$0xff]
    %v7042 = vld [vmem:[#allocation14 + $0x1f08] sm:$0xff]
    %v7043 = vld [vmem:[#allocation14 + $0x1f10] sm:$0xff]
    %v7044 = vld [vmem:[#allocation14 + $0x1f18] sm:$0xff]
    %v7045 = vld [vmem:[#allocation14 + $0x1f20] sm:$0xff]
    %v7046 = vld [vmem:[#allocation14 + $0x1f28] sm:$0xff]
    %v7047 = vld [vmem:[#allocation14 + $0x1f30] sm:$0xff]
    %v7048 = vld [vmem:[#allocation14 + $0x1f38] sm:$0xff]
    %v7049 = vld [vmem:[#allocation14 + $0x1f40] sm:$0xff]
    %v7050 = vld [vmem:[#allocation14 + $0x1f48] sm:$0xff]
    %v7051 = vld [vmem:[#allocation14 + $0x1f50] sm:$0xff]
    %v7052 = vld [vmem:[#allocation14 + $0x1f58] sm:$0xff]
    %v7053 = vld [vmem:[#allocation14 + $0x1f60] sm:$0xff]
    %v7054 = vld [vmem:[#allocation14 + $0x1f68] sm:$0xff]
    %v7055 = vld [vmem:[#allocation14 + $0x1f70] sm:$0xff]
    %v7056 = vld [vmem:[#allocation14 + $0x1f78] sm:$0xff]
    %v7057 = vld [vmem:[#allocation14 + $0x1f80] sm:$0xff]
    %v7058 = vld [vmem:[#allocation14 + $0x1f88] sm:$0xff]
    %v7059 = vld [vmem:[#allocation14 + $0x1f90] sm:$0xff]
    %v7060 = vld [vmem:[#allocation14 + $0x1f98] sm:$0xff]
    %v7061 = vld [vmem:[#allocation14 + $0x1fa0] sm:$0xff]
    %v7062 = vld [vmem:[#allocation14 + $0x1fa8] sm:$0xff]
    %v7063 = vld [vmem:[#allocation14 + $0x1fb0] sm:$0xff]
    %v7064 = vld [vmem:[#allocation14 + $0x1fb8] sm:$0xff]
    %v7065 = vld [vmem:[#allocation14 + $0x1fc0] sm:$0xff]
    %v7066 = vld [vmem:[#allocation14 + $0x1fc8] sm:$0xff]
    %v7067 = vld [vmem:[#allocation14 + $0x1fd0] sm:$0xff]
    %v7068 = vld [vmem:[#allocation14 + $0x1fd8] sm:$0xff]
    %v7069 = vld [vmem:[#allocation14 + $0x1fe0] sm:$0xff]
    %v7070 = vld [vmem:[#allocation14 + $0x1fe8] sm:$0xff]
    %v7071 = vld [vmem:[#allocation14 + $0x1ff0] sm:$0xff]
    %v7072 = vld [vmem:[#allocation14 + $0x1ff8] sm:$0xff]
    %v7073 = vld [vmem:[#allocation14 + $0x2000] sm:$0xff]
    %v7074 = vld [vmem:[#allocation14 + $0x2008] sm:$0xff]
    %v7075 = vld [vmem:[#allocation14 + $0x2010] sm:$0xff]
    %v7076 = vld [vmem:[#allocation14 + $0x2018] sm:$0xff]
    %v7077 = vld [vmem:[#allocation14 + $0x2020] sm:$0xff]
    %v7078 = vld [vmem:[#allocation14 + $0x2028] sm:$0xff]
    %v7079 = vld [vmem:[#allocation14 + $0x2030] sm:$0xff]
    %v7080 = vld [vmem:[#allocation14 + $0x2038] sm:$0xff]
    %v7081 = vld [vmem:[#allocation14 + $0x2040] sm:$0xff]
    %v7082 = vld [vmem:[#allocation14 + $0x2048] sm:$0xff]
    %v7083 = vld [vmem:[#allocation14 + $0x2050] sm:$0xff]
    %v7084 = vld [vmem:[#allocation14 + $0x2058] sm:$0xff]
    %v7085 = vld [vmem:[#allocation14 + $0x2060] sm:$0xff]
    %v7086 = vld [vmem:[#allocation14 + $0x2068] sm:$0xff]
    %v7087 = vld [vmem:[#allocation14 + $0x2070] sm:$0xff]
    %v7088 = vld [vmem:[#allocation14 + $0x2078] sm:$0xff]
    %v7089 = vld [vmem:[#allocation14 + $0x2080] sm:$0xff]
    %v7090 = vld [vmem:[#allocation14 + $0x2088] sm:$0xff]
    %v7091 = vld [vmem:[#allocation14 + $0x2090] sm:$0xff]
    %v7092 = vld [vmem:[#allocation14 + $0x2098] sm:$0xff]
    %v7093 = vld [vmem:[#allocation14 + $0x20a0] sm:$0xff]
    %v7094 = vld [vmem:[#allocation14 + $0x20a8] sm:$0xff]
    %v7095 = vld [vmem:[#allocation14 + $0x20b0] sm:$0xff]
    %v7096 = vld [vmem:[#allocation14 + $0x20b8] sm:$0xff]
    %v7097 = vld [vmem:[#allocation14 + $0x20c0] sm:$0xff]
    %v7098 = vld [vmem:[#allocation14 + $0x20c8] sm:$0xff]
    %v7099 = vld [vmem:[#allocation14 + $0x20d0] sm:$0xff]
    %v7100 = vld [vmem:[#allocation14 + $0x20d8] sm:$0xff]
    %v7101 = vld [vmem:[#allocation14 + $0x20e0] sm:$0xff]
    %v7102 = vld [vmem:[#allocation14 + $0x20e8] sm:$0xff]
    %v7103 = vld [vmem:[#allocation14 + $0x20f0] sm:$0xff]
    %v7104 = vld [vmem:[#allocation14 + $0x20f8] sm:$0xff]
    %v7105 = vld [vmem:[#allocation14 + $0x2100] sm:$0xff]
    %v7106 = vld [vmem:[#allocation14 + $0x2108] sm:$0xff]
    %v7107 = vld [vmem:[#allocation14 + $0x2110] sm:$0xff]
    %v7108 = vld [vmem:[#allocation14 + $0x2118] sm:$0xff]
    %v7109 = vld [vmem:[#allocation14 + $0x2120] sm:$0xff]
    %v7110 = vld [vmem:[#allocation14 + $0x2128] sm:$0xff]
    %v7111 = vld [vmem:[#allocation14 + $0x2130] sm:$0xff]
    %v7112 = vld [vmem:[#allocation14 + $0x2138] sm:$0xff]
    %v7113 = vld [vmem:[#allocation14 + $0x2140] sm:$0xff]
    %v7114 = vld [vmem:[#allocation14 + $0x2148] sm:$0xff]
    %v7115 = vld [vmem:[#allocation14 + $0x2150] sm:$0xff]
    %v7116 = vld [vmem:[#allocation14 + $0x2158] sm:$0xff]
    %v7117 = vld [vmem:[#allocation14 + $0x2160] sm:$0xff]
    %v7118 = vld [vmem:[#allocation14 + $0x2168] sm:$0xff]
    %v7119 = vld [vmem:[#allocation14 + $0x2170] sm:$0xff]
    %v7120 = vld [vmem:[#allocation14 + $0x2178] sm:$0xff]
    %v7121 = vld [vmem:[#allocation14 + $0x2180] sm:$0xff]
    %v7122 = vld [vmem:[#allocation14 + $0x2188] sm:$0xff]
    %v7123 = vld [vmem:[#allocation14 + $0x2190] sm:$0xff]
    %v7124 = vld [vmem:[#allocation14 + $0x2198] sm:$0xff]
    %v7125 = vld [vmem:[#allocation14 + $0x21a0] sm:$0xff]
    %v7126 = vld [vmem:[#allocation14 + $0x21a8] sm:$0xff]
    %v7127 = vld [vmem:[#allocation14 + $0x21b0] sm:$0xff]
    %v7128 = vld [vmem:[#allocation14 + $0x21b8] sm:$0xff]
    %v7129 = vld [vmem:[#allocation14 + $0x21c0] sm:$0xff]
    %v7130 = vld [vmem:[#allocation14 + $0x21c8] sm:$0xff]
    %v7131 = vld [vmem:[#allocation14 + $0x21d0] sm:$0xff]
    %v7132 = vld [vmem:[#allocation14 + $0x21d8] sm:$0xff]
    %v7133 = vld [vmem:[#allocation14 + $0x21e0] sm:$0xff]
    %v7134 = vld [vmem:[#allocation14 + $0x21e8] sm:$0xff]
    %v7135 = vld [vmem:[#allocation14 + $0x21f0] sm:$0xff]
    %v7136 = vld [vmem:[#allocation14 + $0x21f8] sm:$0xff]
    %v7137 = vld [vmem:[#allocation14 + $0x2200] sm:$0xff]
    %v7138 = vld [vmem:[#allocation14 + $0x2208] sm:$0xff]
    %v7139 = vld [vmem:[#allocation14 + $0x2210] sm:$0xff]
    %v7140 = vld [vmem:[#allocation14 + $0x2218] sm:$0xff]
    %v7141 = vld [vmem:[#allocation14 + $0x2220] sm:$0xff]
    %v7142 = vld [vmem:[#allocation14 + $0x2228] sm:$0xff]
    %v7143 = vld [vmem:[#allocation14 + $0x2230] sm:$0xff]
    %v7144 = vld [vmem:[#allocation14 + $0x2238] sm:$0xff]
    %v7145 = vld [vmem:[#allocation14 + $0x2240] sm:$0xff]
    %v7146 = vld [vmem:[#allocation14 + $0x2248] sm:$0xff]
    %v7147 = vld [vmem:[#allocation14 + $0x2250] sm:$0xff]
    %v7148 = vld [vmem:[#allocation14 + $0x2258] sm:$0xff]
    %v7149 = vld [vmem:[#allocation14 + $0x2260] sm:$0xff]
    %v7150 = vld [vmem:[#allocation14 + $0x2268] sm:$0xff]
    %v7151 = vld [vmem:[#allocation14 + $0x2270] sm:$0xff]
    %v7152 = vld [vmem:[#allocation14 + $0x2278] sm:$0xff]
    %v7153 = vld [vmem:[#allocation14 + $0x2280] sm:$0xff]
    %v7154 = vld [vmem:[#allocation14 + $0x2288] sm:$0xff]
    %v7155 = vld [vmem:[#allocation14 + $0x2290] sm:$0xff]
    %v7156 = vld [vmem:[#allocation14 + $0x2298] sm:$0xff]
    %v7157 = vld [vmem:[#allocation14 + $0x22a0] sm:$0xff]
    %v7158 = vld [vmem:[#allocation14 + $0x22a8] sm:$0xff]
    %v7159 = vld [vmem:[#allocation14 + $0x22b0] sm:$0xff]
    %v7160 = vld [vmem:[#allocation14 + $0x22b8] sm:$0xff]
    %v7161 = vld [vmem:[#allocation14 + $0x22c0] sm:$0xff]
    %v7162 = vld [vmem:[#allocation14 + $0x22c8] sm:$0xff]
    %v7163 = vld [vmem:[#allocation14 + $0x22d0] sm:$0xff]
    %v7164 = vld [vmem:[#allocation14 + $0x22d8] sm:$0xff]
    %v7165 = vld [vmem:[#allocation14 + $0x22e0] sm:$0xff]
    %v7166 = vld [vmem:[#allocation14 + $0x22e8] sm:$0xff]
    %v7167 = vld [vmem:[#allocation14 + $0x22f0] sm:$0xff]
    %v7168 = vld [vmem:[#allocation14 + $0x22f8] sm:$0xff]
    %v7169 = vld [vmem:[#allocation14 + $0x2300] sm:$0xff]
    %v7170 = vld [vmem:[#allocation14 + $0x2308] sm:$0xff]
    %v7171 = vld [vmem:[#allocation14 + $0x2310] sm:$0xff]
    %v7172 = vld [vmem:[#allocation14 + $0x2318] sm:$0xff]
    %v7173 = vld [vmem:[#allocation14 + $0x2320] sm:$0xff]
    %v7174 = vld [vmem:[#allocation14 + $0x2328] sm:$0xff]
    %v7175 = vld [vmem:[#allocation14 + $0x2330] sm:$0xff]
    %v7176 = vld [vmem:[#allocation14 + $0x2338] sm:$0xff]
    %v7177 = vld [vmem:[#allocation14 + $0x2340] sm:$0xff]
    %v7178 = vld [vmem:[#allocation14 + $0x2348] sm:$0xff]
    %v7179 = vld [vmem:[#allocation14 + $0x2350] sm:$0xff]
    %v7180 = vld [vmem:[#allocation14 + $0x2358] sm:$0xff]
    %v7181 = vld [vmem:[#allocation14 + $0x2360] sm:$0xff]
    %v7182 = vld [vmem:[#allocation14 + $0x2368] sm:$0xff]
    %v7183 = vld [vmem:[#allocation14 + $0x2370] sm:$0xff]
    %v7184 = vld [vmem:[#allocation14 + $0x2378] sm:$0xff]
    %v7185 = vld [vmem:[#allocation14 + $0x2380] sm:$0xff]
    %v7186 = vld [vmem:[#allocation14 + $0x2388] sm:$0xff]
    %v7187 = vld [vmem:[#allocation14 + $0x2390] sm:$0xff]
    %v7188 = vld [vmem:[#allocation14 + $0x2398] sm:$0xff]
    %v7189 = vld [vmem:[#allocation14 + $0x23a0] sm:$0xff]
    %v7190 = vld [vmem:[#allocation14 + $0x23a8] sm:$0xff]
    %v7191 = vld [vmem:[#allocation14 + $0x23b0] sm:$0xff]
    %v7192 = vld [vmem:[#allocation14 + $0x23b8] sm:$0xff]
    %v7193 = vld [vmem:[#allocation14 + $0x23c0] sm:$0xff]
    %v7194 = vld [vmem:[#allocation14 + $0x23c8] sm:$0xff]
    %v7195 = vld [vmem:[#allocation14 + $0x23d0] sm:$0xff]
    %v7196 = vld [vmem:[#allocation14 + $0x23d8] sm:$0xff]
    %v7197 = vld [vmem:[#allocation14 + $0x23e0] sm:$0xff]
    %v7198 = vld [vmem:[#allocation14 + $0x23e8] sm:$0xff]
    %v7199 = vld [vmem:[#allocation14 + $0x23f0] sm:$0xff]
    %v7200 = vld [vmem:[#allocation14 + $0x23f8] sm:$0xff]
    %v7201 = vld [vmem:[#allocation14 + $0x2400] sm:$0xff]
    %v7202 = vld [vmem:[#allocation14 + $0x2408] sm:$0xff]
    %v7203 = vld [vmem:[#allocation14 + $0x2410] sm:$0xff]
    %v7204 = vld [vmem:[#allocation14 + $0x2418] sm:$0xff]
    %v7205 = vld [vmem:[#allocation14 + $0x2420] sm:$0xff]
    %v7206 = vld [vmem:[#allocation14 + $0x2428] sm:$0xff]
    %v7207 = vld [vmem:[#allocation14 + $0x2430] sm:$0xff]
    %v7208 = vld [vmem:[#allocation14 + $0x2438] sm:$0xff]
    %v7209 = vld [vmem:[#allocation14 + $0x2440] sm:$0xff]
    %v7210 = vld [vmem:[#allocation14 + $0x2448] sm:$0xff]
    %v7211 = vld [vmem:[#allocation14 + $0x2450] sm:$0xff]
    %v7212 = vld [vmem:[#allocation14 + $0x2458] sm:$0xff]
    %v7213 = vld [vmem:[#allocation14 + $0x2460] sm:$0xff]
    %v7214 = vld [vmem:[#allocation14 + $0x2468] sm:$0xff]
    %v7215 = vld [vmem:[#allocation14 + $0x2470] sm:$0xff]
    %v7216 = vld [vmem:[#allocation14 + $0x2478] sm:$0xff]
    %v7217 = vld [vmem:[#allocation14 + $0x2480] sm:$0xff]
    %v7218 = vld [vmem:[#allocation14 + $0x2488] sm:$0xff]
    %v7219 = vld [vmem:[#allocation14 + $0x2490] sm:$0xff]
    %v7220 = vld [vmem:[#allocation14 + $0x2498] sm:$0xff]
    %v7221 = vld [vmem:[#allocation14 + $0x24a0] sm:$0xff]
    %v7222 = vld [vmem:[#allocation14 + $0x24a8] sm:$0xff]
    %v7223 = vld [vmem:[#allocation14 + $0x24b0] sm:$0xff]
    %v7224 = vld [vmem:[#allocation14 + $0x24b8] sm:$0xff]
    %v7225 = vld [vmem:[#allocation14 + $0x24c0] sm:$0xff]
    %v7226 = vld [vmem:[#allocation14 + $0x24c8] sm:$0xff]
    %v7227 = vld [vmem:[#allocation14 + $0x24d0] sm:$0xff]
    %v7228 = vld [vmem:[#allocation14 + $0x24d8] sm:$0xff]
    %v7229 = vld [vmem:[#allocation14 + $0x24e0] sm:$0xff]
    %v7230 = vld [vmem:[#allocation14 + $0x24e8] sm:$0xff]
    %v7231 = vld [vmem:[#allocation14 + $0x24f0] sm:$0xff]
    %v7232 = vld [vmem:[#allocation14 + $0x24f8] sm:$0xff]
    %v7233 = vld [vmem:[#allocation14 + $0x2500] sm:$0xff]
    %v7234 = vld [vmem:[#allocation14 + $0x2508] sm:$0xff]
    %v7235 = vld [vmem:[#allocation14 + $0x2510] sm:$0xff]
    %v7236 = vld [vmem:[#allocation14 + $0x2518] sm:$0xff]
    %v7237 = vld [vmem:[#allocation14 + $0x2520] sm:$0xff]
    %v7238 = vld [vmem:[#allocation14 + $0x2528] sm:$0xff]
    %v7239 = vld [vmem:[#allocation14 + $0x2530] sm:$0xff]
    %v7240 = vld [vmem:[#allocation14 + $0x2538] sm:$0xff]
    %v7241 = vld [vmem:[#allocation14 + $0x2540] sm:$0xff]
    %v7242 = vld [vmem:[#allocation14 + $0x2548] sm:$0xff]
    %v7243 = vld [vmem:[#allocation14 + $0x2550] sm:$0xff]
    %v7244 = vld [vmem:[#allocation14 + $0x2558] sm:$0xff]
    %v7245 = vld [vmem:[#allocation14 + $0x2560] sm:$0xff]
    %v7246 = vld [vmem:[#allocation14 + $0x2568] sm:$0xff]
    %v7247 = vld [vmem:[#allocation14 + $0x2570] sm:$0xff]
    %v7248 = vld [vmem:[#allocation14 + $0x2578] sm:$0xff]
    %v7249 = vld [vmem:[#allocation14 + $0x2580] sm:$0xff]
    %v7250 = vld [vmem:[#allocation14 + $0x2588] sm:$0xff]
    %v7251 = vld [vmem:[#allocation14 + $0x2590] sm:$0xff]
    %v7252 = vld [vmem:[#allocation14 + $0x2598] sm:$0xff]
    %v7253 = vld [vmem:[#allocation14 + $0x25a0] sm:$0xff]
    %v7254 = vld [vmem:[#allocation14 + $0x25a8] sm:$0xff]
    %v7255 = vld [vmem:[#allocation14 + $0x25b0] sm:$0xff]
    %v7256 = vld [vmem:[#allocation14 + $0x25b8] sm:$0xff]
    %v7257 = vld [vmem:[#allocation14 + $0x25c0] sm:$0xff]
    %v7258 = vld [vmem:[#allocation14 + $0x25c8] sm:$0xff]
    %v7259 = vld [vmem:[#allocation14 + $0x25d0] sm:$0xff]
    %v7260 = vld [vmem:[#allocation14 + $0x25d8] sm:$0xff]
    %v7261 = vld [vmem:[#allocation14 + $0x25e0] sm:$0xff]
    %v7262 = vld [vmem:[#allocation14 + $0x25e8] sm:$0xff]
    %v7263 = vld [vmem:[#allocation14 + $0x25f0] sm:$0xff]
    %v7264 = vld [vmem:[#allocation14 + $0x25f8] sm:$0xff]
    %v7265 = vld [vmem:[#allocation14 + $0x2600] sm:$0xff]
    %v7266 = vld [vmem:[#allocation14 + $0x2608] sm:$0xff]
    %v7267 = vld [vmem:[#allocation14 + $0x2610] sm:$0xff]
    %v7268 = vld [vmem:[#allocation14 + $0x2618] sm:$0xff]
    %v7269 = vld [vmem:[#allocation14 + $0x2620] sm:$0xff]
    %v7270 = vld [vmem:[#allocation14 + $0x2628] sm:$0xff]
    %v7271 = vld [vmem:[#allocation14 + $0x2630] sm:$0xff]
    %v7272 = vld [vmem:[#allocation14 + $0x2638] sm:$0xff]
    %v7273 = vld [vmem:[#allocation14 + $0x2640] sm:$0xff]
    %v7274 = vld [vmem:[#allocation14 + $0x2648] sm:$0xff]
    %v7275 = vld [vmem:[#allocation14 + $0x2650] sm:$0xff]
    %v7276 = vld [vmem:[#allocation14 + $0x2658] sm:$0xff]
    %v7277 = vld [vmem:[#allocation14 + $0x2660] sm:$0xff]
    %v7278 = vld [vmem:[#allocation14 + $0x2668] sm:$0xff]
    %v7279 = vld [vmem:[#allocation14 + $0x2670] sm:$0xff]
    %v7280 = vld [vmem:[#allocation14 + $0x2678] sm:$0xff]
    %v7281 = vld [vmem:[#allocation14 + $0x2680] sm:$0xff]
    %v7282 = vld [vmem:[#allocation14 + $0x2688] sm:$0xff]
    %v7283 = vld [vmem:[#allocation14 + $0x2690] sm:$0xff]
    %v7284 = vld [vmem:[#allocation14 + $0x2698] sm:$0xff]
    %v7285 = vld [vmem:[#allocation14 + $0x26a0] sm:$0xff]
    %v7286 = vld [vmem:[#allocation14 + $0x26a8] sm:$0xff]
    %v7287 = vld [vmem:[#allocation14 + $0x26b0] sm:$0xff]
    %v7288 = vld [vmem:[#allocation14 + $0x26b8] sm:$0xff]
    %v7289 = vld [vmem:[#allocation14 + $0x26c0] sm:$0xff]
    %v7290 = vld [vmem:[#allocation14 + $0x26c8] sm:$0xff]
    %v7291 = vld [vmem:[#allocation14 + $0x26d0] sm:$0xff]
    %v7292 = vld [vmem:[#allocation14 + $0x26d8] sm:$0xff]
    %v7293 = vld [vmem:[#allocation14 + $0x26e0] sm:$0xff]
    %v7294 = vld [vmem:[#allocation14 + $0x26e8] sm:$0xff]
    %v7295 = vld [vmem:[#allocation14 + $0x26f0] sm:$0xff]
    %v7296 = vld [vmem:[#allocation14 + $0x26f8] sm:$0xff]
    %v7297 = vld [vmem:[#allocation14 + $0x2700] sm:$0xff]
    %v7298 = vld [vmem:[#allocation14 + $0x2708] sm:$0xff]
    %v7299 = vld [vmem:[#allocation14 + $0x2710] sm:$0xff]
    %v7300 = vld [vmem:[#allocation14 + $0x2718] sm:$0xff]
    %v7301 = vld [vmem:[#allocation14 + $0x2720] sm:$0xff]
    %v7302 = vld [vmem:[#allocation14 + $0x2728] sm:$0xff]
    %v7303 = vld [vmem:[#allocation14 + $0x2730] sm:$0xff]
    %v7304 = vld [vmem:[#allocation14 + $0x2738] sm:$0xff]
    %v7305 = vld [vmem:[#allocation14 + $0x2740] sm:$0xff]
    %v7306 = vld [vmem:[#allocation14 + $0x2748] sm:$0xff]
    %v7307 = vld [vmem:[#allocation14 + $0x2750] sm:$0xff]
    %v7308 = vld [vmem:[#allocation14 + $0x2758] sm:$0xff]
    %v7309 = vld [vmem:[#allocation14 + $0x2760] sm:$0xff]
    %v7310 = vld [vmem:[#allocation14 + $0x2768] sm:$0xff]
    %v7311 = vld [vmem:[#allocation14 + $0x2770] sm:$0xff]
    %v7312 = vld [vmem:[#allocation14 + $0x2778] sm:$0xff]
    %v7313 = vld [vmem:[#allocation14 + $0x2780] sm:$0xff]
    %v7314 = vld [vmem:[#allocation14 + $0x2788] sm:$0xff]
    %v7315 = vld [vmem:[#allocation14 + $0x2790] sm:$0xff]
    %v7316 = vld [vmem:[#allocation14 + $0x2798] sm:$0xff]
    %v7317 = vld [vmem:[#allocation14 + $0x27a0] sm:$0xff]
    %v7318 = vld [vmem:[#allocation14 + $0x27a8] sm:$0xff]
    %v7319 = vld [vmem:[#allocation14 + $0x27b0] sm:$0xff]
    %v7320 = vld [vmem:[#allocation14 + $0x27b8] sm:$0xff]
    %v7321 = vld [vmem:[#allocation14 + $0x27c0] sm:$0xff]
    %v7322 = vld [vmem:[#allocation14 + $0x27c8] sm:$0xff]
    %v7323 = vld [vmem:[#allocation14 + $0x27d0] sm:$0xff]
    %v7324 = vld [vmem:[#allocation14 + $0x27d8] sm:$0xff]
    %v7325 = vld [vmem:[#allocation14 + $0x27e0] sm:$0xff]
    %v7326 = vld [vmem:[#allocation14 + $0x27e8] sm:$0xff]
    %v7327 = vld [vmem:[#allocation14 + $0x27f0] sm:$0xff]
    %v7328 = vld [vmem:[#allocation14 + $0x27f8] sm:$0xff]
    %v7329 = vld [vmem:[#allocation14 + $0x2800] sm:$0xff]
    %v7330 = vld [vmem:[#allocation14 + $0x2808] sm:$0xff]
    %v7331 = vld [vmem:[#allocation14 + $0x2810] sm:$0xff]
    %v7332 = vld [vmem:[#allocation14 + $0x2818] sm:$0xff]
    %v7333 = vld [vmem:[#allocation14 + $0x2820] sm:$0xff]
    %v7334 = vld [vmem:[#allocation14 + $0x2828] sm:$0xff]
    %v7335 = vld [vmem:[#allocation14 + $0x2830] sm:$0xff]
    %v7336 = vld [vmem:[#allocation14 + $0x2838] sm:$0xff]
    %v7337 = vld [vmem:[#allocation14 + $0x2840] sm:$0xff]
    %v7338 = vld [vmem:[#allocation14 + $0x2848] sm:$0xff]
    %v7339 = vld [vmem:[#allocation14 + $0x2850] sm:$0xff]
    %v7340 = vld [vmem:[#allocation14 + $0x2858] sm:$0xff]
    %v7341 = vld [vmem:[#allocation14 + $0x2860] sm:$0xff]
    %v7342 = vld [vmem:[#allocation14 + $0x2868] sm:$0xff]
    %v7343 = vld [vmem:[#allocation14 + $0x2870] sm:$0xff]
    %v7344 = vld [vmem:[#allocation14 + $0x2878] sm:$0xff]
    %v7345 = vld [vmem:[#allocation14 + $0x2880] sm:$0xff]
    %v7346 = vld [vmem:[#allocation14 + $0x2888] sm:$0xff]
    %v7347 = vld [vmem:[#allocation14 + $0x2890] sm:$0xff]
    %v7348 = vld [vmem:[#allocation14 + $0x2898] sm:$0xff]
    %v7349 = vld [vmem:[#allocation14 + $0x28a0] sm:$0xff]
    %v7350 = vld [vmem:[#allocation14 + $0x28a8] sm:$0xff]
    %v7351 = vld [vmem:[#allocation14 + $0x28b0] sm:$0xff]
    %v7352 = vld [vmem:[#allocation14 + $0x28b8] sm:$0xff]
    %v7353 = vld [vmem:[#allocation14 + $0x28c0] sm:$0xff]
    %v7354 = vld [vmem:[#allocation14 + $0x28c8] sm:$0xff]
    %v7355 = vld [vmem:[#allocation14 + $0x28d0] sm:$0xff]
    %v7356 = vld [vmem:[#allocation14 + $0x28d8] sm:$0xff]
    %v7357 = vld [vmem:[#allocation14 + $0x28e0] sm:$0xff]
    %v7358 = vld [vmem:[#allocation14 + $0x28e8] sm:$0xff]
    %v7359 = vld [vmem:[#allocation14 + $0x28f0] sm:$0xff]
    %v7360 = vld [vmem:[#allocation14 + $0x28f8] sm:$0xff]
    %v7361 = vld [vmem:[#allocation14 + $0x2900] sm:$0xff]
    %v7362 = vld [vmem:[#allocation14 + $0x2908] sm:$0xff]
    %v7363 = vld [vmem:[#allocation14 + $0x2910] sm:$0xff]
    %v7364 = vld [vmem:[#allocation14 + $0x2918] sm:$0xff]
    %v7365 = vld [vmem:[#allocation14 + $0x2920] sm:$0xff]
    %v7366 = vld [vmem:[#allocation14 + $0x2928] sm:$0xff]
    %v7367 = vld [vmem:[#allocation14 + $0x2930] sm:$0xff]
    %v7368 = vld [vmem:[#allocation14 + $0x2938] sm:$0xff]
    %v7369 = vld [vmem:[#allocation14 + $0x2940] sm:$0xff]
    %v7370 = vld [vmem:[#allocation14 + $0x2948] sm:$0xff]
    %v7371 = vld [vmem:[#allocation14 + $0x2950] sm:$0xff]
    %v7372 = vld [vmem:[#allocation14 + $0x2958] sm:$0xff]
    %v7373 = vld [vmem:[#allocation14 + $0x2960] sm:$0xff]
    %v7374 = vld [vmem:[#allocation14 + $0x2968] sm:$0xff]
    %v7375 = vld [vmem:[#allocation14 + $0x2970] sm:$0xff]
    %v7376 = vld [vmem:[#allocation14 + $0x2978] sm:$0xff]
    %v7377 = vld [vmem:[#allocation14 + $0x2980] sm:$0xff]
    %v7378 = vld [vmem:[#allocation14 + $0x2988] sm:$0xff]
    %v7379 = vld [vmem:[#allocation14 + $0x2990] sm:$0xff]
    %v7380 = vld [vmem:[#allocation14 + $0x2998] sm:$0xff]
    %v7381 = vld [vmem:[#allocation14 + $0x29a0] sm:$0xff]
    %v7382 = vld [vmem:[#allocation14 + $0x29a8] sm:$0xff]
    %v7383 = vld [vmem:[#allocation14 + $0x29b0] sm:$0xff]
    %v7384 = vld [vmem:[#allocation14 + $0x29b8] sm:$0xff]
    %v7385 = vld [vmem:[#allocation14 + $0x29c0] sm:$0xff]
    %v7386 = vld [vmem:[#allocation14 + $0x29c8] sm:$0xff]
    %v7387 = vld [vmem:[#allocation14 + $0x29d0] sm:$0xff]
    %v7388 = vld [vmem:[#allocation14 + $0x29d8] sm:$0xff]
    %v7389 = vld [vmem:[#allocation14 + $0x29e0] sm:$0xff]
    %v7390 = vld [vmem:[#allocation14 + $0x29e8] sm:$0xff]
    %v7391 = vld [vmem:[#allocation14 + $0x29f0] sm:$0xff]
    %v7392 = vld [vmem:[#allocation14 + $0x29f8] sm:$0xff]
    %v7393 = vld [vmem:[#allocation14 + $0x2a00] sm:$0xff]
    %v7394 = vld [vmem:[#allocation14 + $0x2a08] sm:$0xff]
    %v7395 = vld [vmem:[#allocation14 + $0x2a10] sm:$0xff]
    %v7396 = vld [vmem:[#allocation14 + $0x2a18] sm:$0xff]
    %v7397 = vld [vmem:[#allocation14 + $0x2a20] sm:$0xff]
    %v7398 = vld [vmem:[#allocation14 + $0x2a28] sm:$0xff]
    %v7399 = vld [vmem:[#allocation14 + $0x2a30] sm:$0xff]
    %v7400 = vld [vmem:[#allocation14 + $0x2a38] sm:$0xff]
    %v7401 = vld [vmem:[#allocation14 + $0x2a40] sm:$0xff]
    %v7402 = vld [vmem:[#allocation14 + $0x2a48] sm:$0xff]
    %v7403 = vld [vmem:[#allocation14 + $0x2a50] sm:$0xff]
    %v7404 = vld [vmem:[#allocation14 + $0x2a58] sm:$0xff]
    %v7405 = vld [vmem:[#allocation14 + $0x2a60] sm:$0xff]
    %v7406 = vld [vmem:[#allocation14 + $0x2a68] sm:$0xff]
    %v7407 = vld [vmem:[#allocation14 + $0x2a70] sm:$0xff]
    %v7408 = vld [vmem:[#allocation14 + $0x2a78] sm:$0xff]
    %v7409 = vld [vmem:[#allocation14 + $0x2a80] sm:$0xff]
    %v7410 = vld [vmem:[#allocation14 + $0x2a88] sm:$0xff]
    %v7411 = vld [vmem:[#allocation14 + $0x2a90] sm:$0xff]
    %v7412 = vld [vmem:[#allocation14 + $0x2a98] sm:$0xff]
    %v7413 = vld [vmem:[#allocation14 + $0x2aa0] sm:$0xff]
    %v7414 = vld [vmem:[#allocation14 + $0x2aa8] sm:$0xff]
    %v7415 = vld [vmem:[#allocation14 + $0x2ab0] sm:$0xff]
    %v7416 = vld [vmem:[#allocation14 + $0x2ab8] sm:$0xff]
    %v7417 = vld [vmem:[#allocation14 + $0x2ac0] sm:$0xff]
    %v7418 = vld [vmem:[#allocation14 + $0x2ac8] sm:$0xff]
    %v7419 = vld [vmem:[#allocation14 + $0x2ad0] sm:$0xff]
    %v7420 = vld [vmem:[#allocation14 + $0x2ad8] sm:$0xff]
    %v7421 = vld [vmem:[#allocation14 + $0x2ae0] sm:$0xff]
    %v7422 = vld [vmem:[#allocation14 + $0x2ae8] sm:$0xff]
    %v7423 = vld [vmem:[#allocation14 + $0x2af0] sm:$0xff]
    %v7424 = vld [vmem:[#allocation14 + $0x2af8] sm:$0xff]
    %v7425 = vld [vmem:[#allocation14 + $0x2b00] sm:$0xff]
    %v7426 = vld [vmem:[#allocation14 + $0x2b08] sm:$0xff]
    %v7427 = vld [vmem:[#allocation14 + $0x2b10] sm:$0xff]
    %v7428 = vld [vmem:[#allocation14 + $0x2b18] sm:$0xff]
    %v7429 = vld [vmem:[#allocation14 + $0x2b20] sm:$0xff]
    %v7430 = vld [vmem:[#allocation14 + $0x2b28] sm:$0xff]
    %v7431 = vld [vmem:[#allocation14 + $0x2b30] sm:$0xff]
    %v7432 = vld [vmem:[#allocation14 + $0x2b38] sm:$0xff]
    %v7433 = vld [vmem:[#allocation14 + $0x2b40] sm:$0xff]
    %v7434 = vld [vmem:[#allocation14 + $0x2b48] sm:$0xff]
    %v7435 = vld [vmem:[#allocation14 + $0x2b50] sm:$0xff]
    %v7436 = vld [vmem:[#allocation14 + $0x2b58] sm:$0xff]
    %v7437 = vld [vmem:[#allocation14 + $0x2b60] sm:$0xff]
    %v7438 = vld [vmem:[#allocation14 + $0x2b68] sm:$0xff]
    %v7439 = vld [vmem:[#allocation14 + $0x2b70] sm:$0xff]
    %v7440 = vld [vmem:[#allocation14 + $0x2b78] sm:$0xff]
    %v7441 = vld [vmem:[#allocation14 + $0x2b80] sm:$0xff]
    %v7442 = vld [vmem:[#allocation14 + $0x2b88] sm:$0xff]
    %v7443 = vld [vmem:[#allocation14 + $0x2b90] sm:$0xff]
    %v7444 = vld [vmem:[#allocation14 + $0x2b98] sm:$0xff]
    %v7445 = vld [vmem:[#allocation14 + $0x2ba0] sm:$0xff]
    %v7446 = vld [vmem:[#allocation14 + $0x2ba8] sm:$0xff]
    %v7447 = vld [vmem:[#allocation14 + $0x2bb0] sm:$0xff]
    %v7448 = vld [vmem:[#allocation14 + $0x2bb8] sm:$0xff]
    %v7449 = vld [vmem:[#allocation14 + $0x2bc0] sm:$0xff]
    %v7450 = vld [vmem:[#allocation14 + $0x2bc8] sm:$0xff]
    %v7451 = vld [vmem:[#allocation14 + $0x2bd0] sm:$0xff]
    %v7452 = vld [vmem:[#allocation14 + $0x2bd8] sm:$0xff]
    %v7453 = vld [vmem:[#allocation14 + $0x2be0] sm:$0xff]
    %v7454 = vld [vmem:[#allocation14 + $0x2be8] sm:$0xff]
    %v7455 = vld [vmem:[#allocation14 + $0x2bf0] sm:$0xff]
    %v7456 = vld [vmem:[#allocation14 + $0x2bf8] sm:$0xff]
    %v7457 = vld [vmem:[#allocation14 + $0x2c00] sm:$0xff]
    %v7458 = vld [vmem:[#allocation14 + $0x2c08] sm:$0xff]
    %v7459 = vld [vmem:[#allocation14 + $0x2c10] sm:$0xff]
    %v7460 = vld [vmem:[#allocation14 + $0x2c18] sm:$0xff]
    %v7461 = vld [vmem:[#allocation14 + $0x2c20] sm:$0xff]
    %v7462 = vld [vmem:[#allocation14 + $0x2c28] sm:$0xff]
    %v7463 = vld [vmem:[#allocation14 + $0x2c30] sm:$0xff]
    %v7464 = vld [vmem:[#allocation14 + $0x2c38] sm:$0xff]
    %v7465 = vld [vmem:[#allocation14 + $0x2c40] sm:$0xff]
    %v7466 = vld [vmem:[#allocation14 + $0x2c48] sm:$0xff]
    %v7467 = vld [vmem:[#allocation14 + $0x2c50] sm:$0xff]
    %v7468 = vld [vmem:[#allocation14 + $0x2c58] sm:$0xff]
    %v7469 = vld [vmem:[#allocation14 + $0x2c60] sm:$0xff]
    %v7470 = vld [vmem:[#allocation14 + $0x2c68] sm:$0xff]
    %v7471 = vld [vmem:[#allocation14 + $0x2c70] sm:$0xff]
    %v7472 = vld [vmem:[#allocation14 + $0x2c78] sm:$0xff]
    %v7473 = vld [vmem:[#allocation14 + $0x2c80] sm:$0xff]
    %v7474 = vld [vmem:[#allocation14 + $0x2c88] sm:$0xff]
    %v7475 = vld [vmem:[#allocation14 + $0x2c90] sm:$0xff]
    %v7476 = vld [vmem:[#allocation14 + $0x2c98] sm:$0xff]
    %v7477 = vld [vmem:[#allocation14 + $0x2ca0] sm:$0xff]
    %v7478 = vld [vmem:[#allocation14 + $0x2ca8] sm:$0xff]
    %v7479 = vld [vmem:[#allocation14 + $0x2cb0] sm:$0xff]
    %v7480 = vld [vmem:[#allocation14 + $0x2cb8] sm:$0xff]
    %v7481 = vld [vmem:[#allocation14 + $0x2cc0] sm:$0xff]
    %v7482 = vld [vmem:[#allocation14 + $0x2cc8] sm:$0xff]
    %v7483 = vld [vmem:[#allocation14 + $0x2cd0] sm:$0xff]
    %v7484 = vld [vmem:[#allocation14 + $0x2cd8] sm:$0xff]
    %v7485 = vld [vmem:[#allocation14 + $0x2ce0] sm:$0xff]
    %v7486 = vld [vmem:[#allocation14 + $0x2ce8] sm:$0xff]
    %v7487 = vld [vmem:[#allocation14 + $0x2cf0] sm:$0xff]
    %v7488 = vld [vmem:[#allocation14 + $0x2cf8] sm:$0xff]
    %v7489 = vld [vmem:[#allocation14 + $0x2d00] sm:$0xff]
    %v7490 = vld [vmem:[#allocation14 + $0x2d08] sm:$0xff]
    %v7491 = vld [vmem:[#allocation14 + $0x2d10] sm:$0xff]
    %v7492 = vld [vmem:[#allocation14 + $0x2d18] sm:$0xff]
    %v7493 = vld [vmem:[#allocation14 + $0x2d20] sm:$0xff]
    %v7494 = vld [vmem:[#allocation14 + $0x2d28] sm:$0xff]
    %v7495 = vld [vmem:[#allocation14 + $0x2d30] sm:$0xff]
    %v7496 = vld [vmem:[#allocation14 + $0x2d38] sm:$0xff]
    %v7497 = vld [vmem:[#allocation14 + $0x2d40] sm:$0xff]
    %v7498 = vld [vmem:[#allocation14 + $0x2d48] sm:$0xff]
    %v7499 = vld [vmem:[#allocation14 + $0x2d50] sm:$0xff]
    %v7500 = vld [vmem:[#allocation14 + $0x2d58] sm:$0xff]
    %v7501 = vld [vmem:[#allocation14 + $0x2d60] sm:$0xff]
    %v7502 = vld [vmem:[#allocation14 + $0x2d68] sm:$0xff]
    %v7503 = vld [vmem:[#allocation14 + $0x2d70] sm:$0xff]
    %v7504 = vld [vmem:[#allocation14 + $0x2d78] sm:$0xff]
    %v7505 = vld [vmem:[#allocation14 + $0x2d80] sm:$0xff]
    %v7506 = vld [vmem:[#allocation14 + $0x2d88] sm:$0xff]
    %v7507 = vld [vmem:[#allocation14 + $0x2d90] sm:$0xff]
    %v7508 = vld [vmem:[#allocation14 + $0x2d98] sm:$0xff]
    %v7509 = vld [vmem:[#allocation14 + $0x2da0] sm:$0xff]
    %v7510 = vld [vmem:[#allocation14 + $0x2da8] sm:$0xff]
    %v7511 = vld [vmem:[#allocation14 + $0x2db0] sm:$0xff]
    %v7512 = vld [vmem:[#allocation14 + $0x2db8] sm:$0xff]
    %v7513 = vld [vmem:[#allocation14 + $0x2dc0] sm:$0xff]
    %v7514 = vld [vmem:[#allocation14 + $0x2dc8] sm:$0xff]
    %v7515 = vld [vmem:[#allocation14 + $0x2dd0] sm:$0xff]
    %v7516 = vld [vmem:[#allocation14 + $0x2dd8] sm:$0xff]
    %v7517 = vld [vmem:[#allocation14 + $0x2de0] sm:$0xff]
    %v7518 = vld [vmem:[#allocation14 + $0x2de8] sm:$0xff]
    %v7519 = vld [vmem:[#allocation14 + $0x2df0] sm:$0xff]
    %v7520 = vld [vmem:[#allocation14 + $0x2df8] sm:$0xff]
    %v7521 = vld [vmem:[#allocation14 + $0x2e00] sm:$0xff]
    %v7522 = vld [vmem:[#allocation14 + $0x2e08] sm:$0xff]
    %v7523 = vld [vmem:[#allocation14 + $0x2e10] sm:$0xff]
    %v7524 = vld [vmem:[#allocation14 + $0x2e18] sm:$0xff]
    %v7525 = vld [vmem:[#allocation14 + $0x2e20] sm:$0xff]
    %v7526 = vld [vmem:[#allocation14 + $0x2e28] sm:$0xff]
    %v7527 = vld [vmem:[#allocation14 + $0x2e30] sm:$0xff]
    %v7528 = vld [vmem:[#allocation14 + $0x2e38] sm:$0xff]
    %v7529 = vld [vmem:[#allocation14 + $0x2e40] sm:$0xff]
    %v7530 = vld [vmem:[#allocation14 + $0x2e48] sm:$0xff]
    %v7531 = vld [vmem:[#allocation14 + $0x2e50] sm:$0xff]
    %v7532 = vld [vmem:[#allocation14 + $0x2e58] sm:$0xff]
    %v7533 = vld [vmem:[#allocation14 + $0x2e60] sm:$0xff]
    %v7534 = vld [vmem:[#allocation14 + $0x2e68] sm:$0xff]
    %v7535 = vld [vmem:[#allocation14 + $0x2e70] sm:$0xff]
    %v7536 = vld [vmem:[#allocation14 + $0x2e78] sm:$0xff]
    %v7537 = vld [vmem:[#allocation14 + $0x2e80] sm:$0xff]
    %v7538 = vld [vmem:[#allocation14 + $0x2e88] sm:$0xff]
    %v7539 = vld [vmem:[#allocation14 + $0x2e90] sm:$0xff]
    %v7540 = vld [vmem:[#allocation14 + $0x2e98] sm:$0xff]
    %v7541 = vld [vmem:[#allocation14 + $0x2ea0] sm:$0xff]
    %v7542 = vld [vmem:[#allocation14 + $0x2ea8] sm:$0xff]
    %v7543 = vld [vmem:[#allocation14 + $0x2eb0] sm:$0xff]
    %v7544 = vld [vmem:[#allocation14 + $0x2eb8] sm:$0xff]
    %v7545 = vld [vmem:[#allocation14 + $0x2ec0] sm:$0xff]
    %v7546 = vld [vmem:[#allocation14 + $0x2ec8] sm:$0xff]
    %v7547 = vld [vmem:[#allocation14 + $0x2ed0] sm:$0xff]
    %v7548 = vld [vmem:[#allocation14 + $0x2ed8] sm:$0xff]
    %v7549 = vld [vmem:[#allocation14 + $0x2ee0] sm:$0xff]
    %v7550 = vld [vmem:[#allocation14 + $0x2ee8] sm:$0xff]
    %v7551 = vld [vmem:[#allocation14 + $0x2ef0] sm:$0xff]
    %v7552 = vld [vmem:[#allocation14 + $0x2ef8] sm:$0xff]
    %v7553 = vld [vmem:[#allocation14 + $0x2f00] sm:$0xff]
    %v7554 = vld [vmem:[#allocation14 + $0x2f08] sm:$0xff]
    %v7555 = vld [vmem:[#allocation14 + $0x2f10] sm:$0xff]
    %v7556 = vld [vmem:[#allocation14 + $0x2f18] sm:$0xff]
    %v7557 = vld [vmem:[#allocation14 + $0x2f20] sm:$0xff]
    %v7558 = vld [vmem:[#allocation14 + $0x2f28] sm:$0xff]
    %v7559 = vld [vmem:[#allocation14 + $0x2f30] sm:$0xff]
    %v7560 = vld [vmem:[#allocation14 + $0x2f38] sm:$0xff]
    %v7561 = vld [vmem:[#allocation14 + $0x2f40] sm:$0xff]
    %v7562 = vld [vmem:[#allocation14 + $0x2f48] sm:$0xff]
    %v7563 = vld [vmem:[#allocation14 + $0x2f50] sm:$0xff]
    %v7564 = vld [vmem:[#allocation14 + $0x2f58] sm:$0xff]
    %v7565 = vld [vmem:[#allocation14 + $0x2f60] sm:$0xff]
    %v7566 = vld [vmem:[#allocation14 + $0x2f68] sm:$0xff]
    %v7567 = vld [vmem:[#allocation14 + $0x2f70] sm:$0xff]
    %v7568 = vld [vmem:[#allocation14 + $0x2f78] sm:$0xff]
    %v7569 = vld [vmem:[#allocation14 + $0x2f80] sm:$0xff]
    %v7570 = vld [vmem:[#allocation14 + $0x2f88] sm:$0xff]
    %v7571 = vld [vmem:[#allocation14 + $0x2f90] sm:$0xff]
    %v7572 = vld [vmem:[#allocation14 + $0x2f98] sm:$0xff]
    %v7573 = vld [vmem:[#allocation14 + $0x2fa0] sm:$0xff]
    %v7574 = vld [vmem:[#allocation14 + $0x2fa8] sm:$0xff]
    %v7575 = vld [vmem:[#allocation14 + $0x2fb0] sm:$0xff]
    %v7576 = vld [vmem:[#allocation14 + $0x2fb8] sm:$0xff]
    %v7577 = vld [vmem:[#allocation14 + $0x2fc0] sm:$0xff]
    %v7578 = vld [vmem:[#allocation14 + $0x2fc8] sm:$0xff]
    %v7579 = vld [vmem:[#allocation14 + $0x2fd0] sm:$0xff]
    %v7580 = vld [vmem:[#allocation14 + $0x2fd8] sm:$0xff]
    %v7581 = vld [vmem:[#allocation14 + $0x2fe0] sm:$0xff]
    %v7582 = vld [vmem:[#allocation14 + $0x2fe8] sm:$0xff]
    %v7583 = vld [vmem:[#allocation14 + $0x2ff0] sm:$0xff]
    %v7584 = vld [vmem:[#allocation14 + $0x2ff8] sm:$0xff]
    %v7585 = vld [vmem:[#allocation16] sm:$0x3f]
    %v7587 = vlaneseq
    %v7588 = vshrl.u32 %v7587, 7
    %v7589 = vsub.s32 0, %v7588
    %v7590 = vrot.slane %v7585, %v7589
    %v7591 = vlaneseq
    %v7592 = vshrl.u32 %v7591, 7
    %v7593 = vsub.s32 1, %v7592
    %v7594 = vrot.slane %v7585, %v7593
    %v7595 = vlaneseq
    %v7596 = vshrl.u32 %v7595, 7
    %v7597 = vsub.s32 2, %v7596
    %v7598 = vrot.slane %v7585, %v7597
    %v7599 = vlaneseq
    %v7600 = vshrl.u32 %v7599, 7
    %v7601 = vsub.s32 3, %v7600
    %v7602 = vrot.slane %v7585, %v7601
    %v7603 = vlaneseq
    %v7604 = vshrl.u32 %v7603, 7
    %v7605 = vsub.s32 4, %v7604
    %v7606 = vrot.slane %v7585, %v7605
    %v7607 = vlaneseq
    %v7608 = vshrl.u32 %v7607, 7
    %v7609 = vsub.s32 5, %v7608
    %v7610 = vrot.slane %v7585, %v7609
    %7617 = vmatprep.subr.mxu0 %v6050
    %7618 = vmatpush1.msra.mxu0 %v6049
    %7619 = vmatprep.subr.mxu0 %v6056
    %7620 = vmatpush1.msra.mxu0 %v6055
    %7621 = vmatprep.subr.mxu0 %v6062
    %7622 = vmatpush1.msra.mxu0 %v6061
    %7623 = vmatprep.subr.mxu0 %v6068
    %7624 = vmatpush1.msra.mxu0 %v6067
    %7625 = vmatprep.subr.mxu0 %v6074
    %7626 = vmatpush1.msra.mxu0 %v6073
    %7627 = vmatprep.subr.mxu0 %v6080
    %7628 = vmatpush1.msra.mxu0 %v6079
    %7629 = vmatprep.subr.mxu0 %v6086
    %7630 = vmatpush1.msra.mxu0 %v6085
    %7631 = vmatprep.subr.mxu0 %v6092
    %7632 = vmatpush1.msra.mxu0 %v6091
    %7633 = vmatprep.subr.mxu0 %v6098
    %7634 = vmatpush1.msra.mxu0 %v6097
    %7635 = vmatprep.subr.mxu0 %v6104
    %7636 = vmatpush1.msra.mxu0 %v6103
    %7637 = vmatprep.subr.mxu0 %v6110
    %7638 = vmatpush1.msra.mxu0 %v6109
    %7639 = vmatprep.subr.mxu0 %v6116
    %7640 = vmatpush1.msra.mxu0 %v6115
    %7641 = vmatprep.subr.mxu0 %v6122
    %7642 = vmatpush1.msra.mxu0 %v6121
    %7643 = vmatprep.subr.mxu0 %v6128
    %7644 = vmatpush1.msra.mxu0 %v6127
    %7645 = vmatprep.subr.mxu0 %v6134
    %7646 = vmatpush1.msra.mxu0 %v6133
    %7647 = vmatprep.subr.mxu0 %v6140
    %7648 = vmatpush1.msra.mxu0 %v6139
    %7649 = vmatprep.subr.mxu0 %v6146
    %7650 = vmatpush1.msra.mxu0 %v6145
    %7651 = vmatprep.subr.mxu0 %v6152
    %7652 = vmatpush1.msra.mxu0 %v6151
    %7653 = vmatprep.subr.mxu0 %v6158
    %7654 = vmatpush1.msra.mxu0 %v6157
    %7655 = vmatprep.subr.mxu0 %v6164
    %7656 = vmatpush1.msra.mxu0 %v6163
    %7657 = vmatprep.subr.mxu0 %v6170
    %7658 = vmatpush1.msra.mxu0 %v6169
    %7659 = vmatprep.subr.mxu0 %v6176
    %7660 = vmatpush1.msra.mxu0 %v6175
    %7661 = vmatprep.subr.mxu0 %v6182
    %7662 = vmatpush1.msra.mxu0 %v6181
    %7663 = vmatprep.subr.mxu0 %v6188
    %7664 = vmatpush1.msra.mxu0 %v6187
    %7665 = vmatprep.subr.mxu0 %v6194
    %7666 = vmatpush1.msra.mxu0 %v6193
    %7667 = vmatprep.subr.mxu0 %v6200
    %7668 = vmatpush1.msra.mxu0 %v6199
    %7669 = vmatprep.subr.mxu0 %v6206
    %7670 = vmatpush1.msra.mxu0 %v6205
    %7671 = vmatprep.subr.mxu0 %v6212
    %7672 = vmatpush1.msra.mxu0 %v6211
    %7673 = vmatprep.subr.mxu0 %v6218
    %7674 = vmatpush1.msra.mxu0 %v6217
    %7675 = vmatprep.subr.mxu0 %v6224
    %7676 = vmatpush1.msra.mxu0 %v6223
    %7677 = vmatprep.subr.mxu0 %v6230
    %7678 = vmatpush1.msra.mxu0 %v6229
    %7679 = vmatprep.subr.mxu0 %v6236
    %7680 = vmatpush1.msra.mxu0 %v6235
    %7681 = vmatprep.mubr.f32.mxu0 %v6034
    %7682 = vmatmul.mubr.f32.gmra.mrb[0].mxu0 %v6033
    %v7683 = vpop.f32.mrb[0].mxu0
    %v7684 = vadd.f32 %v7590, %v7683
    %v7685 = vpop.f32.mrb[0].mxu0
    %v7686 = vadd.f32 %v7594, %v7685
    %7687 = vdwg.mxu0
    %7688 = vmatprep.subr.mxu0 %v6242
    %7689 = vmatpush1.msra.mxu0 %v6241
    %7690 = vmatprep.subr.mxu0 %v6248
    %7691 = vmatpush1.msra.mxu0 %v6247
    %7692 = vmatprep.subr.mxu0 %v6254
    %7693 = vmatpush1.msra.mxu0 %v6253
    %7694 = vmatprep.subr.mxu0 %v6260
    %7695 = vmatpush1.msra.mxu0 %v6259
    %7696 = vmatprep.subr.mxu0 %v6266
    %7697 = vmatpush1.msra.mxu0 %v6265
    %7698 = vmatprep.subr.mxu0 %v6272
    %7699 = vmatpush1.msra.mxu0 %v6271
    %7700 = vmatprep.subr.mxu0 %v6278
    %7701 = vmatpush1.msra.mxu0 %v6277
    %7702 = vmatprep.subr.mxu0 %v6284
    %7703 = vmatpush1.msra.mxu0 %v6283
    %7704 = vmatprep.subr.mxu0 %v6290
    %7705 = vmatpush1.msra.mxu0 %v6289
    %7706 = vmatprep.subr.mxu0 %v6296
    %7707 = vmatpush1.msra.mxu0 %v6295
    %7708 = vmatprep.subr.mxu0 %v6302
    %7709 = vmatpush1.msra.mxu0 %v6301
    %7710 = vmatprep.subr.mxu0 %v6308
    %7711 = vmatpush1.msra.mxu0 %v6307
    %7712 = vmatprep.subr.mxu0 %v6314
    %7713 = vmatpush1.msra.mxu0 %v6313
    %7714 = vmatprep.subr.mxu0 %v6320
    %7715 = vmatpush1.msra.mxu0 %v6319
    %7716 = vmatprep.subr.mxu0 %v6326
    %7717 = vmatpush1.msra.mxu0 %v6325
    %7718 = vmatprep.subr.mxu0 %v6332
    %7719 = vmatpush1.msra.mxu0 %v6331
    %7720 = vmatprep.subr.mxu0 %v6338
    %7721 = vmatpush1.msra.mxu0 %v6337
    %7722 = vmatprep.subr.mxu0 %v6344
    %7723 = vmatpush1.msra.mxu0 %v6343
    %7724 = vmatprep.subr.mxu0 %v6350
    %7725 = vmatpush1.msra.mxu0 %v6349
    %7726 = vmatprep.subr.mxu0 %v6356
    %7727 = vmatpush1.msra.mxu0 %v6355
    %7728 = vmatprep.subr.mxu0 %v6362
    %7729 = vmatpush1.msra.mxu0 %v6361
    %7730 = vmatprep.subr.mxu0 %v6368
    %7731 = vmatpush1.msra.mxu0 %v6367
    %7732 = vmatprep.subr.mxu0 %v6374
    %7733 = vmatpush1.msra.mxu0 %v6373
    %7734 = vmatprep.subr.mxu0 %v6380
    %7735 = vmatpush1.msra.mxu0 %v6379
    %7736 = vmatprep.subr.mxu0 %v6386
    %7737 = vmatpush1.msra.mxu0 %v6385
    %7738 = vmatprep.subr.mxu0 %v6392
    %7739 = vmatpush1.msra.mxu0 %v6391
    %7740 = vmatprep.subr.mxu0 %v6398
    %7741 = vmatpush1.msra.mxu0 %v6397
    %7742 = vmatprep.subr.mxu0 %v6404
    %7743 = vmatpush1.msra.mxu0 %v6403
    %7744 = vmatprep.subr.mxu0 %v6410
    %7745 = vmatpush1.msra.mxu0 %v6409
    %7746 = vmatprep.subr.mxu0 %v6416
    %7747 = vmatpush1.msra.mxu0 %v6415
    %7748 = vmatprep.subr.mxu0 %v6422
    %7749 = vmatpush1.msra.mxu0 %v6421
    %7750 = vmatprep.subr.mxu0 %v6428
    %7751 = vmatpush1.msra.mxu0 %v6427
    %7752 = vmatprep.mubr.f32.mxu0 %v6036
    %7753 = vmatmul.mubr.f32.gmra.mrb[0].mxu0 %v6035
    %v7754 = vpop.f32.mrb[0].mxu0
    %v7755 = vadd.f32 %v7684, %v7754
    %v7756 = vpop.f32.mrb[0].mxu0
    %v7757 = vadd.f32 %v7686, %v7756
    %7758 = vdwg.mxu0
    %7759 = vmatprep.subr.mxu0 %v6434
    %7760 = vmatpush1.msra.mxu0 %v6433
    %7761 = vmatprep.subr.mxu0 %v6440
    %7762 = vmatpush1.msra.mxu0 %v6439
    %7763 = vmatprep.subr.mxu0 %v6446
    %7764 = vmatpush1.msra.mxu0 %v6445
    %7765 = vmatprep.subr.mxu0 %v6452
    %7766 = vmatpush1.msra.mxu0 %v6451
    %7767 = vmatprep.subr.mxu0 %v6458
    %7768 = vmatpush1.msra.mxu0 %v6457
    %7769 = vmatprep.subr.mxu0 %v6464
    %7770 = vmatpush1.msra.mxu0 %v6463
    %7771 = vmatprep.subr.mxu0 %v6470
    %7772 = vmatpush1.msra.mxu0 %v6469
    %7773 = vmatprep.subr.mxu0 %v6476
    %7774 = vmatpush1.msra.mxu0 %v6475
    %7775 = vmatprep.subr.mxu0 %v6482
    %7776 = vmatpush1.msra.mxu0 %v6481
    %7777 = vmatprep.subr.mxu0 %v6488
    %7778 = vmatpush1.msra.mxu0 %v6487
    %7779 = vmatprep.subr.mxu0 %v6494
    %7780 = vmatpush1.msra.mxu0 %v6493
    %7781 = vmatprep.subr.mxu0 %v6500
    %7782 = vmatpush1.msra.mxu0 %v6499
    %7783 = vmatprep.subr.mxu0 %v6506
    %7784 = vmatpush1.msra.mxu0 %v6505
    %7785 = vmatprep.subr.mxu0 %v6512
    %7786 = vmatpush1.msra.mxu0 %v6511
    %7787 = vmatprep.subr.mxu0 %v6518
    %7788 = vmatpush1.msra.mxu0 %v6517
    %7789 = vmatprep.subr.mxu0 %v6524
    %7790 = vmatpush1.msra.mxu0 %v6523
    %7791 = vmatprep.subr.mxu0 %v6530
    %7792 = vmatpush1.msra.mxu0 %v6529
    %7793 = vmatprep.subr.mxu0 %v6536
    %7794 = vmatpush1.msra.mxu0 %v6535
    %7795 = vmatprep.subr.mxu0 %v6542
    %7796 = vmatpush1.msra.mxu0 %v6541
    %7797 = vmatprep.subr.mxu0 %v6548
    %7798 = vmatpush1.msra.mxu0 %v6547
    %7799 = vmatprep.subr.mxu0 %v6554
    %7800 = vmatpush1.msra.mxu0 %v6553
    %7801 = vmatprep.subr.mxu0 %v6560
    %7802 = vmatpush1.msra.mxu0 %v6559
    %7803 = vmatprep.subr.mxu0 %v6566
    %7804 = vmatpush1.msra.mxu0 %v6565
    %7805 = vmatprep.subr.mxu0 %v6572
    %7806 = vmatpush1.msra.mxu0 %v6571
    %7807 = vmatprep.subr.mxu0 %v6578
    %7808 = vmatpush1.msra.mxu0 %v6577
    %7809 = vmatprep.subr.mxu0 %v6584
    %7810 = vmatpush1.msra.mxu0 %v6583
    %7811 = vmatprep.subr.mxu0 %v6590
    %7812 = vmatpush1.msra.mxu0 %v6589
    %7813 = vmatprep.subr.mxu0 %v6596
    %7814 = vmatpush1.msra.mxu0 %v6595
    %7815 = vmatprep.subr.mxu0 %v6602
    %7816 = vmatpush1.msra.mxu0 %v6601
    %7817 = vmatprep.subr.mxu0 %v6608
    %7818 = vmatpush1.msra.mxu0 %v6607
    %7819 = vmatprep.subr.mxu0 %v6614
    %7820 = vmatpush1.msra.mxu0 %v6613
    %7821 = vmatprep.subr.mxu0 %v6620
    %7822 = vmatpush1.msra.mxu0 %v6619
    %7823 = vmatprep.mubr.f32.mxu0 %v6038
    %7824 = vmatmul.mubr.f32.gmra.mrb[0].mxu0 %v6037
    %v7825 = vpop.f32.mrb[0].mxu0
    %v7826 = vadd.f32 %v7755, %v7825
    %v7827 = vpop.f32.mrb[0].mxu0
    %v7828 = vadd.f32 %v7757, %v7827
    %7829 = vdwg.mxu0
    %7830 = vmatprep.subr.mxu0 %v6626
    %7831 = vmatpush1.msra.mxu0 %v6625
    %7832 = vmatprep.subr.mxu0 %v6632
    %7833 = vmatpush1.msra.mxu0 %v6631
    %7834 = vmatprep.subr.mxu0 %v6638
    %7835 = vmatpush1.msra.mxu0 %v6637
    %7836 = vmatprep.subr.mxu0 %v6644
    %7837 = vmatpush1.msra.mxu0 %v6643
    %7838 = vmatprep.subr.mxu0 %v6650
    %7839 = vmatpush1.msra.mxu0 %v6649
    %7840 = vmatprep.subr.mxu0 %v6656
    %7841 = vmatpush1.msra.mxu0 %v6655
    %7842 = vmatprep.subr.mxu0 %v6662
    %7843 = vmatpush1.msra.mxu0 %v6661
    %7844 = vmatprep.subr.mxu0 %v6668
    %7845 = vmatpush1.msra.mxu0 %v6667
    %7846 = vmatprep.subr.mxu0 %v6674
    %7847 = vmatpush1.msra.mxu0 %v6673
    %7848 = vmatprep.subr.mxu0 %v6680
    %7849 = vmatpush1.msra.mxu0 %v6679
    %7850 = vmatprep.subr.mxu0 %v6686
    %7851 = vmatpush1.msra.mxu0 %v6685
    %7852 = vmatprep.subr.mxu0 %v6692
    %7853 = vmatpush1.msra.mxu0 %v6691
    %7854 = vmatprep.subr.mxu0 %v6698
    %7855 = vmatpush1.msra.mxu0 %v6697
    %7856 = vmatprep.subr.mxu0 %v6704
    %7857 = vmatpush1.msra.mxu0 %v6703
    %7858 = vmatprep.subr.mxu0 %v6710
    %7859 = vmatpush1.msra.mxu0 %v6709
    %7860 = vmatprep.subr.mxu0 %v6716
    %7861 = vmatpush1.msra.mxu0 %v6715
    %7862 = vmatprep.subr.mxu0 %v6722
    %7863 = vmatpush1.msra.mxu0 %v6721
    %7864 = vmatprep.subr.mxu0 %v6728
    %7865 = vmatpush1.msra.mxu0 %v6727
    %7866 = vmatprep.subr.mxu0 %v6734
    %7867 = vmatpush1.msra.mxu0 %v6733
    %7868 = vmatprep.subr.mxu0 %v6740
    %7869 = vmatpush1.msra.mxu0 %v6739
    %7870 = vmatprep.subr.mxu0 %v6746
    %7871 = vmatpush1.msra.mxu0 %v6745
    %7872 = vmatprep.subr.mxu0 %v6752
    %7873 = vmatpush1.msra.mxu0 %v6751
    %7874 = vmatprep.subr.mxu0 %v6758
    %7875 = vmatpush1.msra.mxu0 %v6757
    %7876 = vmatprep.subr.mxu0 %v6764
    %7877 = vmatpush1.msra.mxu0 %v6763
    %7878 = vmatprep.subr.mxu0 %v6770
    %7879 = vmatpush1.msra.mxu0 %v6769
    %7880 = vmatprep.subr.mxu0 %v6776
    %7881 = vmatpush1.msra.mxu0 %v6775
    %7882 = vmatprep.subr.mxu0 %v6782
    %7883 = vmatpush1.msra.mxu0 %v6781
    %7884 = vmatprep.subr.mxu0 %v6788
    %7885 = vmatpush1.msra.mxu0 %v6787
    %7886 = vmatprep.subr.mxu0 %v6794
    %7887 = vmatpush1.msra.mxu0 %v6793
    %7888 = vmatprep.subr.mxu0 %v6800
    %7889 = vmatpush1.msra.mxu0 %v6799
    %7890 = vmatprep.subr.mxu0 %v6806
    %7891 = vmatpush1.msra.mxu0 %v6805
    %7892 = vmatprep.subr.mxu0 %v6812
    %7893 = vmatpush1.msra.mxu0 %v6811
    %7894 = vmatprep.mubr.f32.mxu0 %v6040
    %7895 = vmatmul.mubr.f32.gmra.mrb[0].mxu0 %v6039
    %v7896 = vpop.f32.mrb[0].mxu0
    %v7897 = vadd.f32 %v7826, %v7896
    %v7898 = vpop.f32.mrb[0].mxu0
    %v7899 = vadd.f32 %v7828, %v7898
    %7900 = vdwg.mxu0
    %7901 = vmatprep.subr.mxu0 %v6818
    %7902 = vmatpush1.msra.mxu0 %v6817
    %7903 = vmatprep.subr.mxu0 %v6824
    %7904 = vmatpush1.msra.mxu0 %v6823
    %7905 = vmatprep.subr.mxu0 %v6830
    %7906 = vmatpush1.msra.mxu0 %v6829
    %7907 = vmatprep.subr.mxu0 %v6836
    %7908 = vmatpush1.msra.mxu0 %v6835
    %7909 = vmatprep.subr.mxu0 %v6842
    %7910 = vmatpush1.msra.mxu0 %v6841
    %7911 = vmatprep.subr.mxu0 %v6848
    %7912 = vmatpush1.msra.mxu0 %v6847
    %7913 = vmatprep.subr.mxu0 %v6854
    %7914 = vmatpush1.msra.mxu0 %v6853
    %7915 = vmatprep.subr.mxu0 %v6860
    %7916 = vmatpush1.msra.mxu0 %v6859
    %7917 = vmatprep.subr.mxu0 %v6866
    %7918 = vmatpush1.msra.mxu0 %v6865
    %7919 = vmatprep.subr.mxu0 %v6872
    %7920 = vmatpush1.msra.mxu0 %v6871
    %7921 = vmatprep.subr.mxu0 %v6878
    %7922 = vmatpush1.msra.mxu0 %v6877
    %7923 = vmatprep.subr.mxu0 %v6884
    %7924 = vmatpush1.msra.mxu0 %v6883
    %7925 = vmatprep.subr.mxu0 %v6890
    %7926 = vmatpush1.msra.mxu0 %v6889
    %7927 = vmatprep.subr.mxu0 %v6896
    %7928 = vmatpush1.msra.mxu0 %v6895
    %7929 = vmatprep.subr.mxu0 %v6902
    %7930 = vmatpush1.msra.mxu0 %v6901
    %7931 = vmatprep.subr.mxu0 %v6908
    %7932 = vmatpush1.msra.mxu0 %v6907
    %7933 = vmatprep.subr.mxu0 %v6914
    %7934 = vmatpush1.msra.mxu0 %v6913
    %7935 = vmatprep.subr.mxu0 %v6920
    %7936 = vmatpush1.msra.mxu0 %v6919
    %7937 = vmatprep.subr.mxu0 %v6926
    %7938 = vmatpush1.msra.mxu0 %v6925
    %7939 = vmatprep.subr.mxu0 %v6932
    %7940 = vmatpush1.msra.mxu0 %v6931
    %7941 = vmatprep.subr.mxu0 %v6938
    %7942 = vmatpush1.msra.mxu0 %v6937
    %7943 = vmatprep.subr.mxu0 %v6944
    %7944 = vmatpush1.msra.mxu0 %v6943
    %7945 = vmatprep.subr.mxu0 %v6950
    %7946 = vmatpush1.msra.mxu0 %v6949
    %7947 = vmatprep.subr.mxu0 %v6956
    %7948 = vmatpush1.msra.mxu0 %v6955
    %7949 = vmatprep.subr.mxu0 %v6962
    %7950 = vmatpush1.msra.mxu0 %v6961
    %7951 = vmatprep.subr.mxu0 %v6968
    %7952 = vmatpush1.msra.mxu0 %v6967
    %7953 = vmatprep.subr.mxu0 %v6974
    %7954 = vmatpush1.msra.mxu0 %v6973
    %7955 = vmatprep.subr.mxu0 %v6980
    %7956 = vmatpush1.msra.mxu0 %v6979
    %7957 = vmatprep.subr.mxu0 %v6986
    %7958 = vmatpush1.msra.mxu0 %v6985
    %7959 = vmatprep.subr.mxu0 %v6992
    %7960 = vmatpush1.msra.mxu0 %v6991
    %7961 = vmatprep.subr.mxu0 %v6998
    %7962 = vmatpush1.msra.mxu0 %v6997
    %7963 = vmatprep.subr.mxu0 %v7004
    %7964 = vmatpush1.msra.mxu0 %v7003
    %7965 = vmatprep.mubr.f32.mxu0 %v6042
    %7966 = vmatmul.mubr.f32.gmra.mrb[0].mxu0 %v6041
    %v7967 = vpop.f32.mrb[0].mxu0
    %v7968 = vadd.f32 %v7897, %v7967
    %v7969 = vpop.f32.mrb[0].mxu0
    %v7970 = vadd.f32 %v7899, %v7969
    %7971 = vdwg.mxu0
    %7972 = vmatprep.subr.mxu0 %v7010
    %7973 = vmatpush1.msra.mxu0 %v7009
    %7974 = vmatprep.subr.mxu0 %v7016
    %7975 = vmatpush1.msra.mxu0 %v7015
    %7976 = vmatprep.subr.mxu0 %v7022
    %7977 = vmatpush1.msra.mxu0 %v7021
    %7978 = vmatprep.subr.mxu0 %v7028
    %7979 = vmatpush1.msra.mxu0 %v7027
    %7980 = vmatprep.subr.mxu0 %v7034
    %7981 = vmatpush1.msra.mxu0 %v7033
    %7982 = vmatprep.subr.mxu0 %v7040
    %7983 = vmatpush1.msra.mxu0 %v7039
    %7984 = vmatprep.subr.mxu0 %v7046
    %7985 = vmatpush1.msra.mxu0 %v7045
    %7986 = vmatprep.subr.mxu0 %v7052
    %7987 = vmatpush1.msra.mxu0 %v7051
    %7988 = vmatprep.subr.mxu0 %v7058
    %7989 = vmatpush1.msra.mxu0 %v7057
    %7990 = vmatprep.subr.mxu0 %v7064
    %7991 = vmatpush1.msra.mxu0 %v7063
    %7992 = vmatprep.subr.mxu0 %v7070
    %7993 = vmatpush1.msra.mxu0 %v7069
    %7994 = vmatprep.subr.mxu0 %v7076
    %7995 = vmatpush1.msra.mxu0 %v7075
    %7996 = vmatprep.subr.mxu0 %v7082
    %7997 = vmatpush1.msra.mxu0 %v7081
    %7998 = vmatprep.subr.mxu0 %v7088
    %7999 = vmatpush1.msra.mxu0 %v7087
    %8000 = vmatprep.subr.mxu0 %v7094
    %8001 = vmatpush1.msra.mxu0 %v7093
    %8002 = vmatprep.subr.mxu0 %v7100
    %8003 = vmatpush1.msra.mxu0 %v7099
    %8004 = vmatprep.subr.mxu0 %v7106
    %8005 = vmatpush1.msra.mxu0 %v7105
    %8006 = vmatprep.subr.mxu0 %v7112
    %8007 = vmatpush1.msra.mxu0 %v7111
    %8008 = vmatprep.subr.mxu0 %v7118
    %8009 = vmatpush1.msra.mxu0 %v7117
    %8010 = vmatprep.subr.mxu0 %v7124
    %8011 = vmatpush1.msra.mxu0 %v7123
    %8012 = vmatprep.subr.mxu0 %v7130
    %8013 = vmatpush1.msra.mxu0 %v7129
    %8014 = vmatprep.subr.mxu0 %v7136
    %8015 = vmatpush1.msra.mxu0 %v7135
    %8016 = vmatprep.subr.mxu0 %v7142
    %8017 = vmatpush1.msra.mxu0 %v7141
    %8018 = vmatprep.subr.mxu0 %v7148
    %8019 = vmatpush1.msra.mxu0 %v7147
    %8020 = vmatprep.subr.mxu0 %v7154
    %8021 = vmatpush1.msra.mxu0 %v7153
    %8022 = vmatprep.subr.mxu0 %v7160
    %8023 = vmatpush1.msra.mxu0 %v7159
    %8024 = vmatprep.subr.mxu0 %v7166
    %8025 = vmatpush1.msra.mxu0 %v7165
    %8026 = vmatprep.subr.mxu0 %v7172
    %8027 = vmatpush1.msra.mxu0 %v7171
    %8028 = vmatprep.subr.mxu0 %v7178
    %8029 = vmatpush1.msra.mxu0 %v7177
    %8030 = vmatprep.subr.mxu0 %v7184
    %8031 = vmatpush1.msra.mxu0 %v7183
    %8032 = vmatprep.subr.mxu0 %v7190
    %8033 = vmatpush1.msra.mxu0 %v7189
    %8034 = vmatprep.subr.mxu0 %v7196
    %8035 = vmatpush1.msra.mxu0 %v7195
    %8036 = vmatprep.mubr.f32.mxu0 %v6044
    %8037 = vmatmul.mubr.f32.gmra.mrb[0].mxu0 %v6043
    %v8038 = vpop.f32.mrb[0].mxu0
    %v8039 = vadd.f32 %v7968, %v8038
    %v8040 = vpop.f32.mrb[0].mxu0
    %v8041 = vadd.f32 %v7970, %v8040
    %8042 = vdwg.mxu0
    %8043 = vmatprep.subr.mxu0 %v7202
    %8044 = vmatpush1.msra.mxu0 %v7201
    %8045 = vmatprep.subr.mxu0 %v7208
    %8046 = vmatpush1.msra.mxu0 %v7207
    %8047 = vmatprep.subr.mxu0 %v7214
    %8048 = vmatpush1.msra.mxu0 %v7213
    %8049 = vmatprep.subr.mxu0 %v7220
    %8050 = vmatpush1.msra.mxu0 %v7219
    %8051 = vmatprep.subr.mxu0 %v7226
    %8052 = vmatpush1.msra.mxu0 %v7225
    %8053 = vmatprep.subr.mxu0 %v7232
    %8054 = vmatpush1.msra.mxu0 %v7231
    %8055 = vmatprep.subr.mxu0 %v7238
    %8056 = vmatpush1.msra.mxu0 %v7237
    %8057 = vmatprep.subr.mxu0 %v7244
    %8058 = vmatpush1.msra.mxu0 %v7243
    %8059 = vmatprep.subr.mxu0 %v7250
    %8060 = vmatpush1.msra.mxu0 %v7249
    %8061 = vmatprep.subr.mxu0 %v7256
    %8062 = vmatpush1.msra.mxu0 %v7255
    %8063 = vmatprep.subr.mxu0 %v7262
    %8064 = vmatpush1.msra.mxu0 %v7261
    %8065 = vmatprep.subr.mxu0 %v7268
    %8066 = vmatpush1.msra.mxu0 %v7267
    %8067 = vmatprep.subr.mxu0 %v7274
    %8068 = vmatpush1.msra.mxu0 %v7273
    %8069 = vmatprep.subr.mxu0 %v7280
    %8070 = vmatpush1.msra.mxu0 %v7279
    %8071 = vmatprep.subr.mxu0 %v7286
    %8072 = vmatpush1.msra.mxu0 %v7285
    %8073 = vmatprep.subr.mxu0 %v7292
    %8074 = vmatpush1.msra.mxu0 %v7291
    %8075 = vmatprep.subr.mxu0 %v7298
    %8076 = vmatpush1.msra.mxu0 %v7297
    %8077 = vmatprep.subr.mxu0 %v7304
    %8078 = vmatpush1.msra.mxu0 %v7303
    %8079 = vmatprep.subr.mxu0 %v7310
    %8080 = vmatpush1.msra.mxu0 %v7309
    %8081 = vmatprep.subr.mxu0 %v7316
    %8082 = vmatpush1.msra.mxu0 %v7315
    %8083 = vmatprep.subr.mxu0 %v7322
    %8084 = vmatpush1.msra.mxu0 %v7321
    %8085 = vmatprep.subr.mxu0 %v7328
    %8086 = vmatpush1.msra.mxu0 %v7327
    %8087 = vmatprep.subr.mxu0 %v7334
    %8088 = vmatpush1.msra.mxu0 %v7333
    %8089 = vmatprep.subr.mxu0 %v7340
    %8090 = vmatpush1.msra.mxu0 %v7339
    %8091 = vmatprep.subr.mxu0 %v7346
    %8092 = vmatpush1.msra.mxu0 %v7345
    %8093 = vmatprep.subr.mxu0 %v7352
    %8094 = vmatpush1.msra.mxu0 %v7351
    %8095 = vmatprep.subr.mxu0 %v7358
    %8096 = vmatpush1.msra.mxu0 %v7357
    %8097 = vmatprep.subr.mxu0 %v7364
    %8098 = vmatpush1.msra.mxu0 %v7363
    %8099 = vmatprep.subr.mxu0 %v7370
    %8100 = vmatpush1.msra.mxu0 %v7369
    %8101 = vmatprep.subr.mxu0 %v7376
    %8102 = vmatpush1.msra.mxu0 %v7375
    %8103 = vmatprep.subr.mxu0 %v7382
    %8104 = vmatpush1.msra.mxu0 %v7381
    %8105 = vmatprep.subr.mxu0 %v7388
    %8106 = vmatpush1.msra.mxu0 %v7387
    %8107 = vmatprep.mubr.f32.mxu0 %v6046
    %8108 = vmatmul.mubr.f32.gmra.mrb[0].mxu0 %v6045
    %v8109 = vpop.f32.mrb[0].mxu0
    %v8110 = vadd.f32 %v8039, %v8109
    %v8111 = vpop.f32.mrb[0].mxu0
    %v8112 = vadd.f32 %v8041, %v8111
    %8113 = vdwg.mxu0
    %8114 = vmatprep.subr.mxu0 %v7394
    %8115 = vmatpush1.msra.mxu0 %v7393
    %8116 = vmatprep.subr.mxu0 %v7400
    %8117 = vmatpush1.msra.mxu0 %v7399
    %8118 = vmatprep.subr.mxu0 %v7406
    %8119 = vmatpush1.msra.mxu0 %v7405
    %8120 = vmatprep.subr.mxu0 %v7412
    %8121 = vmatpush1.msra.mxu0 %v7411
    %8122 = vmatprep.subr.mxu0 %v7418
    %8123 = vmatpush1.msra.mxu0 %v7417
    %8124 = vmatprep.subr.mxu0 %v7424
    %8125 = vmatpush1.msra.mxu0 %v7423
    %8126 = vmatprep.subr.mxu0 %v7430
    %8127 = vmatpush1.msra.mxu0 %v7429
    %8128 = vmatprep.subr.mxu0 %v7436
    %8129 = vmatpush1.msra.mxu0 %v7435
    %8130 = vmatprep.subr.mxu0 %v7442
    %8131 = vmatpush1.msra.mxu0 %v7441
    %8132 = vmatprep.subr.mxu0 %v7448
    %8133 = vmatpush1.msra.mxu0 %v7447
    %8134 = vmatprep.subr.mxu0 %v7454
    %8135 = vmatpush1.msra.mxu0 %v7453
    %8136 = vmatprep.subr.mxu0 %v7460
    %8137 = vmatpush1.msra.mxu0 %v7459
    %8138 = vmatprep.subr.mxu0 %v7466
    %8139 = vmatpush1.msra.mxu0 %v7465
    %8140 = vmatprep.subr.mxu0 %v7472
    %8141 = vmatpush1.msra.mxu0 %v7471
    %8142 = vmatprep.subr.mxu0 %v7478
    %8143 = vmatpush1.msra.mxu0 %v7477
    %8144 = vmatprep.subr.mxu0 %v7484
    %8145 = vmatpush1.msra.mxu0 %v7483
    %8146 = vmatprep.subr.mxu0 %v7490
    %8147 = vmatpush1.msra.mxu0 %v7489
    %8148 = vmatprep.subr.mxu0 %v7496
    %8149 = vmatpush1.msra.mxu0 %v7495
    %8150 = vmatprep.subr.mxu0 %v7502
    %8151 = vmatpush1.msra.mxu0 %v7501
    %8152 = vmatprep.subr.mxu0 %v7508
    %8153 = vmatpush1.msra.mxu0 %v7507
    %8154 = vmatprep.subr.mxu0 %v7514
    %8155 = vmatpush1.msra.mxu0 %v7513
    %8156 = vmatprep.subr.mxu0 %v7520
    %8157 = vmatpush1.msra.mxu0 %v7519
    %8158 = vmatprep.subr.mxu0 %v7526
    %8159 = vmatpush1.msra.mxu0 %v7525
    %8160 = vmatprep.subr.mxu0 %v7532
    %8161 = vmatpush1.msra.mxu0 %v7531
    %8162 = vmatprep.subr.mxu0 %v7538
    %8163 = vmatpush1.msra.mxu0 %v7537
    %8164 = vmatprep.subr.mxu0 %v7544
    %8165 = vmatpush1.msra.mxu0 %v7543
    %8166 = vmatprep.subr.mxu0 %v7550
    %8167 = vmatpush1.msra.mxu0 %v7549
    %8168 = vmatprep.subr.mxu0 %v7556
    %8169 = vmatpush1.msra.mxu0 %v7555
    %8170 = vmatprep.subr.mxu0 %v7562
    %8171 = vmatpush1.msra.mxu0 %v7561
    %8172 = vmatprep.subr.mxu0 %v7568
    %8173 = vmatpush1.msra.mxu0 %v7567
    %8174 = vmatprep.subr.mxu0 %v7574
    %8175 = vmatpush1.msra.mxu0 %v7573
    %8176 = vmatprep.subr.mxu0 %v7580
    %8177 = vmatpush1.msra.mxu0 %v7579
    %8178 = vmatprep.mubr.f32.mxu0 %v6048
    %8179 = vmatmul.mubr.f32.gmra.mrb[0].mxu0 %v6047
    %v8180 = vpop.f32.mrb[0].mxu0
    %v8181 = vadd.f32 %v8110, %v8180
    %v8182 = vpop.f32.mrb[0].mxu0
    %v8183 = vadd.f32 %v8112, %v8182
    %8184 = vdwg.mxu0
    %8185 = vmatprep.subr.mxu0 %v6052
    %8186 = vmatpush1.msra.mxu0 %v6051
    %8187 = vmatprep.subr.mxu0 %v6058
    %8188 = vmatpush1.msra.mxu0 %v6057
    %8189 = vmatprep.subr.mxu0 %v6064
    %8190 = vmatpush1.msra.mxu0 %v6063
    %8191 = vmatprep.subr.mxu0 %v6070
    %8192 = vmatpush1.msra.mxu0 %v6069
    %8193 = vmatprep.subr.mxu0 %v6076
    %8194 = vmatpush1.msra.mxu0 %v6075
    %8195 = vmatprep.subr.mxu0 %v6082
    %8196 = vmatpush1.msra.mxu0 %v6081
    %8197 = vmatprep.subr.mxu0 %v6088
    %8198 = vmatpush1.msra.mxu0 %v6087
    %8199 = vmatprep.subr.mxu0 %v6094
    %8200 = vmatpush1.msra.mxu0 %v6093
    %8201 = vmatprep.subr.mxu0 %v6100
    %8202 = vmatpush1.msra.mxu0 %v6099
    %8203 = vmatprep.subr.mxu0 %v6106
    %8204 = vmatpush1.msra.mxu0 %v6105
    %8205 = vmatprep.subr.mxu0 %v6112
    %8206 = vmatpush1.msra.mxu0 %v6111
    %8207 = vmatprep.subr.mxu0 %v6118
    %8208 = vmatpush1.msra.mxu0 %v6117
    %8209 = vmatprep.subr.mxu0 %v6124
    %8210 = vmatpush1.msra.mxu0 %v6123
    %8211 = vmatprep.subr.mxu0 %v6130
    %8212 = vmatpush1.msra.mxu0 %v6129
    %8213 = vmatprep.subr.mxu0 %v6136
    %8214 = vmatpush1.msra.mxu0 %v6135
    %8215 = vmatprep.subr.mxu0 %v6142
    %8216 = vmatpush1.msra.mxu0 %v6141
    %8217 = vmatprep.subr.mxu0 %v6148
    %8218 = vmatpush1.msra.mxu0 %v6147
    %8219 = vmatprep.subr.mxu0 %v6154
    %8220 = vmatpush1.msra.mxu0 %v6153
    %8221 = vmatprep.subr.mxu0 %v6160
    %8222 = vmatpush1.msra.mxu0 %v6159
    %8223 = vmatprep.subr.mxu0 %v6166
    %8224 = vmatpush1.msra.mxu0 %v6165
    %8225 = vmatprep.subr.mxu0 %v6172
    %8226 = vmatpush1.msra.mxu0 %v6171
    %8227 = vmatprep.subr.mxu0 %v6178
    %8228 = vmatpush1.msra.mxu0 %v6177
    %8229 = vmatprep.subr.mxu0 %v6184
    %8230 = vmatpush1.msra.mxu0 %v6183
    %8231 = vmatprep.subr.mxu0 %v6190
    %8232 = vmatpush1.msra.mxu0 %v6189
    %8233 = vmatprep.subr.mxu0 %v6196
    %8234 = vmatpush1.msra.mxu0 %v6195
    %8235 = vmatprep.subr.mxu0 %v6202
    %8236 = vmatpush1.msra.mxu0 %v6201
    %8237 = vmatprep.subr.mxu0 %v6208
    %8238 = vmatpush1.msra.mxu0 %v6207
    %8239 = vmatprep.subr.mxu0 %v6214
    %8240 = vmatpush1.msra.mxu0 %v6213
    %8241 = vmatprep.subr.mxu0 %v6220
    %8242 = vmatpush1.msra.mxu0 %v6219
    %8243 = vmatprep.subr.mxu0 %v6226
    %8244 = vmatpush1.msra.mxu0 %v6225
    %8245 = vmatprep.subr.mxu0 %v6232
    %8246 = vmatpush1.msra.mxu0 %v6231
    %8247 = vmatprep.subr.mxu0 %v6238
    %8248 = vmatpush1.msra.mxu0 %v6237
    %8249 = vmatprep.mubr.f32.mxu0 %v6034
    %8250 = vmatmul.mubr.f32.gmra.mrb[0].mxu0 %v6033
    %v8251 = vpop.f32.mrb[0].mxu0
    %v8252 = vadd.f32 %v7598, %v8251
    %v8253 = vpop.f32.mrb[0].mxu0
    %v8254 = vadd.f32 %v7602, %v8253
    %8255 = vdwg.mxu0
    %8256 = vmatprep.subr.mxu0 %v6244
    %8257 = vmatpush1.msra.mxu0 %v6243
    %8258 = vmatprep.subr.mxu0 %v6250
    %8259 = vmatpush1.msra.mxu0 %v6249
    %8260 = vmatprep.subr.mxu0 %v6256
    %8261 = vmatpush1.msra.mxu0 %v6255
    %8262 = vmatprep.subr.mxu0 %v6262
    %8263 = vmatpush1.msra.mxu0 %v6261
    %8264 = vmatprep.subr.mxu0 %v6268
    %8265 = vmatpush1.msra.mxu0 %v6267
    %8266 = vmatprep.subr.mxu0 %v6274
    %8267 = vmatpush1.msra.mxu0 %v6273
    %8268 = vmatprep.subr.mxu0 %v6280
    %8269 = vmatpush1.msra.mxu0 %v6279
    %8270 = vmatprep.subr.mxu0 %v6286
    %8271 = vmatpush1.msra.mxu0 %v6285
    %8272 = vmatprep.subr.mxu0 %v6292
    %8273 = vmatpush1.msra.mxu0 %v6291
    %8274 = vmatprep.subr.mxu0 %v6298
    %8275 = vmatpush1.msra.mxu0 %v6297
    %8276 = vmatprep.subr.mxu0 %v6304
    %8277 = vmatpush1.msra.mxu0 %v6303
    %8278 = vmatprep.subr.mxu0 %v6310
    %8279 = vmatpush1.msra.mxu0 %v6309
    %8280 = vmatprep.subr.mxu0 %v6316
    %8281 = vmatpush1.msra.mxu0 %v6315
    %8282 = vmatprep.subr.mxu0 %v6322
    %8283 = vmatpush1.msra.mxu0 %v6321
    %8284 = vmatprep.subr.mxu0 %v6328
    %8285 = vmatpush1.msra.mxu0 %v6327
    %8286 = vmatprep.subr.mxu0 %v6334
    %8287 = vmatpush1.msra.mxu0 %v6333
    %8288 = vmatprep.subr.mxu0 %v6340
    %8289 = vmatpush1.msra.mxu0 %v6339
    %8290 = vmatprep.subr.mxu0 %v6346
    %8291 = vmatpush1.msra.mxu0 %v6345
    %8292 = vmatprep.subr.mxu0 %v6352
    %8293 = vmatpush1.msra.mxu0 %v6351
    %8294 = vmatprep.subr.mxu0 %v6358
    %8295 = vmatpush1.msra.mxu0 %v6357
    %8296 = vmatprep.subr.mxu0 %v6364
    %8297 = vmatpush1.msra.mxu0 %v6363
    %8298 = vmatprep.subr.mxu0 %v6370
    %8299 = vmatpush1.msra.mxu0 %v6369
    %8300 = vmatprep.subr.mxu0 %v6376
    %8301 = vmatpush1.msra.mxu0 %v6375
    %8302 = vmatprep.subr.mxu0 %v6382
    %8303 = vmatpush1.msra.mxu0 %v6381
    %8304 = vmatprep.subr.mxu0 %v6388
    %8305 = vmatpush1.msra.mxu0 %v6387
    %8306 = vmatprep.subr.mxu0 %v6394
    %8307 = vmatpush1.msra.mxu0 %v6393
    %8308 = vmatprep.subr.mxu0 %v6400
    %8309 = vmatpush1.msra.mxu0 %v6399
    %8310 = vmatprep.subr.mxu0 %v6406
    %8311 = vmatpush1.msra.mxu0 %v6405
    %8312 = vmatprep.subr.mxu0 %v6412
    %8313 = vmatpush1.msra.mxu0 %v6411
    %8314 = vmatprep.subr.mxu0 %v6418
    %8315 = vmatpush1.msra.mxu0 %v6417
    %8316 = vmatprep.subr.mxu0 %v6424
    %8317 = vmatpush1.msra.mxu0 %v6423
    %8318 = vmatprep.subr.mxu0 %v6430
    %8319 = vmatpush1.msra.mxu0 %v6429
    %8320 = vmatprep.mubr.f32.mxu0 %v6036
    %8321 = vmatmul.mubr.f32.gmra.mrb[0].mxu0 %v6035
    %v8322 = vpop.f32.mrb[0].mxu0
    %v8323 = vadd.f32 %v8252, %v8322
    %v8324 = vpop.f32.mrb[0].mxu0
    %v8325 = vadd.f32 %v8254, %v8324
    %8326 = vdwg.mxu0
    %8327 = vmatprep.subr.mxu0 %v6436
    %8328 = vmatpush1.msra.mxu0 %v6435
    %8329 = vmatprep.subr.mxu0 %v6442
    %8330 = vmatpush1.msra.mxu0 %v6441
    %8331 = vmatprep.subr.mxu0 %v6448
    %8332 = vmatpush1.msra.mxu0 %v6447
    %8333 = vmatprep.subr.mxu0 %v6454
    %8334 = vmatpush1.msra.mxu0 %v6453
    %8335 = vmatprep.subr.mxu0 %v6460
    %8336 = vmatpush1.msra.mxu0 %v6459
    %8337 = vmatprep.subr.mxu0 %v6466
    %8338 = vmatpush1.msra.mxu0 %v6465
    %8339 = vmatprep.subr.mxu0 %v6472
    %8340 = vmatpush1.msra.mxu0 %v6471
    %8341 = vmatprep.subr.mxu0 %v6478
    %8342 = vmatpush1.msra.mxu0 %v6477
    %8343 = vmatprep.subr.mxu0 %v6484
    %8344 = vmatpush1.msra.mxu0 %v6483
    %8345 = vmatprep.subr.mxu0 %v6490
    %8346 = vmatpush1.msra.mxu0 %v6489
    %8347 = vmatprep.subr.mxu0 %v6496
    %8348 = vmatpush1.msra.mxu0 %v6495
    %8349 = vmatprep.subr.mxu0 %v6502
    %8350 = vmatpush1.msra.mxu0 %v6501
    %8351 = vmatprep.subr.mxu0 %v6508
    %8352 = vmatpush1.msra.mxu0 %v6507
    %8353 = vmatprep.subr.mxu0 %v6514
    %8354 = vmatpush1.msra.mxu0 %v6513
    %8355 = vmatprep.subr.mxu0 %v6520
    %8356 = vmatpush1.msra.mxu0 %v6519
    %8357 = vmatprep.subr.mxu0 %v6526
    %8358 = vmatpush1.msra.mxu0 %v6525
    %8359 = vmatprep.subr.mxu0 %v6532
    %8360 = vmatpush1.msra.mxu0 %v6531
    %8361 = vmatprep.subr.mxu0 %v6538
    %8362 = vmatpush1.msra.mxu0 %v6537
    %8363 = vmatprep.subr.mxu0 %v6544
    %8364 = vmatpush1.msra.mxu0 %v6543
    %8365 = vmatprep.subr.mxu0 %v6550
    %8366 = vmatpush1.msra.mxu0 %v6549
    %8367 = vmatprep.subr.mxu0 %v6556
    %8368 = vmatpush1.msra.mxu0 %v6555
    %8369 = vmatprep.subr.mxu0 %v6562
    %8370 = vmatpush1.msra.mxu0 %v6561
    %8371 = vmatprep.subr.mxu0 %v6568
    %8372 = vmatpush1.msra.mxu0 %v6567
    %8373 = vmatprep.subr.mxu0 %v6574
    %8374 = vmatpush1.msra.mxu0 %v6573
    %8375 = vmatprep.subr.mxu0 %v6580
    %8376 = vmatpush1.msra.mxu0 %v6579
    %8377 = vmatprep.subr.mxu0 %v6586
    %8378 = vmatpush1.msra.mxu0 %v6585
    %8379 = vmatprep.subr.mxu0 %v6592
    %8380 = vmatpush1.msra.mxu0 %v6591
    %8381 = vmatprep.subr.mxu0 %v6598
    %8382 = vmatpush1.msra.mxu0 %v6597
    %8383 = vmatprep.subr.mxu0 %v6604
    %8384 = vmatpush1.msra.mxu0 %v6603
    %8385 = vmatprep.subr.mxu0 %v6610
    %8386 = vmatpush1.msra.mxu0 %v6609
    %8387 = vmatprep.subr.mxu0 %v6616
    %8388 = vmatpush1.msra.mxu0 %v6615
    %8389 = vmatprep.subr.mxu0 %v6622
    %8390 = vmatpush1.msra.mxu0 %v6621
    %8391 = vmatprep.mubr.f32.mxu0 %v6038
    %8392 = vmatmul.mubr.f32.gmra.mrb[0].mxu0 %v6037
    %v8393 = vpop.f32.mrb[0].mxu0
    %v8394 = vadd.f32 %v8323, %v8393
    %v8395 = vpop.f32.mrb[0].mxu0
    %v8396 = vadd.f32 %v8325, %v8395
    %8397 = vdwg.mxu0
    %8398 = vmatprep.subr.mxu0 %v6628
    %8399 = vmatpush1.msra.mxu0 %v6627
    %8400 = vmatprep.subr.mxu0 %v6634
    %8401 = vmatpush1.msra.mxu0 %v6633
    %8402 = vmatprep.subr.mxu0 %v6640
    %8403 = vmatpush1.msra.mxu0 %v6639
    %8404 = vmatprep.subr.mxu0 %v6646
    %8405 = vmatpush1.msra.mxu0 %v6645
    %8406 = vmatprep.subr.mxu0 %v6652
    %8407 = vmatpush1.msra.mxu0 %v6651
    %8408 = vmatprep.subr.mxu0 %v6658
    %8409 = vmatpush1.msra.mxu0 %v6657
    %8410 = vmatprep.subr.mxu0 %v6664
    %8411 = vmatpush1.msra.mxu0 %v6663
    %8412 = vmatprep.subr.mxu0 %v6670
    %8413 = vmatpush1.msra.mxu0 %v6669
    %8414 = vmatprep.subr.mxu0 %v6676
    %8415 = vmatpush1.msra.mxu0 %v6675
    %8416 = vmatprep.subr.mxu0 %v6682
    %8417 = vmatpush1.msra.mxu0 %v6681
    %8418 = vmatprep.subr.mxu0 %v6688
    %8419 = vmatpush1.msra.mxu0 %v6687
    %8420 = vmatprep.subr.mxu0 %v6694
    %8421 = vmatpush1.msra.mxu0 %v6693
    %8422 = vmatprep.subr.mxu0 %v6700
    %8423 = vmatpush1.msra.mxu0 %v6699
    %8424 = vmatprep.subr.mxu0 %v6706
    %8425 = vmatpush1.msra.mxu0 %v6705
    %8426 = vmatprep.subr.mxu0 %v6712
    %8427 = vmatpush1.msra.mxu0 %v6711
    %8428 = vmatprep.subr.mxu0 %v6718
    %8429 = vmatpush1.msra.mxu0 %v6717
    %8430 = vmatprep.subr.mxu0 %v6724
    %8431 = vmatpush1.msra.mxu0 %v6723
    %8432 = vmatprep.subr.mxu0 %v6730
    %8433 = vmatpush1.msra.mxu0 %v6729
    %8434 = vmatprep.subr.mxu0 %v6736
    %8435 = vmatpush1.msra.mxu0 %v6735
    %8436 = vmatprep.subr.mxu0 %v6742
    %8437 = vmatpush1.msra.mxu0 %v6741
    %8438 = vmatprep.subr.mxu0 %v6748
    %8439 = vmatpush1.msra.mxu0 %v6747
    %8440 = vmatprep.subr.mxu0 %v6754
    %8441 = vmatpush1.msra.mxu0 %v6753
    %8442 = vmatprep.subr.mxu0 %v6760
    %8443 = vmatpush1.msra.mxu0 %v6759
    %8444 = vmatprep.subr.mxu0 %v6766
    %8445 = vmatpush1.msra.mxu0 %v6765
    %8446 = vmatprep.subr.mxu0 %v6772
    %8447 = vmatpush1.msra.mxu0 %v6771
    %8448 = vmatprep.subr.mxu0 %v6778
    %8449 = vmatpush1.msra.mxu0 %v6777
    %8450 = vmatprep.subr.mxu0 %v6784
    %8451 = vmatpush1.msra.mxu0 %v6783
    %8452 = vmatprep.subr.mxu0 %v6790
    %8453 = vmatpush1.msra.mxu0 %v6789
    %8454 = vmatprep.subr.mxu0 %v6796
    %8455 = vmatpush1.msra.mxu0 %v6795
    %8456 = vmatprep.subr.mxu0 %v6802
    %8457 = vmatpush1.msra.mxu0 %v6801
    %8458 = vmatprep.subr.mxu0 %v6808
    %8459 = vmatpush1.msra.mxu0 %v6807
    %8460 = vmatprep.subr.mxu0 %v6814
    %8461 = vmatpush1.msra.mxu0 %v6813
    %8462 = vmatprep.mubr.f32.mxu0 %v6040
    %8463 = vmatmul.mubr.f32.gmra.mrb[0].mxu0 %v6039
    %v8464 = vpop.f32.mrb[0].mxu0
    %v8465 = vadd.f32 %v8394, %v8464
    %v8466 = vpop.f32.mrb[0].mxu0
    %v8467 = vadd.f32 %v8396, %v8466
    %8468 = vdwg.mxu0
    %8469 = vmatprep.subr.mxu0 %v6820
    %8470 = vmatpush1.msra.mxu0 %v6819
    %8471 = vmatprep.subr.mxu0 %v6826
    %8472 = vmatpush1.msra.mxu0 %v6825
    %8473 = vmatprep.subr.mxu0 %v6832
    %8474 = vmatpush1.msra.mxu0 %v6831
    %8475 = vmatprep.subr.mxu0 %v6838
    %8476 = vmatpush1.msra.mxu0 %v6837
    %8477 = vmatprep.subr.mxu0 %v6844
    %8478 = vmatpush1.msra.mxu0 %v6843
    %8479 = vmatprep.subr.mxu0 %v6850
    %8480 = vmatpush1.msra.mxu0 %v6849
    %8481 = vmatprep.subr.mxu0 %v6856
    %8482 = vmatpush1.msra.mxu0 %v6855
    %8483 = vmatprep.subr.mxu0 %v6862
    %8484 = vmatpush1.msra.mxu0 %v6861
    %8485 = vmatprep.subr.mxu0 %v6868
    %8486 = vmatpush1.msra.mxu0 %v6867
    %8487 = vmatprep.subr.mxu0 %v6874
    %8488 = vmatpush1.msra.mxu0 %v6873
    %8489 = vmatprep.subr.mxu0 %v6880
    %8490 = vmatpush1.msra.mxu0 %v6879
    %8491 = vmatprep.subr.mxu0 %v6886
    %8492 = vmatpush1.msra.mxu0 %v6885
    %8493 = vmatprep.subr.mxu0 %v6892
    %8494 = vmatpush1.msra.mxu0 %v6891
    %8495 = vmatprep.subr.mxu0 %v6898
    %8496 = vmatpush1.msra.mxu0 %v6897
    %8497 = vmatprep.subr.mxu0 %v6904
    %8498 = vmatpush1.msra.mxu0 %v6903
    %8499 = vmatprep.subr.mxu0 %v6910
    %8500 = vmatpush1.msra.mxu0 %v6909
    %8501 = vmatprep.subr.mxu0 %v6916
    %8502 = vmatpush1.msra.mxu0 %v6915
    %8503 = vmatprep.subr.mxu0 %v6922
    %8504 = vmatpush1.msra.mxu0 %v6921
    %8505 = vmatprep.subr.mxu0 %v6928
    %8506 = vmatpush1.msra.mxu0 %v6927
    %8507 = vmatprep.subr.mxu0 %v6934
    %8508 = vmatpush1.msra.mxu0 %v6933
    %8509 = vmatprep.subr.mxu0 %v6940
    %8510 = vmatpush1.msra.mxu0 %v6939
    %8511 = vmatprep.subr.mxu0 %v6946
    %8512 = vmatpush1.msra.mxu0 %v6945
    %8513 = vmatprep.subr.mxu0 %v6952
    %8514 = vmatpush1.msra.mxu0 %v6951
    %8515 = vmatprep.subr.mxu0 %v6958
    %8516 = vmatpush1.msra.mxu0 %v6957
    %8517 = vmatprep.subr.mxu0 %v6964
    %8518 = vmatpush1.msra.mxu0 %v6963
    %8519 = vmatprep.subr.mxu0 %v6970
    %8520 = vmatpush1.msra.mxu0 %v6969
    %8521 = vmatprep.subr.mxu0 %v6976
    %8522 = vmatpush1.msra.mxu0 %v6975
    %8523 = vmatprep.subr.mxu0 %v6982
    %8524 = vmatpush1.msra.mxu0 %v6981
    %8525 = vmatprep.subr.mxu0 %v6988
    %8526 = vmatpush1.msra.mxu0 %v6987
    %8527 = vmatprep.subr.mxu0 %v6994
    %8528 = vmatpush1.msra.mxu0 %v6993
    %8529 = vmatprep.subr.mxu0 %v7000
    %8530 = vmatpush1.msra.mxu0 %v6999
    %8531 = vmatprep.subr.mxu0 %v7006
    %8532 = vmatpush1.msra.mxu0 %v7005
    %8533 = vmatprep.mubr.f32.mxu0 %v6042
    %8534 = vmatmul.mubr.f32.gmra.mrb[0].mxu0 %v6041
    %v8535 = vpop.f32.mrb[0].mxu0
    %v8536 = vadd.f32 %v8465, %v8535
    %v8537 = vpop.f32.mrb[0].mxu0
    %v8538 = vadd.f32 %v8467, %v8537
    %8539 = vdwg.mxu0
    %8540 = vmatprep.subr.mxu0 %v7012
    %8541 = vmatpush1.msra.mxu0 %v7011
    %8542 = vmatprep.subr.mxu0 %v7018
    %8543 = vmatpush1.msra.mxu0 %v7017
    %8544 = vmatprep.subr.mxu0 %v7024
    %8545 = vmatpush1.msra.mxu0 %v7023
    %8546 = vmatprep.subr.mxu0 %v7030
    %8547 = vmatpush1.msra.mxu0 %v7029
    %8548 = vmatprep.subr.mxu0 %v7036
    %8549 = vmatpush1.msra.mxu0 %v7035
    %8550 = vmatprep.subr.mxu0 %v7042
    %8551 = vmatpush1.msra.mxu0 %v7041
    %8552 = vmatprep.subr.mxu0 %v7048
    %8553 = vmatpush1.msra.mxu0 %v7047
    %8554 = vmatprep.subr.mxu0 %v7054
    %8555 = vmatpush1.msra.mxu0 %v7053
    %8556 = vmatprep.subr.mxu0 %v7060
    %8557 = vmatpush1.msra.mxu0 %v7059
    %8558 = vmatprep.subr.mxu0 %v7066
    %8559 = vmatpush1.msra.mxu0 %v7065
    %8560 = vmatprep.subr.mxu0 %v7072
    %8561 = vmatpush1.msra.mxu0 %v7071
    %8562 = vmatprep.subr.mxu0 %v7078
    %8563 = vmatpush1.msra.mxu0 %v7077
    %8564 = vmatprep.subr.mxu0 %v7084
    %8565 = vmatpush1.msra.mxu0 %v7083
    %8566 = vmatprep.subr.mxu0 %v7090
    %8567 = vmatpush1.msra.mxu0 %v7089
    %8568 = vmatprep.subr.mxu0 %v7096
    %8569 = vmatpush1.msra.mxu0 %v7095
    %8570 = vmatprep.subr.mxu0 %v7102
    %8571 = vmatpush1.msra.mxu0 %v7101
    %8572 = vmatprep.subr.mxu0 %v7108
    %8573 = vmatpush1.msra.mxu0 %v7107
    %8574 = vmatprep.subr.mxu0 %v7114
    %8575 = vmatpush1.msra.mxu0 %v7113
    %8576 = vmatprep.subr.mxu0 %v7120
    %8577 = vmatpush1.msra.mxu0 %v7119
    %8578 = vmatprep.subr.mxu0 %v7126
    %8579 = vmatpush1.msra.mxu0 %v7125
    %8580 = vmatprep.subr.mxu0 %v7132
    %8581 = vmatpush1.msra.mxu0 %v7131
    %8582 = vmatprep.subr.mxu0 %v7138
    %8583 = vmatpush1.msra.mxu0 %v7137
    %8584 = vmatprep.subr.mxu0 %v7144
    %8585 = vmatpush1.msra.mxu0 %v7143
    %8586 = vmatprep.subr.mxu0 %v7150
    %8587 = vmatpush1.msra.mxu0 %v7149
    %8588 = vmatprep.subr.mxu0 %v7156
    %8589 = vmatpush1.msra.mxu0 %v7155
    %8590 = vmatprep.subr.mxu0 %v7162
    %8591 = vmatpush1.msra.mxu0 %v7161
    %8592 = vmatprep.subr.mxu0 %v7168
    %8593 = vmatpush1.msra.mxu0 %v7167
    %8594 = vmatprep.subr.mxu0 %v7174
    %8595 = vmatpush1.msra.mxu0 %v7173
    %8596 = vmatprep.subr.mxu0 %v7180
    %8597 = vmatpush1.msra.mxu0 %v7179
    %8598 = vmatprep.subr.mxu0 %v7186
    %8599 = vmatpush1.msra.mxu0 %v7185
    %8600 = vmatprep.subr.mxu0 %v7192
    %8601 = vmatpush1.msra.mxu0 %v7191
    %8602 = vmatprep.subr.mxu0 %v7198
    %8603 = vmatpush1.msra.mxu0 %v7197
    %8604 = vmatprep.mubr.f32.mxu0 %v6044
    %8605 = vmatmul.mubr.f32.gmra.mrb[0].mxu0 %v6043
    %v8606 = vpop.f32.mrb[0].mxu0
    %v8607 = vadd.f32 %v8536, %v8606
    %v8608 = vpop.f32.mrb[0].mxu0
    %v8609 = vadd.f32 %v8538, %v8608
    %8610 = vdwg.mxu0
    %8611 = vmatprep.subr.mxu0 %v7204
    %8612 = vmatpush1.msra.mxu0 %v7203
    %8613 = vmatprep.subr.mxu0 %v7210
    %8614 = vmatpush1.msra.mxu0 %v7209
    %8615 = vmatprep.subr.mxu0 %v7216
    %8616 = vmatpush1.msra.mxu0 %v7215
    %8617 = vmatprep.subr.mxu0 %v7222
    %8618 = vmatpush1.msra.mxu0 %v7221
    %8619 = vmatprep.subr.mxu0 %v7228
    %8620 = vmatpush1.msra.mxu0 %v7227
    %8621 = vmatprep.subr.mxu0 %v7234
    %8622 = vmatpush1.msra.mxu0 %v7233
    %8623 = vmatprep.subr.mxu0 %v7240
    %8624 = vmatpush1.msra.mxu0 %v7239
    %8625 = vmatprep.subr.mxu0 %v7246
    %8626 = vmatpush1.msra.mxu0 %v7245
    %8627 = vmatprep.subr.mxu0 %v7252
    %8628 = vmatpush1.msra.mxu0 %v7251
    %8629 = vmatprep.subr.mxu0 %v7258
    %8630 = vmatpush1.msra.mxu0 %v7257
    %8631 = vmatprep.subr.mxu0 %v7264
    %8632 = vmatpush1.msra.mxu0 %v7263
    %8633 = vmatprep.subr.mxu0 %v7270
    %8634 = vmatpush1.msra.mxu0 %v7269
    %8635 = vmatprep.subr.mxu0 %v7276
    %8636 = vmatpush1.msra.mxu0 %v7275
    %8637 = vmatprep.subr.mxu0 %v7282
    %8638 = vmatpush1.msra.mxu0 %v7281
    %8639 = vmatprep.subr.mxu0 %v7288
    %8640 = vmatpush1.msra.mxu0 %v7287
    %8641 = vmatprep.subr.mxu0 %v7294
    %8642 = vmatpush1.msra.mxu0 %v7293
    %8643 = vmatprep.subr.mxu0 %v7300
    %8644 = vmatpush1.msra.mxu0 %v7299
    %8645 = vmatprep.subr.mxu0 %v7306
    %8646 = vmatpush1.msra.mxu0 %v7305
    %8647 = vmatprep.subr.mxu0 %v7312
    %8648 = vmatpush1.msra.mxu0 %v7311
    %8649 = vmatprep.subr.mxu0 %v7318
    %8650 = vmatpush1.msra.mxu0 %v7317
    %8651 = vmatprep.subr.mxu0 %v7324
    %8652 = vmatpush1.msra.mxu0 %v7323
    %8653 = vmatprep.subr.mxu0 %v7330
    %8654 = vmatpush1.msra.mxu0 %v7329
    %8655 = vmatprep.subr.mxu0 %v7336
    %8656 = vmatpush1.msra.mxu0 %v7335
    %8657 = vmatprep.subr.mxu0 %v7342
    %8658 = vmatpush1.msra.mxu0 %v7341
    %8659 = vmatprep.subr.mxu0 %v7348
    %8660 = vmatpush1.msra.mxu0 %v7347
    %8661 = vmatprep.subr.mxu0 %v7354
    %8662 = vmatpush1.msra.mxu0 %v7353
    %8663 = vmatprep.subr.mxu0 %v7360
    %8664 = vmatpush1.msra.mxu0 %v7359
    %8665 = vmatprep.subr.mxu0 %v7366
    %8666 = vmatpush1.msra.mxu0 %v7365
    %8667 = vmatprep.subr.mxu0 %v7372
    %8668 = vmatpush1.msra.mxu0 %v7371
    %8669 = vmatprep.subr.mxu0 %v7378
    %8670 = vmatpush1.msra.mxu0 %v7377
    %8671 = vmatprep.subr.mxu0 %v7384
    %8672 = vmatpush1.msra.mxu0 %v7383
    %8673 = vmatprep.subr.mxu0 %v7390
    %8674 = vmatpush1.msra.mxu0 %v7389
    %8675 = vmatprep.mubr.f32.mxu0 %v6046
    %8676 = vmatmul.mubr.f32.gmra.mrb[0].mxu0 %v6045
    %v8677 = vpop.f32.mrb[0].mxu0
    %v8678 = vadd.f32 %v8607, %v8677
    %v8679 = vpop.f32.mrb[0].mxu0
    %v8680 = vadd.f32 %v8609, %v8679
    %8681 = vdwg.mxu0
    %8682 = vmatprep.subr.mxu0 %v7396
    %8683 = vmatpush1.msra.mxu0 %v7395
    %8684 = vmatprep.subr.mxu0 %v7402
    %8685 = vmatpush1.msra.mxu0 %v7401
    %8686 = vmatprep.subr.mxu0 %v7408
    %8687 = vmatpush1.msra.mxu0 %v7407
    %8688 = vmatprep.subr.mxu0 %v7414
    %8689 = vmatpush1.msra.mxu0 %v7413
    %8690 = vmatprep.subr.mxu0 %v7420
    %8691 = vmatpush1.msra.mxu0 %v7419
    %8692 = vmatprep.subr.mxu0 %v7426
    %8693 = vmatpush1.msra.mxu0 %v7425
    %8694 = vmatprep.subr.mxu0 %v7432
    %8695 = vmatpush1.msra.mxu0 %v7431
    %8696 = vmatprep.subr.mxu0 %v7438
    %8697 = vmatpush1.msra.mxu0 %v7437
    %8698 = vmatprep.subr.mxu0 %v7444
    %8699 = vmatpush1.msra.mxu0 %v7443
    %8700 = vmatprep.subr.mxu0 %v7450
    %8701 = vmatpush1.msra.mxu0 %v7449
    %8702 = vmatprep.subr.mxu0 %v7456
    %8703 = vmatpush1.msra.mxu0 %v7455
    %8704 = vmatprep.subr.mxu0 %v7462
    %8705 = vmatpush1.msra.mxu0 %v7461
    %8706 = vmatprep.subr.mxu0 %v7468
    %8707 = vmatpush1.msra.mxu0 %v7467
    %8708 = vmatprep.subr.mxu0 %v7474
    %8709 = vmatpush1.msra.mxu0 %v7473
    %8710 = vmatprep.subr.mxu0 %v7480
    %8711 = vmatpush1.msra.mxu0 %v7479
    %8712 = vmatprep.subr.mxu0 %v7486
    %8713 = vmatpush1.msra.mxu0 %v7485
    %8714 = vmatprep.subr.mxu0 %v7492
    %8715 = vmatpush1.msra.mxu0 %v7491
    %8716 = vmatprep.subr.mxu0 %v7498
    %8717 = vmatpush1.msra.mxu0 %v7497
    %8718 = vmatprep.subr.mxu0 %v7504
    %8719 = vmatpush1.msra.mxu0 %v7503
    %8720 = vmatprep.subr.mxu0 %v7510
    %8721 = vmatpush1.msra.mxu0 %v7509
    %8722 = vmatprep.subr.mxu0 %v7516
    %8723 = vmatpush1.msra.mxu0 %v7515
    %8724 = vmatprep.subr.mxu0 %v7522
    %8725 = vmatpush1.msra.mxu0 %v7521
    %8726 = vmatprep.subr.mxu0 %v7528
    %8727 = vmatpush1.msra.mxu0 %v7527
    %8728 = vmatprep.subr.mxu0 %v7534
    %8729 = vmatpush1.msra.mxu0 %v7533
    %8730 = vmatprep.subr.mxu0 %v7540
    %8731 = vmatpush1.msra.mxu0 %v7539
    %8732 = vmatprep.subr.mxu0 %v7546
    %8733 = vmatpush1.msra.mxu0 %v7545
    %8734 = vmatprep.subr.mxu0 %v7552
    %8735 = vmatpush1.msra.mxu0 %v7551
    %8736 = vmatprep.subr.mxu0 %v7558
    %8737 = vmatpush1.msra.mxu0 %v7557
    %8738 = vmatprep.subr.mxu0 %v7564
    %8739 = vmatpush1.msra.mxu0 %v7563
    %8740 = vmatprep.subr.mxu0 %v7570
    %8741 = vmatpush1.msra.mxu0 %v7569
    %8742 = vmatprep.subr.mxu0 %v7576
    %8743 = vmatpush1.msra.mxu0 %v7575
    %8744 = vmatprep.subr.mxu0 %v7582
    %8745 = vmatpush1.msra.mxu0 %v7581
    %8746 = vmatprep.mubr.f32.mxu0 %v6048
    %8747 = vmatmul.mubr.f32.gmra.mrb[0].mxu0 %v6047
    %v8748 = vpop.f32.mrb[0].mxu0
    %v8749 = vadd.f32 %v8678, %v8748
    %v8750 = vpop.f32.mrb[0].mxu0
    %v8751 = vadd.f32 %v8680, %v8750
    %8752 = vdwg.mxu0
    %8753 = vmatprep.subr.mxu0 %v6054
    %8754 = vmatpush1.msra.mxu0 %v6053
    %8755 = vmatprep.subr.mxu0 %v6060
    %8756 = vmatpush1.msra.mxu0 %v6059
    %8757 = vmatprep.subr.mxu0 %v6066
    %8758 = vmatpush1.msra.mxu0 %v6065
    %8759 = vmatprep.subr.mxu0 %v6072
    %8760 = vmatpush1.msra.mxu0 %v6071
    %8761 = vmatprep.subr.mxu0 %v6078
    %8762 = vmatpush1.msra.mxu0 %v6077
    %8763 = vmatprep.subr.mxu0 %v6084
    %8764 = vmatpush1.msra.mxu0 %v6083
    %8765 = vmatprep.subr.mxu0 %v6090
    %8766 = vmatpush1.msra.mxu0 %v6089
    %8767 = vmatprep.subr.mxu0 %v6096
    %8768 = vmatpush1.msra.mxu0 %v6095
    %8769 = vmatprep.subr.mxu0 %v6102
    %8770 = vmatpush1.msra.mxu0 %v6101
    %8771 = vmatprep.subr.mxu0 %v6108
    %8772 = vmatpush1.msra.mxu0 %v6107
    %8773 = vmatprep.subr.mxu0 %v6114
    %8774 = vmatpush1.msra.mxu0 %v6113
    %8775 = vmatprep.subr.mxu0 %v6120
    %8776 = vmatpush1.msra.mxu0 %v6119
    %8777 = vmatprep.subr.mxu0 %v6126
    %8778 = vmatpush1.msra.mxu0 %v6125
    %8779 = vmatprep.subr.mxu0 %v6132
    %8780 = vmatpush1.msra.mxu0 %v6131
    %8781 = vmatprep.subr.mxu0 %v6138
    %8782 = vmatpush1.msra.mxu0 %v6137
    %8783 = vmatprep.subr.mxu0 %v6144
    %8784 = vmatpush1.msra.mxu0 %v6143
    %8785 = vmatprep.subr.mxu0 %v6150
    %8786 = vmatpush1.msra.mxu0 %v6149
    %8787 = vmatprep.subr.mxu0 %v6156
    %8788 = vmatpush1.msra.mxu0 %v6155
    %8789 = vmatprep.subr.mxu0 %v6162
    %8790 = vmatpush1.msra.mxu0 %v6161
    %8791 = vmatprep.subr.mxu0 %v6168
    %8792 = vmatpush1.msra.mxu0 %v6167
    %8793 = vmatprep.subr.mxu0 %v6174
    %8794 = vmatpush1.msra.mxu0 %v6173
    %8795 = vmatprep.subr.mxu0 %v6180
    %8796 = vmatpush1.msra.mxu0 %v6179
    %8797 = vmatprep.subr.mxu0 %v6186
    %8798 = vmatpush1.msra.mxu0 %v6185
    %8799 = vmatprep.subr.mxu0 %v6192
    %8800 = vmatpush1.msra.mxu0 %v6191
    %8801 = vmatprep.subr.mxu0 %v6198
    %8802 = vmatpush1.msra.mxu0 %v6197
    %8803 = vmatprep.subr.mxu0 %v6204
    %8804 = vmatpush1.msra.mxu0 %v6203
    %8805 = vmatprep.subr.mxu0 %v6210
    %8806 = vmatpush1.msra.mxu0 %v6209
    %8807 = vmatprep.subr.mxu0 %v6216
    %8808 = vmatpush1.msra.mxu0 %v6215
    %8809 = vmatprep.subr.mxu0 %v6222
    %8810 = vmatpush1.msra.mxu0 %v6221
    %8811 = vmatprep.subr.mxu0 %v6228
    %8812 = vmatpush1.msra.mxu0 %v6227
    %8813 = vmatprep.subr.mxu0 %v6234
    %8814 = vmatpush1.msra.mxu0 %v6233
    %8815 = vmatprep.subr.mxu0 %v6240
    %8816 = vmatpush1.msra.mxu0 %v6239
    %8817 = vmatprep.mubr.f32.mxu0 %v6034
    %8818 = vmatmul.mubr.f32.gmra.mrb[0].mxu0 %v6033
    %v8819 = vpop.f32.mrb[0].mxu0
    %v8820 = vadd.f32 %v7606, %v8819
    %v8821 = vpop.f32.mrb[0].mxu0
    %v8822 = vadd.f32 %v7610, %v8821
    %8823 = vdwg.mxu0
    %8824 = vmatprep.subr.mxu0 %v6246
    %8825 = vmatpush1.msra.mxu0 %v6245
    %8826 = vmatprep.subr.mxu0 %v6252
    %8827 = vmatpush1.msra.mxu0 %v6251
    %8828 = vmatprep.subr.mxu0 %v6258
    %8829 = vmatpush1.msra.mxu0 %v6257
    %8830 = vmatprep.subr.mxu0 %v6264
    %8831 = vmatpush1.msra.mxu0 %v6263
    %8832 = vmatprep.subr.mxu0 %v6270
    %8833 = vmatpush1.msra.mxu0 %v6269
    %8834 = vmatprep.subr.mxu0 %v6276
    %8835 = vmatpush1.msra.mxu0 %v6275
    %8836 = vmatprep.subr.mxu0 %v6282
    %8837 = vmatpush1.msra.mxu0 %v6281
    %8838 = vmatprep.subr.mxu0 %v6288
    %8839 = vmatpush1.msra.mxu0 %v6287
    %8840 = vmatprep.subr.mxu0 %v6294
    %8841 = vmatpush1.msra.mxu0 %v6293
    %8842 = vmatprep.subr.mxu0 %v6300
    %8843 = vmatpush1.msra.mxu0 %v6299
    %8844 = vmatprep.subr.mxu0 %v6306
    %8845 = vmatpush1.msra.mxu0 %v6305
    %8846 = vmatprep.subr.mxu0 %v6312
    %8847 = vmatpush1.msra.mxu0 %v6311
    %8848 = vmatprep.subr.mxu0 %v6318
    %8849 = vmatpush1.msra.mxu0 %v6317
    %8850 = vmatprep.subr.mxu0 %v6324
    %8851 = vmatpush1.msra.mxu0 %v6323
    %8852 = vmatprep.subr.mxu0 %v6330
    %8853 = vmatpush1.msra.mxu0 %v6329
    %8854 = vmatprep.subr.mxu0 %v6336
    %8855 = vmatpush1.msra.mxu0 %v6335
    %8856 = vmatprep.subr.mxu0 %v6342
    %8857 = vmatpush1.msra.mxu0 %v6341
    %8858 = vmatprep.subr.mxu0 %v6348
    %8859 = vmatpush1.msra.mxu0 %v6347
    %8860 = vmatprep.subr.mxu0 %v6354
    %8861 = vmatpush1.msra.mxu0 %v6353
    %8862 = vmatprep.subr.mxu0 %v6360
    %8863 = vmatpush1.msra.mxu0 %v6359
    %8864 = vmatprep.subr.mxu0 %v6366
    %8865 = vmatpush1.msra.mxu0 %v6365
    %8866 = vmatprep.subr.mxu0 %v6372
    %8867 = vmatpush1.msra.mxu0 %v6371
    %8868 = vmatprep.subr.mxu0 %v6378
    %8869 = vmatpush1.msra.mxu0 %v6377
    %8870 = vmatprep.subr.mxu0 %v6384
    %8871 = vmatpush1.msra.mxu0 %v6383
    %8872 = vmatprep.subr.mxu0 %v6390
    %8873 = vmatpush1.msra.mxu0 %v6389
    %8874 = vmatprep.subr.mxu0 %v6396
    %8875 = vmatpush1.msra.mxu0 %v6395
    %8876 = vmatprep.subr.mxu0 %v6402
    %8877 = vmatpush1.msra.mxu0 %v6401
    %8878 = vmatprep.subr.mxu0 %v6408
    %8879 = vmatpush1.msra.mxu0 %v6407
    %8880 = vmatprep.subr.mxu0 %v6414
    %8881 = vmatpush1.msra.mxu0 %v6413
    %8882 = vmatprep.subr.mxu0 %v6420
    %8883 = vmatpush1.msra.mxu0 %v6419
    %8884 = vmatprep.subr.mxu0 %v6426
    %8885 = vmatpush1.msra.mxu0 %v6425
    %8886 = vmatprep.subr.mxu0 %v6432
    %8887 = vmatpush1.msra.mxu0 %v6431
    %8888 = vmatprep.mubr.f32.mxu0 %v6036
    %8889 = vmatmul.mubr.f32.gmra.mrb[0].mxu0 %v6035
    %v8890 = vpop.f32.mrb[0].mxu0
    %v8891 = vadd.f32 %v8820, %v8890
    %v8892 = vpop.f32.mrb[0].mxu0
    %v8893 = vadd.f32 %v8822, %v8892
    %8894 = vdwg.mxu0
    %8895 = vmatprep.subr.mxu0 %v6438
    %8896 = vmatpush1.msra.mxu0 %v6437
    %8897 = vmatprep.subr.mxu0 %v6444
    %8898 = vmatpush1.msra.mxu0 %v6443
    %8899 = vmatprep.subr.mxu0 %v6450
    %8900 = vmatpush1.msra.mxu0 %v6449
    %8901 = vmatprep.subr.mxu0 %v6456
    %8902 = vmatpush1.msra.mxu0 %v6455
    %8903 = vmatprep.subr.mxu0 %v6462
    %8904 = vmatpush1.msra.mxu0 %v6461
    %8905 = vmatprep.subr.mxu0 %v6468
    %8906 = vmatpush1.msra.mxu0 %v6467
    %8907 = vmatprep.subr.mxu0 %v6474
    %8908 = vmatpush1.msra.mxu0 %v6473
    %8909 = vmatprep.subr.mxu0 %v6480
    %8910 = vmatpush1.msra.mxu0 %v6479
    %8911 = vmatprep.subr.mxu0 %v6486
    %8912 = vmatpush1.msra.mxu0 %v6485
    %8913 = vmatprep.subr.mxu0 %v6492
    %8914 = vmatpush1.msra.mxu0 %v6491
    %8915 = vmatprep.subr.mxu0 %v6498
    %8916 = vmatpush1.msra.mxu0 %v6497
    %8917 = vmatprep.subr.mxu0 %v6504
    %8918 = vmatpush1.msra.mxu0 %v6503
    %8919 = vmatprep.subr.mxu0 %v6510
    %8920 = vmatpush1.msra.mxu0 %v6509
    %8921 = vmatprep.subr.mxu0 %v6516
    %8922 = vmatpush1.msra.mxu0 %v6515
    %8923 = vmatprep.subr.mxu0 %v6522
    %8924 = vmatpush1.msra.mxu0 %v6521
    %8925 = vmatprep.subr.mxu0 %v6528
    %8926 = vmatpush1.msra.mxu0 %v6527
    %8927 = vmatprep.subr.mxu0 %v6534
    %8928 = vmatpush1.msra.mxu0 %v6533
    %8929 = vmatprep.subr.mxu0 %v6540
    %8930 = vmatpush1.msra.mxu0 %v6539
    %8931 = vmatprep.subr.mxu0 %v6546
    %8932 = vmatpush1.msra.mxu0 %v6545
    %8933 = vmatprep.subr.mxu0 %v6552
    %8934 = vmatpush1.msra.mxu0 %v6551
    %8935 = vmatprep.subr.mxu0 %v6558
    %8936 = vmatpush1.msra.mxu0 %v6557
    %8937 = vmatprep.subr.mxu0 %v6564
    %8938 = vmatpush1.msra.mxu0 %v6563
    %8939 = vmatprep.subr.mxu0 %v6570
    %8940 = vmatpush1.msra.mxu0 %v6569
    %8941 = vmatprep.subr.mxu0 %v6576
    %8942 = vmatpush1.msra.mxu0 %v6575
    %8943 = vmatprep.subr.mxu0 %v6582
    %8944 = vmatpush1.msra.mxu0 %v6581
    %8945 = vmatprep.subr.mxu0 %v6588
    %8946 = vmatpush1.msra.mxu0 %v6587
    %8947 = vmatprep.subr.mxu0 %v6594
    %8948 = vmatpush1.msra.mxu0 %v6593
    %8949 = vmatprep.subr.mxu0 %v6600
    %8950 = vmatpush1.msra.mxu0 %v6599
    %8951 = vmatprep.subr.mxu0 %v6606
    %8952 = vmatpush1.msra.mxu0 %v6605
    %8953 = vmatprep.subr.mxu0 %v6612
    %8954 = vmatpush1.msra.mxu0 %v6611
    %8955 = vmatprep.subr.mxu0 %v6618
    %8956 = vmatpush1.msra.mxu0 %v6617
    %8957 = vmatprep.subr.mxu0 %v6624
    %8958 = vmatpush1.msra.mxu0 %v6623
    %8959 = vmatprep.mubr.f32.mxu0 %v6038
    %8960 = vmatmul.mubr.f32.gmra.mrb[0].mxu0 %v6037
    %v8961 = vpop.f32.mrb[0].mxu0
    %v8962 = vadd.f32 %v8891, %v8961
    %v8963 = vpop.f32.mrb[0].mxu0
    %v8964 = vadd.f32 %v8893, %v8963
    %8965 = vdwg.mxu0
    %8966 = vmatprep.subr.mxu0 %v6630
    %8967 = vmatpush1.msra.mxu0 %v6629
    %8968 = vmatprep.subr.mxu0 %v6636
    %8969 = vmatpush1.msra.mxu0 %v6635
    %8970 = vmatprep.subr.mxu0 %v6642
    %8971 = vmatpush1.msra.mxu0 %v6641
    %8972 = vmatprep.subr.mxu0 %v6648
    %8973 = vmatpush1.msra.mxu0 %v6647
    %8974 = vmatprep.subr.mxu0 %v6654
    %8975 = vmatpush1.msra.mxu0 %v6653
    %8976 = vmatprep.subr.mxu0 %v6660
    %8977 = vmatpush1.msra.mxu0 %v6659
    %8978 = vmatprep.subr.mxu0 %v6666
    %8979 = vmatpush1.msra.mxu0 %v6665
    %8980 = vmatprep.subr.mxu0 %v6672
    %8981 = vmatpush1.msra.mxu0 %v6671
    %8982 = vmatprep.subr.mxu0 %v6678
    %8983 = vmatpush1.msra.mxu0 %v6677
    %8984 = vmatprep.subr.mxu0 %v6684
    %8985 = vmatpush1.msra.mxu0 %v6683
    %8986 = vmatprep.subr.mxu0 %v6690
    %8987 = vmatpush1.msra.mxu0 %v6689
    %8988 = vmatprep.subr.mxu0 %v6696
    %8989 = vmatpush1.msra.mxu0 %v6695
    %8990 = vmatprep.subr.mxu0 %v6702
    %8991 = vmatpush1.msra.mxu0 %v6701
    %8992 = vmatprep.subr.mxu0 %v6708
    %8993 = vmatpush1.msra.mxu0 %v6707
    %8994 = vmatprep.subr.mxu0 %v6714
    %8995 = vmatpush1.msra.mxu0 %v6713
    %8996 = vmatprep.subr.mxu0 %v6720
    %8997 = vmatpush1.msra.mxu0 %v6719
    %8998 = vmatprep.subr.mxu0 %v6726
    %8999 = vmatpush1.msra.mxu0 %v6725
    %9000 = vmatprep.subr.mxu0 %v6732
    %9001 = vmatpush1.msra.mxu0 %v6731
    %9002 = vmatprep.subr.mxu0 %v6738
    %9003 = vmatpush1.msra.mxu0 %v6737
    %9004 = vmatprep.subr.mxu0 %v6744
    %9005 = vmatpush1.msra.mxu0 %v6743
    %9006 = vmatprep.subr.mxu0 %v6750
    %9007 = vmatpush1.msra.mxu0 %v6749
    %9008 = vmatprep.subr.mxu0 %v6756
    %9009 = vmatpush1.msra.mxu0 %v6755
    %9010 = vmatprep.subr.mxu0 %v6762
    %9011 = vmatpush1.msra.mxu0 %v6761
    %9012 = vmatprep.subr.mxu0 %v6768
    %9013 = vmatpush1.msra.mxu0 %v6767
    %9014 = vmatprep.subr.mxu0 %v6774
    %9015 = vmatpush1.msra.mxu0 %v6773
    %9016 = vmatprep.subr.mxu0 %v6780
    %9017 = vmatpush1.msra.mxu0 %v6779
    %9018 = vmatprep.subr.mxu0 %v6786
    %9019 = vmatpush1.msra.mxu0 %v6785
    %9020 = vmatprep.subr.mxu0 %v6792
    %9021 = vmatpush1.msra.mxu0 %v6791
    %9022 = vmatprep.subr.mxu0 %v6798
    %9023 = vmatpush1.msra.mxu0 %v6797
    %9024 = vmatprep.subr.mxu0 %v6804
    %9025 = vmatpush1.msra.mxu0 %v6803
    %9026 = vmatprep.subr.mxu0 %v6810
    %9027 = vmatpush1.msra.mxu0 %v6809
    %9028 = vmatprep.subr.mxu0 %v6816
    %9029 = vmatpush1.msra.mxu0 %v6815
    %9030 = vmatprep.mubr.f32.mxu0 %v6040
    %9031 = vmatmul.mubr.f32.gmra.mrb[0].mxu0 %v6039
    %v9032 = vpop.f32.mrb[0].mxu0
    %v9033 = vadd.f32 %v8962, %v9032
    %v9034 = vpop.f32.mrb[0].mxu0
    %v9035 = vadd.f32 %v8964, %v9034
    %9036 = vdwg.mxu0
    %9037 = vmatprep.subr.mxu0 %v6822
    %9038 = vmatpush1.msra.mxu0 %v6821
    %9039 = vmatprep.subr.mxu0 %v6828
    %9040 = vmatpush1.msra.mxu0 %v6827
    %9041 = vmatprep.subr.mxu0 %v6834
    %9042 = vmatpush1.msra.mxu0 %v6833
    %9043 = vmatprep.subr.mxu0 %v6840
    %9044 = vmatpush1.msra.mxu0 %v6839
    %9045 = vmatprep.subr.mxu0 %v6846
    %9046 = vmatpush1.msra.mxu0 %v6845
    %9047 = vmatprep.subr.mxu0 %v6852
    %9048 = vmatpush1.msra.mxu0 %v6851
    %9049 = vmatprep.subr.mxu0 %v6858
    %9050 = vmatpush1.msra.mxu0 %v6857
    %9051 = vmatprep.subr.mxu0 %v6864
    %9052 = vmatpush1.msra.mxu0 %v6863
    %9053 = vmatprep.subr.mxu0 %v6870
    %9054 = vmatpush1.msra.mxu0 %v6869
    %9055 = vmatprep.subr.mxu0 %v6876
    %9056 = vmatpush1.msra.mxu0 %v6875
    %9057 = vmatprep.subr.mxu0 %v6882
    %9058 = vmatpush1.msra.mxu0 %v6881
    %9059 = vmatprep.subr.mxu0 %v6888
    %9060 = vmatpush1.msra.mxu0 %v6887
    %9061 = vmatprep.subr.mxu0 %v6894
    %9062 = vmatpush1.msra.mxu0 %v6893
    %9063 = vmatprep.subr.mxu0 %v6900
    %9064 = vmatpush1.msra.mxu0 %v6899
    %9065 = vmatprep.subr.mxu0 %v6906
    %9066 = vmatpush1.msra.mxu0 %v6905
    %9067 = vmatprep.subr.mxu0 %v6912
    %9068 = vmatpush1.msra.mxu0 %v6911
    %9069 = vmatprep.subr.mxu0 %v6918
    %9070 = vmatpush1.msra.mxu0 %v6917
    %9071 = vmatprep.subr.mxu0 %v6924
    %9072 = vmatpush1.msra.mxu0 %v6923
    %9073 = vmatprep.subr.mxu0 %v6930
    %9074 = vmatpush1.msra.mxu0 %v6929
    %9075 = vmatprep.subr.mxu0 %v6936
    %9076 = vmatpush1.msra.mxu0 %v6935
    %9077 = vmatprep.subr.mxu0 %v6942
    %9078 = vmatpush1.msra.mxu0 %v6941
    %9079 = vmatprep.subr.mxu0 %v6948
    %9080 = vmatpush1.msra.mxu0 %v6947
    %9081 = vmatprep.subr.mxu0 %v6954
    %9082 = vmatpush1.msra.mxu0 %v6953
    %9083 = vmatprep.subr.mxu0 %v6960
    %9084 = vmatpush1.msra.mxu0 %v6959
    %9085 = vmatprep.subr.mxu0 %v6966
    %9086 = vmatpush1.msra.mxu0 %v6965
    %9087 = vmatprep.subr.mxu0 %v6972
    %9088 = vmatpush1.msra.mxu0 %v6971
    %9089 = vmatprep.subr.mxu0 %v6978
    %9090 = vmatpush1.msra.mxu0 %v6977
    %9091 = vmatprep.subr.mxu0 %v6984
    %9092 = vmatpush1.msra.mxu0 %v6983
    %9093 = vmatprep.subr.mxu0 %v6990
    %9094 = vmatpush1.msra.mxu0 %v6989
    %9095 = vmatprep.subr.mxu0 %v6996
    %9096 = vmatpush1.msra.mxu0 %v6995
    %9097 = vmatprep.subr.mxu0 %v7002
    %9098 = vmatpush1.msra.mxu0 %v7001
    %9099 = vmatprep.subr.mxu0 %v7008
    %9100 = vmatpush1.msra.mxu0 %v7007
    %9101 = vmatprep.mubr.f32.mxu0 %v6042
    %9102 = vmatmul.mubr.f32.gmra.mrb[0].mxu0 %v6041
    %v9103 = vpop.f32.mrb[0].mxu0
    %v9104 = vadd.f32 %v9033, %v9103
    %v9105 = vpop.f32.mrb[0].mxu0
    %v9106 = vadd.f32 %v9035, %v9105
    %9107 = vdwg.mxu0
    %9108 = vmatprep.subr.mxu0 %v7014
    %9109 = vmatpush1.msra.mxu0 %v7013
    %9110 = vmatprep.subr.mxu0 %v7020
    %9111 = vmatpush1.msra.mxu0 %v7019
    %9112 = vmatprep.subr.mxu0 %v7026
    %9113 = vmatpush1.msra.mxu0 %v7025
    %9114 = vmatprep.subr.mxu0 %v7032
    %9115 = vmatpush1.msra.mxu0 %v7031
    %9116 = vmatprep.subr.mxu0 %v7038
    %9117 = vmatpush1.msra.mxu0 %v7037
    %9118 = vmatprep.subr.mxu0 %v7044
    %9119 = vmatpush1.msra.mxu0 %v7043
    %9120 = vmatprep.subr.mxu0 %v7050
    %9121 = vmatpush1.msra.mxu0 %v7049
    %9122 = vmatprep.subr.mxu0 %v7056
    %9123 = vmatpush1.msra.mxu0 %v7055
    %9124 = vmatprep.subr.mxu0 %v7062
    %9125 = vmatpush1.msra.mxu0 %v7061
    %9126 = vmatprep.subr.mxu0 %v7068
    %9127 = vmatpush1.msra.mxu0 %v7067
    %9128 = vmatprep.subr.mxu0 %v7074
    %9129 = vmatpush1.msra.mxu0 %v7073
    %9130 = vmatprep.subr.mxu0 %v7080
    %9131 = vmatpush1.msra.mxu0 %v7079
    %9132 = vmatprep.subr.mxu0 %v7086
    %9133 = vmatpush1.msra.mxu0 %v7085
    %9134 = vmatprep.subr.mxu0 %v7092
    %9135 = vmatpush1.msra.mxu0 %v7091
    %9136 = vmatprep.subr.mxu0 %v7098
    %9137 = vmatpush1.msra.mxu0 %v7097
    %9138 = vmatprep.subr.mxu0 %v7104
    %9139 = vmatpush1.msra.mxu0 %v7103
    %9140 = vmatprep.subr.mxu0 %v7110
    %9141 = vmatpush1.msra.mxu0 %v7109
    %9142 = vmatprep.subr.mxu0 %v7116
    %9143 = vmatpush1.msra.mxu0 %v7115
    %9144 = vmatprep.subr.mxu0 %v7122
    %9145 = vmatpush1.msra.mxu0 %v7121
    %9146 = vmatprep.subr.mxu0 %v7128
    %9147 = vmatpush1.msra.mxu0 %v7127
    %9148 = vmatprep.subr.mxu0 %v7134
    %9149 = vmatpush1.msra.mxu0 %v7133
    %9150 = vmatprep.subr.mxu0 %v7140
    %9151 = vmatpush1.msra.mxu0 %v7139
    %9152 = vmatprep.subr.mxu0 %v7146
    %9153 = vmatpush1.msra.mxu0 %v7145
    %9154 = vmatprep.subr.mxu0 %v7152
    %9155 = vmatpush1.msra.mxu0 %v7151
    %9156 = vmatprep.subr.mxu0 %v7158
    %9157 = vmatpush1.msra.mxu0 %v7157
    %9158 = vmatprep.subr.mxu0 %v7164
    %9159 = vmatpush1.msra.mxu0 %v7163
    %9160 = vmatprep.subr.mxu0 %v7170
    %9161 = vmatpush1.msra.mxu0 %v7169
    %9162 = vmatprep.subr.mxu0 %v7176
    %9163 = vmatpush1.msra.mxu0 %v7175
    %9164 = vmatprep.subr.mxu0 %v7182
    %9165 = vmatpush1.msra.mxu0 %v7181
    %9166 = vmatprep.subr.mxu0 %v7188
    %9167 = vmatpush1.msra.mxu0 %v7187
    %9168 = vmatprep.subr.mxu0 %v7194
    %9169 = vmatpush1.msra.mxu0 %v7193
    %9170 = vmatprep.subr.mxu0 %v7200
    %9171 = vmatpush1.msra.mxu0 %v7199
    %9172 = vmatprep.mubr.f32.mxu0 %v6044
    %9173 = vmatmul.mubr.f32.gmra.mrb[0].mxu0 %v6043
    %v9174 = vpop.f32.mrb[0].mxu0
    %v9175 = vadd.f32 %v9104, %v9174
    %v9176 = vpop.f32.mrb[0].mxu0
    %v9177 = vadd.f32 %v9106, %v9176
    %9178 = vdwg.mxu0
    %9179 = vmatprep.subr.mxu0 %v7206
    %9180 = vmatpush1.msra.mxu0 %v7205
    %9181 = vmatprep.subr.mxu0 %v7212
    %9182 = vmatpush1.msra.mxu0 %v7211
    %9183 = vmatprep.subr.mxu0 %v7218
    %9184 = vmatpush1.msra.mxu0 %v7217
    %9185 = vmatprep.subr.mxu0 %v7224
    %9186 = vmatpush1.msra.mxu0 %v7223
    %9187 = vmatprep.subr.mxu0 %v7230
    %9188 = vmatpush1.msra.mxu0 %v7229
    %9189 = vmatprep.subr.mxu0 %v7236
    %9190 = vmatpush1.msra.mxu0 %v7235
    %9191 = vmatprep.subr.mxu0 %v7242
    %9192 = vmatpush1.msra.mxu0 %v7241
    %9193 = vmatprep.subr.mxu0 %v7248
    %9194 = vmatpush1.msra.mxu0 %v7247
    %9195 = vmatprep.subr.mxu0 %v7254
    %9196 = vmatpush1.msra.mxu0 %v7253
    %9197 = vmatprep.subr.mxu0 %v7260
    %9198 = vmatpush1.msra.mxu0 %v7259
    %9199 = vmatprep.subr.mxu0 %v7266
    %9200 = vmatpush1.msra.mxu0 %v7265
    %9201 = vmatprep.subr.mxu0 %v7272
    %9202 = vmatpush1.msra.mxu0 %v7271
    %9203 = vmatprep.subr.mxu0 %v7278
    %9204 = vmatpush1.msra.mxu0 %v7277
    %9205 = vmatprep.subr.mxu0 %v7284
    %9206 = vmatpush1.msra.mxu0 %v7283
    %9207 = vmatprep.subr.mxu0 %v7290
    %9208 = vmatpush1.msra.mxu0 %v7289
    %9209 = vmatprep.subr.mxu0 %v7296
    %9210 = vmatpush1.msra.mxu0 %v7295
    %9211 = vmatprep.subr.mxu0 %v7302
    %9212 = vmatpush1.msra.mxu0 %v7301
    %9213 = vmatprep.subr.mxu0 %v7308
    %9214 = vmatpush1.msra.mxu0 %v7307
    %9215 = vmatprep.subr.mxu0 %v7314
    %9216 = vmatpush1.msra.mxu0 %v7313
    %9217 = vmatprep.subr.mxu0 %v7320
    %9218 = vmatpush1.msra.mxu0 %v7319
    %9219 = vmatprep.subr.mxu0 %v7326
    %9220 = vmatpush1.msra.mxu0 %v7325
    %9221 = vmatprep.subr.mxu0 %v7332
    %9222 = vmatpush1.msra.mxu0 %v7331
    %9223 = vmatprep.subr.mxu0 %v7338
    %9224 = vmatpush1.msra.mxu0 %v7337
    %9225 = vmatprep.subr.mxu0 %v7344
    %9226 = vmatpush1.msra.mxu0 %v7343
    %9227 = vmatprep.subr.mxu0 %v7350
    %9228 = vmatpush1.msra.mxu0 %v7349
    %9229 = vmatprep.subr.mxu0 %v7356
    %9230 = vmatpush1.msra.mxu0 %v7355
    %9231 = vmatprep.subr.mxu0 %v7362
    %9232 = vmatpush1.msra.mxu0 %v7361
    %9233 = vmatprep.subr.mxu0 %v7368
    %9234 = vmatpush1.msra.mxu0 %v7367
    %9235 = vmatprep.subr.mxu0 %v7374
    %9236 = vmatpush1.msra.mxu0 %v7373
    %9237 = vmatprep.subr.mxu0 %v7380
    %9238 = vmatpush1.msra.mxu0 %v7379
    %9239 = vmatprep.subr.mxu0 %v7386
    %9240 = vmatpush1.msra.mxu0 %v7385
    %9241 = vmatprep.subr.mxu0 %v7392
    %9242 = vmatpush1.msra.mxu0 %v7391
    %9243 = vmatprep.mubr.f32.mxu0 %v6046
    %9244 = vmatmul.mubr.f32.gmra.mrb[0].mxu0 %v6045
    %v9245 = vpop.f32.mrb[0].mxu0
    %v9246 = vadd.f32 %v9175, %v9245
    %v9247 = vpop.f32.mrb[0].mxu0
    %v9248 = vadd.f32 %v9177, %v9247
    %9249 = vdwg.mxu0
    %9250 = vmatprep.subr.mxu0 %v7398
    %9251 = vmatpush1.msra.mxu0 %v7397
    %9252 = vmatprep.subr.mxu0 %v7404
    %9253 = vmatpush1.msra.mxu0 %v7403
    %9254 = vmatprep.subr.mxu0 %v7410
    %9255 = vmatpush1.msra.mxu0 %v7409
    %9256 = vmatprep.subr.mxu0 %v7416
    %9257 = vmatpush1.msra.mxu0 %v7415
    %9258 = vmatprep.subr.mxu0 %v7422
    %9259 = vmatpush1.msra.mxu0 %v7421
    %9260 = vmatprep.subr.mxu0 %v7428
    %9261 = vmatpush1.msra.mxu0 %v7427
    %9262 = vmatprep.subr.mxu0 %v7434
    %9263 = vmatpush1.msra.mxu0 %v7433
    %9264 = vmatprep.subr.mxu0 %v7440
    %9265 = vmatpush1.msra.mxu0 %v7439
    %9266 = vmatprep.subr.mxu0 %v7446
    %9267 = vmatpush1.msra.mxu0 %v7445
    %9268 = vmatprep.subr.mxu0 %v7452
    %9269 = vmatpush1.msra.mxu0 %v7451
    %9270 = vmatprep.subr.mxu0 %v7458
    %9271 = vmatpush1.msra.mxu0 %v7457
    %9272 = vmatprep.subr.mxu0 %v7464
    %9273 = vmatpush1.msra.mxu0 %v7463
    %9274 = vmatprep.subr.mxu0 %v7470
    %9275 = vmatpush1.msra.mxu0 %v7469
    %9276 = vmatprep.subr.mxu0 %v7476
    %9277 = vmatpush1.msra.mxu0 %v7475
    %9278 = vmatprep.subr.mxu0 %v7482
    %9279 = vmatpush1.msra.mxu0 %v7481
    %9280 = vmatprep.subr.mxu0 %v7488
    %9281 = vmatpush1.msra.mxu0 %v7487
    %9282 = vmatprep.subr.mxu0 %v7494
    %9283 = vmatpush1.msra.mxu0 %v7493
    %9284 = vmatprep.subr.mxu0 %v7500
    %9285 = vmatpush1.msra.mxu0 %v7499
    %9286 = vmatprep.subr.mxu0 %v7506
    %9287 = vmatpush1.msra.mxu0 %v7505
    %9288 = vmatprep.subr.mxu0 %v7512
    %9289 = vmatpush1.msra.mxu0 %v7511
    %9290 = vmatprep.subr.mxu0 %v7518
    %9291 = vmatpush1.msra.mxu0 %v7517
    %9292 = vmatprep.subr.mxu0 %v7524
    %9293 = vmatpush1.msra.mxu0 %v7523
    %9294 = vmatprep.subr.mxu0 %v7530
    %9295 = vmatpush1.msra.mxu0 %v7529
    %9296 = vmatprep.subr.mxu0 %v7536
    %9297 = vmatpush1.msra.mxu0 %v7535
    %9298 = vmatprep.subr.mxu0 %v7542
    %9299 = vmatpush1.msra.mxu0 %v7541
    %9300 = vmatprep.subr.mxu0 %v7548
    %9301 = vmatpush1.msra.mxu0 %v7547
    %9302 = vmatprep.subr.mxu0 %v7554
    %9303 = vmatpush1.msra.mxu0 %v7553
    %9304 = vmatprep.subr.mxu0 %v7560
    %9305 = vmatpush1.msra.mxu0 %v7559
    %9306 = vmatprep.subr.mxu0 %v7566
    %9307 = vmatpush1.msra.mxu0 %v7565
    %9308 = vmatprep.subr.mxu0 %v7572
    %9309 = vmatpush1.msra.mxu0 %v7571
    %9310 = vmatprep.subr.mxu0 %v7578
    %9311 = vmatpush1.msra.mxu0 %v7577
    %9312 = vmatprep.subr.mxu0 %v7584
    %9313 = vmatpush1.msra.mxu0 %v7583
    %9314 = vmatprep.mubr.f32.mxu0 %v6048
    %9315 = vmatmul.mubr.f32.gmra.mrb[0].mxu0 %v6047
    %v9316 = vpop.f32.mrb[0].mxu0
    %v9317 = vadd.f32 %v9246, %v9316
    %v9318 = vpop.f32.mrb[0].mxu0
    %v9319 = vadd.f32 %v9248, %v9318
    %9320 = vdwg.mxu0
    %v9321 = vtanh.pop %v8181
    %v9322 = vtanh.pop %v8183
    %v9323 = vtanh.pop %v8749
    %v9324 = vtanh.pop %v8751
    %v9325 = vtanh.pop %v9317
    %v9326 = vtanh.pop %v9319
    %9327 = vst [vmem:[#allocation17] sm:$0xff] %v9321
    %9328 = vst [vmem:[#allocation17 + $0x8] sm:$0xff] %v9322
    %9329 = vst [vmem:[#allocation17 + $0x10] sm:$0xff] %v9323
    %9330 = vst [vmem:[#allocation17 + $0x18] sm:$0xff] %v9324
    %9331 = vst [vmem:[#allocation17 + $0x20] sm:$0xff] %v9325
    %9332 = vst [vmem:[#allocation17 + $0x28] sm:$0xff] %v9326
    // Predicated region
    $region74: #{wrapper_forward.1} parent=1 // pred_check
      _
    $region75: #{wrapper_forward.1} parent=1 // pred_check_branch
      %9334 = sbr.rel (0) target = $region77
    $region76: #{wrapper_forward.1} parent=1 // pred_region
      %s9336 = ssub.s32 768, 768
      %9337 = vsyncadd [#allocation4], %s9336
      %s9339 = sshll.u32 [#allocation17], 4
      %s9340 = int_to_ptr.vmem [resolvable:$true] %s9339
      %9342 = dma.vmem_to_hbm [thread:$0]  %s9340, 768, %s9, [#allocation4]
    $region77: #{wrapper_forward.1} parent=1 // pred_fallthru
      _
    // Predicated region
    $region78: #{wrapper_forward.1} parent=1 // pred_check
      _
    $region79: #{wrapper_forward.1} parent=1 // pred_check_branch
      %9344 = sbr.rel (0) target = $region81
    $region80: #{wrapper_forward.1} parent=1 // pred_region
      %9345 = dma.done [#allocation4], 768
    $region81: #{wrapper_forward.1} parent=1 // pred_fallthru
      _
    %9346 = vsyncpa [#allocation3], 1
    %9347 = vsyncpa [#allocation6], 1
    %9348 = vsyncpa [#allocation9], 1
    %9349 = vsyncpa [#allocation12], 1
    %9350 = vsyncpa [#allocation15], 1
    %9351 = vsyncpa [#allocation4], 1

</llo_original>
